<compile_context>
chip_gen: v7x
topology: tpu7x:2x2x1
jax: 0.10.0
libtpu: 0.0.40
codegen_flags: <defaults>
</compile_context>

<pallas_src>
import jax
import jax.numpy as jnp
import numpy as np
from jax.experimental import pallas as pl
from jax.experimental.pallas import tpu as pltpu

LRELU_SLOPE = 0.2
BN_EPS = 1e-5

# (kernel tap, row shift) pairs contributing to each output-row parity of the
# stride-2, k=4, pad=1 transposed conv (same table reused for columns):
#   out_row = 2*ih + kh - 1  =>  even out rows: kh in {1,3}; odd: kh in {0,2}
_PHASE_TAPS = (((1, 0), (3, -1)),   # even output rows: r[j]   , r[j-1]
               ((2, 0), (0, +1)))   # odd  output rows: r[j]   , r[j+1]


def _round_up(x, m):
    return (x + m - 1) // m * m


def _pick_batch_block(N, per_image_bytes, act_budget_bytes, P, target_m=256):
    """Divisor of N: reach >=target_m MXU rows while fitting the VMEM budget."""
    divs = [d for d in range(1, N + 1) if N % d == 0]
    fits = [d for d in divs if 2 * d * per_image_bytes <= act_budget_bytes] or [1]
    reach = [d for d in fits if d * P >= target_m]
    return min(reach) if reach else max(fits)


def _pick_bn_tile(R, max_rows):
    """Row tile for the BN-apply kernel that divides R exactly (no pad copy)."""
    if R <= max_rows:
        return R
    for d in range(max_rows - max_rows % 8, 7, -8):
        if R % d == 0:
            return d
    return 0                              # no clean divisor -> caller pads


def _resident_spec(shape, single_buffer):
    """Constant-index BlockSpec: operand stays VMEM-resident across grid steps."""
    rank = len(shape)

    def index_map(g):
        return (0,) * rank

    if single_buffer:
        try:    # large, never-changing weights: don't double-buffer them
            return pl.BlockSpec(shape, index_map, pipeline_mode=pl.Buffered(1))
        except (TypeError, AttributeError):
            pass
    return pl.BlockSpec(shape, index_map)


# ----------------------------- Pallas kernels ------------------------------ #
def _make_down_up_kernel(n_blk, Ho, Wo, cin_p, inner_p, outer_p):
    P = Ho * Wo
    M = n_blk * P

    def kernel(xph_ref, wd_ref, wu_ref, y_ref, stats_ref, rpad_ref):
        # xph_ref : (n_blk, 4, Ho+1, Wo+1, cin_p) bf16  phase-split padded input
        # wd_ref  : (16*cin_p, inner_p)           bf16  down-conv taps, K-concat
        # wu_ref  : (4, 4*inner_p, outer_p)       bf16  up-conv taps per phase
        # y_ref   : (4, n_blk, Ho, Wo, outer_p)   bf16  up-conv output phases
        # stats_ref: (1, 2, outer_p)              f32   per-block [sum, sum_sq]
        # rpad_ref: (n_blk, Ho+2, Wo+2, inner_p)  bf16  zero-bordered down act
        xph = xph_ref[...]
        a = jnp.where(xph > 0, xph, LRELU_SLOPE * xph)          # LeakyReLU(0.2)

        # ---- down: Conv2d(k=4, s=2, p=1) as ONE long-K MXU matmul ----------
        # Tap (kh,kw) lives in input phase (kh%2, kw%2) at offset (kh//2,kw//2)
        # (no HBM im2col); all 16 taps are K-concatenated in VMEM so the MXU
        # does a single pass instead of 16 small dots + 16 f32 accumulator adds.
        taps = [a[:, (kh % 2) * 2 + (kw % 2),
                  kh // 2:kh // 2 + Ho, kw // 2:kw // 2 + Wo, :].reshape(M, cin_p)
                for kh in range(4) for kw in range(4)]
        a_cat = jnp.concatenate(taps, axis=1)                   # (M, 16*cin_p)
        r = jnp.dot(a_cat, wd_ref[...], preferred_element_type=jnp.float32)
        r = jnp.maximum(r, 0.0)                                 # ReLU

        # Zero only the 1-pixel border of the scratch (interior fully rewritten
        # below).  Done every step so 'parallel' multi-core sharding is safe.
        zr = jnp.zeros((n_blk, 1, Wo + 2, inner_p), jnp.bfloat16)
        zc = jnp.zeros((n_blk, Ho + 2, 1, inner_p), jnp.bfloat16)
        rpad_ref[:, 0:1, :, :] = zr
        rpad_ref[:, Ho + 1:Ho + 2, :, :] = zr
        rpad_ref[:, :, 0:1, :] = zc
        rpad_ref[:, :, Wo + 1:Wo + 2, :] = zc
        rpad_ref[:, 1:Ho + 1, 1:Wo + 1, :] = (
            r.astype(jnp.bfloat16).reshape(n_blk, Ho, Wo, inner_p))

        # ---- up: ConvTranspose2d(k=4, s=2, p=1) as 4 sub-pixel phases -------
        # Each output phase is one long-K matmul over its 4 contributing taps
        # (no overlap-add, no 16x intermediate written to HBM).
        ssum = jnp.zeros((1, outer_p), jnp.float32)
        ssq = jnp.zeros((1, outer_p), jnp.float32)
        for ph in range(2):
            for pw in range(2):
                rs = [rpad_ref[:, 1 + dh:1 + dh + Ho,
                               1 + dw:1 + dw + Wo, :].reshape(M, inner_p)
                      for _kh, dh in _PHASE_TAPS[ph]
                      for _kw, dw in _PHASE_TAPS[pw]]
                r_cat = jnp.concatenate(rs, axis=1)             # (M, 4*inner_p)
                acc = jnp.dot(r_cat, wu_ref[ph * 2 + pw],
                              preferred_element_type=jnp.float32)
                y_ref[ph * 2 + pw] = (
                    acc.astype(jnp.bfloat16).reshape(n_blk, Ho, Wo, outer_p))
                # BN partial sums from the f32 accumulator (not the bf16 store).
                ssum = ssum + jnp.sum(acc, axis=0, keepdims=True)
                ssq = ssq + jnp.sum(acc * acc, axis=0, keepdims=True)
        stats_ref[0, 0:1, :] = ssum
        stats_ref[0, 1:2, :] = ssq

    return kernel


def _bn_apply_kernel(y_ref, scale_ref, shift_ref, o_ref):
    # y_ref/o_ref: (tile_r, outer_p) bf16; scale/shift: (1, outer_p) f32, resident.
    y = y_ref[...].astype(jnp.float32)
    o_ref[...] = (y * scale_ref[...] + shift_ref[...]).astype(o_ref.dtype)


# ------------------------------ JAX wrapper -------------------------------- #
def unet_innermost_block(x, w_down, w_up, gamma, beta, *,
                         act_vmem_budget=16 << 20, bn_tile_rows=2048):
    """Innermost UnetSkipConnectionBlock.

    x: (N, Cin, H, W); w_down: (inner, Cin, 4, 4); w_up: (inner, outer, 4, 4).
    Returns cat([x, BN(ConvT(ReLU(Conv(LeakyReLU(x)))))], dim=1).
    """
    N, Cin, H, W = x.shape
    inner = w_down.shape[0]
    outer = w_up.shape[1]
    assert H % 2 == 0 and W % 2 == 0
    Ho, Wo = H // 2, W // 2
    P = Ho * Wo
    cin_p = _round_up(Cin, 128)     # lane-dense operands; no-op at >=128 channels
    inner_p = _round_up(inner, 128)
    outer_p = _round_up(outer, 128)

    # Phase-split the zero-padded NHWC input: tap (kh,kw) of the stride-2 conv
    # becomes an UNSTRIDED slice of phase (kh%2, kw%2) -> no 16x im2col in HBM.
    x_nhwc = jnp.transpose(x, (0, 2, 3, 1))
    x_nhwc = jnp.pad(x_nhwc, ((0, 0), (0, 0), (0, 0), (0, cin_p - Cin)))
    xp = jnp.pad(x_nhwc, ((0, 0), (1, 1), (1, 1), (0, 0)))
    xph = jnp.stack([xp[:, e::2, f::2, :] for e in range(2) for f in range(2)],
                    axis=1).astype(jnp.bfloat16)     # (N, 4, Ho+1, Wo+1, cin_p)

    # Down-conv weights: all 16 taps K-concatenated -> (16*cin_p, inner_p).
    wd4 = jnp.transpose(w_down, (2, 3, 1, 0))                  # (4,4,Cin,inner)
    wd4 = jnp.pad(wd4, ((0, 0), (0, 0), (0, cin_p - Cin), (0, inner_p - inner)))
    wd_cat = wd4.reshape(16 * cin_p, inner_p).astype(jnp.bfloat16)
    # Up-conv weights: per output sub-pixel phase, its 4 contributing taps are
    # K-concatenated in the same order the kernel concatenates the activations.
    wu4 = jnp.transpose(w_up, (2, 3, 0, 1))                    # (4,4,inner,outer)
    wu4 = jnp.pad(wu4, ((0, 0), (0, 0), (0, inner_p - inner), (0, outer_p - outer)))
    wu_cat = jnp.stack(
        [jnp.concatenate([wu4[kh, kw]
                          for kh, _dh in _PHASE_TAPS[ph]
                          for kw, _dw in _PHASE_TAPS[pw]], axis=0)
         for ph in range(2) for pw in range(2)], axis=0).astype(jnp.bfloat16)

    # ---- batch blocking + VMEM budget (re-derived per shape / generation) ---
    per_img = (4 * (Ho + 1) * (Wo + 1) * cin_p * 2       # xph block
               + 4 * P * outer_p * 2                     # y block
               + (Ho + 2) * (Wo + 2) * inner_p * 2       # rpad scratch
               + P * 16 * cin_p * 2                      # a_cat temp
               + P * 4 * inner_p * 2                     # r_cat temp
               + P * (inner_p + outer_p) * 4)            # f32 matmul results
    n_blk = _pick_batch_block(N, per_img, act_vmem_budget, P)
    weight_bytes = (wd_cat.size + wu_cat.size) * 2
    single_buf_weights = weight_bytes > (4 << 20)        # only worth it when big
    vmem_limit = int(min(100 << 20,
                         max(32 << 20,
                             weight_bytes * (1 if single_buf_weights else 2)
                             + 2 * n_blk * per_img + (8 << 20))))
    G = N // n_blk

    # Kernel 1: fused LeakyReLU -> down conv -> ReLU -> transposed conv + BN
    # partial sums, n_blk images per grid step ("parallel" batch axis).
    y_ph, stats = pl.pallas_call(
        _make_down_up_kernel(n_blk, Ho, Wo, cin_p, inner_p, outer_p),
        out_shape=(jax.ShapeDtypeStruct((4, N, Ho, Wo, outer_p), jnp.bfloat16),
                   jax.ShapeDtypeStruct((G, 2, outer_p), jnp.float32)),
        grid=(G,),
        in_specs=[
            pl.BlockSpec((n_blk, 4, Ho + 1, Wo + 1, cin_p),
                         lambda g: (g, 0, 0, 0, 0)),
            _resident_spec((16 * cin_p, inner_p), single_buf_weights),
            _resident_spec((4, 4 * inner_p, outer_p), single_buf_weights),
        ],
        out_specs=(pl.BlockSpec((4, n_blk, Ho, Wo, outer_p),
                                lambda g: (0, g, 0, 0, 0)),
                   pl.BlockSpec((1, 2, outer_p), lambda g: (g, 0, 0))),
        scratch_shapes=[pltpu.VMEM((n_blk, Ho + 2, Wo + 2, inner_p),
                                   jnp.bfloat16)],
        compiler_params=pltpu.CompilerParams(
            dimension_semantics=("parallel",),
            vmem_limit_bytes=vmem_limit),
    )(xph, wd_cat, wu_cat)

    # Exact BatchNorm2d training statistics (biased variance) from the per-block
    # f32 partial sums.  NOTE: E[x^2]-E[x]^2 in f32 is cancellation-prone when
    # |mean| >> std; clamped at zero and fine at these magnitudes.
    cnt = jnp.float32(N * H * W)
    mean = jnp.sum(stats[:, 0, :], axis=0) / cnt
    var = jnp.maximum(jnp.sum(stats[:, 1, :], axis=0) / cnt - mean * mean, 0.0)
    gamma_p = jnp.pad(gamma.astype(jnp.float32), (0, outer_p - outer))
    beta_p = jnp.pad(beta.astype(jnp.float32), (0, outer_p - outer))
    scale = gamma_p * jax.lax.rsqrt(var + BN_EPS)
    shift = beta_p - mean * scale

    # Kernel 2: tiled BN apply — bf16 in/out, in-place (aliased), tile divides R
    # so no pad copy, scale/shift resident.
    R = 4 * N * P
    y2 = y_ph.reshape(R, outer_p)
    tile_r = _pick_bn_tile(R, bn_tile_rows)
    pad_r = 0
    if tile_r == 0:                                # no clean divisor (rare)
        tile_r = min(bn_tile_rows, _round_up(R, 8))
        pad_r = _round_up(R, tile_r) - R
        y2 = jnp.pad(y2, ((0, pad_r), (0, 0)))
    yn = pl.pallas_call(
        _bn_apply_kernel,
        out_shape=jax.ShapeDtypeStruct((R + pad_r, outer_p), jnp.bfloat16),
        grid=((R + pad_r) // tile_r,),
        in_specs=[pl.BlockSpec((tile_r, outer_p), lambda i: (i, 0)),
                  pl.BlockSpec((1, outer_p), lambda i: (0, 0)),
                  pl.BlockSpec((1, outer_p), lambda i: (0, 0))],
        out_specs=pl.BlockSpec((tile_r, outer_p), lambda i: (i, 0)),
        input_output_aliases={0: 0},
        compiler_params=pltpu.CompilerParams(
            dimension_semantics=("parallel",)),
    )(y2, scale.reshape(1, outer_p), shift.reshape(1, outer_p))[:R]

    # Interleave the 4 sub-pixel phases back to NHWC, strip channel padding,
    # go to NCHW and apply the skip concat (pure XLA layout work, on bf16).
    y6 = yn.reshape(2, 2, N, Ho, Wo, outer_p)[..., :outer]     # (ph,pw,n,ih,iw,c)
    y_nhwc = y6.transpose(2, 3, 0, 4, 1, 5).reshape(N, H, W, outer)
    y_nchw = y_nhwc.transpose(0, 3, 1, 2).astype(x.dtype)
    return jnp.concatenate([x, y_nchw], axis=1)


# --------------------------- pure-JAX reference ----------------------------- #
def reference(x, w_down, w_up, gamma, beta):
    a = jnp.where(x > 0, x, LRELU_SLOPE * x)
    d = jax.lax.conv_general_dilated(
        a, w_down, (2, 2), ((1, 1), (1, 1)),
        dimension_numbers=("NCHW", "OIHW", "NCHW"))
    r = jnp.maximum(d, 0.0)
    # ConvTranspose2d(k=4, s=2, p=1) == conv with lhs_dilation=2, flipped
    # kernel, padding k-1-p = 2.
    w_t = jnp.flip(w_up, axis=(2, 3)).transpose(1, 0, 2, 3)   # (outer,inner,4,4)
    y = jax.lax.conv_general_dilated(
        r, w_t, (1, 1), ((2, 2), (2, 2)), lhs_dilation=(2, 2),
        dimension_numbers=("NCHW", "OIHW", "NCHW"))
    mean = y.mean(axis=(0, 2, 3), keepdims=True)
    var = ((y - mean) ** 2).mean(axis=(0, 2, 3), keepdims=True)
    yn = (y - mean) * jax.lax.rsqrt(var + BN_EPS)
    yn = yn * gamma.reshape(1, -1, 1, 1) + beta.reshape(1, -1, 1, 1)
    return jnp.concatenate([x, yn], axis=1)


# ---------------------------------- main ------------------------------------ #
if __name__ == "__main__":
    key = jax.random.PRNGKey(0)
    k1, k2, k3, k4, k5 = jax.random.split(key, 5)

    N, H, W = 2, 16, 16
    outer_nc, inner_nc = 4, 8
    input_nc = outer_nc                      # input_nc defaults to outer_nc

    x = jax.random.normal(k1, (N, input_nc, H, W), jnp.float32)
    w_down = 0.1 * jax.random.normal(k2, (inner_nc, input_nc, 4, 4), jnp.float32)
    w_up = 0.1 * jax.random.normal(k3, (inner_nc, outer_nc, 4, 4), jnp.float32)
    gamma = 1.0 + 0.1 * jax.random.normal(k4, (outer_nc,), jnp.float32)
    beta = 0.1 * jax.random.normal(k5, (outer_nc,), jnp.float32)

    out = jax.jit(unet_innermost_block)(x, w_down, w_up, gamma, beta)
    out = jax.block_until_ready(out)

    assert out.shape == (N, input_nc + outer_nc, H, W)
    ref = reference(x, w_down, w_up, gamma, beta)
    # bf16 MXU operands + bf16 y intermediate (f32 accumulation / f32 BN stats)
    # vs the pure-f32 reference -> loosened tolerance.
    np.testing.assert_allclose(np.asarray(out), np.asarray(ref),
                               rtol=5e-2, atol=5e-2)
    print("KERNEL_OK")
</pallas_src>

<mosaic_0001>
module attributes {stable_mosaic.version = 11 : i64} {
  func.func @kernel(%arg0: i32, %arg1: memref<2x4x9x9x128xbf16, #tpu.memory_space<vmem>>, %arg2: memref<2048x128xbf16, #tpu.memory_space<vmem>>, %arg3: memref<4x512x128xbf16, #tpu.memory_space<vmem>>, %arg4: memref<4x2x8x8x128xbf16, #tpu.memory_space<vmem>>, %arg5: memref<1x2x128xf32, #tpu.memory_space<vmem>>, %arg6: memref<2x10x10x128xbf16, #tpu.memory_space<vmem>>) attributes {dimension_semantics = [#tpu.dimension_semantics<parallel>], iteration_bounds = array<i64: 1>, scalar_prefetch = 0 : i64, scratch_operands = 1 : i64, tpu.core_type = #tpu.core_type<tc>, window_params = [{transform_indices = @transform_0, window_bounds = array<i64: 2, 4, 9, 9, 128>}, {pipeline_mode = #tpu.pipeline_mode<synchronous>, transform_indices = @transform_1, window_bounds = array<i64: 2048, 128>}, {pipeline_mode = #tpu.pipeline_mode<synchronous>, transform_indices = @transform_2, window_bounds = array<i64: 4, 512, 128>}, {transform_indices = @transform_3, window_bounds = array<i64: 4, 2, 8, 8, 128>}, {transform_indices = @transform_4, window_bounds = array<i64: 1, 2, 128>}]} {
    %c0 = arith.constant 0 : index
    %c0_0 = arith.constant 0 : index
    %c0_1 = arith.constant 0 : index
    %c0_2 = arith.constant 0 : index
    %c0_3 = arith.constant 0 : index
    %0 = vector.load %arg1[%c0, %c0_0, %c0_1, %c0_2, %c0_3] : memref<2x4x9x9x128xbf16, #tpu.memory_space<vmem>>, vector<2x4x9x9x128xbf16>
    %cst = arith.constant 0.000000e+00 : bf16
    %1 = vector.broadcast %cst : bf16 to vector<2x4x9x9x128xbf16>
    %2 = arith.cmpf ogt, %0, %1 : vector<2x4x9x9x128xbf16>
    %cst_4 = arith.constant 2.001950e-01 : bf16
    %3 = vector.broadcast %cst_4 : bf16 to vector<2x4x9x9x128xbf16>
    %4 = arith.mulf %3, %0 : vector<2x4x9x9x128xbf16>
    %5 = arith.select %2, %0, %4 : vector<2x4x9x9x128xi1>, vector<2x4x9x9x128xbf16>
    %6 = vector.extract_strided_slice %5 {offsets = [0, 0, 0, 0, 0], sizes = [2, 1, 8, 8, 128], strides = [1, 1, 1, 1, 1]} : vector<2x4x9x9x128xbf16> to vector<2x1x8x8x128xbf16>
    %7 = vector.shape_cast %6 : vector<2x1x8x8x128xbf16> to vector<2x8x8x128xbf16>
    %8 = vector.shape_cast %7 : vector<2x8x8x128xbf16> to vector<128x128xbf16>
    %9 = vector.extract_strided_slice %5 {offsets = [0, 1, 0, 0, 0], sizes = [2, 1, 8, 8, 128], strides = [1, 1, 1, 1, 1]} : vector<2x4x9x9x128xbf16> to vector<2x1x8x8x128xbf16>
    %10 = vector.shape_cast %9 : vector<2x1x8x8x128xbf16> to vector<2x8x8x128xbf16>
    %11 = vector.shape_cast %10 : vector<2x8x8x128xbf16> to vector<128x128xbf16>
    %12 = vector.extract_strided_slice %5 {offsets = [0, 0, 0, 1, 0], sizes = [2, 1, 8, 8, 128], strides = [1, 1, 1, 1, 1]} : vector<2x4x9x9x128xbf16> to vector<2x1x8x8x128xbf16>
    %13 = vector.shape_cast %12 : vector<2x1x8x8x128xbf16> to vector<2x8x8x128xbf16>
    %14 = vector.shape_cast %13 : vector<2x8x8x128xbf16> to vector<128x128xbf16>
    %15 = vector.extract_strided_slice %5 {offsets = [0, 1, 0, 1, 0], sizes = [2, 1, 8, 8, 128], strides = [1, 1, 1, 1, 1]} : vector<2x4x9x9x128xbf16> to vector<2x1x8x8x128xbf16>
    %16 = vector.shape_cast %15 : vector<2x1x8x8x128xbf16> to vector<2x8x8x128xbf16>
    %17 = vector.shape_cast %16 : vector<2x8x8x128xbf16> to vector<128x128xbf16>
    %18 = vector.extract_strided_slice %5 {offsets = [0, 2, 0, 0, 0], sizes = [2, 1, 8, 8, 128], strides = [1, 1, 1, 1, 1]} : vector<2x4x9x9x128xbf16> to vector<2x1x8x8x128xbf16>
    %19 = vector.shape_cast %18 : vector<2x1x8x8x128xbf16> to vector<2x8x8x128xbf16>
    %20 = vector.shape_cast %19 : vector<2x8x8x128xbf16> to vector<128x128xbf16>
    %21 = vector.extract_strided_slice %5 {offsets = [0, 3, 0, 0, 0], sizes = [2, 1, 8, 8, 128], strides = [1, 1, 1, 1, 1]} : vector<2x4x9x9x128xbf16> to vector<2x1x8x8x128xbf16>
    %22 = vector.shape_cast %21 : vector<2x1x8x8x128xbf16> to vector<2x8x8x128xbf16>
    %23 = vector.shape_cast %22 : vector<2x8x8x128xbf16> to vector<128x128xbf16>
    %24 = vector.extract_strided_slice %5 {offsets = [0, 2, 0, 1, 0], sizes = [2, 1, 8, 8, 128], strides = [1, 1, 1, 1, 1]} : vector<2x4x9x9x128xbf16> to vector<2x1x8x8x128xbf16>
    %25 = vector.shape_cast %24 : vector<2x1x8x8x128xbf16> to vector<2x8x8x128xbf16>
    %26 = vector.shape_cast %25 : vector<2x8x8x128xbf16> to vector<128x128xbf16>
    %27 = vector.extract_strided_slice %5 {offsets = [0, 3, 0, 1, 0], sizes = [2, 1, 8, 8, 128], strides = [1, 1, 1, 1, 1]} : vector<2x4x9x9x128xbf16> to vector<2x1x8x8x128xbf16>
    %28 = vector.shape_cast %27 : vector<2x1x8x8x128xbf16> to vector<2x8x8x128xbf16>
    %29 = vector.shape_cast %28 : vector<2x8x8x128xbf16> to vector<128x128xbf16>
    %30 = vector.extract_strided_slice %5 {offsets = [0, 0, 1, 0, 0], sizes = [2, 1, 8, 8, 128], strides = [1, 1, 1, 1, 1]} : vector<2x4x9x9x128xbf16> to vector<2x1x8x8x128xbf16>
    %31 = vector.shape_cast %30 : vector<2x1x8x8x128xbf16> to vector<2x8x8x128xbf16>
    %32 = vector.shape_cast %31 : vector<2x8x8x128xbf16> to vector<128x128xbf16>
    %33 = vector.extract_strided_slice %5 {offsets = [0, 1, 1, 0, 0], sizes = [2, 1, 8, 8, 128], strides = [1, 1, 1, 1, 1]} : vector<2x4x9x9x128xbf16> to vector<2x1x8x8x128xbf16>
    %34 = vector.shape_cast %33 : vector<2x1x8x8x128xbf16> to vector<2x8x8x128xbf16>
    %35 = vector.shape_cast %34 : vector<2x8x8x128xbf16> to vector<128x128xbf16>
    %36 = vector.extract_strided_slice %5 {offsets = [0, 0, 1, 1, 0], sizes = [2, 1, 8, 8, 128], strides = [1, 1, 1, 1, 1]} : vector<2x4x9x9x128xbf16> to vector<2x1x8x8x128xbf16>
    %37 = vector.shape_cast %36 : vector<2x1x8x8x128xbf16> to vector<2x8x8x128xbf16>
    %38 = vector.shape_cast %37 : vector<2x8x8x128xbf16> to vector<128x128xbf16>
    %39 = vector.extract_strided_slice %5 {offsets = [0, 1, 1, 1, 0], sizes = [2, 1, 8, 8, 128], strides = [1, 1, 1, 1, 1]} : vector<2x4x9x9x128xbf16> to vector<2x1x8x8x128xbf16>
    %40 = vector.shape_cast %39 : vector<2x1x8x8x128xbf16> to vector<2x8x8x128xbf16>
    %41 = vector.shape_cast %40 : vector<2x8x8x128xbf16> to vector<128x128xbf16>
    %42 = vector.extract_strided_slice %5 {offsets = [0, 2, 1, 0, 0], sizes = [2, 1, 8, 8, 128], strides = [1, 1, 1, 1, 1]} : vector<2x4x9x9x128xbf16> to vector<2x1x8x8x128xbf16>
    %43 = vector.shape_cast %42 : vector<2x1x8x8x128xbf16> to vector<2x8x8x128xbf16>
    %44 = vector.shape_cast %43 : vector<2x8x8x128xbf16> to vector<128x128xbf16>
    %45 = vector.extract_strided_slice %5 {offsets = [0, 3, 1, 0, 0], sizes = [2, 1, 8, 8, 128], strides = [1, 1, 1, 1, 1]} : vector<2x4x9x9x128xbf16> to vector<2x1x8x8x128xbf16>
    %46 = vector.shape_cast %45 : vector<2x1x8x8x128xbf16> to vector<2x8x8x128xbf16>
    %47 = vector.shape_cast %46 : vector<2x8x8x128xbf16> to vector<128x128xbf16>
    %48 = vector.extract_strided_slice %5 {offsets = [0, 2, 1, 1, 0], sizes = [2, 1, 8, 8, 128], strides = [1, 1, 1, 1, 1]} : vector<2x4x9x9x128xbf16> to vector<2x1x8x8x128xbf16>
    %49 = vector.shape_cast %48 : vector<2x1x8x8x128xbf16> to vector<2x8x8x128xbf16>
    %50 = vector.shape_cast %49 : vector<2x8x8x128xbf16> to vector<128x128xbf16>
    %51 = vector.extract_strided_slice %5 {offsets = [0, 3, 1, 1, 0], sizes = [2, 1, 8, 8, 128], strides = [1, 1, 1, 1, 1]} : vector<2x4x9x9x128xbf16> to vector<2x1x8x8x128xbf16>
    %52 = vector.shape_cast %51 : vector<2x1x8x8x128xbf16> to vector<2x8x8x128xbf16>
    %53 = vector.shape_cast %52 : vector<2x8x8x128xbf16> to vector<128x128xbf16>
    %54 = tpu.concatenate %8, %11, %14, %17, %20, %23, %26, %29, %32, %35, %38, %41, %44, %47, %50, %53 in 1 : vector<128x128xbf16>, vector<128x128xbf16>, vector<128x128xbf16>, vector<128x128xbf16>, vector<128x128xbf16>, vector<128x128xbf16>, vector<128x128xbf16>, vector<128x128xbf16>, vector<128x128xbf16>, vector<128x128xbf16>, vector<128x128xbf16>, vector<128x128xbf16>, vector<128x128xbf16>, vector<128x128xbf16>, vector<128x128xbf16>, vector<128x128xbf16> -> vector<128x2048xbf16>
    %c0_5 = arith.constant 0 : index
    %c0_6 = arith.constant 0 : index
    %55 = vector.load %arg2[%c0_5, %c0_6] : memref<2048x128xbf16, #tpu.memory_space<vmem>>, vector<2048x128xbf16>
    %cst_7 = arith.constant dense<0.000000e+00> : vector<128x128xf32>
    %56 = tpu.matmul %54, %55, %cst_7 {dimension_numbers = #tpu.dot_dimension_numbers<[1], [0], [0], [1], [0, 0, 1, 1], [], []>} : vector<128x2048xbf16>, vector<2048x128xbf16>, vector<128x128xf32> -> vector<128x128xf32>
    %cst_8 = arith.constant 0.000000e+00 : f32
    %57 = vector.broadcast %cst_8 : f32 to vector<128x128xf32>
    %58 = arith.maximumf %56, %57 : vector<128x128xf32>
    %cst_9 = arith.constant 0.000000e+00 : bf16
    %59 = vector.broadcast %cst_9 : bf16 to vector<2x1x10x128xbf16>
    %cst_10 = arith.constant 0.000000e+00 : bf16
    %60 = vector.broadcast %cst_10 : bf16 to vector<2x10x1x128xbf16>
    %c0_11 = arith.constant 0 : index
    %c0_12 = arith.constant 0 : index
    %c0_13 = arith.constant 0 : index
    %c0_14 = arith.constant 0 : index
    %61 = vector.load %arg6[%c0_11, %c0_12, %c0_13, %c0_14] : memref<2x10x10x128xbf16, #tpu.memory_space<vmem>>, vector<2x1x10x128xbf16>
    tpu.vector_store %arg6[%c0_11, %c0_12, %c0_13, %c0_14], %59 {strides = array<i32>} : memref<2x10x10x128xbf16, #tpu.memory_space<vmem>>, vector<2x1x10x128xbf16>,
    %c0_15 = arith.constant 0 : index
    %c9 = arith.constant 9 : index
    %c0_16 = arith.constant 0 : index
    %c0_17 = arith.constant 0 : index
    %62 = vector.load %arg6[%c0_15, %c9, %c0_16, %c0_17] : memref<2x10x10x128xbf16, #tpu.memory_space<vmem>>, vector<2x1x10x128xbf16>
    tpu.vector_store %arg6[%c0_15, %c9, %c0_16, %c0_17], %59 {strides = array<i32>} : memref<2x10x10x128xbf16, #tpu.memory_space<vmem>>, vector<2x1x10x128xbf16>,
    %c0_18 = arith.constant 0 : index
    %c0_19 = arith.constant 0 : index
    %c0_20 = arith.constant 0 : index
    %c0_21 = arith.constant 0 : index
    %63 = vector.load %arg6[%c0_18, %c0_19, %c0_20, %c0_21] : memref<2x10x10x128xbf16, #tpu.memory_space<vmem>>, vector<2x10x1x128xbf16>
    tpu.vector_store %arg6[%c0_18, %c0_19, %c0_20, %c0_21], %60 {strides = array<i32>} : memref<2x10x10x128xbf16, #tpu.memory_space<vmem>>, vector<2x10x1x128xbf16>,
    %c0_22 = arith.constant 0 : index
    %c0_23 = arith.constant 0 : index
    %c9_24 = arith.constant 9 : index
    %c0_25 = arith.constant 0 : index
    %64 = vector.load %arg6[%c0_22, %c0_23, %c9_24, %c0_25] : memref<2x10x10x128xbf16, #tpu.memory_space<vmem>>, vector<2x10x1x128xbf16>
    tpu.vector_store %arg6[%c0_22, %c0_23, %c9_24, %c0_25], %60 {strides = array<i32>} : memref<2x10x10x128xbf16, #tpu.memory_space<vmem>>, vector<2x10x1x128xbf16>,
    %65 = arith.truncf %58 : vector<128x128xf32> to vector<128x128xbf16>
    %66 = vector.shape_cast %65 : vector<128x128xbf16> to vector<2x8x8x128xbf16>
    %c0_26 = arith.constant 0 : index
    %c1 = arith.constant 1 : index
    %c1_27 = arith.constant 1 : index
    %c0_28 = arith.constant 0 : index
    %67 = vector.load %arg6[%c0_26, %c1, %c1_27, %c0_28] : memref<2x10x10x128xbf16, #tpu.memory_space<vmem>>, vector<2x8x8x128xbf16>
    tpu.vector_store %arg6[%c0_26, %c1, %c1_27, %c0_28], %66 {strides = array<i32>} : memref<2x10x10x128xbf16, #tpu.memory_space<vmem>>, vector<2x8x8x128xbf16>,
    %cst_29 = arith.constant 0.000000e+00 : f32
    %68 = vector.broadcast %cst_29 : f32 to vector<1x128xf32>
    %cst_30 = arith.constant 0.000000e+00 : f32
    %69 = vector.broadcast %cst_30 : f32 to vector<1x128xf32>
    %c0_31 = arith.constant 0 : index
    %c1_32 = arith.constant 1 : index
    %c1_33 = arith.constant 1 : index
    %c0_34 = arith.constant 0 : index
    %70 = vector.load %arg6[%c0_31, %c1_32, %c1_33, %c0_34] : memref<2x10x10x128xbf16, #tpu.memory_space<vmem>>, vector<2x8x8x128xbf16>
    %71 = vector.shape_cast %70 : vector<2x8x8x128xbf16> to vector<128x128xbf16>
    %c0_35 = arith.constant 0 : index
    %c1_36 = arith.constant 1 : index
    %c0_37 = arith.constant 0 : index
    %c0_38 = arith.constant 0 : index
    %72 = vector.load %arg6[%c0_35, %c1_36, %c0_37, %c0_38] : memref<2x10x10x128xbf16, #tpu.memory_space<vmem>>, vector<2x8x8x128xbf16>
    %73 = vector.shape_cast %72 : vector<2x8x8x128xbf16> to vector<128x128xbf16>
    %c0_39 = arith.constant 0 : index
    %c0_40 = arith.constant 0 : index
    %c1_41 = arith.constant 1 : index
    %c0_42 = arith.constant 0 : index
    %74 = vector.load %arg6[%c0_39, %c0_40, %c1_41, %c0_42] : memref<2x10x10x128xbf16, #tpu.memory_space<vmem>>, vector<2x8x8x128xbf16>
    %75 = vector.shape_cast %74 : vector<2x8x8x128xbf16> to vector<128x128xbf16>
    %c0_43 = arith.constant 0 : index
    %c0_44 = arith.constant 0 : index
    %c0_45 = arith.constant 0 : index
    %c0_46 = arith.constant 0 : index
    %76 = vector.load %arg6[%c0_43, %c0_44, %c0_45, %c0_46] : memref<2x10x10x128xbf16, #tpu.memory_space<vmem>>, vector<2x8x8x128xbf16>
    %77 = vector.shape_cast %76 : vector<2x8x8x128xbf16> to vector<128x128xbf16>
    %78 = tpu.concatenate %71, %73, %75, %77 in 1 : vector<128x128xbf16>, vector<128x128xbf16>, vector<128x128xbf16>, vector<128x128xbf16> -> vector<128x512xbf16>
    %c0_47 = arith.constant 0 : index
    %c0_48 = arith.constant 0 : index
    %c0_49 = arith.constant 0 : index
    %79 = vector.load %arg3[%c0_47, %c0_48, %c0_49] : memref<4x512x128xbf16, #tpu.memory_space<vmem>>, vector<1x512x128xbf16>
    %80 = vector.shape_cast %79 : vector<1x512x128xbf16> to vector<512x128xbf16>
    %cst_50 = arith.constant dense<0.000000e+00> : vector<128x128xf32>
    %81 = tpu.matmul %78, %80, %cst_50 {dimension_numbers = #tpu.dot_dimension_numbers<[1], [0], [0], [1], [0, 0, 1, 1], [], []>} : vector<128x512xbf16>, vector<512x128xbf16>, vector<128x128xf32> -> vector<128x128xf32>
    %82 = arith.truncf %81 : vector<128x128xf32> to vector<128x128xbf16>
    %83 = vector.shape_cast %82 : vector<128x128xbf16> to vector<2x8x8x128xbf16>
    %c0_51 = arith.constant 0 : index
    %c0_52 = arith.constant 0 : index
    %c0_53 = arith.constant 0 : index
    %c0_54 = arith.constant 0 : index
    %c0_55 = arith.constant 0 : index
    %84 = vector.load %arg4[%c0_51, %c0_52, %c0_53, %c0_54, %c0_55] : memref<4x2x8x8x128xbf16, #tpu.memory_space<vmem>>, vector<1x2x8x8x128xbf16>
    %85 = vector.shape_cast %84 : vector<1x2x8x8x128xbf16> to vector<2x8x8x128xbf16>
    %86 = vector.shape_cast %83 : vector<2x8x8x128xbf16> to vector<1x2x8x8x128xbf16>
    tpu.vector_store %arg4[%c0_51, %c0_52, %c0_53, %c0_54, %c0_55], %86 {strides = array<i32>} : memref<4x2x8x8x128xbf16, #tpu.memory_space<vmem>>, vector<1x2x8x8x128xbf16>,
    %cst_56 = arith.constant dense<0.000000e+00> : vector<128xf32>
    %87 = vector.multi_reduction <add>, %81, %cst_56 [0] : vector<128x128xf32> to vector<128xf32>
    %88 = vector.shape_cast %87 : vector<128xf32> to vector<1x128xf32>
    %89 = arith.addf %68, %88 : vector<1x128xf32>
    %90 = arith.mulf %81, %81 : vector<128x128xf32>
    %cst_57 = arith.constant dense<0.000000e+00> : vector<128xf32>
    %91 = vector.multi_reduction <add>, %90, %cst_57 [0] : vector<128x128xf32> to vector<128xf32>
    %92 = vector.shape_cast %91 : vector<128xf32> to vector<1x128xf32>
    %93 = arith.addf %69, %92 : vector<1x128xf32>
    %c0_58 = arith.constant 0 : index
    %c1_59 = arith.constant 1 : index
    %c1_60 = arith.constant 1 : index
    %c0_61 = arith.constant 0 : index
    %94 = vector.load %arg6[%c0_58, %c1_59, %c1_60, %c0_61] : memref<2x10x10x128xbf16, #tpu.memory_space<vmem>>, vector<2x8x8x128xbf16>
    %95 = vector.shape_cast %94 : vector<2x8x8x128xbf16> to vector<128x128xbf16>
    %c0_62 = arith.constant 0 : index
    %c1_63 = arith.constant 1 : index
    %c2 = arith.constant 2 : index
    %c0_64 = arith.constant 0 : index
    %96 = vector.load %arg6[%c0_62, %c1_63, %c2, %c0_64] : memref<2x10x10x128xbf16, #tpu.memory_space<vmem>>, vector<2x8x8x128xbf16>
    %97 = vector.shape_cast %96 : vector<2x8x8x128xbf16> to vector<128x128xbf16>
    %c0_65 = arith.constant 0 : index
    %c0_66 = arith.constant 0 : index
    %c1_67 = arith.constant 1 : index
    %c0_68 = arith.constant 0 : index
    %98 = vector.load %arg6[%c0_65, %c0_66, %c1_67, %c0_68] : memref<2x10x10x128xbf16, #tpu.memory_space<vmem>>, vector<2x8x8x128xbf16>
    %99 = vector.shape_cast %98 : vector<2x8x8x128xbf16> to vector<128x128xbf16>
    %c0_69 = arith.constant 0 : index
    %c0_70 = arith.constant 0 : index
    %c2_71 = arith.constant 2 : index
    %c0_72 = arith.constant 0 : index
    %100 = vector.load %arg6[%c0_69, %c0_70, %c2_71, %c0_72] : memref<2x10x10x128xbf16, #tpu.memory_space<vmem>>, vector<2x8x8x128xbf16>
    %101 = vector.shape_cast %100 : vector<2x8x8x128xbf16> to vector<128x128xbf16>
    %102 = tpu.concatenate %95, %97, %99, %101 in 1 : vector<128x128xbf16>, vector<128x128xbf16>, vector<128x128xbf16>, vector<128x128xbf16> -> vector<128x512xbf16>
    %c1_73 = arith.constant 1 : index
    %c0_74 = arith.constant 0 : index
    %c0_75 = arith.constant 0 : index
    %103 = vector.load %arg3[%c1_73, %c0_74, %c0_75] : memref<4x512x128xbf16, #tpu.memory_space<vmem>>, vector<1x512x128xbf16>
    %104 = vector.shape_cast %103 : vector<1x512x128xbf16> to vector<512x128xbf16>
    %cst_76 = arith.constant dense<0.000000e+00> : vector<128x128xf32>
    %105 = tpu.matmul %102, %104, %cst_76 {dimension_numbers = #tpu.dot_dimension_numbers<[1], [0], [0], [1], [0, 0, 1, 1], [], []>} : vector<128x512xbf16>, vector<512x128xbf16>, vector<128x128xf32> -> vector<128x128xf32>
    %106 = arith.truncf %105 : vector<128x128xf32> to vector<128x128xbf16>
    %107 = vector.shape_cast %106 : vector<128x128xbf16> to vector<2x8x8x128xbf16>
    %c1_77 = arith.constant 1 : index
    %c0_78 = arith.constant 0 : index
    %c0_79 = arith.constant 0 : index
    %c0_80 = arith.constant 0 : index
    %c0_81 = arith.constant 0 : index
    %108 = vector.load %arg4[%c1_77, %c0_78, %c0_79, %c0_80, %c0_81] : memref<4x2x8x8x128xbf16, #tpu.memory_space<vmem>>, vector<1x2x8x8x128xbf16>
    %109 = vector.shape_cast %108 : vector<1x2x8x8x128xbf16> to vector<2x8x8x128xbf16>
    %110 = vector.shape_cast %107 : vector<2x8x8x128xbf16> to vector<1x2x8x8x128xbf16>
    tpu.vector_store %arg4[%c1_77, %c0_78, %c0_79, %c0_80, %c0_81], %110 {strides = array<i32>} : memref<4x2x8x8x128xbf16, #tpu.memory_space<vmem>>, vector<1x2x8x8x128xbf16>,
    %cst_82 = arith.constant dense<0.000000e+00> : vector<128xf32>
    %111 = vector.multi_reduction <add>, %105, %cst_82 [0] : vector<128x128xf32> to vector<128xf32>
    %112 = vector.shape_cast %111 : vector<128xf32> to vector<1x128xf32>
    %113 = arith.addf %89, %112 : vector<1x128xf32>
    %114 = arith.mulf %105, %105 : vector<128x128xf32>
    %cst_83 = arith.constant dense<0.000000e+00> : vector<128xf32>
    %115 = vector.multi_reduction <add>, %114, %cst_83 [0] : vector<128x128xf32> to vector<128xf32>
    %116 = vector.shape_cast %115 : vector<128xf32> to vector<1x128xf32>
    %117 = arith.addf %93, %116 : vector<1x128xf32>
    %c0_84 = arith.constant 0 : index
    %c1_85 = arith.constant 1 : index
    %c1_86 = arith.constant 1 : index
    %c0_87 = arith.constant 0 : index
    %118 = vector.load %arg6[%c0_84, %c1_85, %c1_86, %c0_87] : memref<2x10x10x128xbf16, #tpu.memory_space<vmem>>, vector<2x8x8x128xbf16>
    %119 = vector.shape_cast %118 : vector<2x8x8x128xbf16> to vector<128x128xbf16>
    %c0_88 = arith.constant 0 : index
    %c1_89 = arith.constant 1 : index
    %c0_90 = arith.constant 0 : index
    %c0_91 = arith.constant 0 : index
    %120 = vector.load %arg6[%c0_88, %c1_89, %c0_90, %c0_91] : memref<2x10x10x128xbf16, #tpu.memory_space<vmem>>, vector<2x8x8x128xbf16>
    %121 = vector.shape_cast %120 : vector<2x8x8x128xbf16> to vector<128x128xbf16>
    %c0_92 = arith.constant 0 : index
    %c2_93 = arith.constant 2 : index
    %c1_94 = arith.constant 1 : index
    %c0_95 = arith.constant 0 : index
    %122 = vector.load %arg6[%c0_92, %c2_93, %c1_94, %c0_95] : memref<2x10x10x128xbf16, #tpu.memory_space<vmem>>, vector<2x8x8x128xbf16>
    %123 = vector.shape_cast %122 : vector<2x8x8x128xbf16> to vector<128x128xbf16>
    %c0_96 = arith.constant 0 : index
    %c2_97 = arith.constant 2 : index
    %c0_98 = arith.constant 0 : index
    %c0_99 = arith.constant 0 : index
    %124 = vector.load %arg6[%c0_96, %c2_97, %c0_98, %c0_99] : memref<2x10x10x128xbf16, #tpu.memory_space<vmem>>, vector<2x8x8x128xbf16>
    %125 = vector.shape_cast %124 : vector<2x8x8x128xbf16> to vector<128x128xbf16>
    %126 = tpu.concatenate %119, %121, %123, %125 in 1 : vector<128x128xbf16>, vector<128x128xbf16>, vector<128x128xbf16>, vector<128x128xbf16> -> vector<128x512xbf16>
    %c2_100 = arith.constant 2 : index
    %c0_101 = arith.constant 0 : index
    %c0_102 = arith.constant 0 : index
    %127 = vector.load %arg3[%c2_100, %c0_101, %c0_102] : memref<4x512x128xbf16, #tpu.memory_space<vmem>>, vector<1x512x128xbf16>
    %128 = vector.shape_cast %127 : vector<1x512x128xbf16> to vector<512x128xbf16>
    %cst_103 = arith.constant dense<0.000000e+00> : vector<128x128xf32>
    %129 = tpu.matmul %126, %128, %cst_103 {dimension_numbers = #tpu.dot_dimension_numbers<[1], [0], [0], [1], [0, 0, 1, 1], [], []>} : vector<128x512xbf16>, vector<512x128xbf16>, vector<128x128xf32> -> vector<128x128xf32>
    %130 = arith.truncf %129 : vector<128x128xf32> to vector<128x128xbf16>
    %131 = vector.shape_cast %130 : vector<128x128xbf16> to vector<2x8x8x128xbf16>
    %c2_104 = arith.constant 2 : index
    %c0_105 = arith.constant 0 : index
    %c0_106 = arith.constant 0 : index
    %c0_107 = arith.constant 0 : index
    %c0_108 = arith.constant 0 : index
    %132 = vector.load %arg4[%c2_104, %c0_105, %c0_106, %c0_107, %c0_108] : memref<4x2x8x8x128xbf16, #tpu.memory_space<vmem>>, vector<1x2x8x8x128xbf16>
    %133 = vector.shape_cast %132 : vector<1x2x8x8x128xbf16> to vector<2x8x8x128xbf16>
    %134 = vector.shape_cast %131 : vector<2x8x8x128xbf16> to vector<1x2x8x8x128xbf16>
    tpu.vector_store %arg4[%c2_104, %c0_105, %c0_106, %c0_107, %c0_108], %134 {strides = array<i32>} : memref<4x2x8x8x128xbf16, #tpu.memory_space<vmem>>, vector<1x2x8x8x128xbf16>,
    %cst_109 = arith.constant dense<0.000000e+00> : vector<128xf32>
    %135 = vector.multi_reduction <add>, %129, %cst_109 [0] : vector<128x128xf32> to vector<128xf32>
    %136 = vector.shape_cast %135 : vector<128xf32> to vector<1x128xf32>
    %137 = arith.addf %113, %136 : vector<1x128xf32>
    %138 = arith.mulf %129, %129 : vector<128x128xf32>
    %cst_110 = arith.constant dense<0.000000e+00> : vector<128xf32>
    %139 = vector.multi_reduction <add>, %138, %cst_110 [0] : vector<128x128xf32> to vector<128xf32>
    %140 = vector.shape_cast %139 : vector<128xf32> to vector<1x128xf32>
    %141 = arith.addf %117, %140 : vector<1x128xf32>
    %c0_111 = arith.constant 0 : index
    %c1_112 = arith.constant 1 : index
    %c1_113 = arith.constant 1 : index
    %c0_114 = arith.constant 0 : index
    %142 = vector.load %arg6[%c0_111, %c1_112, %c1_113, %c0_114] : memref<2x10x10x128xbf16, #tpu.memory_space<vmem>>, vector<2x8x8x128xbf16>
    %143 = vector.shape_cast %142 : vector<2x8x8x128xbf16> to vector<128x128xbf16>
    %c0_115 = arith.constant 0 : index
    %c1_116 = arith.constant 1 : index
    %c2_117 = arith.constant 2 : index
    %c0_118 = arith.constant 0 : index
    %144 = vector.load %arg6[%c0_115, %c1_116, %c2_117, %c0_118] : memref<2x10x10x128xbf16, #tpu.memory_space<vmem>>, vector<2x8x8x128xbf16>
    %145 = vector.shape_cast %144 : vector<2x8x8x128xbf16> to vector<128x128xbf16>
    %c0_119 = arith.constant 0 : index
    %c2_120 = arith.constant 2 : index
    %c1_121 = arith.constant 1 : index
    %c0_122 = arith.constant 0 : index
    %146 = vector.load %arg6[%c0_119, %c2_120, %c1_121, %c0_122] : memref<2x10x10x128xbf16, #tpu.memory_space<vmem>>, vector<2x8x8x128xbf16>
    %147 = vector.shape_cast %146 : vector<2x8x8x128xbf16> to vector<128x128xbf16>
    %c0_123 = arith.constant 0 : index
    %c2_124 = arith.constant 2 : index
    %c2_125 = arith.constant 2 : index
    %c0_126 = arith.constant 0 : index
    %148 = vector.load %arg6[%c0_123, %c2_124, %c2_125, %c0_126] : memref<2x10x10x128xbf16, #tpu.memory_space<vmem>>, vector<2x8x8x128xbf16>
    %149 = vector.shape_cast %148 : vector<2x8x8x128xbf16> to vector<128x128xbf16>
    %150 = tpu.concatenate %143, %145, %147, %149 in 1 : vector<128x128xbf16>, vector<128x128xbf16>, vector<128x128xbf16>, vector<128x128xbf16> -> vector<128x512xbf16>
    %c3 = arith.constant 3 : index
    %c0_127 = arith.constant 0 : index
    %c0_128 = arith.constant 0 : index
    %151 = vector.load %arg3[%c3, %c0_127, %c0_128] : memref<4x512x128xbf16, #tpu.memory_space<vmem>>, vector<1x512x128xbf16>
    %152 = vector.shape_cast %151 : vector<1x512x128xbf16> to vector<512x128xbf16>
    %cst_129 = arith.constant dense<0.000000e+00> : vector<128x128xf32>
    %153 = tpu.matmul %150, %152, %cst_129 {dimension_numbers = #tpu.dot_dimension_numbers<[1], [0], [0], [1], [0, 0, 1, 1], [], []>} : vector<128x512xbf16>, vector<512x128xbf16>, vector<128x128xf32> -> vector<128x128xf32>
    %154 = arith.truncf %153 : vector<128x128xf32> to vector<128x128xbf16>
    %155 = vector.shape_cast %154 : vector<128x128xbf16> to vector<2x8x8x128xbf16>
    %c3_130 = arith.constant 3 : index
    %c0_131 = arith.constant 0 : index
    %c0_132 = arith.constant 0 : index
    %c0_133 = arith.constant 0 : index
    %c0_134 = arith.constant 0 : index
    %156 = vector.load %arg4[%c3_130, %c0_131, %c0_132, %c0_133, %c0_134] : memref<4x2x8x8x128xbf16, #tpu.memory_space<vmem>>, vector<1x2x8x8x128xbf16>
    %157 = vector.shape_cast %156 : vector<1x2x8x8x128xbf16> to vector<2x8x8x128xbf16>
    %158 = vector.shape_cast %155 : vector<2x8x8x128xbf16> to vector<1x2x8x8x128xbf16>
    tpu.vector_store %arg4[%c3_130, %c0_131, %c0_132, %c0_133, %c0_134], %158 {strides = array<i32>} : memref<4x2x8x8x128xbf16, #tpu.memory_space<vmem>>, vector<1x2x8x8x128xbf16>,
    %cst_135 = arith.constant dense<0.000000e+00> : vector<128xf32>
    %159 = vector.multi_reduction <add>, %153, %cst_135 [0] : vector<128x128xf32> to vector<128xf32>
    %160 = vector.shape_cast %159 : vector<128xf32> to vector<1x128xf32>
    %161 = arith.addf %137, %160 : vector<1x128xf32>
    %162 = arith.mulf %153, %153 : vector<128x128xf32>
    %cst_136 = arith.constant dense<0.000000e+00> : vector<128xf32>
    %163 = vector.multi_reduction <add>, %162, %cst_136 [0] : vector<128x128xf32> to vector<128xf32>
    %164 = vector.shape_cast %163 : vector<128xf32> to vector<1x128xf32>
    %165 = arith.addf %141, %164 : vector<1x128xf32>
    %c0_137 = arith.constant 0 : index
    %c0_138 = arith.constant 0 : index
    %c0_139 = arith.constant 0 : index
    %166 = vector.load %arg5[%c0_137, %c0_138, %c0_139] : memref<1x2x128xf32, #tpu.memory_space<vmem>>, vector<1x1x128xf32>
    %167 = vector.shape_cast %166 : vector<1x1x128xf32> to vector<1x128xf32>
    %168 = vector.shape_cast %161 : vector<1x128xf32> to vector<1x1x128xf32>
    tpu.vector_store %arg5[%c0_137, %c0_138, %c0_139], %168 {strides = array<i32>} : memref<1x2x128xf32, #tpu.memory_space<vmem>>, vector<1x1x128xf32>,
    %c0_140 = arith.constant 0 : index
    %c1_141 = arith.constant 1 : index
    %c0_142 = arith.constant 0 : index
    %169 = vector.load %arg5[%c0_140, %c1_141, %c0_142] : memref<1x2x128xf32, #tpu.memory_space<vmem>>, vector<1x1x128xf32>
    %170 = vector.shape_cast %169 : vector<1x1x128xf32> to vector<1x128xf32>
    %171 = vector.shape_cast %165 : vector<1x128xf32> to vector<1x1x128xf32>
    tpu.vector_store %arg5[%c0_140, %c1_141, %c0_142], %171 {strides = array<i32>} : memref<1x2x128xf32, #tpu.memory_space<vmem>>, vector<1x1x128xf32>,
    return
  }
  func.func @transform_0(%arg0: i32) -> (i32, i32, i32, i32, i32) {
    %c0_i32 = arith.constant 0 : i32
    %c0_i32_0 = arith.constant 0 : i32
    %c0_i32_1 = arith.constant 0 : i32
    %c0_i32_2 = arith.constant 0 : i32
    %c0_i32_3 = arith.constant 0 : i32
    return %arg0, %c0_i32, %c0_i32_0, %c0_i32_1, %c0_i32_2 : i32, i32, i32, i32, i32
  }
  func.func @transform_1(%arg0: i32) -> (i32, i32) {
    %c0_i32 = arith.constant 0 : i32
    %c0_i32_0 = arith.constant 0 : i32
    %c0_i32_1 = arith.constant 0 : i32
    return %c0_i32, %c0_i32_0 : i32, i32
  }
  func.func @transform_2(%arg0: i32) -> (i32, i32, i32) {
    %c0_i32 = arith.constant 0 : i32
    %c0_i32_0 = arith.constant 0 : i32
    %c0_i32_1 = arith.constant 0 : i32
    %c0_i32_2 = arith.constant 0 : i32
    return %c0_i32, %c0_i32_0, %c0_i32_1 : i32, i32, i32
  }
  func.func @transform_3(%arg0: i32) -> (i32, i32, i32, i32, i32) {
    %c0_i32 = arith.constant 0 : i32
    %c0_i32_0 = arith.constant 0 : i32
    %c0_i32_1 = arith.constant 0 : i32
    %c0_i32_2 = arith.constant 0 : i32
    %c0_i32_3 = arith.constant 0 : i32
    return %c0_i32, %arg0, %c0_i32_0, %c0_i32_1, %c0_i32_2 : i32, i32, i32, i32, i32
  }
  func.func @transform_4(%arg0: i32) -> (i32, i32, i32) {
    %c0_i32 = arith.constant 0 : i32
    %c0_i32_0 = arith.constant 0 : i32
    %c0_i32_1 = arith.constant 0 : i32
    return %arg0, %c0_i32, %c0_i32_0 : i32, i32, i32
  }
}

module attributes {stable_mosaic.version = 11 : i64} {
  func.func @_bn_apply_kernel(%arg0: i32, %arg1: memref<512x128xbf16, #tpu.memory_space<vmem>>, %arg2: memref<1x128xf32, #tpu.memory_space<vmem>>, %arg3: memref<1x128xf32, #tpu.memory_space<vmem>>, %arg4: memref<512x128xbf16, #tpu.memory_space<vmem>>) attributes {dimension_semantics = [#tpu.dimension_semantics<parallel>], iteration_bounds = array<i64: 1>, scalar_prefetch = 0 : i64, scratch_operands = 0 : i64, tpu.core_type = #tpu.core_type<tc>, window_params = [{transform_indices = @transform_0, window_bounds = array<i64: 512, 128>}, {pipeline_mode = #tpu.pipeline_mode<synchronous>, transform_indices = @transform_1, window_bounds = array<i64: 1, 128>}, {pipeline_mode = #tpu.pipeline_mode<synchronous>, transform_indices = @transform_2, window_bounds = array<i64: 1, 128>}, {transform_indices = @transform_3, window_bounds = array<i64: 512, 128>}]} {
    %c0 = arith.constant 0 : index
    %c0_0 = arith.constant 0 : index
    %0 = vector.load %arg1[%c0, %c0_0] : memref<512x128xbf16, #tpu.memory_space<vmem>>, vector<512x128xbf16>
    %1 = arith.extf %0 : vector<512x128xbf16> to vector<512x128xf32>
    %c0_1 = arith.constant 0 : index
    %c0_2 = arith.constant 0 : index
    %2 = vector.load %arg2[%c0_1, %c0_2] : memref<1x128xf32, #tpu.memory_space<vmem>>, vector<1x128xf32>
    %3 = vector.broadcast %2 : vector<1x128xf32> to vector<512x128xf32>
    %4 = arith.mulf %1, %3 : vector<512x128xf32>
    %c0_3 = arith.constant 0 : index
    %c0_4 = arith.constant 0 : index
    %5 = vector.load %arg3[%c0_3, %c0_4] : memref<1x128xf32, #tpu.memory_space<vmem>>, vector<1x128xf32>
    %6 = vector.broadcast %5 : vector<1x128xf32> to vector<512x128xf32>
    %7 = arith.addf %4, %6 : vector<512x128xf32>
    %8 = arith.truncf %7 : vector<512x128xf32> to vector<512x128xbf16>
    %c0_5 = arith.constant 0 : index
    %c0_6 = arith.constant 0 : index
    %9 = vector.load %arg4[%c0_5, %c0_6] : memref<512x128xbf16, #tpu.memory_space<vmem>>, vector<512x128xbf16>
    tpu.vector_store %arg4[%c0_5, %c0_6], %8 {strides = array<i32>} : memref<512x128xbf16, #tpu.memory_space<vmem>>, vector<512x128xbf16>,
    return
  }
  func.func @transform_0(%arg0: i32) -> (i32, i32) {
    %c0_i32 = arith.constant 0 : i32
    %c0_i32_0 = arith.constant 0 : i32
    return %arg0, %c0_i32 : i32, i32
  }
  func.func @transform_1(%arg0: i32) -> (i32, i32) {
    %c0_i32 = arith.constant 0 : i32
    %c0_i32_0 = arith.constant 0 : i32
    %c0_i32_1 = arith.constant 0 : i32
    return %c0_i32, %c0_i32_0 : i32, i32
  }
  func.func @transform_2(%arg0: i32) -> (i32, i32) {
    %c0_i32 = arith.constant 0 : i32
    %c0_i32_0 = arith.constant 0 : i32
    %c0_i32_1 = arith.constant 0 : i32
    return %c0_i32, %c0_i32_0 : i32, i32
  }
  func.func @transform_3(%arg0: i32) -> (i32, i32) {
    %c0_i32 = arith.constant 0 : i32
    %c0_i32_0 = arith.constant 0 : i32
    return %arg0, %c0_i32 : i32, i32
  }
}

</mosaic_0001>

<llo_original>
// kernel: unet_innermost_block.3
$region0: #{unet_innermost_block.3}
  #allocation0 [shape = 'u32[]', space=smem, size = 0x4, offset = 0x4, fixed_abs, tag = 'smem constant byte address 0x4 - core index']
  #allocation1 [shape = 'u32[144,128]{1,0:T(1,128)}', space=vmem, size = 0x12000, scoped, tag = 'internal scratch']
  %s0 = inlined_call_operand.vmem [shape: bf16[512,128], index: 0, kind: input, shape index: {}, may-alias: {0,3}]
  %s1 = inlined_call_operand.vmem [shape: f32[1,128], index: 1, kind: input, shape index: {}]
  %s2 = inlined_call_operand.vmem [shape: f32[1,128], index: 2, kind: input, shape index: {}]
  %s3 = inlined_call_operand.vmem [shape: bf16[512,128], index: 3, kind: output, shape index: {}, may-alias: {0,3}]
  %s4 = sld [smem:[#allocation0]]
  $region22: #{unet_innermost_block.3} parent=0
    _
  %s6 = ssub.s32 1, %s4
  %s7 = scalar_select 0, %s6, %s4
  // Predicated region
  $region2: #{unet_innermost_block.3} parent=0 // pred_check
    _
  $region3: #{unet_innermost_block.3} parent=0 // pred_check_branch
    %9 = sbr.rel (0) target = $region5
  $region4: #{unet_innermost_block.3} parent=0 // pred_region
    _
  $region5: #{unet_innermost_block.3} parent=0 // pred_fallthru
    _
  // Predicated region
  $region6: #{unet_innermost_block.3} parent=0 // pred_check
    _
  $region7: #{unet_innermost_block.3} parent=0 // pred_check_branch
    %11 = sbr.rel (0) target = $region9
  $region8: #{unet_innermost_block.3} parent=0 // pred_region
    _
  $region9: #{unet_innermost_block.3} parent=0 // pred_fallthru
    _
  // Predicated region
  $region10: #{unet_innermost_block.3} parent=0 // pred_check
    _
  $region11: #{unet_innermost_block.3} parent=0 // pred_check_branch
    %13 = sbr.rel (0) target = $region13
  $region12: #{unet_innermost_block.3} parent=0 // pred_region
    _
  $region13: #{unet_innermost_block.3} parent=0 // pred_fallthru
    _
  %v14 = vld [vmem:[%s0] sm:$0xf]
  %v15 = vld [vmem:[%s0 + $0x4] sm:$0xf]
  %v16 = vld [vmem:[%s0 + $0x8] sm:$0xf]
  %v17 = vld [vmem:[%s0 + $0xc] sm:$0xf]
  %v18 = vld [vmem:[%s0 + $0x10] sm:$0xf]
  %v19 = vld [vmem:[%s0 + $0x14] sm:$0xf]
  %v20 = vld [vmem:[%s0 + $0x18] sm:$0xf]
  %v21 = vld [vmem:[%s0 + $0x1c] sm:$0xf]
  %v22 = vld [vmem:[%s0 + $0x20] sm:$0xf]
  %v23 = vld [vmem:[%s0 + $0x24] sm:$0xf]
  %v24 = vld [vmem:[%s0 + $0x28] sm:$0xf]
  %v25 = vld [vmem:[%s0 + $0x2c] sm:$0xf]
  %v26 = vld [vmem:[%s0 + $0x30] sm:$0xf]
  %v27 = vld [vmem:[%s0 + $0x34] sm:$0xf]
  %v28 = vld [vmem:[%s0 + $0x38] sm:$0xf]
  %v29 = vld [vmem:[%s0 + $0x3c] sm:$0xf]
  %v30 = vld [vmem:[%s0 + $0x40] sm:$0xf]
  %v31 = vld [vmem:[%s0 + $0x44] sm:$0xf]
  %v32 = vld [vmem:[%s0 + $0x48] sm:$0xf]
  %v33 = vld [vmem:[%s0 + $0x4c] sm:$0xf]
  %v34 = vld [vmem:[%s0 + $0x50] sm:$0xf]
  %v35 = vld [vmem:[%s0 + $0x54] sm:$0xf]
  %v36 = vld [vmem:[%s0 + $0x58] sm:$0xf]
  %v37 = vld [vmem:[%s0 + $0x5c] sm:$0xf]
  %v38 = vld [vmem:[%s0 + $0x60] sm:$0xf]
  %v39 = vld [vmem:[%s0 + $0x64] sm:$0xf]
  %v40 = vld [vmem:[%s0 + $0x68] sm:$0xf]
  %v41 = vld [vmem:[%s0 + $0x6c] sm:$0xf]
  %v42 = vld [vmem:[%s0 + $0x70] sm:$0xf]
  %v43 = vld [vmem:[%s0 + $0x74] sm:$0xf]
  %v44 = vld [vmem:[%s0 + $0x78] sm:$0xf]
  %v45 = vld [vmem:[%s0 + $0x7c] sm:$0xf]
  %v46 = vld [vmem:[%s0 + $0x80] sm:$0xf]
  %v47 = vld [vmem:[%s0 + $0x84] sm:$0xf]
  %v48 = vld [vmem:[%s0 + $0x88] sm:$0xf]
  %v49 = vld [vmem:[%s0 + $0x8c] sm:$0xf]
  %v50 = vld [vmem:[%s0 + $0x90] sm:$0xf]
  %v51 = vld [vmem:[%s0 + $0x94] sm:$0xf]
  %v52 = vld [vmem:[%s0 + $0x98] sm:$0xf]
  %v53 = vld [vmem:[%s0 + $0x9c] sm:$0xf]
  %v54 = vld [vmem:[%s0 + $0xa0] sm:$0xf]
  %v55 = vld [vmem:[%s0 + $0xa4] sm:$0xf]
  %v56 = vld [vmem:[%s0 + $0xa8] sm:$0xf]
  %v57 = vld [vmem:[%s0 + $0xac] sm:$0xf]
  %v58 = vld [vmem:[%s0 + $0xb0] sm:$0xf]
  %v59 = vld [vmem:[%s0 + $0xb4] sm:$0xf]
  %v60 = vld [vmem:[%s0 + $0xb8] sm:$0xf]
  %v61 = vld [vmem:[%s0 + $0xbc] sm:$0xf]
  %v62 = vld [vmem:[%s0 + $0xc0] sm:$0xf]
  %v63 = vld [vmem:[%s0 + $0xc4] sm:$0xf]
  %v64 = vld [vmem:[%s0 + $0xc8] sm:$0xf]
  %v65 = vld [vmem:[%s0 + $0xcc] sm:$0xf]
  %v66 = vld [vmem:[%s0 + $0xd0] sm:$0xf]
  %v67 = vld [vmem:[%s0 + $0xd4] sm:$0xf]
  %v68 = vld [vmem:[%s0 + $0xd8] sm:$0xf]
  %v69 = vld [vmem:[%s0 + $0xdc] sm:$0xf]
  %v70 = vld [vmem:[%s0 + $0xe0] sm:$0xf]
  %v71 = vld [vmem:[%s0 + $0xe4] sm:$0xf]
  %v72 = vld [vmem:[%s0 + $0xe8] sm:$0xf]
  %v73 = vld [vmem:[%s0 + $0xec] sm:$0xf]
  %v74 = vld [vmem:[%s0 + $0xf0] sm:$0xf]
  %v75 = vld [vmem:[%s0 + $0xf4] sm:$0xf]
  %v76 = vld [vmem:[%s0 + $0xf8] sm:$0xf]
  %v77 = vld [vmem:[%s0 + $0xfc] sm:$0xf]
  %v78 = vunpack.c.l.bf16 %v14
  %v79 = vunpack.c.l.bf16 %v15
  %v80 = vunpack.c.l.bf16 %v16
  %v81 = vunpack.c.l.bf16 %v17
  %v82 = vunpack.c.l.bf16 %v18
  %v83 = vunpack.c.l.bf16 %v19
  %v84 = vunpack.c.l.bf16 %v20
  %v85 = vunpack.c.l.bf16 %v21
  %v86 = vunpack.c.l.bf16 %v22
  %v87 = vunpack.c.l.bf16 %v23
  %v88 = vunpack.c.l.bf16 %v24
  %v89 = vunpack.c.l.bf16 %v25
  %v90 = vunpack.c.l.bf16 %v26
  %v91 = vunpack.c.l.bf16 %v27
  %v92 = vunpack.c.l.bf16 %v28
  %v93 = vunpack.c.l.bf16 %v29
  %v94 = vunpack.c.l.bf16 %v30
  %v95 = vunpack.c.l.bf16 %v31
  %v96 = vunpack.c.l.bf16 %v32
  %v97 = vunpack.c.l.bf16 %v33
  %v98 = vunpack.c.l.bf16 %v34
  %v99 = vunpack.c.l.bf16 %v35
  %v100 = vunpack.c.l.bf16 %v36
  %v101 = vunpack.c.l.bf16 %v37
  %v102 = vunpack.c.l.bf16 %v38
  %v103 = vunpack.c.l.bf16 %v39
  %v104 = vunpack.c.l.bf16 %v40
  %v105 = vunpack.c.l.bf16 %v41
  %v106 = vunpack.c.l.bf16 %v42
  %v107 = vunpack.c.l.bf16 %v43
  %v108 = vunpack.c.l.bf16 %v44
  %v109 = vunpack.c.l.bf16 %v45
  %v110 = vunpack.c.l.bf16 %v46
  %v111 = vunpack.c.l.bf16 %v47
  %v112 = vunpack.c.l.bf16 %v48
  %v113 = vunpack.c.l.bf16 %v49
  %v114 = vunpack.c.l.bf16 %v50
  %v115 = vunpack.c.l.bf16 %v51
  %v116 = vunpack.c.l.bf16 %v52
  %v117 = vunpack.c.l.bf16 %v53
  %v118 = vunpack.c.l.bf16 %v54
  %v119 = vunpack.c.l.bf16 %v55
  %v120 = vunpack.c.l.bf16 %v56
  %v121 = vunpack.c.l.bf16 %v57
  %v122 = vunpack.c.l.bf16 %v58
  %v123 = vunpack.c.l.bf16 %v59
  %v124 = vunpack.c.l.bf16 %v60
  %v125 = vunpack.c.l.bf16 %v61
  %v126 = vunpack.c.l.bf16 %v62
  %v127 = vunpack.c.l.bf16 %v63
  %v128 = vunpack.c.l.bf16 %v64
  %v129 = vunpack.c.l.bf16 %v65
  %v130 = vunpack.c.l.bf16 %v66
  %v131 = vunpack.c.l.bf16 %v67
  %v132 = vunpack.c.l.bf16 %v68
  %v133 = vunpack.c.l.bf16 %v69
  %v134 = vunpack.c.l.bf16 %v70
  %v135 = vunpack.c.l.bf16 %v71
  %v136 = vunpack.c.l.bf16 %v72
  %v137 = vunpack.c.l.bf16 %v73
  %v138 = vunpack.c.l.bf16 %v74
  %v139 = vunpack.c.l.bf16 %v75
  %v140 = vunpack.c.l.bf16 %v76
  %v141 = vunpack.c.l.bf16 %v77
  %v142 = vld [vmem:[%s1] sm:$0x1]
  %v144 = vlaneseq
  %v145 = vshrl.u32 %v144, 7
  %v146 = vsub.s32 0, %v145
  %v147 = vrot.slane %v142, %v146
  %v149 = vmul.f32 %v78, %v147
  %v150 = vmul.f32 %v79, %v147
  %v151 = vmul.f32 %v80, %v147
  %v152 = vmul.f32 %v81, %v147
  %v153 = vmul.f32 %v82, %v147
  %v154 = vmul.f32 %v83, %v147
  %v155 = vmul.f32 %v84, %v147
  %v156 = vmul.f32 %v85, %v147
  %v157 = vmul.f32 %v86, %v147
  %v158 = vmul.f32 %v87, %v147
  %v159 = vmul.f32 %v88, %v147
  %v160 = vmul.f32 %v89, %v147
  %v161 = vmul.f32 %v90, %v147
  %v162 = vmul.f32 %v91, %v147
  %v163 = vmul.f32 %v92, %v147
  %v164 = vmul.f32 %v93, %v147
  %v165 = vmul.f32 %v94, %v147
  %v166 = vmul.f32 %v95, %v147
  %v167 = vmul.f32 %v96, %v147
  %v168 = vmul.f32 %v97, %v147
  %v169 = vmul.f32 %v98, %v147
  %v170 = vmul.f32 %v99, %v147
  %v171 = vmul.f32 %v100, %v147
  %v172 = vmul.f32 %v101, %v147
  %v173 = vmul.f32 %v102, %v147
  %v174 = vmul.f32 %v103, %v147
  %v175 = vmul.f32 %v104, %v147
  %v176 = vmul.f32 %v105, %v147
  %v177 = vmul.f32 %v106, %v147
  %v178 = vmul.f32 %v107, %v147
  %v179 = vmul.f32 %v108, %v147
  %v180 = vmul.f32 %v109, %v147
  %v181 = vmul.f32 %v110, %v147
  %v182 = vmul.f32 %v111, %v147
  %v183 = vmul.f32 %v112, %v147
  %v184 = vmul.f32 %v113, %v147
  %v185 = vmul.f32 %v114, %v147
  %v186 = vmul.f32 %v115, %v147
  %v187 = vmul.f32 %v116, %v147
  %v188 = vmul.f32 %v117, %v147
  %v189 = vmul.f32 %v118, %v147
  %v190 = vmul.f32 %v119, %v147
  %v191 = vmul.f32 %v120, %v147
  %v192 = vmul.f32 %v121, %v147
  %v193 = vmul.f32 %v122, %v147
  %v194 = vmul.f32 %v123, %v147
  %v195 = vmul.f32 %v124, %v147
  %v196 = vmul.f32 %v125, %v147
  %v197 = vmul.f32 %v126, %v147
  %v198 = vmul.f32 %v127, %v147
  %v199 = vmul.f32 %v128, %v147
  %v200 = vmul.f32 %v129, %v147
  %v201 = vmul.f32 %v130, %v147
  %v202 = vmul.f32 %v131, %v147
  %v203 = vmul.f32 %v132, %v147
  %v204 = vmul.f32 %v133, %v147
  %v205 = vmul.f32 %v134, %v147
  %v206 = vmul.f32 %v135, %v147
  %v207 = vmul.f32 %v136, %v147
  %v208 = vmul.f32 %v137, %v147
  %v209 = vmul.f32 %v138, %v147
  %v210 = vmul.f32 %v139, %v147
  %v211 = vmul.f32 %v140, %v147
  %v212 = vmul.f32 %v141, %v147
  %v213 = vld [vmem:[%s2] sm:$0x1]
  %v215 = vlaneseq
  %v216 = vshrl.u32 %v215, 7
  %v217 = vsub.s32 0, %v216
  %v218 = vrot.slane %v213, %v217
  %v220 = vadd.f32 %v149, %v218
  %v221 = vadd.f32 %v150, %v218
  %v222 = vadd.f32 %v151, %v218
  %v223 = vadd.f32 %v152, %v218
  %v224 = vadd.f32 %v153, %v218
  %v225 = vadd.f32 %v154, %v218
  %v226 = vadd.f32 %v155, %v218
  %v227 = vadd.f32 %v156, %v218
  %v228 = vadd.f32 %v157, %v218
  %v229 = vadd.f32 %v158, %v218
  %v230 = vadd.f32 %v159, %v218
  %v231 = vadd.f32 %v160, %v218
  %v232 = vadd.f32 %v161, %v218
  %v233 = vadd.f32 %v162, %v218
  %v234 = vadd.f32 %v163, %v218
  %v235 = vadd.f32 %v164, %v218
  %v236 = vadd.f32 %v165, %v218
  %v237 = vadd.f32 %v166, %v218
  %v238 = vadd.f32 %v167, %v218
  %v239 = vadd.f32 %v168, %v218
  %v240 = vadd.f32 %v169, %v218
  %v241 = vadd.f32 %v170, %v218
  %v242 = vadd.f32 %v171, %v218
  %v243 = vadd.f32 %v172, %v218
  %v244 = vadd.f32 %v173, %v218
  %v245 = vadd.f32 %v174, %v218
  %v246 = vadd.f32 %v175, %v218
  %v247 = vadd.f32 %v176, %v218
  %v248 = vadd.f32 %v177, %v218
  %v249 = vadd.f32 %v178, %v218
  %v250 = vadd.f32 %v179, %v218
  %v251 = vadd.f32 %v180, %v218
  %v252 = vadd.f32 %v181, %v218
  %v253 = vadd.f32 %v182, %v218
  %v254 = vadd.f32 %v183, %v218
  %v255 = vadd.f32 %v184, %v218
  %v256 = vadd.f32 %v185, %v218
  %v257 = vadd.f32 %v186, %v218
  %v258 = vadd.f32 %v187, %v218
  %v259 = vadd.f32 %v188, %v218
  %v260 = vadd.f32 %v189, %v218
  %v261 = vadd.f32 %v190, %v218
  %v262 = vadd.f32 %v191, %v218
  %v263 = vadd.f32 %v192, %v218
  %v264 = vadd.f32 %v193, %v218
  %v265 = vadd.f32 %v194, %v218
  %v266 = vadd.f32 %v195, %v218
  %v267 = vadd.f32 %v196, %v218
  %v268 = vadd.f32 %v197, %v218
  %v269 = vadd.f32 %v198, %v218
  %v270 = vadd.f32 %v199, %v218
  %v271 = vadd.f32 %v200, %v218
  %v272 = vadd.f32 %v201, %v218
  %v273 = vadd.f32 %v202, %v218
  %v274 = vadd.f32 %v203, %v218
  %v275 = vadd.f32 %v204, %v218
  %v276 = vadd.f32 %v205, %v218
  %v277 = vadd.f32 %v206, %v218
  %v278 = vadd.f32 %v207, %v218
  %v279 = vadd.f32 %v208, %v218
  %v280 = vadd.f32 %v209, %v218
  %v281 = vadd.f32 %v210, %v218
  %v282 = vadd.f32 %v211, %v218
  %v283 = vadd.f32 %v212, %v218
  %v284 = vpack.c.bf16 %v221, %v220
  %v285 = vpack.c.bf16 %v223, %v222
  %v286 = vpack.c.bf16 %v225, %v224
  %v287 = vpack.c.bf16 %v227, %v226
  %v288 = vpack.c.bf16 %v229, %v228
  %v289 = vpack.c.bf16 %v231, %v230
  %v290 = vpack.c.bf16 %v233, %v232
  %v291 = vpack.c.bf16 %v235, %v234
  %v292 = vpack.c.bf16 %v237, %v236
  %v293 = vpack.c.bf16 %v239, %v238
  %v294 = vpack.c.bf16 %v241, %v240
  %v295 = vpack.c.bf16 %v243, %v242
  %v296 = vpack.c.bf16 %v245, %v244
  %v297 = vpack.c.bf16 %v247, %v246
  %v298 = vpack.c.bf16 %v249, %v248
  %v299 = vpack.c.bf16 %v251, %v250
  %v300 = vpack.c.bf16 %v253, %v252
  %v301 = vpack.c.bf16 %v255, %v254
  %v302 = vpack.c.bf16 %v257, %v256
  %v303 = vpack.c.bf16 %v259, %v258
  %v304 = vpack.c.bf16 %v261, %v260
  %v305 = vpack.c.bf16 %v263, %v262
  %v306 = vpack.c.bf16 %v265, %v264
  %v307 = vpack.c.bf16 %v267, %v266
  %v308 = vpack.c.bf16 %v269, %v268
  %v309 = vpack.c.bf16 %v271, %v270
  %v310 = vpack.c.bf16 %v273, %v272
  %v311 = vpack.c.bf16 %v275, %v274
  %v312 = vpack.c.bf16 %v277, %v276
  %v313 = vpack.c.bf16 %v279, %v278
  %v314 = vpack.c.bf16 %v281, %v280
  %v315 = vpack.c.bf16 %v283, %v282
  %v348 = vunpack.c.l.b16 %v284
  %v349 = vunpack.c.h.b16 %v284
  %v350 = vunpack.c.l.b16 %v285
  %v351 = vunpack.c.h.b16 %v285
  %v352 = vunpack.c.l.b16 %v286
  %v353 = vunpack.c.h.b16 %v286
  %v354 = vunpack.c.l.b16 %v287
  %v355 = vunpack.c.h.b16 %v287
  %v356 = vunpack.c.l.b16 %v288
  %v357 = vunpack.c.h.b16 %v288
  %v358 = vunpack.c.l.b16 %v289
  %v359 = vunpack.c.h.b16 %v289
  %v360 = vunpack.c.l.b16 %v290
  %v361 = vunpack.c.h.b16 %v290
  %v362 = vunpack.c.l.b16 %v291
  %v363 = vunpack.c.h.b16 %v291
  %v364 = vunpack.c.l.b16 %v292
  %v365 = vunpack.c.h.b16 %v292
  %v366 = vunpack.c.l.b16 %v293
  %v367 = vunpack.c.h.b16 %v293
  %v368 = vunpack.c.l.b16 %v294
  %v369 = vunpack.c.h.b16 %v294
  %v370 = vunpack.c.l.b16 %v295
  %v371 = vunpack.c.h.b16 %v295
  %v372 = vunpack.c.l.b16 %v296
  %v373 = vunpack.c.h.b16 %v296
  %v374 = vunpack.c.l.b16 %v297
  %v375 = vunpack.c.h.b16 %v297
  %v376 = vunpack.c.l.b16 %v298
  %v377 = vunpack.c.h.b16 %v298
  %v378 = vunpack.c.l.b16 %v299
  %v379 = vunpack.c.h.b16 %v299
  %v380 = vunpack.c.l.b16 %v300
  %v381 = vunpack.c.h.b16 %v300
  %v382 = vunpack.c.l.b16 %v301
  %v383 = vunpack.c.h.b16 %v301
  %v384 = vunpack.c.l.b16 %v302
  %v385 = vunpack.c.h.b16 %v302
  %v386 = vunpack.c.l.b16 %v303
  %v387 = vunpack.c.h.b16 %v303
  %v388 = vunpack.c.l.b16 %v304
  %v389 = vunpack.c.h.b16 %v304
  %v390 = vunpack.c.l.b16 %v305
  %v391 = vunpack.c.h.b16 %v305
  %v392 = vunpack.c.l.b16 %v306
  %v393 = vunpack.c.h.b16 %v306
  %v394 = vunpack.c.l.b16 %v307
  %v395 = vunpack.c.h.b16 %v307
  %v396 = vunpack.c.l.b16 %v308
  %v397 = vunpack.c.h.b16 %v308
  %v398 = vunpack.c.l.b16 %v309
  %v399 = vunpack.c.h.b16 %v309
  %v400 = vunpack.c.l.b16 %v310
  %v401 = vunpack.c.h.b16 %v310
  %v402 = vunpack.c.l.b16 %v311
  %v403 = vunpack.c.h.b16 %v311
  %v404 = vunpack.c.l.b16 %v312
  %v405 = vunpack.c.h.b16 %v312
  %v406 = vunpack.c.l.b16 %v313
  %v407 = vunpack.c.h.b16 %v313
  %v408 = vunpack.c.l.b16 %v314
  %v409 = vunpack.c.h.b16 %v314
  %v410 = vunpack.c.l.b16 %v315
  %v411 = vunpack.c.h.b16 %v315
  %v412 = vpack.c.b16 %v348, %v348
  %v413 = vpack.c.b16 %v349, %v349
  %v414 = vpack.c.b16 %v350, %v350
  %v415 = vpack.c.b16 %v351, %v351
  %v416 = vpack.c.b16 %v352, %v352
  %v417 = vpack.c.b16 %v353, %v353
  %v418 = vpack.c.b16 %v354, %v354
  %v419 = vpack.c.b16 %v355, %v355
  %v420 = vpack.c.b16 %v356, %v356
  %v421 = vpack.c.b16 %v357, %v357
  %v422 = vpack.c.b16 %v358, %v358
  %v423 = vpack.c.b16 %v359, %v359
  %v424 = vpack.c.b16 %v360, %v360
  %v425 = vpack.c.b16 %v361, %v361
  %v426 = vpack.c.b16 %v362, %v362
  %v427 = vpack.c.b16 %v363, %v363
  %v428 = vpack.c.b16 %v364, %v364
  %v429 = vpack.c.b16 %v365, %v365
  %v430 = vpack.c.b16 %v366, %v366
  %v431 = vpack.c.b16 %v367, %v367
  %v432 = vpack.c.b16 %v368, %v368
  %v433 = vpack.c.b16 %v369, %v369
  %v434 = vpack.c.b16 %v370, %v370
  %v435 = vpack.c.b16 %v371, %v371
  %v436 = vpack.c.b16 %v372, %v372
  %v437 = vpack.c.b16 %v373, %v373
  %v438 = vpack.c.b16 %v374, %v374
  %v439 = vpack.c.b16 %v375, %v375
  %v440 = vpack.c.b16 %v376, %v376
  %v441 = vpack.c.b16 %v377, %v377
  %v442 = vpack.c.b16 %v378, %v378
  %v443 = vpack.c.b16 %v379, %v379
  %v444 = vpack.c.b16 %v380, %v380
  %v445 = vpack.c.b16 %v381, %v381
  %v446 = vpack.c.b16 %v382, %v382
  %v447 = vpack.c.b16 %v383, %v383
  %v448 = vpack.c.b16 %v384, %v384
  %v449 = vpack.c.b16 %v385, %v385
  %v450 = vpack.c.b16 %v386, %v386
  %v451 = vpack.c.b16 %v387, %v387
  %v452 = vpack.c.b16 %v388, %v388
  %v453 = vpack.c.b16 %v389, %v389
  %v454 = vpack.c.b16 %v390, %v390
  %v455 = vpack.c.b16 %v391, %v391
  %v456 = vpack.c.b16 %v392, %v392
  %v457 = vpack.c.b16 %v393, %v393
  %v458 = vpack.c.b16 %v394, %v394
  %v459 = vpack.c.b16 %v395, %v395
  %v460 = vpack.c.b16 %v396, %v396
  %v461 = vpack.c.b16 %v397, %v397
  %v462 = vpack.c.b16 %v398, %v398
  %v463 = vpack.c.b16 %v399, %v399
  %v464 = vpack.c.b16 %v400, %v400
  %v465 = vpack.c.b16 %v401, %v401
  %v466 = vpack.c.b16 %v402, %v402
  %v467 = vpack.c.b16 %v403, %v403
  %v468 = vpack.c.b16 %v404, %v404
  %v469 = vpack.c.b16 %v405, %v405
  %v470 = vpack.c.b16 %v406, %v406
  %v471 = vpack.c.b16 %v407, %v407
  %v472 = vpack.c.b16 %v408, %v408
  %v473 = vpack.c.b16 %v409, %v409
  %v474 = vpack.c.b16 %v410, %v410
  %v475 = vpack.c.b16 %v411, %v411
  %540 = vst [vmem:[%s3] sm:$0xf] %v412
  %541 = vst [vmem:[%s3 + $0x4] sm:$0xf] %v413
  %542 = vst [vmem:[%s3 + $0x8] sm:$0xf] %v414
  %543 = vst [vmem:[%s3 + $0xc] sm:$0xf] %v415
  %544 = vst [vmem:[%s3 + $0x10] sm:$0xf] %v416
  %545 = vst [vmem:[%s3 + $0x14] sm:$0xf] %v417
  %546 = vst [vmem:[%s3 + $0x18] sm:$0xf] %v418
  %547 = vst [vmem:[%s3 + $0x1c] sm:$0xf] %v419
  %548 = vst [vmem:[%s3 + $0x20] sm:$0xf] %v420
  %549 = vst [vmem:[%s3 + $0x24] sm:$0xf] %v421
  %550 = vst [vmem:[%s3 + $0x28] sm:$0xf] %v422
  %551 = vst [vmem:[%s3 + $0x2c] sm:$0xf] %v423
  %552 = vst [vmem:[%s3 + $0x30] sm:$0xf] %v424
  %553 = vst [vmem:[%s3 + $0x34] sm:$0xf] %v425
  %554 = vst [vmem:[%s3 + $0x38] sm:$0xf] %v426
  %555 = vst [vmem:[%s3 + $0x3c] sm:$0xf] %v427
  %556 = vst [vmem:[%s3 + $0x40] sm:$0xf] %v428
  %557 = vst [vmem:[%s3 + $0x44] sm:$0xf] %v429
  %558 = vst [vmem:[%s3 + $0x48] sm:$0xf] %v430
  %559 = vst [vmem:[%s3 + $0x4c] sm:$0xf] %v431
  %560 = vst [vmem:[%s3 + $0x50] sm:$0xf] %v432
  %561 = vst [vmem:[%s3 + $0x54] sm:$0xf] %v433
  %562 = vst [vmem:[%s3 + $0x58] sm:$0xf] %v434
  %563 = vst [vmem:[%s3 + $0x5c] sm:$0xf] %v435
  %564 = vst [vmem:[%s3 + $0x60] sm:$0xf] %v436
  %565 = vst [vmem:[%s3 + $0x64] sm:$0xf] %v437
  %566 = vst [vmem:[%s3 + $0x68] sm:$0xf] %v438
  %567 = vst [vmem:[%s3 + $0x6c] sm:$0xf] %v439
  %568 = vst [vmem:[%s3 + $0x70] sm:$0xf] %v440
  %569 = vst [vmem:[%s3 + $0x74] sm:$0xf] %v441
  %570 = vst [vmem:[%s3 + $0x78] sm:$0xf] %v442
  %571 = vst [vmem:[%s3 + $0x7c] sm:$0xf] %v443
  %572 = vst [vmem:[%s3 + $0x80] sm:$0xf] %v444
  %573 = vst [vmem:[%s3 + $0x84] sm:$0xf] %v445
  %574 = vst [vmem:[%s3 + $0x88] sm:$0xf] %v446
  %575 = vst [vmem:[%s3 + $0x8c] sm:$0xf] %v447
  %576 = vst [vmem:[%s3 + $0x90] sm:$0xf] %v448
  %577 = vst [vmem:[%s3 + $0x94] sm:$0xf] %v449
  %578 = vst [vmem:[%s3 + $0x98] sm:$0xf] %v450
  %579 = vst [vmem:[%s3 + $0x9c] sm:$0xf] %v451
  %580 = vst [vmem:[%s3 + $0xa0] sm:$0xf] %v452
  %581 = vst [vmem:[%s3 + $0xa4] sm:$0xf] %v453
  %582 = vst [vmem:[%s3 + $0xa8] sm:$0xf] %v454
  %583 = vst [vmem:[%s3 + $0xac] sm:$0xf] %v455
  %584 = vst [vmem:[%s3 + $0xb0] sm:$0xf] %v456
  %585 = vst [vmem:[%s3 + $0xb4] sm:$0xf] %v457
  %586 = vst [vmem:[%s3 + $0xb8] sm:$0xf] %v458
  %587 = vst [vmem:[%s3 + $0xbc] sm:$0xf] %v459
  %588 = vst [vmem:[%s3 + $0xc0] sm:$0xf] %v460
  %589 = vst [vmem:[%s3 + $0xc4] sm:$0xf] %v461
  %590 = vst [vmem:[%s3 + $0xc8] sm:$0xf] %v462
  %591 = vst [vmem:[%s3 + $0xcc] sm:$0xf] %v463
  %592 = vst [vmem:[%s3 + $0xd0] sm:$0xf] %v464
  %593 = vst [vmem:[%s3 + $0xd4] sm:$0xf] %v465
  %594 = vst [vmem:[%s3 + $0xd8] sm:$0xf] %v466
  %595 = vst [vmem:[%s3 + $0xdc] sm:$0xf] %v467
  %596 = vst [vmem:[%s3 + $0xe0] sm:$0xf] %v468
  %597 = vst [vmem:[%s3 + $0xe4] sm:$0xf] %v469
  %598 = vst [vmem:[%s3 + $0xe8] sm:$0xf] %v470
  %599 = vst [vmem:[%s3 + $0xec] sm:$0xf] %v471
  %600 = vst [vmem:[%s3 + $0xf0] sm:$0xf] %v472
  %601 = vst [vmem:[%s3 + $0xf4] sm:$0xf] %v473
  %602 = vst [vmem:[%s3 + $0xf8] sm:$0xf] %v474
  %603 = vst [vmem:[%s3 + $0xfc] sm:$0xf] %v475
  // Predicated region
  $region14: #{unet_innermost_block.3} parent=0 // pred_check
    _
  $region15: #{unet_innermost_block.3} parent=0 // pred_check_branch
    %605 = sbr.rel (0) target = $region17
  $region16: #{unet_innermost_block.3} parent=0 // pred_region
    _
  $region17: #{unet_innermost_block.3} parent=0 // pred_fallthru
    _
  // Predicated region
  $region18: #{unet_innermost_block.3} parent=0 // pred_check
    _
  $region19: #{unet_innermost_block.3} parent=0 // pred_check_branch
    %607 = sbr.rel (0) target = $region21
  $region20: #{unet_innermost_block.3} parent=0 // pred_region
    _
  $region21: #{unet_innermost_block.3} parent=0 // pred_fallthru
    _

// kernel: unet_innermost_block.2
$region0: #{unet_innermost_block.2}
  #allocation0 [shape = 'u32[]', space=smem, size = 0x4, offset = 0x4, fixed_abs, tag = 'smem constant byte address 0x4 - core index']
  #allocation1 [shape = 'u32[144,128]{1,0:T(1,128)}', space=vmem, size = 0x12000, scoped, tag = 'internal scratch']
  #allocation2 [shape = 'bf16[2,10,10,128]{3,2,1,0:T(8,128)(2,1)}', space=vmem, size = 0x14000, scoped, tag = 'scratch operand']
  %s0 = inlined_call_operand.vmem [shape: bf16[2,4,9,9,128], index: 0, kind: input, shape index: {}]
  %s1 = inlined_call_operand.vmem [shape: bf16[2048,128], index: 1, kind: input, shape index: {}]
  %s2 = inlined_call_operand.vmem [shape: bf16[4,512,128], index: 2, kind: input, shape index: {}]
  %s3 = inlined_call_operand.vmem [shape: bf16[4,2,8,8,128], index: 3, kind: output, shape index: {0}]
  %s4 = inlined_call_operand.vmem [shape: f32[1,2,128], index: 4, kind: output, shape index: {1}]
  %5 = xla_tuple %s3, %s4
  %s6 = sld [smem:[#allocation0]]
  $region30: #{unet_innermost_block.2} parent=0
    _
  %s8 = ssub.s32 1, %s6
  %s9 = scalar_select 0, %s8, %s6
  // Predicated region
  $region2: #{unet_innermost_block.2} parent=0 // pred_check
    _
  $region3: #{unet_innermost_block.2} parent=0 // pred_check_branch
    %11 = sbr.rel (0) target = $region5
  $region4: #{unet_innermost_block.2} parent=0 // pred_region
    _
  $region5: #{unet_innermost_block.2} parent=0 // pred_fallthru
    _
  // Predicated region
  $region6: #{unet_innermost_block.2} parent=0 // pred_check
    _
  $region7: #{unet_innermost_block.2} parent=0 // pred_check_branch
    %13 = sbr.rel (0) target = $region9
  $region8: #{unet_innermost_block.2} parent=0 // pred_region
    _
  $region9: #{unet_innermost_block.2} parent=0 // pred_fallthru
    _
  // Predicated region
  $region10: #{unet_innermost_block.2} parent=0 // pred_check
    _
  $region11: #{unet_innermost_block.2} parent=0 // pred_check_branch
    %15 = sbr.rel (0) target = $region13
  $region12: #{unet_innermost_block.2} parent=0 // pred_region
    _
  $region13: #{unet_innermost_block.2} parent=0 // pred_fallthru
    _
  %v18 = vld [vmem:[%s0] sm:$0xf]
  %v19 = vld [vmem:[%s0 + $0x4] sm:$0x1]
  %v20 = vld [vmem:[%s0 + $0x8] sm:$0xf]
  %v21 = vld [vmem:[%s0 + $0xc] sm:$0x1]
  %v22 = vld [vmem:[%s0 + $0x10] sm:$0xf]
  %v23 = vld [vmem:[%s0 + $0x14] sm:$0x1]
  %v24 = vld [vmem:[%s0 + $0x18] sm:$0xf]
  %v25 = vld [vmem:[%s0 + $0x1c] sm:$0x1]
  %v26 = vld [vmem:[%s0 + $0x20] sm:$0xf]
  %v27 = vld [vmem:[%s0 + $0x24] sm:$0x1]
  %v28 = vld [vmem:[%s0 + $0x28] sm:$0xf]
  %v29 = vld [vmem:[%s0 + $0x2c] sm:$0x1]
  %v30 = vld [vmem:[%s0 + $0x30] sm:$0xf]
  %v31 = vld [vmem:[%s0 + $0x34] sm:$0x1]
  %v32 = vld [vmem:[%s0 + $0x38] sm:$0xf]
  %v33 = vld [vmem:[%s0 + $0x3c] sm:$0x1]
  %v34 = vld [vmem:[%s0 + $0x40] sm:$0xf]
  %v35 = vld [vmem:[%s0 + $0x44] sm:$0x1]
  %v36 = vld [vmem:[%s0 + $0x48] sm:$0xf]
  %v37 = vld [vmem:[%s0 + $0x4c] sm:$0x1]
  %v38 = vld [vmem:[%s0 + $0x50] sm:$0xf]
  %v39 = vld [vmem:[%s0 + $0x54] sm:$0x1]
  %v40 = vld [vmem:[%s0 + $0x58] sm:$0xf]
  %v41 = vld [vmem:[%s0 + $0x5c] sm:$0x1]
  %v42 = vld [vmem:[%s0 + $0x60] sm:$0xf]
  %v43 = vld [vmem:[%s0 + $0x64] sm:$0x1]
  %v44 = vld [vmem:[%s0 + $0x68] sm:$0xf]
  %v45 = vld [vmem:[%s0 + $0x6c] sm:$0x1]
  %v46 = vld [vmem:[%s0 + $0x70] sm:$0xf]
  %v47 = vld [vmem:[%s0 + $0x74] sm:$0x1]
  %v48 = vld [vmem:[%s0 + $0x78] sm:$0xf]
  %v49 = vld [vmem:[%s0 + $0x7c] sm:$0x1]
  %v50 = vld [vmem:[%s0 + $0x80] sm:$0xf]
  %v51 = vld [vmem:[%s0 + $0x84] sm:$0x1]
  %v52 = vld [vmem:[%s0 + $0x88] sm:$0xf]
  %v53 = vld [vmem:[%s0 + $0x8c] sm:$0x1]
  %v54 = vld [vmem:[%s0 + $0x90] sm:$0xf]
  %v55 = vld [vmem:[%s0 + $0x94] sm:$0x1]
  %v56 = vld [vmem:[%s0 + $0x98] sm:$0xf]
  %v57 = vld [vmem:[%s0 + $0x9c] sm:$0x1]
  %v58 = vld [vmem:[%s0 + $0xa0] sm:$0xf]
  %v59 = vld [vmem:[%s0 + $0xa4] sm:$0x1]
  %v60 = vld [vmem:[%s0 + $0xa8] sm:$0xf]
  %v61 = vld [vmem:[%s0 + $0xac] sm:$0x1]
  %v62 = vld [vmem:[%s0 + $0xb0] sm:$0xf]
  %v63 = vld [vmem:[%s0 + $0xb4] sm:$0x1]
  %v64 = vld [vmem:[%s0 + $0xb8] sm:$0xf]
  %v65 = vld [vmem:[%s0 + $0xbc] sm:$0x1]
  %v66 = vld [vmem:[%s0 + $0xc0] sm:$0xf]
  %v67 = vld [vmem:[%s0 + $0xc4] sm:$0x1]
  %v68 = vld [vmem:[%s0 + $0xc8] sm:$0xf]
  %v69 = vld [vmem:[%s0 + $0xcc] sm:$0x1]
  %v70 = vld [vmem:[%s0 + $0xd0] sm:$0xf]
  %v71 = vld [vmem:[%s0 + $0xd4] sm:$0x1]
  %v72 = vld [vmem:[%s0 + $0xd8] sm:$0xf]
  %v73 = vld [vmem:[%s0 + $0xdc] sm:$0x1]
  %v74 = vld [vmem:[%s0 + $0xe0] sm:$0xf]
  %v75 = vld [vmem:[%s0 + $0xe4] sm:$0x1]
  %v76 = vld [vmem:[%s0 + $0xe8] sm:$0xf]
  %v77 = vld [vmem:[%s0 + $0xec] sm:$0x1]
  %v78 = vld [vmem:[%s0 + $0xf0] sm:$0xf]
  %v79 = vld [vmem:[%s0 + $0xf4] sm:$0x1]
  %v80 = vld [vmem:[%s0 + $0xf8] sm:$0xf]
  %v81 = vld [vmem:[%s0 + $0xfc] sm:$0x1]
  %v82 = vld [vmem:[%s0 + $0x100] sm:$0xf]
  %v83 = vld [vmem:[%s0 + $0x104] sm:$0x1]
  %v84 = vld [vmem:[%s0 + $0x108] sm:$0xf]
  %v85 = vld [vmem:[%s0 + $0x10c] sm:$0x1]
  %v86 = vld [vmem:[%s0 + $0x110] sm:$0xf]
  %v87 = vld [vmem:[%s0 + $0x114] sm:$0x1]
  %v88 = vld [vmem:[%s0 + $0x118] sm:$0xf]
  %v89 = vld [vmem:[%s0 + $0x11c] sm:$0x1]
  %v90 = vld [vmem:[%s0 + $0x120] sm:$0xf]
  %v91 = vld [vmem:[%s0 + $0x124] sm:$0x1]
  %v92 = vld [vmem:[%s0 + $0x128] sm:$0xf]
  %v93 = vld [vmem:[%s0 + $0x12c] sm:$0x1]
  %v94 = vld [vmem:[%s0 + $0x130] sm:$0xf]
  %v95 = vld [vmem:[%s0 + $0x134] sm:$0x1]
  %v96 = vld [vmem:[%s0 + $0x138] sm:$0xf]
  %v97 = vld [vmem:[%s0 + $0x13c] sm:$0x1]
  %v98 = vld [vmem:[%s0 + $0x140] sm:$0xf]
  %v99 = vld [vmem:[%s0 + $0x144] sm:$0x1]
  %v100 = vld [vmem:[%s0 + $0x148] sm:$0xf]
  %v101 = vld [vmem:[%s0 + $0x14c] sm:$0x1]
  %v102 = vld [vmem:[%s0 + $0x150] sm:$0xf]
  %v103 = vld [vmem:[%s0 + $0x154] sm:$0x1]
  %v104 = vld [vmem:[%s0 + $0x158] sm:$0xf]
  %v105 = vld [vmem:[%s0 + $0x15c] sm:$0x1]
  %v106 = vld [vmem:[%s0 + $0x160] sm:$0xf]
  %v107 = vld [vmem:[%s0 + $0x164] sm:$0x1]
  %v108 = vld [vmem:[%s0 + $0x168] sm:$0xf]
  %v109 = vld [vmem:[%s0 + $0x16c] sm:$0x1]
  %v110 = vld [vmem:[%s0 + $0x170] sm:$0xf]
  %v111 = vld [vmem:[%s0 + $0x174] sm:$0x1]
  %v112 = vld [vmem:[%s0 + $0x178] sm:$0xf]
  %v113 = vld [vmem:[%s0 + $0x17c] sm:$0x1]
  %v114 = vld [vmem:[%s0 + $0x180] sm:$0xf]
  %v115 = vld [vmem:[%s0 + $0x184] sm:$0x1]
  %v116 = vld [vmem:[%s0 + $0x188] sm:$0xf]
  %v117 = vld [vmem:[%s0 + $0x18c] sm:$0x1]
  %v118 = vld [vmem:[%s0 + $0x190] sm:$0xf]
  %v119 = vld [vmem:[%s0 + $0x194] sm:$0x1]
  %v120 = vld [vmem:[%s0 + $0x198] sm:$0xf]
  %v121 = vld [vmem:[%s0 + $0x19c] sm:$0x1]
  %v122 = vld [vmem:[%s0 + $0x1a0] sm:$0xf]
  %v123 = vld [vmem:[%s0 + $0x1a4] sm:$0x1]
  %v124 = vld [vmem:[%s0 + $0x1a8] sm:$0xf]
  %v125 = vld [vmem:[%s0 + $0x1ac] sm:$0x1]
  %v126 = vld [vmem:[%s0 + $0x1b0] sm:$0xf]
  %v127 = vld [vmem:[%s0 + $0x1b4] sm:$0x1]
  %v128 = vld [vmem:[%s0 + $0x1b8] sm:$0xf]
  %v129 = vld [vmem:[%s0 + $0x1bc] sm:$0x1]
  %v130 = vld [vmem:[%s0 + $0x1c0] sm:$0xf]
  %v131 = vld [vmem:[%s0 + $0x1c4] sm:$0x1]
  %v132 = vld [vmem:[%s0 + $0x1c8] sm:$0xf]
  %v133 = vld [vmem:[%s0 + $0x1cc] sm:$0x1]
  %v134 = vld [vmem:[%s0 + $0x1d0] sm:$0xf]
  %v135 = vld [vmem:[%s0 + $0x1d4] sm:$0x1]
  %v136 = vld [vmem:[%s0 + $0x1d8] sm:$0xf]
  %v137 = vld [vmem:[%s0 + $0x1dc] sm:$0x1]
  %v138 = vld [vmem:[%s0 + $0x1e0] sm:$0xf]
  %v139 = vld [vmem:[%s0 + $0x1e4] sm:$0x1]
  %v140 = vld [vmem:[%s0 + $0x1e8] sm:$0xf]
  %v141 = vld [vmem:[%s0 + $0x1ec] sm:$0x1]
  %v142 = vld [vmem:[%s0 + $0x1f0] sm:$0xf]
  %v143 = vld [vmem:[%s0 + $0x1f4] sm:$0x1]
  %v144 = vld [vmem:[%s0 + $0x1f8] sm:$0xf]
  %v145 = vld [vmem:[%s0 + $0x1fc] sm:$0x1]
  %v146 = vld [vmem:[%s0 + $0x200] sm:$0xf]
  %v147 = vld [vmem:[%s0 + $0x204] sm:$0x1]
  %v148 = vld [vmem:[%s0 + $0x208] sm:$0xf]
  %v149 = vld [vmem:[%s0 + $0x20c] sm:$0x1]
  %v150 = vld [vmem:[%s0 + $0x210] sm:$0xf]
  %v151 = vld [vmem:[%s0 + $0x214] sm:$0x1]
  %v152 = vld [vmem:[%s0 + $0x218] sm:$0xf]
  %v153 = vld [vmem:[%s0 + $0x21c] sm:$0x1]
  %v154 = vld [vmem:[%s0 + $0x220] sm:$0xf]
  %v155 = vld [vmem:[%s0 + $0x224] sm:$0x1]
  %v156 = vld [vmem:[%s0 + $0x228] sm:$0xf]
  %v157 = vld [vmem:[%s0 + $0x22c] sm:$0x1]
  %v158 = vld [vmem:[%s0 + $0x230] sm:$0xf]
  %v159 = vld [vmem:[%s0 + $0x234] sm:$0x1]
  %v160 = vld [vmem:[%s0 + $0x238] sm:$0xf]
  %v161 = vld [vmem:[%s0 + $0x23c] sm:$0x1]
  %vm162 = vcmp.gt.bf16.partialorder %v18, 0
  %vm163 = vcmp.gt.bf16.partialorder %v19, 0
  %vm164 = vcmp.gt.bf16.partialorder %v20, 0
  %vm165 = vcmp.gt.bf16.partialorder %v21, 0
  %vm166 = vcmp.gt.bf16.partialorder %v22, 0
  %vm167 = vcmp.gt.bf16.partialorder %v23, 0
  %vm168 = vcmp.gt.bf16.partialorder %v24, 0
  %vm169 = vcmp.gt.bf16.partialorder %v25, 0
  %vm170 = vcmp.gt.bf16.partialorder %v26, 0
  %vm171 = vcmp.gt.bf16.partialorder %v27, 0
  %vm172 = vcmp.gt.bf16.partialorder %v28, 0
  %vm173 = vcmp.gt.bf16.partialorder %v29, 0
  %vm174 = vcmp.gt.bf16.partialorder %v30, 0
  %vm175 = vcmp.gt.bf16.partialorder %v31, 0
  %vm176 = vcmp.gt.bf16.partialorder %v32, 0
  %vm177 = vcmp.gt.bf16.partialorder %v33, 0
  %vm178 = vcmp.gt.bf16.partialorder %v34, 0
  %vm179 = vcmp.gt.bf16.partialorder %v35, 0
  %vm180 = vcmp.gt.bf16.partialorder %v36, 0
  %vm181 = vcmp.gt.bf16.partialorder %v37, 0
  %vm182 = vcmp.gt.bf16.partialorder %v38, 0
  %vm183 = vcmp.gt.bf16.partialorder %v39, 0
  %vm184 = vcmp.gt.bf16.partialorder %v40, 0
  %vm185 = vcmp.gt.bf16.partialorder %v41, 0
  %vm186 = vcmp.gt.bf16.partialorder %v42, 0
  %vm187 = vcmp.gt.bf16.partialorder %v43, 0
  %vm188 = vcmp.gt.bf16.partialorder %v44, 0
  %vm189 = vcmp.gt.bf16.partialorder %v45, 0
  %vm190 = vcmp.gt.bf16.partialorder %v46, 0
  %vm191 = vcmp.gt.bf16.partialorder %v47, 0
  %vm192 = vcmp.gt.bf16.partialorder %v48, 0
  %vm193 = vcmp.gt.bf16.partialorder %v49, 0
  %vm194 = vcmp.gt.bf16.partialorder %v50, 0
  %vm195 = vcmp.gt.bf16.partialorder %v51, 0
  %vm196 = vcmp.gt.bf16.partialorder %v52, 0
  %vm197 = vcmp.gt.bf16.partialorder %v53, 0
  %vm198 = vcmp.gt.bf16.partialorder %v54, 0
  %vm199 = vcmp.gt.bf16.partialorder %v55, 0
  %vm200 = vcmp.gt.bf16.partialorder %v56, 0
  %vm201 = vcmp.gt.bf16.partialorder %v57, 0
  %vm202 = vcmp.gt.bf16.partialorder %v58, 0
  %vm203 = vcmp.gt.bf16.partialorder %v59, 0
  %vm204 = vcmp.gt.bf16.partialorder %v60, 0
  %vm205 = vcmp.gt.bf16.partialorder %v61, 0
  %vm206 = vcmp.gt.bf16.partialorder %v62, 0
  %vm207 = vcmp.gt.bf16.partialorder %v63, 0
  %vm208 = vcmp.gt.bf16.partialorder %v64, 0
  %vm209 = vcmp.gt.bf16.partialorder %v65, 0
  %vm210 = vcmp.gt.bf16.partialorder %v66, 0
  %vm211 = vcmp.gt.bf16.partialorder %v67, 0
  %vm212 = vcmp.gt.bf16.partialorder %v68, 0
  %vm213 = vcmp.gt.bf16.partialorder %v69, 0
  %vm214 = vcmp.gt.bf16.partialorder %v70, 0
  %vm215 = vcmp.gt.bf16.partialorder %v71, 0
  %vm216 = vcmp.gt.bf16.partialorder %v72, 0
  %vm217 = vcmp.gt.bf16.partialorder %v73, 0
  %vm218 = vcmp.gt.bf16.partialorder %v74, 0
  %vm219 = vcmp.gt.bf16.partialorder %v75, 0
  %vm220 = vcmp.gt.bf16.partialorder %v76, 0
  %vm221 = vcmp.gt.bf16.partialorder %v77, 0
  %vm222 = vcmp.gt.bf16.partialorder %v78, 0
  %vm223 = vcmp.gt.bf16.partialorder %v79, 0
  %vm224 = vcmp.gt.bf16.partialorder %v80, 0
  %vm225 = vcmp.gt.bf16.partialorder %v81, 0
  %vm226 = vcmp.gt.bf16.partialorder %v82, 0
  %vm227 = vcmp.gt.bf16.partialorder %v83, 0
  %vm228 = vcmp.gt.bf16.partialorder %v84, 0
  %vm229 = vcmp.gt.bf16.partialorder %v85, 0
  %vm230 = vcmp.gt.bf16.partialorder %v86, 0
  %vm231 = vcmp.gt.bf16.partialorder %v87, 0
  %vm232 = vcmp.gt.bf16.partialorder %v88, 0
  %vm233 = vcmp.gt.bf16.partialorder %v89, 0
  %vm234 = vcmp.gt.bf16.partialorder %v90, 0
  %vm235 = vcmp.gt.bf16.partialorder %v91, 0
  %vm236 = vcmp.gt.bf16.partialorder %v92, 0
  %vm237 = vcmp.gt.bf16.partialorder %v93, 0
  %vm238 = vcmp.gt.bf16.partialorder %v94, 0
  %vm239 = vcmp.gt.bf16.partialorder %v95, 0
  %vm240 = vcmp.gt.bf16.partialorder %v96, 0
  %vm241 = vcmp.gt.bf16.partialorder %v97, 0
  %vm242 = vcmp.gt.bf16.partialorder %v98, 0
  %vm243 = vcmp.gt.bf16.partialorder %v99, 0
  %vm244 = vcmp.gt.bf16.partialorder %v100, 0
  %vm245 = vcmp.gt.bf16.partialorder %v101, 0
  %vm246 = vcmp.gt.bf16.partialorder %v102, 0
  %vm247 = vcmp.gt.bf16.partialorder %v103, 0
  %vm248 = vcmp.gt.bf16.partialorder %v104, 0
  %vm249 = vcmp.gt.bf16.partialorder %v105, 0
  %vm250 = vcmp.gt.bf16.partialorder %v106, 0
  %vm251 = vcmp.gt.bf16.partialorder %v107, 0
  %vm252 = vcmp.gt.bf16.partialorder %v108, 0
  %vm253 = vcmp.gt.bf16.partialorder %v109, 0
  %vm254 = vcmp.gt.bf16.partialorder %v110, 0
  %vm255 = vcmp.gt.bf16.partialorder %v111, 0
  %vm256 = vcmp.gt.bf16.partialorder %v112, 0
  %vm257 = vcmp.gt.bf16.partialorder %v113, 0
  %vm258 = vcmp.gt.bf16.partialorder %v114, 0
  %vm259 = vcmp.gt.bf16.partialorder %v115, 0
  %vm260 = vcmp.gt.bf16.partialorder %v116, 0
  %vm261 = vcmp.gt.bf16.partialorder %v117, 0
  %vm262 = vcmp.gt.bf16.partialorder %v118, 0
  %vm263 = vcmp.gt.bf16.partialorder %v119, 0
  %vm264 = vcmp.gt.bf16.partialorder %v120, 0
  %vm265 = vcmp.gt.bf16.partialorder %v121, 0
  %vm266 = vcmp.gt.bf16.partialorder %v122, 0
  %vm267 = vcmp.gt.bf16.partialorder %v123, 0
  %vm268 = vcmp.gt.bf16.partialorder %v124, 0
  %vm269 = vcmp.gt.bf16.partialorder %v125, 0
  %vm270 = vcmp.gt.bf16.partialorder %v126, 0
  %vm271 = vcmp.gt.bf16.partialorder %v127, 0
  %vm272 = vcmp.gt.bf16.partialorder %v128, 0
  %vm273 = vcmp.gt.bf16.partialorder %v129, 0
  %vm274 = vcmp.gt.bf16.partialorder %v130, 0
  %vm275 = vcmp.gt.bf16.partialorder %v131, 0
  %vm276 = vcmp.gt.bf16.partialorder %v132, 0
  %vm277 = vcmp.gt.bf16.partialorder %v133, 0
  %vm278 = vcmp.gt.bf16.partialorder %v134, 0
  %vm279 = vcmp.gt.bf16.partialorder %v135, 0
  %vm280 = vcmp.gt.bf16.partialorder %v136, 0
  %vm281 = vcmp.gt.bf16.partialorder %v137, 0
  %vm282 = vcmp.gt.bf16.partialorder %v138, 0
  %vm283 = vcmp.gt.bf16.partialorder %v139, 0
  %vm284 = vcmp.gt.bf16.partialorder %v140, 0
  %vm285 = vcmp.gt.bf16.partialorder %v141, 0
  %vm286 = vcmp.gt.bf16.partialorder %v142, 0
  %vm287 = vcmp.gt.bf16.partialorder %v143, 0
  %vm288 = vcmp.gt.bf16.partialorder %v144, 0
  %vm289 = vcmp.gt.bf16.partialorder %v145, 0
  %vm290 = vcmp.gt.bf16.partialorder %v146, 0
  %vm291 = vcmp.gt.bf16.partialorder %v147, 0
  %vm292 = vcmp.gt.bf16.partialorder %v148, 0
  %vm293 = vcmp.gt.bf16.partialorder %v149, 0
  %vm294 = vcmp.gt.bf16.partialorder %v150, 0
  %vm295 = vcmp.gt.bf16.partialorder %v151, 0
  %vm296 = vcmp.gt.bf16.partialorder %v152, 0
  %vm297 = vcmp.gt.bf16.partialorder %v153, 0
  %vm298 = vcmp.gt.bf16.partialorder %v154, 0
  %vm299 = vcmp.gt.bf16.partialorder %v155, 0
  %vm300 = vcmp.gt.bf16.partialorder %v156, 0
  %vm301 = vcmp.gt.bf16.partialorder %v157, 0
  %vm302 = vcmp.gt.bf16.partialorder %v158, 0
  %vm303 = vcmp.gt.bf16.partialorder %v159, 0
  %vm304 = vcmp.gt.bf16.partialorder %v160, 0
  %vm305 = vcmp.gt.bf16.partialorder %v161, 0
  %v306 = vmul.bf16 %v18, 1045249613
  %v307 = vmul.bf16 %v19, 1045249613
  %v308 = vmul.bf16 %v20, 1045249613
  %v309 = vmul.bf16 %v21, 1045249613
  %v310 = vmul.bf16 %v22, 1045249613
  %v311 = vmul.bf16 %v23, 1045249613
  %v312 = vmul.bf16 %v24, 1045249613
  %v313 = vmul.bf16 %v25, 1045249613
  %v314 = vmul.bf16 %v26, 1045249613
  %v315 = vmul.bf16 %v27, 1045249613
  %v316 = vmul.bf16 %v28, 1045249613
  %v317 = vmul.bf16 %v29, 1045249613
  %v318 = vmul.bf16 %v30, 1045249613
  %v319 = vmul.bf16 %v31, 1045249613
  %v320 = vmul.bf16 %v32, 1045249613
  %v321 = vmul.bf16 %v33, 1045249613
  %v322 = vmul.bf16 %v34, 1045249613
  %v323 = vmul.bf16 %v35, 1045249613
  %v324 = vmul.bf16 %v36, 1045249613
  %v325 = vmul.bf16 %v37, 1045249613
  %v326 = vmul.bf16 %v38, 1045249613
  %v327 = vmul.bf16 %v39, 1045249613
  %v328 = vmul.bf16 %v40, 1045249613
  %v329 = vmul.bf16 %v41, 1045249613
  %v330 = vmul.bf16 %v42, 1045249613
  %v331 = vmul.bf16 %v43, 1045249613
  %v332 = vmul.bf16 %v44, 1045249613
  %v333 = vmul.bf16 %v45, 1045249613
  %v334 = vmul.bf16 %v46, 1045249613
  %v335 = vmul.bf16 %v47, 1045249613
  %v336 = vmul.bf16 %v48, 1045249613
  %v337 = vmul.bf16 %v49, 1045249613
  %v338 = vmul.bf16 %v50, 1045249613
  %v339 = vmul.bf16 %v51, 1045249613
  %v340 = vmul.bf16 %v52, 1045249613
  %v341 = vmul.bf16 %v53, 1045249613
  %v342 = vmul.bf16 %v54, 1045249613
  %v343 = vmul.bf16 %v55, 1045249613
  %v344 = vmul.bf16 %v56, 1045249613
  %v345 = vmul.bf16 %v57, 1045249613
  %v346 = vmul.bf16 %v58, 1045249613
  %v347 = vmul.bf16 %v59, 1045249613
  %v348 = vmul.bf16 %v60, 1045249613
  %v349 = vmul.bf16 %v61, 1045249613
  %v350 = vmul.bf16 %v62, 1045249613
  %v351 = vmul.bf16 %v63, 1045249613
  %v352 = vmul.bf16 %v64, 1045249613
  %v353 = vmul.bf16 %v65, 1045249613
  %v354 = vmul.bf16 %v66, 1045249613
  %v355 = vmul.bf16 %v67, 1045249613
  %v356 = vmul.bf16 %v68, 1045249613
  %v357 = vmul.bf16 %v69, 1045249613
  %v358 = vmul.bf16 %v70, 1045249613
  %v359 = vmul.bf16 %v71, 1045249613
  %v360 = vmul.bf16 %v72, 1045249613
  %v361 = vmul.bf16 %v73, 1045249613
  %v362 = vmul.bf16 %v74, 1045249613
  %v363 = vmul.bf16 %v75, 1045249613
  %v364 = vmul.bf16 %v76, 1045249613
  %v365 = vmul.bf16 %v77, 1045249613
  %v366 = vmul.bf16 %v78, 1045249613
  %v367 = vmul.bf16 %v79, 1045249613
  %v368 = vmul.bf16 %v80, 1045249613
  %v369 = vmul.bf16 %v81, 1045249613
  %v370 = vmul.bf16 %v82, 1045249613
  %v371 = vmul.bf16 %v83, 1045249613
  %v372 = vmul.bf16 %v84, 1045249613
  %v373 = vmul.bf16 %v85, 1045249613
  %v374 = vmul.bf16 %v86, 1045249613
  %v375 = vmul.bf16 %v87, 1045249613
  %v376 = vmul.bf16 %v88, 1045249613
  %v377 = vmul.bf16 %v89, 1045249613
  %v378 = vmul.bf16 %v90, 1045249613
  %v379 = vmul.bf16 %v91, 1045249613
  %v380 = vmul.bf16 %v92, 1045249613
  %v381 = vmul.bf16 %v93, 1045249613
  %v382 = vmul.bf16 %v94, 1045249613
  %v383 = vmul.bf16 %v95, 1045249613
  %v384 = vmul.bf16 %v96, 1045249613
  %v385 = vmul.bf16 %v97, 1045249613
  %v386 = vmul.bf16 %v98, 1045249613
  %v387 = vmul.bf16 %v99, 1045249613
  %v388 = vmul.bf16 %v100, 1045249613
  %v389 = vmul.bf16 %v101, 1045249613
  %v390 = vmul.bf16 %v102, 1045249613
  %v391 = vmul.bf16 %v103, 1045249613
  %v392 = vmul.bf16 %v104, 1045249613
  %v393 = vmul.bf16 %v105, 1045249613
  %v394 = vmul.bf16 %v106, 1045249613
  %v395 = vmul.bf16 %v107, 1045249613
  %v396 = vmul.bf16 %v108, 1045249613
  %v397 = vmul.bf16 %v109, 1045249613
  %v398 = vmul.bf16 %v110, 1045249613
  %v399 = vmul.bf16 %v111, 1045249613
  %v400 = vmul.bf16 %v112, 1045249613
  %v401 = vmul.bf16 %v113, 1045249613
  %v402 = vmul.bf16 %v114, 1045249613
  %v403 = vmul.bf16 %v115, 1045249613
  %v404 = vmul.bf16 %v116, 1045249613
  %v405 = vmul.bf16 %v117, 1045249613
  %v406 = vmul.bf16 %v118, 1045249613
  %v407 = vmul.bf16 %v119, 1045249613
  %v408 = vmul.bf16 %v120, 1045249613
  %v409 = vmul.bf16 %v121, 1045249613
  %v410 = vmul.bf16 %v122, 1045249613
  %v411 = vmul.bf16 %v123, 1045249613
  %v412 = vmul.bf16 %v124, 1045249613
  %v413 = vmul.bf16 %v125, 1045249613
  %v414 = vmul.bf16 %v126, 1045249613
  %v415 = vmul.bf16 %v127, 1045249613
  %v416 = vmul.bf16 %v128, 1045249613
  %v417 = vmul.bf16 %v129, 1045249613
  %v418 = vmul.bf16 %v130, 1045249613
  %v419 = vmul.bf16 %v131, 1045249613
  %v420 = vmul.bf16 %v132, 1045249613
  %v421 = vmul.bf16 %v133, 1045249613
  %v422 = vmul.bf16 %v134, 1045249613
  %v423 = vmul.bf16 %v135, 1045249613
  %v424 = vmul.bf16 %v136, 1045249613
  %v425 = vmul.bf16 %v137, 1045249613
  %v426 = vmul.bf16 %v138, 1045249613
  %v427 = vmul.bf16 %v139, 1045249613
  %v428 = vmul.bf16 %v140, 1045249613
  %v429 = vmul.bf16 %v141, 1045249613
  %v430 = vmul.bf16 %v142, 1045249613
  %v431 = vmul.bf16 %v143, 1045249613
  %v432 = vmul.bf16 %v144, 1045249613
  %v433 = vmul.bf16 %v145, 1045249613
  %v434 = vmul.bf16 %v146, 1045249613
  %v435 = vmul.bf16 %v147, 1045249613
  %v436 = vmul.bf16 %v148, 1045249613
  %v437 = vmul.bf16 %v149, 1045249613
  %v438 = vmul.bf16 %v150, 1045249613
  %v439 = vmul.bf16 %v151, 1045249613
  %v440 = vmul.bf16 %v152, 1045249613
  %v441 = vmul.bf16 %v153, 1045249613
  %v442 = vmul.bf16 %v154, 1045249613
  %v443 = vmul.bf16 %v155, 1045249613
  %v444 = vmul.bf16 %v156, 1045249613
  %v445 = vmul.bf16 %v157, 1045249613
  %v446 = vmul.bf16 %v158, 1045249613
  %v447 = vmul.bf16 %v159, 1045249613
  %v448 = vmul.bf16 %v160, 1045249613
  %v449 = vmul.bf16 %v161, 1045249613
  %v450 = vsel %vm162, %v18, %v306
  %v451 = vsel %vm163, %v19, %v307
  %v452 = vsel %vm164, %v20, %v308
  %v453 = vsel %vm165, %v21, %v309
  %v454 = vsel %vm166, %v22, %v310
  %v455 = vsel %vm167, %v23, %v311
  %v456 = vsel %vm168, %v24, %v312
  %v457 = vsel %vm169, %v25, %v313
  %v458 = vsel %vm170, %v26, %v314
  %v459 = vsel %vm171, %v27, %v315
  %v460 = vsel %vm172, %v28, %v316
  %v461 = vsel %vm173, %v29, %v317
  %v462 = vsel %vm174, %v30, %v318
  %v463 = vsel %vm175, %v31, %v319
  %v464 = vsel %vm176, %v32, %v320
  %v465 = vsel %vm177, %v33, %v321
  %v466 = vsel %vm178, %v34, %v322
  %v467 = vsel %vm179, %v35, %v323
  %v468 = vsel %vm180, %v36, %v324
  %v469 = vsel %vm181, %v37, %v325
  %v470 = vsel %vm182, %v38, %v326
  %v471 = vsel %vm183, %v39, %v327
  %v472 = vsel %vm184, %v40, %v328
  %v473 = vsel %vm185, %v41, %v329
  %v474 = vsel %vm186, %v42, %v330
  %v475 = vsel %vm187, %v43, %v331
  %v476 = vsel %vm188, %v44, %v332
  %v477 = vsel %vm189, %v45, %v333
  %v478 = vsel %vm190, %v46, %v334
  %v479 = vsel %vm191, %v47, %v335
  %v480 = vsel %vm192, %v48, %v336
  %v481 = vsel %vm193, %v49, %v337
  %v482 = vsel %vm194, %v50, %v338
  %v483 = vsel %vm195, %v51, %v339
  %v484 = vsel %vm196, %v52, %v340
  %v485 = vsel %vm197, %v53, %v341
  %v486 = vsel %vm198, %v54, %v342
  %v487 = vsel %vm199, %v55, %v343
  %v488 = vsel %vm200, %v56, %v344
  %v489 = vsel %vm201, %v57, %v345
  %v490 = vsel %vm202, %v58, %v346
  %v491 = vsel %vm203, %v59, %v347
  %v492 = vsel %vm204, %v60, %v348
  %v493 = vsel %vm205, %v61, %v349
  %v494 = vsel %vm206, %v62, %v350
  %v495 = vsel %vm207, %v63, %v351
  %v496 = vsel %vm208, %v64, %v352
  %v497 = vsel %vm209, %v65, %v353
  %v498 = vsel %vm210, %v66, %v354
  %v499 = vsel %vm211, %v67, %v355
  %v500 = vsel %vm212, %v68, %v356
  %v501 = vsel %vm213, %v69, %v357
  %v502 = vsel %vm214, %v70, %v358
  %v503 = vsel %vm215, %v71, %v359
  %v504 = vsel %vm216, %v72, %v360
  %v505 = vsel %vm217, %v73, %v361
  %v506 = vsel %vm218, %v74, %v362
  %v507 = vsel %vm219, %v75, %v363
  %v508 = vsel %vm220, %v76, %v364
  %v509 = vsel %vm221, %v77, %v365
  %v510 = vsel %vm222, %v78, %v366
  %v511 = vsel %vm223, %v79, %v367
  %v512 = vsel %vm224, %v80, %v368
  %v513 = vsel %vm225, %v81, %v369
  %v514 = vsel %vm226, %v82, %v370
  %v515 = vsel %vm227, %v83, %v371
  %v516 = vsel %vm228, %v84, %v372
  %v517 = vsel %vm229, %v85, %v373
  %v518 = vsel %vm230, %v86, %v374
  %v519 = vsel %vm231, %v87, %v375
  %v520 = vsel %vm232, %v88, %v376
  %v521 = vsel %vm233, %v89, %v377
  %v522 = vsel %vm234, %v90, %v378
  %v523 = vsel %vm235, %v91, %v379
  %v524 = vsel %vm236, %v92, %v380
  %v525 = vsel %vm237, %v93, %v381
  %v526 = vsel %vm238, %v94, %v382
  %v527 = vsel %vm239, %v95, %v383
  %v528 = vsel %vm240, %v96, %v384
  %v529 = vsel %vm241, %v97, %v385
  %v530 = vsel %vm242, %v98, %v386
  %v531 = vsel %vm243, %v99, %v387
  %v532 = vsel %vm244, %v100, %v388
  %v533 = vsel %vm245, %v101, %v389
  %v534 = vsel %vm246, %v102, %v390
  %v535 = vsel %vm247, %v103, %v391
  %v536 = vsel %vm248, %v104, %v392
  %v537 = vsel %vm249, %v105, %v393
  %v538 = vsel %vm250, %v106, %v394
  %v539 = vsel %vm251, %v107, %v395
  %v540 = vsel %vm252, %v108, %v396
  %v541 = vsel %vm253, %v109, %v397
  %v542 = vsel %vm254, %v110, %v398
  %v543 = vsel %vm255, %v111, %v399
  %v544 = vsel %vm256, %v112, %v400
  %v545 = vsel %vm257, %v113, %v401
  %v546 = vsel %vm258, %v114, %v402
  %v547 = vsel %vm259, %v115, %v403
  %v548 = vsel %vm260, %v116, %v404
  %v549 = vsel %vm261, %v117, %v405
  %v550 = vsel %vm262, %v118, %v406
  %v551 = vsel %vm263, %v119, %v407
  %v552 = vsel %vm264, %v120, %v408
  %v553 = vsel %vm265, %v121, %v409
  %v554 = vsel %vm266, %v122, %v410
  %v555 = vsel %vm267, %v123, %v411
  %v556 = vsel %vm268, %v124, %v412
  %v557 = vsel %vm269, %v125, %v413
  %v558 = vsel %vm270, %v126, %v414
  %v559 = vsel %vm271, %v127, %v415
  %v560 = vsel %vm272, %v128, %v416
  %v561 = vsel %vm273, %v129, %v417
  %v562 = vsel %vm274, %v130, %v418
  %v563 = vsel %vm275, %v131, %v419
  %v564 = vsel %vm276, %v132, %v420
  %v565 = vsel %vm277, %v133, %v421
  %v566 = vsel %vm278, %v134, %v422
  %v567 = vsel %vm279, %v135, %v423
  %v568 = vsel %vm280, %v136, %v424
  %v569 = vsel %vm281, %v137, %v425
  %v570 = vsel %vm282, %v138, %v426
  %v571 = vsel %vm283, %v139, %v427
  %v572 = vsel %vm284, %v140, %v428
  %v573 = vsel %vm285, %v141, %v429
  %v574 = vsel %vm286, %v142, %v430
  %v575 = vsel %vm287, %v143, %v431
  %v576 = vsel %vm288, %v144, %v432
  %v577 = vsel %vm289, %v145, %v433
  %v578 = vsel %vm290, %v146, %v434
  %v579 = vsel %vm291, %v147, %v435
  %v580 = vsel %vm292, %v148, %v436
  %v581 = vsel %vm293, %v149, %v437
  %v582 = vsel %vm294, %v150, %v438
  %v583 = vsel %vm295, %v151, %v439
  %v584 = vsel %vm296, %v152, %v440
  %v585 = vsel %vm297, %v153, %v441
  %v586 = vsel %vm298, %v154, %v442
  %v587 = vsel %vm299, %v155, %v443
  %v588 = vsel %vm300, %v156, %v444
  %v589 = vsel %vm301, %v157, %v445
  %v590 = vsel %vm302, %v158, %v446
  %v591 = vsel %vm303, %v159, %v447
  %v592 = vsel %vm304, %v160, %v448
  %v593 = vsel %vm305, %v161, %v449
  %vm594 = vsmask.f32 3328
  %vm595 = vsmask.f32 7440
  %vm596 = vmor %vm594, %vm595
  %v598 = vshrl.u32 %v450, 16
  %v600 = vrot.slane %v598, 4
  %v601 = vshll.u32 %v450, 16
  %v603 = vrot.slane %v601, 5
  %v604 = vor.u32 %v600, %v603
  %v605 = vrot.slane %v604, 4
  %v607 = vshll.u32 %v451, 16
  %v609 = vrot.slane %v607, 5
  %v610 = vsel %vm596, %v605, %v609
  %v612 = vshrl.u32 %v452, 16
  %v614 = vrot.slane %v612, 4
  %v615 = vshll.u32 %v452, 16
  %v617 = vrot.slane %v615, 5
  %v618 = vor.u32 %v614, %v617
  %v619 = vrot.slane %v618, 4
  %v621 = vshll.u32 %v453, 16
  %v623 = vrot.slane %v621, 5
  %v624 = vsel %vm596, %v619, %v623
  %v626 = vshrl.u32 %v454, 16
  %v628 = vrot.slane %v626, 4
  %v629 = vshll.u32 %v454, 16
  %v631 = vrot.slane %v629, 5
  %v632 = vor.u32 %v628, %v631
  %v633 = vrot.slane %v632, 4
  %v635 = vshll.u32 %v455, 16
  %v637 = vrot.slane %v635, 5
  %v638 = vsel %vm596, %v633, %v637
  %v640 = vshrl.u32 %v456, 16
  %v642 = vrot.slane %v640, 4
  %v643 = vshll.u32 %v456, 16
  %v645 = vrot.slane %v643, 5
  %v646 = vor.u32 %v642, %v645
  %v647 = vrot.slane %v646, 4
  %v649 = vshll.u32 %v457, 16
  %v651 = vrot.slane %v649, 5
  %v652 = vsel %vm596, %v647, %v651
  %v654 = vshrl.u32 %v458, 16
  %v656 = vrot.slane %v654, 4
  %v657 = vshll.u32 %v458, 16
  %v659 = vrot.slane %v657, 5
  %v660 = vor.u32 %v656, %v659
  %v661 = vrot.slane %v660, 4
  %v663 = vshll.u32 %v459, 16
  %v665 = vrot.slane %v663, 5
  %v666 = vsel %vm596, %v661, %v665
  %v668 = vshrl.u32 %v460, 16
  %v670 = vrot.slane %v668, 4
  %v671 = vshll.u32 %v460, 16
  %v673 = vrot.slane %v671, 5
  %v674 = vor.u32 %v670, %v673
  %v675 = vrot.slane %v674, 4
  %v677 = vshll.u32 %v461, 16
  %v679 = vrot.slane %v677, 5
  %v680 = vsel %vm596, %v675, %v679
  %v682 = vshrl.u32 %v462, 16
  %v684 = vrot.slane %v682, 4
  %v685 = vshll.u32 %v462, 16
  %v687 = vrot.slane %v685, 5
  %v688 = vor.u32 %v684, %v687
  %v689 = vrot.slane %v688, 4
  %v691 = vshll.u32 %v463, 16
  %v693 = vrot.slane %v691, 5
  %v694 = vsel %vm596, %v689, %v693
  %v696 = vshrl.u32 %v464, 16
  %v698 = vrot.slane %v696, 4
  %v699 = vshll.u32 %v464, 16
  %v701 = vrot.slane %v699, 5
  %v702 = vor.u32 %v698, %v701
  %v703 = vrot.slane %v702, 4
  %v705 = vshll.u32 %v465, 16
  %v707 = vrot.slane %v705, 5
  %v708 = vsel %vm596, %v703, %v707
  %v710 = vshrl.u32 %v522, 16
  %v712 = vrot.slane %v710, 4
  %v713 = vshll.u32 %v522, 16
  %v715 = vrot.slane %v713, 5
  %v716 = vor.u32 %v712, %v715
  %v717 = vrot.slane %v716, 4
  %v719 = vshll.u32 %v523, 16
  %v721 = vrot.slane %v719, 5
  %v722 = vsel %vm596, %v717, %v721
  %v724 = vshrl.u32 %v524, 16
  %v726 = vrot.slane %v724, 4
  %v727 = vshll.u32 %v524, 16
  %v729 = vrot.slane %v727, 5
  %v730 = vor.u32 %v726, %v729
  %v731 = vrot.slane %v730, 4
  %v733 = vshll.u32 %v525, 16
  %v735 = vrot.slane %v733, 5
  %v736 = vsel %vm596, %v731, %v735
  %v738 = vshrl.u32 %v526, 16
  %v740 = vrot.slane %v738, 4
  %v741 = vshll.u32 %v526, 16
  %v743 = vrot.slane %v741, 5
  %v744 = vor.u32 %v740, %v743
  %v745 = vrot.slane %v744, 4
  %v747 = vshll.u32 %v527, 16
  %v749 = vrot.slane %v747, 5
  %v750 = vsel %vm596, %v745, %v749
  %v752 = vshrl.u32 %v528, 16
  %v754 = vrot.slane %v752, 4
  %v755 = vshll.u32 %v528, 16
  %v757 = vrot.slane %v755, 5
  %v758 = vor.u32 %v754, %v757
  %v759 = vrot.slane %v758, 4
  %v761 = vshll.u32 %v529, 16
  %v763 = vrot.slane %v761, 5
  %v764 = vsel %vm596, %v759, %v763
  %v766 = vshrl.u32 %v530, 16
  %v768 = vrot.slane %v766, 4
  %v769 = vshll.u32 %v530, 16
  %v771 = vrot.slane %v769, 5
  %v772 = vor.u32 %v768, %v771
  %v773 = vrot.slane %v772, 4
  %v775 = vshll.u32 %v531, 16
  %v777 = vrot.slane %v775, 5
  %v778 = vsel %vm596, %v773, %v777
  %v780 = vshrl.u32 %v532, 16
  %v782 = vrot.slane %v780, 4
  %v783 = vshll.u32 %v532, 16
  %v785 = vrot.slane %v783, 5
  %v786 = vor.u32 %v782, %v785
  %v787 = vrot.slane %v786, 4
  %v789 = vshll.u32 %v533, 16
  %v791 = vrot.slane %v789, 5
  %v792 = vsel %vm596, %v787, %v791
  %v794 = vshrl.u32 %v534, 16
  %v796 = vrot.slane %v794, 4
  %v797 = vshll.u32 %v534, 16
  %v799 = vrot.slane %v797, 5
  %v800 = vor.u32 %v796, %v799
  %v801 = vrot.slane %v800, 4
  %v803 = vshll.u32 %v535, 16
  %v805 = vrot.slane %v803, 5
  %v806 = vsel %vm596, %v801, %v805
  %v808 = vshrl.u32 %v536, 16
  %v810 = vrot.slane %v808, 4
  %v811 = vshll.u32 %v536, 16
  %v813 = vrot.slane %v811, 5
  %v814 = vor.u32 %v810, %v813
  %v815 = vrot.slane %v814, 4
  %v817 = vshll.u32 %v537, 16
  %v819 = vrot.slane %v817, 5
  %v820 = vsel %vm596, %v815, %v819
  %v822 = vshrl.u32 %v468, 16
  %v824 = vrot.slane %v822, 4
  %v825 = vshll.u32 %v468, 16
  %v827 = vrot.slane %v825, 5
  %v828 = vor.u32 %v824, %v827
  %v829 = vrot.slane %v828, 4
  %v831 = vshll.u32 %v469, 16
  %v833 = vrot.slane %v831, 5
  %v834 = vsel %vm596, %v829, %v833
  %v836 = vshrl.u32 %v470, 16
  %v838 = vrot.slane %v836, 4
  %v839 = vshll.u32 %v470, 16
  %v841 = vrot.slane %v839, 5
  %v842 = vor.u32 %v838, %v841
  %v843 = vrot.slane %v842, 4
  %v845 = vshll.u32 %v471, 16
  %v847 = vrot.slane %v845, 5
  %v848 = vsel %vm596, %v843, %v847
  %v850 = vshrl.u32 %v472, 16
  %v852 = vrot.slane %v850, 4
  %v853 = vshll.u32 %v472, 16
  %v855 = vrot.slane %v853, 5
  %v856 = vor.u32 %v852, %v855
  %v857 = vrot.slane %v856, 4
  %v859 = vshll.u32 %v473, 16
  %v861 = vrot.slane %v859, 5
  %v862 = vsel %vm596, %v857, %v861
  %v864 = vshrl.u32 %v474, 16
  %v866 = vrot.slane %v864, 4
  %v867 = vshll.u32 %v474, 16
  %v869 = vrot.slane %v867, 5
  %v870 = vor.u32 %v866, %v869
  %v871 = vrot.slane %v870, 4
  %v873 = vshll.u32 %v475, 16
  %v875 = vrot.slane %v873, 5
  %v876 = vsel %vm596, %v871, %v875
  %v878 = vshrl.u32 %v476, 16
  %v880 = vrot.slane %v878, 4
  %v881 = vshll.u32 %v476, 16
  %v883 = vrot.slane %v881, 5
  %v884 = vor.u32 %v880, %v883
  %v885 = vrot.slane %v884, 4
  %v887 = vshll.u32 %v477, 16
  %v889 = vrot.slane %v887, 5
  %v890 = vsel %vm596, %v885, %v889
  %v892 = vshrl.u32 %v478, 16
  %v894 = vrot.slane %v892, 4
  %v895 = vshll.u32 %v478, 16
  %v897 = vrot.slane %v895, 5
  %v898 = vor.u32 %v894, %v897
  %v899 = vrot.slane %v898, 4
  %v901 = vshll.u32 %v479, 16
  %v903 = vrot.slane %v901, 5
  %v904 = vsel %vm596, %v899, %v903
  %v906 = vshrl.u32 %v480, 16
  %v908 = vrot.slane %v906, 4
  %v909 = vshll.u32 %v480, 16
  %v911 = vrot.slane %v909, 5
  %v912 = vor.u32 %v908, %v911
  %v913 = vrot.slane %v912, 4
  %v915 = vshll.u32 %v481, 16
  %v917 = vrot.slane %v915, 5
  %v918 = vsel %vm596, %v913, %v917
  %v920 = vshrl.u32 %v482, 16
  %v922 = vrot.slane %v920, 4
  %v923 = vshll.u32 %v482, 16
  %v925 = vrot.slane %v923, 5
  %v926 = vor.u32 %v922, %v925
  %v927 = vrot.slane %v926, 4
  %v929 = vshll.u32 %v483, 16
  %v931 = vrot.slane %v929, 5
  %v932 = vsel %vm596, %v927, %v931
  %v934 = vshrl.u32 %v540, 16
  %v936 = vrot.slane %v934, 4
  %v937 = vshll.u32 %v540, 16
  %v939 = vrot.slane %v937, 5
  %v940 = vor.u32 %v936, %v939
  %v941 = vrot.slane %v940, 4
  %v943 = vshll.u32 %v541, 16
  %v945 = vrot.slane %v943, 5
  %v946 = vsel %vm596, %v941, %v945
  %v948 = vshrl.u32 %v542, 16
  %v950 = vrot.slane %v948, 4
  %v951 = vshll.u32 %v542, 16
  %v953 = vrot.slane %v951, 5
  %v954 = vor.u32 %v950, %v953
  %v955 = vrot.slane %v954, 4
  %v957 = vshll.u32 %v543, 16
  %v959 = vrot.slane %v957, 5
  %v960 = vsel %vm596, %v955, %v959
  %v962 = vshrl.u32 %v544, 16
  %v964 = vrot.slane %v962, 4
  %v965 = vshll.u32 %v544, 16
  %v967 = vrot.slane %v965, 5
  %v968 = vor.u32 %v964, %v967
  %v969 = vrot.slane %v968, 4
  %v971 = vshll.u32 %v545, 16
  %v973 = vrot.slane %v971, 5
  %v974 = vsel %vm596, %v969, %v973
  %v976 = vshrl.u32 %v546, 16
  %v978 = vrot.slane %v976, 4
  %v979 = vshll.u32 %v546, 16
  %v981 = vrot.slane %v979, 5
  %v982 = vor.u32 %v978, %v981
  %v983 = vrot.slane %v982, 4
  %v985 = vshll.u32 %v547, 16
  %v987 = vrot.slane %v985, 5
  %v988 = vsel %vm596, %v983, %v987
  %v990 = vshrl.u32 %v548, 16
  %v992 = vrot.slane %v990, 4
  %v993 = vshll.u32 %v548, 16
  %v995 = vrot.slane %v993, 5
  %v996 = vor.u32 %v992, %v995
  %v997 = vrot.slane %v996, 4
  %v999 = vshll.u32 %v549, 16
  %v1001 = vrot.slane %v999, 5
  %v1002 = vsel %vm596, %v997, %v1001
  %v1004 = vshrl.u32 %v550, 16
  %v1006 = vrot.slane %v1004, 4
  %v1007 = vshll.u32 %v550, 16
  %v1009 = vrot.slane %v1007, 5
  %v1010 = vor.u32 %v1006, %v1009
  %v1011 = vrot.slane %v1010, 4
  %v1013 = vshll.u32 %v551, 16
  %v1015 = vrot.slane %v1013, 5
  %v1016 = vsel %vm596, %v1011, %v1015
  %v1018 = vshrl.u32 %v552, 16
  %v1020 = vrot.slane %v1018, 4
  %v1021 = vshll.u32 %v552, 16
  %v1023 = vrot.slane %v1021, 5
  %v1024 = vor.u32 %v1020, %v1023
  %v1025 = vrot.slane %v1024, 4
  %v1027 = vshll.u32 %v553, 16
  %v1029 = vrot.slane %v1027, 5
  %v1030 = vsel %vm596, %v1025, %v1029
  %v1032 = vshrl.u32 %v554, 16
  %v1034 = vrot.slane %v1032, 4
  %v1035 = vshll.u32 %v554, 16
  %v1037 = vrot.slane %v1035, 5
  %v1038 = vor.u32 %v1034, %v1037
  %v1039 = vrot.slane %v1038, 4
  %v1041 = vshll.u32 %v555, 16
  %v1043 = vrot.slane %v1041, 5
  %v1044 = vsel %vm596, %v1039, %v1043
  %v1046 = vshrl.u32 %v486, 16
  %v1048 = vrot.slane %v1046, 4
  %v1049 = vshll.u32 %v486, 16
  %v1051 = vrot.slane %v1049, 5
  %v1052 = vor.u32 %v1048, %v1051
  %v1053 = vrot.slane %v1052, 4
  %v1055 = vshll.u32 %v487, 16
  %v1057 = vrot.slane %v1055, 5
  %v1058 = vsel %vm596, %v1053, %v1057
  %v1060 = vshrl.u32 %v488, 16
  %v1062 = vrot.slane %v1060, 4
  %v1063 = vshll.u32 %v488, 16
  %v1065 = vrot.slane %v1063, 5
  %v1066 = vor.u32 %v1062, %v1065
  %v1067 = vrot.slane %v1066, 4
  %v1069 = vshll.u32 %v489, 16
  %v1071 = vrot.slane %v1069, 5
  %v1072 = vsel %vm596, %v1067, %v1071
  %v1074 = vshrl.u32 %v490, 16
  %v1076 = vrot.slane %v1074, 4
  %v1077 = vshll.u32 %v490, 16
  %v1079 = vrot.slane %v1077, 5
  %v1080 = vor.u32 %v1076, %v1079
  %v1081 = vrot.slane %v1080, 4
  %v1083 = vshll.u32 %v491, 16
  %v1085 = vrot.slane %v1083, 5
  %v1086 = vsel %vm596, %v1081, %v1085
  %v1088 = vshrl.u32 %v492, 16
  %v1090 = vrot.slane %v1088, 4
  %v1091 = vshll.u32 %v492, 16
  %v1093 = vrot.slane %v1091, 5
  %v1094 = vor.u32 %v1090, %v1093
  %v1095 = vrot.slane %v1094, 4
  %v1097 = vshll.u32 %v493, 16
  %v1099 = vrot.slane %v1097, 5
  %v1100 = vsel %vm596, %v1095, %v1099
  %v1102 = vshrl.u32 %v494, 16
  %v1104 = vrot.slane %v1102, 4
  %v1105 = vshll.u32 %v494, 16
  %v1107 = vrot.slane %v1105, 5
  %v1108 = vor.u32 %v1104, %v1107
  %v1109 = vrot.slane %v1108, 4
  %v1111 = vshll.u32 %v495, 16
  %v1113 = vrot.slane %v1111, 5
  %v1114 = vsel %vm596, %v1109, %v1113
  %v1116 = vshrl.u32 %v496, 16
  %v1118 = vrot.slane %v1116, 4
  %v1119 = vshll.u32 %v496, 16
  %v1121 = vrot.slane %v1119, 5
  %v1122 = vor.u32 %v1118, %v1121
  %v1123 = vrot.slane %v1122, 4
  %v1125 = vshll.u32 %v497, 16
  %v1127 = vrot.slane %v1125, 5
  %v1128 = vsel %vm596, %v1123, %v1127
  %v1130 = vshrl.u32 %v498, 16
  %v1132 = vrot.slane %v1130, 4
  %v1133 = vshll.u32 %v498, 16
  %v1135 = vrot.slane %v1133, 5
  %v1136 = vor.u32 %v1132, %v1135
  %v1137 = vrot.slane %v1136, 4
  %v1139 = vshll.u32 %v499, 16
  %v1141 = vrot.slane %v1139, 5
  %v1142 = vsel %vm596, %v1137, %v1141
  %v1144 = vshrl.u32 %v500, 16
  %v1146 = vrot.slane %v1144, 4
  %v1147 = vshll.u32 %v500, 16
  %v1149 = vrot.slane %v1147, 5
  %v1150 = vor.u32 %v1146, %v1149
  %v1151 = vrot.slane %v1150, 4
  %v1153 = vshll.u32 %v501, 16
  %v1155 = vrot.slane %v1153, 5
  %v1156 = vsel %vm596, %v1151, %v1155
  %v1158 = vshrl.u32 %v558, 16
  %v1160 = vrot.slane %v1158, 4
  %v1161 = vshll.u32 %v558, 16
  %v1163 = vrot.slane %v1161, 5
  %v1164 = vor.u32 %v1160, %v1163
  %v1165 = vrot.slane %v1164, 4
  %v1167 = vshll.u32 %v559, 16
  %v1169 = vrot.slane %v1167, 5
  %v1170 = vsel %vm596, %v1165, %v1169
  %v1172 = vshrl.u32 %v560, 16
  %v1174 = vrot.slane %v1172, 4
  %v1175 = vshll.u32 %v560, 16
  %v1177 = vrot.slane %v1175, 5
  %v1178 = vor.u32 %v1174, %v1177
  %v1179 = vrot.slane %v1178, 4
  %v1181 = vshll.u32 %v561, 16
  %v1183 = vrot.slane %v1181, 5
  %v1184 = vsel %vm596, %v1179, %v1183
  %v1186 = vshrl.u32 %v562, 16
  %v1188 = vrot.slane %v1186, 4
  %v1189 = vshll.u32 %v562, 16
  %v1191 = vrot.slane %v1189, 5
  %v1192 = vor.u32 %v1188, %v1191
  %v1193 = vrot.slane %v1192, 4
  %v1195 = vshll.u32 %v563, 16
  %v1197 = vrot.slane %v1195, 5
  %v1198 = vsel %vm596, %v1193, %v1197
  %v1200 = vshrl.u32 %v564, 16
  %v1202 = vrot.slane %v1200, 4
  %v1203 = vshll.u32 %v564, 16
  %v1205 = vrot.slane %v1203, 5
  %v1206 = vor.u32 %v1202, %v1205
  %v1207 = vrot.slane %v1206, 4
  %v1209 = vshll.u32 %v565, 16
  %v1211 = vrot.slane %v1209, 5
  %v1212 = vsel %vm596, %v1207, %v1211
  %v1214 = vshrl.u32 %v566, 16
  %v1216 = vrot.slane %v1214, 4
  %v1217 = vshll.u32 %v566, 16
  %v1219 = vrot.slane %v1217, 5
  %v1220 = vor.u32 %v1216, %v1219
  %v1221 = vrot.slane %v1220, 4
  %v1223 = vshll.u32 %v567, 16
  %v1225 = vrot.slane %v1223, 5
  %v1226 = vsel %vm596, %v1221, %v1225
  %v1228 = vshrl.u32 %v568, 16
  %v1230 = vrot.slane %v1228, 4
  %v1231 = vshll.u32 %v568, 16
  %v1233 = vrot.slane %v1231, 5
  %v1234 = vor.u32 %v1230, %v1233
  %v1235 = vrot.slane %v1234, 4
  %v1237 = vshll.u32 %v569, 16
  %v1239 = vrot.slane %v1237, 5
  %v1240 = vsel %vm596, %v1235, %v1239
  %v1242 = vshrl.u32 %v570, 16
  %v1244 = vrot.slane %v1242, 4
  %v1245 = vshll.u32 %v570, 16
  %v1247 = vrot.slane %v1245, 5
  %v1248 = vor.u32 %v1244, %v1247
  %v1249 = vrot.slane %v1248, 4
  %v1251 = vshll.u32 %v571, 16
  %v1253 = vrot.slane %v1251, 5
  %v1254 = vsel %vm596, %v1249, %v1253
  %v1256 = vshrl.u32 %v572, 16
  %v1258 = vrot.slane %v1256, 4
  %v1259 = vshll.u32 %v572, 16
  %v1261 = vrot.slane %v1259, 5
  %v1262 = vor.u32 %v1258, %v1261
  %v1263 = vrot.slane %v1262, 4
  %v1265 = vshll.u32 %v573, 16
  %v1267 = vrot.slane %v1265, 5
  %v1268 = vsel %vm596, %v1263, %v1267
  %v1270 = vshrl.u32 %v504, 16
  %v1272 = vrot.slane %v1270, 4
  %v1273 = vshll.u32 %v504, 16
  %v1275 = vrot.slane %v1273, 5
  %v1276 = vor.u32 %v1272, %v1275
  %v1277 = vrot.slane %v1276, 4
  %v1279 = vshll.u32 %v505, 16
  %v1281 = vrot.slane %v1279, 5
  %v1282 = vsel %vm596, %v1277, %v1281
  %v1284 = vshrl.u32 %v506, 16
  %v1286 = vrot.slane %v1284, 4
  %v1287 = vshll.u32 %v506, 16
  %v1289 = vrot.slane %v1287, 5
  %v1290 = vor.u32 %v1286, %v1289
  %v1291 = vrot.slane %v1290, 4
  %v1293 = vshll.u32 %v507, 16
  %v1295 = vrot.slane %v1293, 5
  %v1296 = vsel %vm596, %v1291, %v1295
  %v1298 = vshrl.u32 %v508, 16
  %v1300 = vrot.slane %v1298, 4
  %v1301 = vshll.u32 %v508, 16
  %v1303 = vrot.slane %v1301, 5
  %v1304 = vor.u32 %v1300, %v1303
  %v1305 = vrot.slane %v1304, 4
  %v1307 = vshll.u32 %v509, 16
  %v1309 = vrot.slane %v1307, 5
  %v1310 = vsel %vm596, %v1305, %v1309
  %v1312 = vshrl.u32 %v510, 16
  %v1314 = vrot.slane %v1312, 4
  %v1315 = vshll.u32 %v510, 16
  %v1317 = vrot.slane %v1315, 5
  %v1318 = vor.u32 %v1314, %v1317
  %v1319 = vrot.slane %v1318, 4
  %v1321 = vshll.u32 %v511, 16
  %v1323 = vrot.slane %v1321, 5
  %v1324 = vsel %vm596, %v1319, %v1323
  %v1326 = vshrl.u32 %v512, 16
  %v1328 = vrot.slane %v1326, 4
  %v1329 = vshll.u32 %v512, 16
  %v1331 = vrot.slane %v1329, 5
  %v1332 = vor.u32 %v1328, %v1331
  %v1333 = vrot.slane %v1332, 4
  %v1335 = vshll.u32 %v513, 16
  %v1337 = vrot.slane %v1335, 5
  %v1338 = vsel %vm596, %v1333, %v1337
  %v1340 = vshrl.u32 %v514, 16
  %v1342 = vrot.slane %v1340, 4
  %v1343 = vshll.u32 %v514, 16
  %v1345 = vrot.slane %v1343, 5
  %v1346 = vor.u32 %v1342, %v1345
  %v1347 = vrot.slane %v1346, 4
  %v1349 = vshll.u32 %v515, 16
  %v1351 = vrot.slane %v1349, 5
  %v1352 = vsel %vm596, %v1347, %v1351
  %v1354 = vshrl.u32 %v516, 16
  %v1356 = vrot.slane %v1354, 4
  %v1357 = vshll.u32 %v516, 16
  %v1359 = vrot.slane %v1357, 5
  %v1360 = vor.u32 %v1356, %v1359
  %v1361 = vrot.slane %v1360, 4
  %v1363 = vshll.u32 %v517, 16
  %v1365 = vrot.slane %v1363, 5
  %v1366 = vsel %vm596, %v1361, %v1365
  %v1368 = vshrl.u32 %v518, 16
  %v1370 = vrot.slane %v1368, 4
  %v1371 = vshll.u32 %v518, 16
  %v1373 = vrot.slane %v1371, 5
  %v1374 = vor.u32 %v1370, %v1373
  %v1375 = vrot.slane %v1374, 4
  %v1377 = vshll.u32 %v519, 16
  %v1379 = vrot.slane %v1377, 5
  %v1380 = vsel %vm596, %v1375, %v1379
  %v1382 = vshrl.u32 %v576, 16
  %v1384 = vrot.slane %v1382, 4
  %v1385 = vshll.u32 %v576, 16
  %v1387 = vrot.slane %v1385, 5
  %v1388 = vor.u32 %v1384, %v1387
  %v1389 = vrot.slane %v1388, 4
  %v1391 = vshll.u32 %v577, 16
  %v1393 = vrot.slane %v1391, 5
  %v1394 = vsel %vm596, %v1389, %v1393
  %v1396 = vshrl.u32 %v578, 16
  %v1398 = vrot.slane %v1396, 4
  %v1399 = vshll.u32 %v578, 16
  %v1401 = vrot.slane %v1399, 5
  %v1402 = vor.u32 %v1398, %v1401
  %v1403 = vrot.slane %v1402, 4
  %v1405 = vshll.u32 %v579, 16
  %v1407 = vrot.slane %v1405, 5
  %v1408 = vsel %vm596, %v1403, %v1407
  %v1410 = vshrl.u32 %v580, 16
  %v1412 = vrot.slane %v1410, 4
  %v1413 = vshll.u32 %v580, 16
  %v1415 = vrot.slane %v1413, 5
  %v1416 = vor.u32 %v1412, %v1415
  %v1417 = vrot.slane %v1416, 4
  %v1419 = vshll.u32 %v581, 16
  %v1421 = vrot.slane %v1419, 5
  %v1422 = vsel %vm596, %v1417, %v1421
  %v1424 = vshrl.u32 %v582, 16
  %v1426 = vrot.slane %v1424, 4
  %v1427 = vshll.u32 %v582, 16
  %v1429 = vrot.slane %v1427, 5
  %v1430 = vor.u32 %v1426, %v1429
  %v1431 = vrot.slane %v1430, 4
  %v1433 = vshll.u32 %v583, 16
  %v1435 = vrot.slane %v1433, 5
  %v1436 = vsel %vm596, %v1431, %v1435
  %v1438 = vshrl.u32 %v584, 16
  %v1440 = vrot.slane %v1438, 4
  %v1441 = vshll.u32 %v584, 16
  %v1443 = vrot.slane %v1441, 5
  %v1444 = vor.u32 %v1440, %v1443
  %v1445 = vrot.slane %v1444, 4
  %v1447 = vshll.u32 %v585, 16
  %v1449 = vrot.slane %v1447, 5
  %v1450 = vsel %vm596, %v1445, %v1449
  %v1452 = vshrl.u32 %v586, 16
  %v1454 = vrot.slane %v1452, 4
  %v1455 = vshll.u32 %v586, 16
  %v1457 = vrot.slane %v1455, 5
  %v1458 = vor.u32 %v1454, %v1457
  %v1459 = vrot.slane %v1458, 4
  %v1461 = vshll.u32 %v587, 16
  %v1463 = vrot.slane %v1461, 5
  %v1464 = vsel %vm596, %v1459, %v1463
  %v1466 = vshrl.u32 %v588, 16
  %v1468 = vrot.slane %v1466, 4
  %v1469 = vshll.u32 %v588, 16
  %v1471 = vrot.slane %v1469, 5
  %v1472 = vor.u32 %v1468, %v1471
  %v1473 = vrot.slane %v1472, 4
  %v1475 = vshll.u32 %v589, 16
  %v1477 = vrot.slane %v1475, 5
  %v1478 = vsel %vm596, %v1473, %v1477
  %v1480 = vshrl.u32 %v590, 16
  %v1482 = vrot.slane %v1480, 4
  %v1483 = vshll.u32 %v590, 16
  %v1485 = vrot.slane %v1483, 5
  %v1486 = vor.u32 %v1482, %v1485
  %v1487 = vrot.slane %v1486, 4
  %v1489 = vshll.u32 %v591, 16
  %v1491 = vrot.slane %v1489, 5
  %v1492 = vsel %vm596, %v1487, %v1491
  %v1494 = vshrl.u32 %v466, 16
  %v1496 = vrot.slane %v1494, 4
  %v1497 = vshll.u32 %v466, 16
  %v1499 = vrot.slane %v1497, 5
  %v1500 = vor.u32 %v1496, %v1499
  %v1501 = vrot.slane %v1500, 4
  %v1503 = vshll.u32 %v467, 16
  %v1505 = vrot.slane %v1503, 5
  %v1506 = vsel %vm596, %v1501, %v1505
  %v1508 = vshrl.u32 %v538, 16
  %v1510 = vrot.slane %v1508, 4
  %v1511 = vshll.u32 %v538, 16
  %v1513 = vrot.slane %v1511, 5
  %v1514 = vor.u32 %v1510, %v1513
  %v1515 = vrot.slane %v1514, 4
  %v1517 = vshll.u32 %v539, 16
  %v1519 = vrot.slane %v1517, 5
  %v1520 = vsel %vm596, %v1515, %v1519
  %v1522 = vshrl.u32 %v484, 16
  %v1524 = vrot.slane %v1522, 4
  %v1525 = vshll.u32 %v484, 16
  %v1527 = vrot.slane %v1525, 5
  %v1528 = vor.u32 %v1524, %v1527
  %v1529 = vrot.slane %v1528, 4
  %v1531 = vshll.u32 %v485, 16
  %v1533 = vrot.slane %v1531, 5
  %v1534 = vsel %vm596, %v1529, %v1533
  %v1536 = vshrl.u32 %v556, 16
  %v1538 = vrot.slane %v1536, 4
  %v1539 = vshll.u32 %v556, 16
  %v1541 = vrot.slane %v1539, 5
  %v1542 = vor.u32 %v1538, %v1541
  %v1543 = vrot.slane %v1542, 4
  %v1545 = vshll.u32 %v557, 16
  %v1547 = vrot.slane %v1545, 5
  %v1548 = vsel %vm596, %v1543, %v1547
  %v1550 = vshrl.u32 %v502, 16
  %v1552 = vrot.slane %v1550, 4
  %v1553 = vshll.u32 %v502, 16
  %v1555 = vrot.slane %v1553, 5
  %v1556 = vor.u32 %v1552, %v1555
  %v1557 = vrot.slane %v1556, 4
  %v1559 = vshll.u32 %v503, 16
  %v1561 = vrot.slane %v1559, 5
  %v1562 = vsel %vm596, %v1557, %v1561
  %v1564 = vshrl.u32 %v574, 16
  %v1566 = vrot.slane %v1564, 4
  %v1567 = vshll.u32 %v574, 16
  %v1569 = vrot.slane %v1567, 5
  %v1570 = vor.u32 %v1566, %v1569
  %v1571 = vrot.slane %v1570, 4
  %v1573 = vshll.u32 %v575, 16
  %v1575 = vrot.slane %v1573, 5
  %v1576 = vsel %vm596, %v1571, %v1575
  %v1578 = vshrl.u32 %v520, 16
  %v1580 = vrot.slane %v1578, 4
  %v1581 = vshll.u32 %v520, 16
  %v1583 = vrot.slane %v1581, 5
  %v1584 = vor.u32 %v1580, %v1583
  %v1585 = vrot.slane %v1584, 4
  %v1587 = vshll.u32 %v521, 16
  %v1589 = vrot.slane %v1587, 5
  %v1590 = vsel %vm596, %v1585, %v1589
  %v1592 = vshrl.u32 %v592, 16
  %v1594 = vrot.slane %v1592, 4
  %v1595 = vshll.u32 %v592, 16
  %v1597 = vrot.slane %v1595, 5
  %v1598 = vor.u32 %v1594, %v1597
  %v1599 = vrot.slane %v1598, 4
  %v1601 = vshll.u32 %v593, 16
  %v1603 = vrot.slane %v1601, 5
  %v1604 = vsel %vm596, %v1599, %v1603
  %v1621 = vunpack.c.l.b16 %v450
  %v1622 = vunpack.c.l.b16 %v452
  %v1623 = vunpack.c.l.b16 %v454
  %v1624 = vunpack.c.l.b16 %v456
  %v1625 = vunpack.c.l.b16 %v458
  %v1626 = vunpack.c.l.b16 %v460
  %v1627 = vunpack.c.l.b16 %v462
  %v1628 = vunpack.c.l.b16 %v464
  %v1629 = vunpack.c.l.b16 %v522
  %v1630 = vunpack.c.l.b16 %v524
  %v1631 = vunpack.c.l.b16 %v526
  %v1632 = vunpack.c.l.b16 %v528
  %v1633 = vunpack.c.l.b16 %v530
  %v1634 = vunpack.c.l.b16 %v532
  %v1635 = vunpack.c.l.b16 %v534
  %v1636 = vunpack.c.l.b16 %v536
  %v1637 = vpack.c.b16 %v1622, %v1621
  %v1638 = vpack.c.b16 %v1624, %v1623
  %v1639 = vpack.c.b16 %v1626, %v1625
  %v1640 = vpack.c.b16 %v1628, %v1627
  %v1641 = vpack.c.b16 %v1630, %v1629
  %v1642 = vpack.c.b16 %v1632, %v1631
  %v1643 = vpack.c.b16 %v1634, %v1633
  %v1644 = vpack.c.b16 %v1636, %v1635
  %v1669 = vunpack.c.l.b16 %v468
  %v1670 = vunpack.c.l.b16 %v470
  %v1671 = vunpack.c.l.b16 %v472
  %v1672 = vunpack.c.l.b16 %v474
  %v1673 = vunpack.c.l.b16 %v476
  %v1674 = vunpack.c.l.b16 %v478
  %v1675 = vunpack.c.l.b16 %v480
  %v1676 = vunpack.c.l.b16 %v482
  %v1677 = vunpack.c.l.b16 %v540
  %v1678 = vunpack.c.l.b16 %v542
  %v1679 = vunpack.c.l.b16 %v544
  %v1680 = vunpack.c.l.b16 %v546
  %v1681 = vunpack.c.l.b16 %v548
  %v1682 = vunpack.c.l.b16 %v550
  %v1683 = vunpack.c.l.b16 %v552
  %v1684 = vunpack.c.l.b16 %v554
  %v1685 = vpack.c.b16 %v1670, %v1669
  %v1686 = vpack.c.b16 %v1672, %v1671
  %v1687 = vpack.c.b16 %v1674, %v1673
  %v1688 = vpack.c.b16 %v1676, %v1675
  %v1689 = vpack.c.b16 %v1678, %v1677
  %v1690 = vpack.c.b16 %v1680, %v1679
  %v1691 = vpack.c.b16 %v1682, %v1681
  %v1692 = vpack.c.b16 %v1684, %v1683
  %v1701 = vunpack.c.l.b16 %v610
  %v1702 = vunpack.c.l.b16 %v624
  %v1703 = vunpack.c.l.b16 %v638
  %v1704 = vunpack.c.l.b16 %v652
  %v1705 = vunpack.c.l.b16 %v666
  %v1706 = vunpack.c.l.b16 %v680
  %v1707 = vunpack.c.l.b16 %v694
  %v1708 = vunpack.c.l.b16 %v708
  %v1709 = vunpack.c.l.b16 %v722
  %v1710 = vunpack.c.l.b16 %v736
  %v1711 = vunpack.c.l.b16 %v750
  %v1712 = vunpack.c.l.b16 %v764
  %v1713 = vunpack.c.l.b16 %v778
  %v1714 = vunpack.c.l.b16 %v792
  %v1715 = vunpack.c.l.b16 %v806
  %v1716 = vunpack.c.l.b16 %v820
  %v1717 = vpack.c.b16 %v1702, %v1701
  %v1718 = vpack.c.b16 %v1704, %v1703
  %v1719 = vpack.c.b16 %v1706, %v1705
  %v1720 = vpack.c.b16 %v1708, %v1707
  %v1721 = vpack.c.b16 %v1710, %v1709
  %v1722 = vpack.c.b16 %v1712, %v1711
  %v1723 = vpack.c.b16 %v1714, %v1713
  %v1724 = vpack.c.b16 %v1716, %v1715
  %v1733 = vunpack.c.l.b16 %v834
  %v1734 = vunpack.c.l.b16 %v848
  %v1735 = vunpack.c.l.b16 %v862
  %v1736 = vunpack.c.l.b16 %v876
  %v1737 = vunpack.c.l.b16 %v890
  %v1738 = vunpack.c.l.b16 %v904
  %v1739 = vunpack.c.l.b16 %v918
  %v1740 = vunpack.c.l.b16 %v932
  %v1741 = vunpack.c.l.b16 %v946
  %v1742 = vunpack.c.l.b16 %v960
  %v1743 = vunpack.c.l.b16 %v974
  %v1744 = vunpack.c.l.b16 %v988
  %v1745 = vunpack.c.l.b16 %v1002
  %v1746 = vunpack.c.l.b16 %v1016
  %v1747 = vunpack.c.l.b16 %v1030
  %v1748 = vunpack.c.l.b16 %v1044
  %v1749 = vpack.c.b16 %v1734, %v1733
  %v1750 = vpack.c.b16 %v1736, %v1735
  %v1751 = vpack.c.b16 %v1738, %v1737
  %v1752 = vpack.c.b16 %v1740, %v1739
  %v1753 = vpack.c.b16 %v1742, %v1741
  %v1754 = vpack.c.b16 %v1744, %v1743
  %v1755 = vpack.c.b16 %v1746, %v1745
  %v1756 = vpack.c.b16 %v1748, %v1747
  %v1781 = vunpack.c.l.b16 %v486
  %v1782 = vunpack.c.l.b16 %v488
  %v1783 = vunpack.c.l.b16 %v490
  %v1784 = vunpack.c.l.b16 %v492
  %v1785 = vunpack.c.l.b16 %v494
  %v1786 = vunpack.c.l.b16 %v496
  %v1787 = vunpack.c.l.b16 %v498
  %v1788 = vunpack.c.l.b16 %v500
  %v1789 = vunpack.c.l.b16 %v558
  %v1790 = vunpack.c.l.b16 %v560
  %v1791 = vunpack.c.l.b16 %v562
  %v1792 = vunpack.c.l.b16 %v564
  %v1793 = vunpack.c.l.b16 %v566
  %v1794 = vunpack.c.l.b16 %v568
  %v1795 = vunpack.c.l.b16 %v570
  %v1796 = vunpack.c.l.b16 %v572
  %v1797 = vpack.c.b16 %v1782, %v1781
  %v1798 = vpack.c.b16 %v1784, %v1783
  %v1799 = vpack.c.b16 %v1786, %v1785
  %v1800 = vpack.c.b16 %v1788, %v1787
  %v1801 = vpack.c.b16 %v1790, %v1789
  %v1802 = vpack.c.b16 %v1792, %v1791
  %v1803 = vpack.c.b16 %v1794, %v1793
  %v1804 = vpack.c.b16 %v1796, %v1795
  %v1829 = vunpack.c.l.b16 %v504
  %v1830 = vunpack.c.l.b16 %v506
  %v1831 = vunpack.c.l.b16 %v508
  %v1832 = vunpack.c.l.b16 %v510
  %v1833 = vunpack.c.l.b16 %v512
  %v1834 = vunpack.c.l.b16 %v514
  %v1835 = vunpack.c.l.b16 %v516
  %v1836 = vunpack.c.l.b16 %v518
  %v1837 = vunpack.c.l.b16 %v576
  %v1838 = vunpack.c.l.b16 %v578
  %v1839 = vunpack.c.l.b16 %v580
  %v1840 = vunpack.c.l.b16 %v582
  %v1841 = vunpack.c.l.b16 %v584
  %v1842 = vunpack.c.l.b16 %v586
  %v1843 = vunpack.c.l.b16 %v588
  %v1844 = vunpack.c.l.b16 %v590
  %v1845 = vpack.c.b16 %v1830, %v1829
  %v1846 = vpack.c.b16 %v1832, %v1831
  %v1847 = vpack.c.b16 %v1834, %v1833
  %v1848 = vpack.c.b16 %v1836, %v1835
  %v1849 = vpack.c.b16 %v1838, %v1837
  %v1850 = vpack.c.b16 %v1840, %v1839
  %v1851 = vpack.c.b16 %v1842, %v1841
  %v1852 = vpack.c.b16 %v1844, %v1843
  %v1861 = vunpack.c.l.b16 %v1058
  %v1862 = vunpack.c.l.b16 %v1072
  %v1863 = vunpack.c.l.b16 %v1086
  %v1864 = vunpack.c.l.b16 %v1100
  %v1865 = vunpack.c.l.b16 %v1114
  %v1866 = vunpack.c.l.b16 %v1128
  %v1867 = vunpack.c.l.b16 %v1142
  %v1868 = vunpack.c.l.b16 %v1156
  %v1869 = vunpack.c.l.b16 %v1170
  %v1870 = vunpack.c.l.b16 %v1184
  %v1871 = vunpack.c.l.b16 %v1198
  %v1872 = vunpack.c.l.b16 %v1212
  %v1873 = vunpack.c.l.b16 %v1226
  %v1874 = vunpack.c.l.b16 %v1240
  %v1875 = vunpack.c.l.b16 %v1254
  %v1876 = vunpack.c.l.b16 %v1268
  %v1877 = vpack.c.b16 %v1862, %v1861
  %v1878 = vpack.c.b16 %v1864, %v1863
  %v1879 = vpack.c.b16 %v1866, %v1865
  %v1880 = vpack.c.b16 %v1868, %v1867
  %v1881 = vpack.c.b16 %v1870, %v1869
  %v1882 = vpack.c.b16 %v1872, %v1871
  %v1883 = vpack.c.b16 %v1874, %v1873
  %v1884 = vpack.c.b16 %v1876, %v1875
  %v1893 = vunpack.c.l.b16 %v1282
  %v1894 = vunpack.c.l.b16 %v1296
  %v1895 = vunpack.c.l.b16 %v1310
  %v1896 = vunpack.c.l.b16 %v1324
  %v1897 = vunpack.c.l.b16 %v1338
  %v1898 = vunpack.c.l.b16 %v1352
  %v1899 = vunpack.c.l.b16 %v1366
  %v1900 = vunpack.c.l.b16 %v1380
  %v1901 = vunpack.c.l.b16 %v1394
  %v1902 = vunpack.c.l.b16 %v1408
  %v1903 = vunpack.c.l.b16 %v1422
  %v1904 = vunpack.c.l.b16 %v1436
  %v1905 = vunpack.c.l.b16 %v1450
  %v1906 = vunpack.c.l.b16 %v1464
  %v1907 = vunpack.c.l.b16 %v1478
  %v1908 = vunpack.c.l.b16 %v1492
  %v1909 = vpack.c.b16 %v1894, %v1893
  %v1910 = vpack.c.b16 %v1896, %v1895
  %v1911 = vpack.c.b16 %v1898, %v1897
  %v1912 = vpack.c.b16 %v1900, %v1899
  %v1913 = vpack.c.b16 %v1902, %v1901
  %v1914 = vpack.c.b16 %v1904, %v1903
  %v1915 = vpack.c.b16 %v1906, %v1905
  %v1916 = vpack.c.b16 %v1908, %v1907
  %v1927 = vunpack.c.l.b16 %v466
  %v1928 = vunpack.c.l.b16 %v538
  %v1929 = vpack.c.b16 %v1623, %v1622
  %v1930 = vpack.c.b16 %v1625, %v1624
  %v1931 = vpack.c.b16 %v1627, %v1626
  %v1932 = vpack.c.b16 %v1927, %v1628
  %v1933 = vpack.c.b16 %v1631, %v1630
  %v1934 = vpack.c.b16 %v1633, %v1632
  %v1935 = vpack.c.b16 %v1635, %v1634
  %v1936 = vpack.c.b16 %v1928, %v1636
  %v1947 = vunpack.c.l.b16 %v484
  %v1948 = vunpack.c.l.b16 %v556
  %v1949 = vpack.c.b16 %v1671, %v1670
  %v1950 = vpack.c.b16 %v1673, %v1672
  %v1951 = vpack.c.b16 %v1675, %v1674
  %v1952 = vpack.c.b16 %v1947, %v1676
  %v1953 = vpack.c.b16 %v1679, %v1678
  %v1954 = vpack.c.b16 %v1681, %v1680
  %v1955 = vpack.c.b16 %v1683, %v1682
  %v1956 = vpack.c.b16 %v1948, %v1684
  %v1965 = vunpack.c.l.b16 %v1506
  %v1966 = vunpack.c.l.b16 %v1520
  %v1967 = vpack.c.b16 %v1703, %v1702
  %v1968 = vpack.c.b16 %v1705, %v1704
  %v1969 = vpack.c.b16 %v1707, %v1706
  %v1970 = vpack.c.b16 %v1965, %v1708
  %v1971 = vpack.c.b16 %v1711, %v1710
  %v1972 = vpack.c.b16 %v1713, %v1712
  %v1973 = vpack.c.b16 %v1715, %v1714
  %v1974 = vpack.c.b16 %v1966, %v1716
  %v1983 = vunpack.c.l.b16 %v1534
  %v1984 = vunpack.c.l.b16 %v1548
  %v1985 = vpack.c.b16 %v1735, %v1734
  %v1986 = vpack.c.b16 %v1737, %v1736
  %v1987 = vpack.c.b16 %v1739, %v1738
  %v1988 = vpack.c.b16 %v1983, %v1740
  %v1989 = vpack.c.b16 %v1743, %v1742
  %v1990 = vpack.c.b16 %v1745, %v1744
  %v1991 = vpack.c.b16 %v1747, %v1746
  %v1992 = vpack.c.b16 %v1984, %v1748
  %v2003 = vunpack.c.l.b16 %v502
  %v2004 = vunpack.c.l.b16 %v574
  %v2005 = vpack.c.b16 %v1783, %v1782
  %v2006 = vpack.c.b16 %v1785, %v1784
  %v2007 = vpack.c.b16 %v1787, %v1786
  %v2008 = vpack.c.b16 %v2003, %v1788
  %v2009 = vpack.c.b16 %v1791, %v1790
  %v2010 = vpack.c.b16 %v1793, %v1792
  %v2011 = vpack.c.b16 %v1795, %v1794
  %v2012 = vpack.c.b16 %v2004, %v1796
  %v2023 = vunpack.c.l.b16 %v520
  %v2024 = vunpack.c.l.b16 %v592
  %v2025 = vpack.c.b16 %v1831, %v1830
  %v2026 = vpack.c.b16 %v1833, %v1832
  %v2027 = vpack.c.b16 %v1835, %v1834
  %v2028 = vpack.c.b16 %v2023, %v1836
  %v2029 = vpack.c.b16 %v1839, %v1838
  %v2030 = vpack.c.b16 %v1841, %v1840
  %v2031 = vpack.c.b16 %v1843, %v1842
  %v2032 = vpack.c.b16 %v2024, %v1844
  %v2041 = vunpack.c.l.b16 %v1562
  %v2042 = vunpack.c.l.b16 %v1576
  %v2043 = vpack.c.b16 %v1863, %v1862
  %v2044 = vpack.c.b16 %v1865, %v1864
  %v2045 = vpack.c.b16 %v1867, %v1866
  %v2046 = vpack.c.b16 %v2041, %v1868
  %v2047 = vpack.c.b16 %v1871, %v1870
  %v2048 = vpack.c.b16 %v1873, %v1872
  %v2049 = vpack.c.b16 %v1875, %v1874
  %v2050 = vpack.c.b16 %v2042, %v1876
  %v2059 = vunpack.c.l.b16 %v1590
  %v2060 = vunpack.c.l.b16 %v1604
  %v2061 = vpack.c.b16 %v1895, %v1894
  %v2062 = vpack.c.b16 %v1897, %v1896
  %v2063 = vpack.c.b16 %v1899, %v1898
  %v2064 = vpack.c.b16 %v2059, %v1900
  %v2065 = vpack.c.b16 %v1903, %v1902
  %v2066 = vpack.c.b16 %v1905, %v1904
  %v2067 = vpack.c.b16 %v1907, %v1906
  %v2068 = vpack.c.b16 %v2060, %v1908
  %v2077 = vld [vmem:[%s1] sm:$0xf]
  %v2078 = vld [vmem:[%s1 + $0x4] sm:$0xf]
  %v2079 = vld [vmem:[%s1 + $0x8] sm:$0xf]
  %v2080 = vld [vmem:[%s1 + $0xc] sm:$0xf]
  %v2081 = vld [vmem:[%s1 + $0x10] sm:$0xf]
  %v2082 = vld [vmem:[%s1 + $0x14] sm:$0xf]
  %v2083 = vld [vmem:[%s1 + $0x18] sm:$0xf]
  %v2084 = vld [vmem:[%s1 + $0x1c] sm:$0xf]
  %v2085 = vld [vmem:[%s1 + $0x20] sm:$0xf]
  %v2086 = vld [vmem:[%s1 + $0x24] sm:$0xf]
  %v2087 = vld [vmem:[%s1 + $0x28] sm:$0xf]
  %v2088 = vld [vmem:[%s1 + $0x2c] sm:$0xf]
  %v2089 = vld [vmem:[%s1 + $0x30] sm:$0xf]
  %v2090 = vld [vmem:[%s1 + $0x34] sm:$0xf]
  %v2091 = vld [vmem:[%s1 + $0x38] sm:$0xf]
  %v2092 = vld [vmem:[%s1 + $0x3c] sm:$0xf]
  %v2093 = vld [vmem:[%s1 + $0x40] sm:$0xf]
  %v2094 = vld [vmem:[%s1 + $0x44] sm:$0xf]
  %v2095 = vld [vmem:[%s1 + $0x48] sm:$0xf]
  %v2096 = vld [vmem:[%s1 + $0x4c] sm:$0xf]
  %v2097 = vld [vmem:[%s1 + $0x50] sm:$0xf]
  %v2098 = vld [vmem:[%s1 + $0x54] sm:$0xf]
  %v2099 = vld [vmem:[%s1 + $0x58] sm:$0xf]
  %v2100 = vld [vmem:[%s1 + $0x5c] sm:$0xf]
  %v2101 = vld [vmem:[%s1 + $0x60] sm:$0xf]
  %v2102 = vld [vmem:[%s1 + $0x64] sm:$0xf]
  %v2103 = vld [vmem:[%s1 + $0x68] sm:$0xf]
  %v2104 = vld [vmem:[%s1 + $0x6c] sm:$0xf]
  %v2105 = vld [vmem:[%s1 + $0x70] sm:$0xf]
  %v2106 = vld [vmem:[%s1 + $0x74] sm:$0xf]
  %v2107 = vld [vmem:[%s1 + $0x78] sm:$0xf]
  %v2108 = vld [vmem:[%s1 + $0x7c] sm:$0xf]
  %v2109 = vld [vmem:[%s1 + $0x80] sm:$0xf]
  %v2110 = vld [vmem:[%s1 + $0x84] sm:$0xf]
  %v2111 = vld [vmem:[%s1 + $0x88] sm:$0xf]
  %v2112 = vld [vmem:[%s1 + $0x8c] sm:$0xf]
  %v2113 = vld [vmem:[%s1 + $0x90] sm:$0xf]
  %v2114 = vld [vmem:[%s1 + $0x94] sm:$0xf]
  %v2115 = vld [vmem:[%s1 + $0x98] sm:$0xf]
  %v2116 = vld [vmem:[%s1 + $0x9c] sm:$0xf]
  %v2117 = vld [vmem:[%s1 + $0xa0] sm:$0xf]
  %v2118 = vld [vmem:[%s1 + $0xa4] sm:$0xf]
  %v2119 = vld [vmem:[%s1 + $0xa8] sm:$0xf]
  %v2120 = vld [vmem:[%s1 + $0xac] sm:$0xf]
  %v2121 = vld [vmem:[%s1 + $0xb0] sm:$0xf]
  %v2122 = vld [vmem:[%s1 + $0xb4] sm:$0xf]
  %v2123 = vld [vmem:[%s1 + $0xb8] sm:$0xf]
  %v2124 = vld [vmem:[%s1 + $0xbc] sm:$0xf]
  %v2125 = vld [vmem:[%s1 + $0xc0] sm:$0xf]
  %v2126 = vld [vmem:[%s1 + $0xc4] sm:$0xf]
  %v2127 = vld [vmem:[%s1 + $0xc8] sm:$0xf]
  %v2128 = vld [vmem:[%s1 + $0xcc] sm:$0xf]
  %v2129 = vld [vmem:[%s1 + $0xd0] sm:$0xf]
  %v2130 = vld [vmem:[%s1 + $0xd4] sm:$0xf]
  %v2131 = vld [vmem:[%s1 + $0xd8] sm:$0xf]
  %v2132 = vld [vmem:[%s1 + $0xdc] sm:$0xf]
  %v2133 = vld [vmem:[%s1 + $0xe0] sm:$0xf]
  %v2134 = vld [vmem:[%s1 + $0xe4] sm:$0xf]
  %v2135 = vld [vmem:[%s1 + $0xe8] sm:$0xf]
  %v2136 = vld [vmem:[%s1 + $0xec] sm:$0xf]
  %v2137 = vld [vmem:[%s1 + $0xf0] sm:$0xf]
  %v2138 = vld [vmem:[%s1 + $0xf4] sm:$0xf]
  %v2139 = vld [vmem:[%s1 + $0xf8] sm:$0xf]
  %v2140 = vld [vmem:[%s1 + $0xfc] sm:$0xf]
  %v2141 = vld [vmem:[%s1 + $0x100] sm:$0xf]
  %v2142 = vld [vmem:[%s1 + $0x104] sm:$0xf]
  %v2143 = vld [vmem:[%s1 + $0x108] sm:$0xf]
  %v2144 = vld [vmem:[%s1 + $0x10c] sm:$0xf]
  %v2145 = vld [vmem:[%s1 + $0x110] sm:$0xf]
  %v2146 = vld [vmem:[%s1 + $0x114] sm:$0xf]
  %v2147 = vld [vmem:[%s1 + $0x118] sm:$0xf]
  %v2148 = vld [vmem:[%s1 + $0x11c] sm:$0xf]
  %v2149 = vld [vmem:[%s1 + $0x120] sm:$0xf]
  %v2150 = vld [vmem:[%s1 + $0x124] sm:$0xf]
  %v2151 = vld [vmem:[%s1 + $0x128] sm:$0xf]
  %v2152 = vld [vmem:[%s1 + $0x12c] sm:$0xf]
  %v2153 = vld [vmem:[%s1 + $0x130] sm:$0xf]
  %v2154 = vld [vmem:[%s1 + $0x134] sm:$0xf]
  %v2155 = vld [vmem:[%s1 + $0x138] sm:$0xf]
  %v2156 = vld [vmem:[%s1 + $0x13c] sm:$0xf]
  %v2157 = vld [vmem:[%s1 + $0x140] sm:$0xf]
  %v2158 = vld [vmem:[%s1 + $0x144] sm:$0xf]
  %v2159 = vld [vmem:[%s1 + $0x148] sm:$0xf]
  %v2160 = vld [vmem:[%s1 + $0x14c] sm:$0xf]
  %v2161 = vld [vmem:[%s1 + $0x150] sm:$0xf]
  %v2162 = vld [vmem:[%s1 + $0x154] sm:$0xf]
  %v2163 = vld [vmem:[%s1 + $0x158] sm:$0xf]
  %v2164 = vld [vmem:[%s1 + $0x15c] sm:$0xf]
  %v2165 = vld [vmem:[%s1 + $0x160] sm:$0xf]
  %v2166 = vld [vmem:[%s1 + $0x164] sm:$0xf]
  %v2167 = vld [vmem:[%s1 + $0x168] sm:$0xf]
  %v2168 = vld [vmem:[%s1 + $0x16c] sm:$0xf]
  %v2169 = vld [vmem:[%s1 + $0x170] sm:$0xf]
  %v2170 = vld [vmem:[%s1 + $0x174] sm:$0xf]
  %v2171 = vld [vmem:[%s1 + $0x178] sm:$0xf]
  %v2172 = vld [vmem:[%s1 + $0x17c] sm:$0xf]
  %v2173 = vld [vmem:[%s1 + $0x180] sm:$0xf]
  %v2174 = vld [vmem:[%s1 + $0x184] sm:$0xf]
  %v2175 = vld [vmem:[%s1 + $0x188] sm:$0xf]
  %v2176 = vld [vmem:[%s1 + $0x18c] sm:$0xf]
  %v2177 = vld [vmem:[%s1 + $0x190] sm:$0xf]
  %v2178 = vld [vmem:[%s1 + $0x194] sm:$0xf]
  %v2179 = vld [vmem:[%s1 + $0x198] sm:$0xf]
  %v2180 = vld [vmem:[%s1 + $0x19c] sm:$0xf]
  %v2181 = vld [vmem:[%s1 + $0x1a0] sm:$0xf]
  %v2182 = vld [vmem:[%s1 + $0x1a4] sm:$0xf]
  %v2183 = vld [vmem:[%s1 + $0x1a8] sm:$0xf]
  %v2184 = vld [vmem:[%s1 + $0x1ac] sm:$0xf]
  %v2185 = vld [vmem:[%s1 + $0x1b0] sm:$0xf]
  %v2186 = vld [vmem:[%s1 + $0x1b4] sm:$0xf]
  %v2187 = vld [vmem:[%s1 + $0x1b8] sm:$0xf]
  %v2188 = vld [vmem:[%s1 + $0x1bc] sm:$0xf]
  %v2189 = vld [vmem:[%s1 + $0x1c0] sm:$0xf]
  %v2190 = vld [vmem:[%s1 + $0x1c4] sm:$0xf]
  %v2191 = vld [vmem:[%s1 + $0x1c8] sm:$0xf]
  %v2192 = vld [vmem:[%s1 + $0x1cc] sm:$0xf]
  %v2193 = vld [vmem:[%s1 + $0x1d0] sm:$0xf]
  %v2194 = vld [vmem:[%s1 + $0x1d4] sm:$0xf]
  %v2195 = vld [vmem:[%s1 + $0x1d8] sm:$0xf]
  %v2196 = vld [vmem:[%s1 + $0x1dc] sm:$0xf]
  %v2197 = vld [vmem:[%s1 + $0x1e0] sm:$0xf]
  %v2198 = vld [vmem:[%s1 + $0x1e4] sm:$0xf]
  %v2199 = vld [vmem:[%s1 + $0x1e8] sm:$0xf]
  %v2200 = vld [vmem:[%s1 + $0x1ec] sm:$0xf]
  %v2201 = vld [vmem:[%s1 + $0x1f0] sm:$0xf]
  %v2202 = vld [vmem:[%s1 + $0x1f4] sm:$0xf]
  %v2203 = vld [vmem:[%s1 + $0x1f8] sm:$0xf]
  %v2204 = vld [vmem:[%s1 + $0x1fc] sm:$0xf]
  %v2205 = vld [vmem:[%s1 + $0x200] sm:$0xf]
  %v2206 = vld [vmem:[%s1 + $0x204] sm:$0xf]
  %v2207 = vld [vmem:[%s1 + $0x208] sm:$0xf]
  %v2208 = vld [vmem:[%s1 + $0x20c] sm:$0xf]
  %v2209 = vld [vmem:[%s1 + $0x210] sm:$0xf]
  %v2210 = vld [vmem:[%s1 + $0x214] sm:$0xf]
  %v2211 = vld [vmem:[%s1 + $0x218] sm:$0xf]
  %v2212 = vld [vmem:[%s1 + $0x21c] sm:$0xf]
  %v2213 = vld [vmem:[%s1 + $0x220] sm:$0xf]
  %v2214 = vld [vmem:[%s1 + $0x224] sm:$0xf]
  %v2215 = vld [vmem:[%s1 + $0x228] sm:$0xf]
  %v2216 = vld [vmem:[%s1 + $0x22c] sm:$0xf]
  %v2217 = vld [vmem:[%s1 + $0x230] sm:$0xf]
  %v2218 = vld [vmem:[%s1 + $0x234] sm:$0xf]
  %v2219 = vld [vmem:[%s1 + $0x238] sm:$0xf]
  %v2220 = vld [vmem:[%s1 + $0x23c] sm:$0xf]
  %v2221 = vld [vmem:[%s1 + $0x240] sm:$0xf]
  %v2222 = vld [vmem:[%s1 + $0x244] sm:$0xf]
  %v2223 = vld [vmem:[%s1 + $0x248] sm:$0xf]
  %v2224 = vld [vmem:[%s1 + $0x24c] sm:$0xf]
  %v2225 = vld [vmem:[%s1 + $0x250] sm:$0xf]
  %v2226 = vld [vmem:[%s1 + $0x254] sm:$0xf]
  %v2227 = vld [vmem:[%s1 + $0x258] sm:$0xf]
  %v2228 = vld [vmem:[%s1 + $0x25c] sm:$0xf]
  %v2229 = vld [vmem:[%s1 + $0x260] sm:$0xf]
  %v2230 = vld [vmem:[%s1 + $0x264] sm:$0xf]
  %v2231 = vld [vmem:[%s1 + $0x268] sm:$0xf]
  %v2232 = vld [vmem:[%s1 + $0x26c] sm:$0xf]
  %v2233 = vld [vmem:[%s1 + $0x270] sm:$0xf]
  %v2234 = vld [vmem:[%s1 + $0x274] sm:$0xf]
  %v2235 = vld [vmem:[%s1 + $0x278] sm:$0xf]
  %v2236 = vld [vmem:[%s1 + $0x27c] sm:$0xf]
  %v2237 = vld [vmem:[%s1 + $0x280] sm:$0xf]
  %v2238 = vld [vmem:[%s1 + $0x284] sm:$0xf]
  %v2239 = vld [vmem:[%s1 + $0x288] sm:$0xf]
  %v2240 = vld [vmem:[%s1 + $0x28c] sm:$0xf]
  %v2241 = vld [vmem:[%s1 + $0x290] sm:$0xf]
  %v2242 = vld [vmem:[%s1 + $0x294] sm:$0xf]
  %v2243 = vld [vmem:[%s1 + $0x298] sm:$0xf]
  %v2244 = vld [vmem:[%s1 + $0x29c] sm:$0xf]
  %v2245 = vld [vmem:[%s1 + $0x2a0] sm:$0xf]
  %v2246 = vld [vmem:[%s1 + $0x2a4] sm:$0xf]
  %v2247 = vld [vmem:[%s1 + $0x2a8] sm:$0xf]
  %v2248 = vld [vmem:[%s1 + $0x2ac] sm:$0xf]
  %v2249 = vld [vmem:[%s1 + $0x2b0] sm:$0xf]
  %v2250 = vld [vmem:[%s1 + $0x2b4] sm:$0xf]
  %v2251 = vld [vmem:[%s1 + $0x2b8] sm:$0xf]
  %v2252 = vld [vmem:[%s1 + $0x2bc] sm:$0xf]
  %v2253 = vld [vmem:[%s1 + $0x2c0] sm:$0xf]
  %v2254 = vld [vmem:[%s1 + $0x2c4] sm:$0xf]
  %v2255 = vld [vmem:[%s1 + $0x2c8] sm:$0xf]
  %v2256 = vld [vmem:[%s1 + $0x2cc] sm:$0xf]
  %v2257 = vld [vmem:[%s1 + $0x2d0] sm:$0xf]
  %v2258 = vld [vmem:[%s1 + $0x2d4] sm:$0xf]
  %v2259 = vld [vmem:[%s1 + $0x2d8] sm:$0xf]
  %v2260 = vld [vmem:[%s1 + $0x2dc] sm:$0xf]
  %v2261 = vld [vmem:[%s1 + $0x2e0] sm:$0xf]
  %v2262 = vld [vmem:[%s1 + $0x2e4] sm:$0xf]
  %v2263 = vld [vmem:[%s1 + $0x2e8] sm:$0xf]
  %v2264 = vld [vmem:[%s1 + $0x2ec] sm:$0xf]
  %v2265 = vld [vmem:[%s1 + $0x2f0] sm:$0xf]
  %v2266 = vld [vmem:[%s1 + $0x2f4] sm:$0xf]
  %v2267 = vld [vmem:[%s1 + $0x2f8] sm:$0xf]
  %v2268 = vld [vmem:[%s1 + $0x2fc] sm:$0xf]
  %v2269 = vld [vmem:[%s1 + $0x300] sm:$0xf]
  %v2270 = vld [vmem:[%s1 + $0x304] sm:$0xf]
  %v2271 = vld [vmem:[%s1 + $0x308] sm:$0xf]
  %v2272 = vld [vmem:[%s1 + $0x30c] sm:$0xf]
  %v2273 = vld [vmem:[%s1 + $0x310] sm:$0xf]
  %v2274 = vld [vmem:[%s1 + $0x314] sm:$0xf]
  %v2275 = vld [vmem:[%s1 + $0x318] sm:$0xf]
  %v2276 = vld [vmem:[%s1 + $0x31c] sm:$0xf]
  %v2277 = vld [vmem:[%s1 + $0x320] sm:$0xf]
  %v2278 = vld [vmem:[%s1 + $0x324] sm:$0xf]
  %v2279 = vld [vmem:[%s1 + $0x328] sm:$0xf]
  %v2280 = vld [vmem:[%s1 + $0x32c] sm:$0xf]
  %v2281 = vld [vmem:[%s1 + $0x330] sm:$0xf]
  %v2282 = vld [vmem:[%s1 + $0x334] sm:$0xf]
  %v2283 = vld [vmem:[%s1 + $0x338] sm:$0xf]
  %v2284 = vld [vmem:[%s1 + $0x33c] sm:$0xf]
  %v2285 = vld [vmem:[%s1 + $0x340] sm:$0xf]
  %v2286 = vld [vmem:[%s1 + $0x344] sm:$0xf]
  %v2287 = vld [vmem:[%s1 + $0x348] sm:$0xf]
  %v2288 = vld [vmem:[%s1 + $0x34c] sm:$0xf]
  %v2289 = vld [vmem:[%s1 + $0x350] sm:$0xf]
  %v2290 = vld [vmem:[%s1 + $0x354] sm:$0xf]
  %v2291 = vld [vmem:[%s1 + $0x358] sm:$0xf]
  %v2292 = vld [vmem:[%s1 + $0x35c] sm:$0xf]
  %v2293 = vld [vmem:[%s1 + $0x360] sm:$0xf]
  %v2294 = vld [vmem:[%s1 + $0x364] sm:$0xf]
  %v2295 = vld [vmem:[%s1 + $0x368] sm:$0xf]
  %v2296 = vld [vmem:[%s1 + $0x36c] sm:$0xf]
  %v2297 = vld [vmem:[%s1 + $0x370] sm:$0xf]
  %v2298 = vld [vmem:[%s1 + $0x374] sm:$0xf]
  %v2299 = vld [vmem:[%s1 + $0x378] sm:$0xf]
  %v2300 = vld [vmem:[%s1 + $0x37c] sm:$0xf]
  %v2301 = vld [vmem:[%s1 + $0x380] sm:$0xf]
  %v2302 = vld [vmem:[%s1 + $0x384] sm:$0xf]
  %v2303 = vld [vmem:[%s1 + $0x388] sm:$0xf]
  %v2304 = vld [vmem:[%s1 + $0x38c] sm:$0xf]
  %v2305 = vld [vmem:[%s1 + $0x390] sm:$0xf]
  %v2306 = vld [vmem:[%s1 + $0x394] sm:$0xf]
  %v2307 = vld [vmem:[%s1 + $0x398] sm:$0xf]
  %v2308 = vld [vmem:[%s1 + $0x39c] sm:$0xf]
  %v2309 = vld [vmem:[%s1 + $0x3a0] sm:$0xf]
  %v2310 = vld [vmem:[%s1 + $0x3a4] sm:$0xf]
  %v2311 = vld [vmem:[%s1 + $0x3a8] sm:$0xf]
  %v2312 = vld [vmem:[%s1 + $0x3ac] sm:$0xf]
  %v2313 = vld [vmem:[%s1 + $0x3b0] sm:$0xf]
  %v2314 = vld [vmem:[%s1 + $0x3b4] sm:$0xf]
  %v2315 = vld [vmem:[%s1 + $0x3b8] sm:$0xf]
  %v2316 = vld [vmem:[%s1 + $0x3bc] sm:$0xf]
  %v2317 = vld [vmem:[%s1 + $0x3c0] sm:$0xf]
  %v2318 = vld [vmem:[%s1 + $0x3c4] sm:$0xf]
  %v2319 = vld [vmem:[%s1 + $0x3c8] sm:$0xf]
  %v2320 = vld [vmem:[%s1 + $0x3cc] sm:$0xf]
  %v2321 = vld [vmem:[%s1 + $0x3d0] sm:$0xf]
  %v2322 = vld [vmem:[%s1 + $0x3d4] sm:$0xf]
  %v2323 = vld [vmem:[%s1 + $0x3d8] sm:$0xf]
  %v2324 = vld [vmem:[%s1 + $0x3dc] sm:$0xf]
  %v2325 = vld [vmem:[%s1 + $0x3e0] sm:$0xf]
  %v2326 = vld [vmem:[%s1 + $0x3e4] sm:$0xf]
  %v2327 = vld [vmem:[%s1 + $0x3e8] sm:$0xf]
  %v2328 = vld [vmem:[%s1 + $0x3ec] sm:$0xf]
  %v2329 = vld [vmem:[%s1 + $0x3f0] sm:$0xf]
  %v2330 = vld [vmem:[%s1 + $0x3f4] sm:$0xf]
  %v2331 = vld [vmem:[%s1 + $0x3f8] sm:$0xf]
  %v2332 = vld [vmem:[%s1 + $0x3fc] sm:$0xf]
  %v2589 = vunpack.c.l.b16 %v2077
  %v2590 = vunpack.c.l.b16 %v2078
  %v2591 = vunpack.c.l.b16 %v2079
  %v2592 = vunpack.c.l.b16 %v2080
  %v2593 = vunpack.c.l.b16 %v2081
  %v2594 = vunpack.c.l.b16 %v2082
  %v2595 = vunpack.c.l.b16 %v2083
  %v2596 = vunpack.c.l.b16 %v2084
  %v2597 = vunpack.c.l.b16 %v2085
  %v2598 = vunpack.c.l.b16 %v2086
  %v2599 = vunpack.c.l.b16 %v2087
  %v2600 = vunpack.c.l.b16 %v2088
  %v2601 = vunpack.c.l.b16 %v2089
  %v2602 = vunpack.c.l.b16 %v2090
  %v2603 = vunpack.c.l.b16 %v2091
  %v2604 = vunpack.c.l.b16 %v2092
  %v2605 = vunpack.c.l.b16 %v2093
  %v2606 = vunpack.c.l.b16 %v2094
  %v2607 = vunpack.c.l.b16 %v2095
  %v2608 = vunpack.c.l.b16 %v2096
  %v2609 = vunpack.c.l.b16 %v2097
  %v2610 = vunpack.c.l.b16 %v2098
  %v2611 = vunpack.c.l.b16 %v2099
  %v2612 = vunpack.c.l.b16 %v2100
  %v2613 = vunpack.c.l.b16 %v2101
  %v2614 = vunpack.c.l.b16 %v2102
  %v2615 = vunpack.c.l.b16 %v2103
  %v2616 = vunpack.c.l.b16 %v2104
  %v2617 = vunpack.c.l.b16 %v2105
  %v2618 = vunpack.c.l.b16 %v2106
  %v2619 = vunpack.c.l.b16 %v2107
  %v2620 = vunpack.c.l.b16 %v2108
  %v2621 = vunpack.c.l.b16 %v2109
  %v2622 = vunpack.c.l.b16 %v2110
  %v2623 = vunpack.c.l.b16 %v2111
  %v2624 = vunpack.c.l.b16 %v2112
  %v2625 = vunpack.c.l.b16 %v2113
  %v2626 = vunpack.c.l.b16 %v2114
  %v2627 = vunpack.c.l.b16 %v2115
  %v2628 = vunpack.c.l.b16 %v2116
  %v2629 = vunpack.c.l.b16 %v2117
  %v2630 = vunpack.c.l.b16 %v2118
  %v2631 = vunpack.c.l.b16 %v2119
  %v2632 = vunpack.c.l.b16 %v2120
  %v2633 = vunpack.c.l.b16 %v2121
  %v2634 = vunpack.c.l.b16 %v2122
  %v2635 = vunpack.c.l.b16 %v2123
  %v2636 = vunpack.c.l.b16 %v2124
  %v2637 = vunpack.c.l.b16 %v2125
  %v2638 = vunpack.c.l.b16 %v2126
  %v2639 = vunpack.c.l.b16 %v2127
  %v2640 = vunpack.c.l.b16 %v2128
  %v2641 = vunpack.c.l.b16 %v2129
  %v2642 = vunpack.c.l.b16 %v2130
  %v2643 = vunpack.c.l.b16 %v2131
  %v2644 = vunpack.c.l.b16 %v2132
  %v2645 = vunpack.c.l.b16 %v2133
  %v2646 = vunpack.c.l.b16 %v2134
  %v2647 = vunpack.c.l.b16 %v2135
  %v2648 = vunpack.c.l.b16 %v2136
  %v2649 = vunpack.c.l.b16 %v2137
  %v2650 = vunpack.c.l.b16 %v2138
  %v2651 = vunpack.c.l.b16 %v2139
  %v2652 = vunpack.c.l.b16 %v2140
  %v2653 = vunpack.c.l.b16 %v2141
  %v2654 = vunpack.c.l.b16 %v2142
  %v2655 = vunpack.c.l.b16 %v2143
  %v2656 = vunpack.c.l.b16 %v2144
  %v2657 = vunpack.c.l.b16 %v2145
  %v2658 = vunpack.c.l.b16 %v2146
  %v2659 = vunpack.c.l.b16 %v2147
  %v2660 = vunpack.c.l.b16 %v2148
  %v2661 = vunpack.c.l.b16 %v2149
  %v2662 = vunpack.c.l.b16 %v2150
  %v2663 = vunpack.c.l.b16 %v2151
  %v2664 = vunpack.c.l.b16 %v2152
  %v2665 = vunpack.c.l.b16 %v2153
  %v2666 = vunpack.c.l.b16 %v2154
  %v2667 = vunpack.c.l.b16 %v2155
  %v2668 = vunpack.c.l.b16 %v2156
  %v2669 = vunpack.c.l.b16 %v2157
  %v2670 = vunpack.c.l.b16 %v2158
  %v2671 = vunpack.c.l.b16 %v2159
  %v2672 = vunpack.c.l.b16 %v2160
  %v2673 = vunpack.c.l.b16 %v2161
  %v2674 = vunpack.c.l.b16 %v2162
  %v2675 = vunpack.c.l.b16 %v2163
  %v2676 = vunpack.c.l.b16 %v2164
  %v2677 = vunpack.c.l.b16 %v2165
  %v2678 = vunpack.c.l.b16 %v2166
  %v2679 = vunpack.c.l.b16 %v2167
  %v2680 = vunpack.c.l.b16 %v2168
  %v2681 = vunpack.c.l.b16 %v2169
  %v2682 = vunpack.c.l.b16 %v2170
  %v2683 = vunpack.c.l.b16 %v2171
  %v2684 = vunpack.c.l.b16 %v2172
  %v2685 = vunpack.c.l.b16 %v2173
  %v2686 = vunpack.c.l.b16 %v2174
  %v2687 = vunpack.c.l.b16 %v2175
  %v2688 = vunpack.c.l.b16 %v2176
  %v2689 = vunpack.c.l.b16 %v2177
  %v2690 = vunpack.c.l.b16 %v2178
  %v2691 = vunpack.c.l.b16 %v2179
  %v2692 = vunpack.c.l.b16 %v2180
  %v2693 = vunpack.c.l.b16 %v2181
  %v2694 = vunpack.c.l.b16 %v2182
  %v2695 = vunpack.c.l.b16 %v2183
  %v2696 = vunpack.c.l.b16 %v2184
  %v2697 = vunpack.c.l.b16 %v2185
  %v2698 = vunpack.c.l.b16 %v2186
  %v2699 = vunpack.c.l.b16 %v2187
  %v2700 = vunpack.c.l.b16 %v2188
  %v2701 = vunpack.c.l.b16 %v2189
  %v2702 = vunpack.c.l.b16 %v2190
  %v2703 = vunpack.c.l.b16 %v2191
  %v2704 = vunpack.c.l.b16 %v2192
  %v2705 = vunpack.c.l.b16 %v2193
  %v2706 = vunpack.c.l.b16 %v2194
  %v2707 = vunpack.c.l.b16 %v2195
  %v2708 = vunpack.c.l.b16 %v2196
  %v2709 = vunpack.c.l.b16 %v2197
  %v2710 = vunpack.c.l.b16 %v2198
  %v2711 = vunpack.c.l.b16 %v2199
  %v2712 = vunpack.c.l.b16 %v2200
  %v2713 = vunpack.c.l.b16 %v2201
  %v2714 = vunpack.c.l.b16 %v2202
  %v2715 = vunpack.c.l.b16 %v2203
  %v2716 = vunpack.c.l.b16 %v2204
  %v2717 = vunpack.c.l.b16 %v2205
  %v2718 = vunpack.c.l.b16 %v2206
  %v2719 = vunpack.c.l.b16 %v2207
  %v2720 = vunpack.c.l.b16 %v2208
  %v2721 = vunpack.c.l.b16 %v2209
  %v2722 = vunpack.c.l.b16 %v2210
  %v2723 = vunpack.c.l.b16 %v2211
  %v2724 = vunpack.c.l.b16 %v2212
  %v2725 = vunpack.c.l.b16 %v2213
  %v2726 = vunpack.c.l.b16 %v2214
  %v2727 = vunpack.c.l.b16 %v2215
  %v2728 = vunpack.c.l.b16 %v2216
  %v2729 = vunpack.c.l.b16 %v2217
  %v2730 = vunpack.c.l.b16 %v2218
  %v2731 = vunpack.c.l.b16 %v2219
  %v2732 = vunpack.c.l.b16 %v2220
  %v2733 = vunpack.c.l.b16 %v2221
  %v2734 = vunpack.c.l.b16 %v2222
  %v2735 = vunpack.c.l.b16 %v2223
  %v2736 = vunpack.c.l.b16 %v2224
  %v2737 = vunpack.c.l.b16 %v2225
  %v2738 = vunpack.c.l.b16 %v2226
  %v2739 = vunpack.c.l.b16 %v2227
  %v2740 = vunpack.c.l.b16 %v2228
  %v2741 = vunpack.c.l.b16 %v2229
  %v2742 = vunpack.c.l.b16 %v2230
  %v2743 = vunpack.c.l.b16 %v2231
  %v2744 = vunpack.c.l.b16 %v2232
  %v2745 = vunpack.c.l.b16 %v2233
  %v2746 = vunpack.c.l.b16 %v2234
  %v2747 = vunpack.c.l.b16 %v2235
  %v2748 = vunpack.c.l.b16 %v2236
  %v2749 = vunpack.c.l.b16 %v2237
  %v2750 = vunpack.c.l.b16 %v2238
  %v2751 = vunpack.c.l.b16 %v2239
  %v2752 = vunpack.c.l.b16 %v2240
  %v2753 = vunpack.c.l.b16 %v2241
  %v2754 = vunpack.c.l.b16 %v2242
  %v2755 = vunpack.c.l.b16 %v2243
  %v2756 = vunpack.c.l.b16 %v2244
  %v2757 = vunpack.c.l.b16 %v2245
  %v2758 = vunpack.c.l.b16 %v2246
  %v2759 = vunpack.c.l.b16 %v2247
  %v2760 = vunpack.c.l.b16 %v2248
  %v2761 = vunpack.c.l.b16 %v2249
  %v2762 = vunpack.c.l.b16 %v2250
  %v2763 = vunpack.c.l.b16 %v2251
  %v2764 = vunpack.c.l.b16 %v2252
  %v2765 = vunpack.c.l.b16 %v2253
  %v2766 = vunpack.c.l.b16 %v2254
  %v2767 = vunpack.c.l.b16 %v2255
  %v2768 = vunpack.c.l.b16 %v2256
  %v2769 = vunpack.c.l.b16 %v2257
  %v2770 = vunpack.c.l.b16 %v2258
  %v2771 = vunpack.c.l.b16 %v2259
  %v2772 = vunpack.c.l.b16 %v2260
  %v2773 = vunpack.c.l.b16 %v2261
  %v2774 = vunpack.c.l.b16 %v2262
  %v2775 = vunpack.c.l.b16 %v2263
  %v2776 = vunpack.c.l.b16 %v2264
  %v2777 = vunpack.c.l.b16 %v2265
  %v2778 = vunpack.c.l.b16 %v2266
  %v2779 = vunpack.c.l.b16 %v2267
  %v2780 = vunpack.c.l.b16 %v2268
  %v2781 = vunpack.c.l.b16 %v2269
  %v2782 = vunpack.c.l.b16 %v2270
  %v2783 = vunpack.c.l.b16 %v2271
  %v2784 = vunpack.c.l.b16 %v2272
  %v2785 = vunpack.c.l.b16 %v2273
  %v2786 = vunpack.c.l.b16 %v2274
  %v2787 = vunpack.c.l.b16 %v2275
  %v2788 = vunpack.c.l.b16 %v2276
  %v2789 = vunpack.c.l.b16 %v2277
  %v2790 = vunpack.c.l.b16 %v2278
  %v2791 = vunpack.c.l.b16 %v2279
  %v2792 = vunpack.c.l.b16 %v2280
  %v2793 = vunpack.c.l.b16 %v2281
  %v2794 = vunpack.c.l.b16 %v2282
  %v2795 = vunpack.c.l.b16 %v2283
  %v2796 = vunpack.c.l.b16 %v2284
  %v2797 = vunpack.c.l.b16 %v2285
  %v2798 = vunpack.c.l.b16 %v2286
  %v2799 = vunpack.c.l.b16 %v2287
  %v2800 = vunpack.c.l.b16 %v2288
  %v2801 = vunpack.c.l.b16 %v2289
  %v2802 = vunpack.c.l.b16 %v2290
  %v2803 = vunpack.c.l.b16 %v2291
  %v2804 = vunpack.c.l.b16 %v2292
  %v2805 = vunpack.c.l.b16 %v2293
  %v2806 = vunpack.c.l.b16 %v2294
  %v2807 = vunpack.c.l.b16 %v2295
  %v2808 = vunpack.c.l.b16 %v2296
  %v2809 = vunpack.c.l.b16 %v2297
  %v2810 = vunpack.c.l.b16 %v2298
  %v2811 = vunpack.c.l.b16 %v2299
  %v2812 = vunpack.c.l.b16 %v2300
  %v2813 = vunpack.c.l.b16 %v2301
  %v2814 = vunpack.c.l.b16 %v2302
  %v2815 = vunpack.c.l.b16 %v2303
  %v2816 = vunpack.c.l.b16 %v2304
  %v2817 = vunpack.c.l.b16 %v2305
  %v2818 = vunpack.c.l.b16 %v2306
  %v2819 = vunpack.c.l.b16 %v2307
  %v2820 = vunpack.c.l.b16 %v2308
  %v2821 = vunpack.c.l.b16 %v2309
  %v2822 = vunpack.c.l.b16 %v2310
  %v2823 = vunpack.c.l.b16 %v2311
  %v2824 = vunpack.c.l.b16 %v2312
  %v2825 = vunpack.c.l.b16 %v2313
  %v2826 = vunpack.c.l.b16 %v2314
  %v2827 = vunpack.c.l.b16 %v2315
  %v2828 = vunpack.c.l.b16 %v2316
  %v2829 = vunpack.c.l.b16 %v2317
  %v2830 = vunpack.c.l.b16 %v2318
  %v2831 = vunpack.c.l.b16 %v2319
  %v2832 = vunpack.c.l.b16 %v2320
  %v2833 = vunpack.c.l.b16 %v2321
  %v2834 = vunpack.c.l.b16 %v2322
  %v2835 = vunpack.c.l.b16 %v2323
  %v2836 = vunpack.c.l.b16 %v2324
  %v2837 = vunpack.c.l.b16 %v2325
  %v2838 = vunpack.c.l.b16 %v2326
  %v2839 = vunpack.c.l.b16 %v2327
  %v2840 = vunpack.c.l.b16 %v2328
  %v2841 = vunpack.c.l.b16 %v2329
  %v2842 = vunpack.c.l.b16 %v2330
  %v2843 = vunpack.c.l.b16 %v2331
  %v2844 = vunpack.c.l.b16 %v2332
  %v2845 = vpack.c.b16 %v2590, %v2589
  %v2846 = vpack.c.b16 %v2592, %v2591
  %v2847 = vpack.c.b16 %v2594, %v2593
  %v2848 = vpack.c.b16 %v2596, %v2595
  %v2849 = vpack.c.b16 %v2598, %v2597
  %v2850 = vpack.c.b16 %v2600, %v2599
  %v2851 = vpack.c.b16 %v2602, %v2601
  %v2852 = vpack.c.b16 %v2604, %v2603
  %v2853 = vpack.c.b16 %v2606, %v2605
  %v2854 = vpack.c.b16 %v2608, %v2607
  %v2855 = vpack.c.b16 %v2610, %v2609
  %v2856 = vpack.c.b16 %v2612, %v2611
  %v2857 = vpack.c.b16 %v2614, %v2613
  %v2858 = vpack.c.b16 %v2616, %v2615
  %v2859 = vpack.c.b16 %v2618, %v2617
  %v2860 = vpack.c.b16 %v2620, %v2619
  %v2861 = vpack.c.b16 %v2622, %v2621
  %v2862 = vpack.c.b16 %v2624, %v2623
  %v2863 = vpack.c.b16 %v2626, %v2625
  %v2864 = vpack.c.b16 %v2628, %v2627
  %v2865 = vpack.c.b16 %v2630, %v2629
  %v2866 = vpack.c.b16 %v2632, %v2631
  %v2867 = vpack.c.b16 %v2634, %v2633
  %v2868 = vpack.c.b16 %v2636, %v2635
  %v2869 = vpack.c.b16 %v2638, %v2637
  %v2870 = vpack.c.b16 %v2640, %v2639
  %v2871 = vpack.c.b16 %v2642, %v2641
  %v2872 = vpack.c.b16 %v2644, %v2643
  %v2873 = vpack.c.b16 %v2646, %v2645
  %v2874 = vpack.c.b16 %v2648, %v2647
  %v2875 = vpack.c.b16 %v2650, %v2649
  %v2876 = vpack.c.b16 %v2652, %v2651
  %v2877 = vpack.c.b16 %v2654, %v2653
  %v2878 = vpack.c.b16 %v2656, %v2655
  %v2879 = vpack.c.b16 %v2658, %v2657
  %v2880 = vpack.c.b16 %v2660, %v2659
  %v2881 = vpack.c.b16 %v2662, %v2661
  %v2882 = vpack.c.b16 %v2664, %v2663
  %v2883 = vpack.c.b16 %v2666, %v2665
  %v2884 = vpack.c.b16 %v2668, %v2667
  %v2885 = vpack.c.b16 %v2670, %v2669
  %v2886 = vpack.c.b16 %v2672, %v2671
  %v2887 = vpack.c.b16 %v2674, %v2673
  %v2888 = vpack.c.b16 %v2676, %v2675
  %v2889 = vpack.c.b16 %v2678, %v2677
  %v2890 = vpack.c.b16 %v2680, %v2679
  %v2891 = vpack.c.b16 %v2682, %v2681
  %v2892 = vpack.c.b16 %v2684, %v2683
  %v2893 = vpack.c.b16 %v2686, %v2685
  %v2894 = vpack.c.b16 %v2688, %v2687
  %v2895 = vpack.c.b16 %v2690, %v2689
  %v2896 = vpack.c.b16 %v2692, %v2691
  %v2897 = vpack.c.b16 %v2694, %v2693
  %v2898 = vpack.c.b16 %v2696, %v2695
  %v2899 = vpack.c.b16 %v2698, %v2697
  %v2900 = vpack.c.b16 %v2700, %v2699
  %v2901 = vpack.c.b16 %v2702, %v2701
  %v2902 = vpack.c.b16 %v2704, %v2703
  %v2903 = vpack.c.b16 %v2706, %v2705
  %v2904 = vpack.c.b16 %v2708, %v2707
  %v2905 = vpack.c.b16 %v2710, %v2709
  %v2906 = vpack.c.b16 %v2712, %v2711
  %v2907 = vpack.c.b16 %v2714, %v2713
  %v2908 = vpack.c.b16 %v2716, %v2715
  %v2909 = vpack.c.b16 %v2718, %v2717
  %v2910 = vpack.c.b16 %v2720, %v2719
  %v2911 = vpack.c.b16 %v2722, %v2721
  %v2912 = vpack.c.b16 %v2724, %v2723
  %v2913 = vpack.c.b16 %v2726, %v2725
  %v2914 = vpack.c.b16 %v2728, %v2727
  %v2915 = vpack.c.b16 %v2730, %v2729
  %v2916 = vpack.c.b16 %v2732, %v2731
  %v2917 = vpack.c.b16 %v2734, %v2733
  %v2918 = vpack.c.b16 %v2736, %v2735
  %v2919 = vpack.c.b16 %v2738, %v2737
  %v2920 = vpack.c.b16 %v2740, %v2739
  %v2921 = vpack.c.b16 %v2742, %v2741
  %v2922 = vpack.c.b16 %v2744, %v2743
  %v2923 = vpack.c.b16 %v2746, %v2745
  %v2924 = vpack.c.b16 %v2748, %v2747
  %v2925 = vpack.c.b16 %v2750, %v2749
  %v2926 = vpack.c.b16 %v2752, %v2751
  %v2927 = vpack.c.b16 %v2754, %v2753
  %v2928 = vpack.c.b16 %v2756, %v2755
  %v2929 = vpack.c.b16 %v2758, %v2757
  %v2930 = vpack.c.b16 %v2760, %v2759
  %v2931 = vpack.c.b16 %v2762, %v2761
  %v2932 = vpack.c.b16 %v2764, %v2763
  %v2933 = vpack.c.b16 %v2766, %v2765
  %v2934 = vpack.c.b16 %v2768, %v2767
  %v2935 = vpack.c.b16 %v2770, %v2769
  %v2936 = vpack.c.b16 %v2772, %v2771
  %v2937 = vpack.c.b16 %v2774, %v2773
  %v2938 = vpack.c.b16 %v2776, %v2775
  %v2939 = vpack.c.b16 %v2778, %v2777
  %v2940 = vpack.c.b16 %v2780, %v2779
  %v2941 = vpack.c.b16 %v2782, %v2781
  %v2942 = vpack.c.b16 %v2784, %v2783
  %v2943 = vpack.c.b16 %v2786, %v2785
  %v2944 = vpack.c.b16 %v2788, %v2787
  %v2945 = vpack.c.b16 %v2790, %v2789
  %v2946 = vpack.c.b16 %v2792, %v2791
  %v2947 = vpack.c.b16 %v2794, %v2793
  %v2948 = vpack.c.b16 %v2796, %v2795
  %v2949 = vpack.c.b16 %v2798, %v2797
  %v2950 = vpack.c.b16 %v2800, %v2799
  %v2951 = vpack.c.b16 %v2802, %v2801
  %v2952 = vpack.c.b16 %v2804, %v2803
  %v2953 = vpack.c.b16 %v2806, %v2805
  %v2954 = vpack.c.b16 %v2808, %v2807
  %v2955 = vpack.c.b16 %v2810, %v2809
  %v2956 = vpack.c.b16 %v2812, %v2811
  %v2957 = vpack.c.b16 %v2814, %v2813
  %v2958 = vpack.c.b16 %v2816, %v2815
  %v2959 = vpack.c.b16 %v2818, %v2817
  %v2960 = vpack.c.b16 %v2820, %v2819
  %v2961 = vpack.c.b16 %v2822, %v2821
  %v2962 = vpack.c.b16 %v2824, %v2823
  %v2963 = vpack.c.b16 %v2826, %v2825
  %v2964 = vpack.c.b16 %v2828, %v2827
  %v2965 = vpack.c.b16 %v2830, %v2829
  %v2966 = vpack.c.b16 %v2832, %v2831
  %v2967 = vpack.c.b16 %v2834, %v2833
  %v2968 = vpack.c.b16 %v2836, %v2835
  %v2969 = vpack.c.b16 %v2838, %v2837
  %v2970 = vpack.c.b16 %v2840, %v2839
  %v2971 = vpack.c.b16 %v2842, %v2841
  %v2972 = vpack.c.b16 %v2844, %v2843
  %3101 = vmatprep.subr.bf16.mxu0 0
  %3102 = vmatpush1.bf16.msra.mxu0 %v2845
  %3103 = vmatprep.subr.bf16.mxu0 0
  %3104 = vmatpush1.bf16.msra.mxu0 %v2846
  %3105 = vmatprep.subr.bf16.mxu0 0
  %3106 = vmatpush1.bf16.msra.mxu0 %v2847
  %3107 = vmatprep.subr.bf16.mxu0 0
  %3108 = vmatpush1.bf16.msra.mxu0 %v2848
  %3109 = vmatprep.subr.bf16.mxu0 0
  %3110 = vmatpush1.bf16.msra.mxu0 %v2849
  %3111 = vmatprep.subr.bf16.mxu0 0
  %3112 = vmatpush1.bf16.msra.mxu0 %v2850
  %3113 = vmatprep.subr.bf16.mxu0 0
  %3114 = vmatpush1.bf16.msra.mxu0 %v2851
  %3115 = vmatprep.subr.bf16.mxu0 0
  %3116 = vmatpush1.bf16.msra.mxu0 %v2852
  %3117 = vmatprep.subr.bf16.mxu0 0
  %3118 = vmatpush1.bf16.msra.mxu0 %v2853
  %3119 = vmatprep.subr.bf16.mxu0 0
  %3120 = vmatpush1.bf16.msra.mxu0 %v2854
  %3121 = vmatprep.subr.bf16.mxu0 0
  %3122 = vmatpush1.bf16.msra.mxu0 %v2855
  %3123 = vmatprep.subr.bf16.mxu0 0
  %3124 = vmatpush1.bf16.msra.mxu0 %v2856
  %3125 = vmatprep.subr.bf16.mxu0 0
  %3126 = vmatpush1.bf16.msra.mxu0 %v2857
  %3127 = vmatprep.subr.bf16.mxu0 0
  %3128 = vmatpush1.bf16.msra.mxu0 %v2858
  %3129 = vmatprep.subr.bf16.mxu0 0
  %3130 = vmatpush1.bf16.msra.mxu0 %v2859
  %3131 = vmatprep.subr.bf16.mxu0 0
  %3132 = vmatpush1.bf16.msra.mxu0 %v2860
  %3133 = vmatprep.mubr.bf16.mxu0 %v1685
  %3134 = vmatmul.mubr.bf16.gmra.mrb[0].mxu0 %v1637
  %v3135 = vpop.f32.mrb[0].mxu0
  %v3136 = vadd.f32 0.0, %v3135
  %v3137 = vpop.f32.mrb[0].mxu0
  %v3138 = vpop.f32.mrb[0].mxu0
  %v3139 = vadd.f32 0.0, %v3138
  %v3140 = vpop.f32.mrb[0].mxu0
  %3141 = vmatprep.mubr.bf16.mxu0 %v1686
  %3142 = vmatmul.mubr.bf16.gmra.mrb[0].mxu0 %v1638
  %v3143 = vpop.f32.mrb[0].mxu0
  %v3144 = vadd.f32 0.0, %v3143
  %v3145 = vpop.f32.mrb[0].mxu0
  %v3146 = vpop.f32.mrb[0].mxu0
  %v3147 = vadd.f32 0.0, %v3146
  %v3148 = vpop.f32.mrb[0].mxu0
  %3149 = vmatprep.mubr.bf16.mxu0 %v1687
  %3150 = vmatmul.mubr.bf16.gmra.mrb[0].mxu0 %v1639
  %v3151 = vpop.f32.mrb[0].mxu0
  %v3152 = vadd.f32 0.0, %v3151
  %v3153 = vpop.f32.mrb[0].mxu0
  %v3154 = vpop.f32.mrb[0].mxu0
  %v3155 = vadd.f32 0.0, %v3154
  %v3156 = vpop.f32.mrb[0].mxu0
  %3157 = vmatprep.mubr.bf16.mxu0 %v1688
  %3158 = vmatmul.mubr.bf16.gmra.mrb[0].mxu0 %v1640
  %v3159 = vpop.f32.mrb[0].mxu0
  %v3160 = vadd.f32 0.0, %v3159
  %v3161 = vpop.f32.mrb[0].mxu0
  %v3162 = vpop.f32.mrb[0].mxu0
  %v3163 = vadd.f32 0.0, %v3162
  %v3164 = vpop.f32.mrb[0].mxu0
  %3165 = vmatprep.mubr.bf16.mxu0 %v1689
  %3166 = vmatmul.mubr.bf16.gmra.mrb[0].mxu0 %v1641
  %v3167 = vpop.f32.mrb[0].mxu0
  %v3168 = vadd.f32 0.0, %v3167
  %v3169 = vpop.f32.mrb[0].mxu0
  %v3170 = vpop.f32.mrb[0].mxu0
  %v3171 = vadd.f32 0.0, %v3170
  %v3172 = vpop.f32.mrb[0].mxu0
  %3173 = vmatprep.mubr.bf16.mxu0 %v1690
  %3174 = vmatmul.mubr.bf16.gmra.mrb[0].mxu0 %v1642
  %v3175 = vpop.f32.mrb[0].mxu0
  %v3176 = vadd.f32 0.0, %v3175
  %v3177 = vpop.f32.mrb[0].mxu0
  %v3178 = vpop.f32.mrb[0].mxu0
  %v3179 = vadd.f32 0.0, %v3178
  %v3180 = vpop.f32.mrb[0].mxu0
  %3181 = vmatprep.mubr.bf16.mxu0 %v1691
  %3182 = vmatmul.mubr.bf16.gmra.mrb[0].mxu0 %v1643
  %v3183 = vpop.f32.mrb[0].mxu0
  %v3184 = vadd.f32 0.0, %v3183
  %v3185 = vpop.f32.mrb[0].mxu0
  %v3186 = vpop.f32.mrb[0].mxu0
  %v3187 = vadd.f32 0.0, %v3186
  %v3188 = vpop.f32.mrb[0].mxu0
  %3189 = vmatprep.mubr.bf16.mxu0 %v1692
  %3190 = vmatmul.mubr.bf16.gmra.mrb[0].mxu0 %v1644
  %v3191 = vpop.f32.mrb[0].mxu0
  %v3192 = vadd.f32 0.0, %v3191
  %v3193 = vpop.f32.mrb[0].mxu0
  %v3194 = vpop.f32.mrb[0].mxu0
  %v3195 = vadd.f32 0.0, %v3194
  %v3196 = vpop.f32.mrb[0].mxu0
  %3197 = vdwg.mxu0
  %3198 = vmatprep.subr.bf16.mxu0 0
  %3199 = vmatpush1.bf16.msra.mxu0 %v2861
  %3200 = vmatprep.subr.bf16.mxu0 0
  %3201 = vmatpush1.bf16.msra.mxu0 %v2862
  %3202 = vmatprep.subr.bf16.mxu0 0
  %3203 = vmatpush1.bf16.msra.mxu0 %v2863
  %3204 = vmatprep.subr.bf16.mxu0 0
  %3205 = vmatpush1.bf16.msra.mxu0 %v2864
  %3206 = vmatprep.subr.bf16.mxu0 0
  %3207 = vmatpush1.bf16.msra.mxu0 %v2865
  %3208 = vmatprep.subr.bf16.mxu0 0
  %3209 = vmatpush1.bf16.msra.mxu0 %v2866
  %3210 = vmatprep.subr.bf16.mxu0 0
  %3211 = vmatpush1.bf16.msra.mxu0 %v2867
  %3212 = vmatprep.subr.bf16.mxu0 0
  %3213 = vmatpush1.bf16.msra.mxu0 %v2868
  %3214 = vmatprep.subr.bf16.mxu0 0
  %3215 = vmatpush1.bf16.msra.mxu0 %v2869
  %3216 = vmatprep.subr.bf16.mxu0 0
  %3217 = vmatpush1.bf16.msra.mxu0 %v2870
  %3218 = vmatprep.subr.bf16.mxu0 0
  %3219 = vmatpush1.bf16.msra.mxu0 %v2871
  %3220 = vmatprep.subr.bf16.mxu0 0
  %3221 = vmatpush1.bf16.msra.mxu0 %v2872
  %3222 = vmatprep.subr.bf16.mxu0 0
  %3223 = vmatpush1.bf16.msra.mxu0 %v2873
  %3224 = vmatprep.subr.bf16.mxu0 0
  %3225 = vmatpush1.bf16.msra.mxu0 %v2874
  %3226 = vmatprep.subr.bf16.mxu0 0
  %3227 = vmatpush1.bf16.msra.mxu0 %v2875
  %3228 = vmatprep.subr.bf16.mxu0 0
  %3229 = vmatpush1.bf16.msra.mxu0 %v2876
  %3230 = vmatprep.mubr.bf16.mxu0 %v1749
  %3231 = vmatmul.mubr.bf16.gmra.mrb[0].mxu0 %v1717
  %v3232 = vpop.f32.mrb[0].mxu0
  %v3233 = vadd.f32 %v3136, %v3232
  %v3234 = vpop.f32.mrb[0].mxu0
  %v3235 = vpop.f32.mrb[0].mxu0
  %v3236 = vadd.f32 %v3139, %v3235
  %v3237 = vpop.f32.mrb[0].mxu0
  %3238 = vmatprep.mubr.bf16.mxu0 %v1750
  %3239 = vmatmul.mubr.bf16.gmra.mrb[0].mxu0 %v1718
  %v3240 = vpop.f32.mrb[0].mxu0
  %v3241 = vadd.f32 %v3144, %v3240
  %v3242 = vpop.f32.mrb[0].mxu0
  %v3243 = vpop.f32.mrb[0].mxu0
  %v3244 = vadd.f32 %v3147, %v3243
  %v3245 = vpop.f32.mrb[0].mxu0
  %3246 = vmatprep.mubr.bf16.mxu0 %v1751
  %3247 = vmatmul.mubr.bf16.gmra.mrb[0].mxu0 %v1719
  %v3248 = vpop.f32.mrb[0].mxu0
  %v3249 = vadd.f32 %v3152, %v3248
  %v3250 = vpop.f32.mrb[0].mxu0
  %v3251 = vpop.f32.mrb[0].mxu0
  %v3252 = vadd.f32 %v3155, %v3251
  %v3253 = vpop.f32.mrb[0].mxu0
  %3254 = vmatprep.mubr.bf16.mxu0 %v1752
  %3255 = vmatmul.mubr.bf16.gmra.mrb[0].mxu0 %v1720
  %v3256 = vpop.f32.mrb[0].mxu0
  %v3257 = vadd.f32 %v3160, %v3256
  %v3258 = vpop.f32.mrb[0].mxu0
  %v3259 = vpop.f32.mrb[0].mxu0
  %v3260 = vadd.f32 %v3163, %v3259
  %v3261 = vpop.f32.mrb[0].mxu0
  %3262 = vmatprep.mubr.bf16.mxu0 %v1753
  %3263 = vmatmul.mubr.bf16.gmra.mrb[0].mxu0 %v1721
  %v3264 = vpop.f32.mrb[0].mxu0
  %v3265 = vadd.f32 %v3168, %v3264
  %v3266 = vpop.f32.mrb[0].mxu0
  %v3267 = vpop.f32.mrb[0].mxu0
  %v3268 = vadd.f32 %v3171, %v3267
  %v3269 = vpop.f32.mrb[0].mxu0
  %3270 = vmatprep.mubr.bf16.mxu0 %v1754
  %3271 = vmatmul.mubr.bf16.gmra.mrb[0].mxu0 %v1722
  %v3272 = vpop.f32.mrb[0].mxu0
  %v3273 = vadd.f32 %v3176, %v3272
  %v3274 = vpop.f32.mrb[0].mxu0
  %v3275 = vpop.f32.mrb[0].mxu0
  %v3276 = vadd.f32 %v3179, %v3275
  %v3277 = vpop.f32.mrb[0].mxu0
  %3278 = vmatprep.mubr.bf16.mxu0 %v1755
  %3279 = vmatmul.mubr.bf16.gmra.mrb[0].mxu0 %v1723
  %v3280 = vpop.f32.mrb[0].mxu0
  %v3281 = vadd.f32 %v3184, %v3280
  %v3282 = vpop.f32.mrb[0].mxu0
  %v3283 = vpop.f32.mrb[0].mxu0
  %v3284 = vadd.f32 %v3187, %v3283
  %v3285 = vpop.f32.mrb[0].mxu0
  %3286 = vmatprep.mubr.bf16.mxu0 %v1756
  %3287 = vmatmul.mubr.bf16.gmra.mrb[0].mxu0 %v1724
  %v3288 = vpop.f32.mrb[0].mxu0
  %v3289 = vadd.f32 %v3192, %v3288
  %v3290 = vpop.f32.mrb[0].mxu0
  %v3291 = vpop.f32.mrb[0].mxu0
  %v3292 = vadd.f32 %v3195, %v3291
  %v3293 = vpop.f32.mrb[0].mxu0
  %3294 = vdwg.mxu0
  %3295 = vmatprep.subr.bf16.mxu0 0
  %3296 = vmatpush1.bf16.msra.mxu0 %v2877
  %3297 = vmatprep.subr.bf16.mxu0 0
  %3298 = vmatpush1.bf16.msra.mxu0 %v2878
  %3299 = vmatprep.subr.bf16.mxu0 0
  %3300 = vmatpush1.bf16.msra.mxu0 %v2879
  %3301 = vmatprep.subr.bf16.mxu0 0
  %3302 = vmatpush1.bf16.msra.mxu0 %v2880
  %3303 = vmatprep.subr.bf16.mxu0 0
  %3304 = vmatpush1.bf16.msra.mxu0 %v2881
  %3305 = vmatprep.subr.bf16.mxu0 0
  %3306 = vmatpush1.bf16.msra.mxu0 %v2882
  %3307 = vmatprep.subr.bf16.mxu0 0
  %3308 = vmatpush1.bf16.msra.mxu0 %v2883
  %3309 = vmatprep.subr.bf16.mxu0 0
  %3310 = vmatpush1.bf16.msra.mxu0 %v2884
  %3311 = vmatprep.subr.bf16.mxu0 0
  %3312 = vmatpush1.bf16.msra.mxu0 %v2885
  %3313 = vmatprep.subr.bf16.mxu0 0
  %3314 = vmatpush1.bf16.msra.mxu0 %v2886
  %3315 = vmatprep.subr.bf16.mxu0 0
  %3316 = vmatpush1.bf16.msra.mxu0 %v2887
  %3317 = vmatprep.subr.bf16.mxu0 0
  %3318 = vmatpush1.bf16.msra.mxu0 %v2888
  %3319 = vmatprep.subr.bf16.mxu0 0
  %3320 = vmatpush1.bf16.msra.mxu0 %v2889
  %3321 = vmatprep.subr.bf16.mxu0 0
  %3322 = vmatpush1.bf16.msra.mxu0 %v2890
  %3323 = vmatprep.subr.bf16.mxu0 0
  %3324 = vmatpush1.bf16.msra.mxu0 %v2891
  %3325 = vmatprep.subr.bf16.mxu0 0
  %3326 = vmatpush1.bf16.msra.mxu0 %v2892
  %3327 = vmatprep.mubr.bf16.mxu0 %v1845
  %3328 = vmatmul.mubr.bf16.gmra.mrb[0].mxu0 %v1797
  %v3329 = vpop.f32.mrb[0].mxu0
  %v3330 = vadd.f32 %v3233, %v3329
  %v3331 = vpop.f32.mrb[0].mxu0
  %v3332 = vpop.f32.mrb[0].mxu0
  %v3333 = vadd.f32 %v3236, %v3332
  %v3334 = vpop.f32.mrb[0].mxu0
  %3335 = vmatprep.mubr.bf16.mxu0 %v1846
  %3336 = vmatmul.mubr.bf16.gmra.mrb[0].mxu0 %v1798
  %v3337 = vpop.f32.mrb[0].mxu0
  %v3338 = vadd.f32 %v3241, %v3337
  %v3339 = vpop.f32.mrb[0].mxu0
  %v3340 = vpop.f32.mrb[0].mxu0
  %v3341 = vadd.f32 %v3244, %v3340
  %v3342 = vpop.f32.mrb[0].mxu0
  %3343 = vmatprep.mubr.bf16.mxu0 %v1847
  %3344 = vmatmul.mubr.bf16.gmra.mrb[0].mxu0 %v1799
  %v3345 = vpop.f32.mrb[0].mxu0
  %v3346 = vadd.f32 %v3249, %v3345
  %v3347 = vpop.f32.mrb[0].mxu0
  %v3348 = vpop.f32.mrb[0].mxu0
  %v3349 = vadd.f32 %v3252, %v3348
  %v3350 = vpop.f32.mrb[0].mxu0
  %3351 = vmatprep.mubr.bf16.mxu0 %v1848
  %3352 = vmatmul.mubr.bf16.gmra.mrb[0].mxu0 %v1800
  %v3353 = vpop.f32.mrb[0].mxu0
  %v3354 = vadd.f32 %v3257, %v3353
  %v3355 = vpop.f32.mrb[0].mxu0
  %v3356 = vpop.f32.mrb[0].mxu0
  %v3357 = vadd.f32 %v3260, %v3356
  %v3358 = vpop.f32.mrb[0].mxu0
  %3359 = vmatprep.mubr.bf16.mxu0 %v1849
  %3360 = vmatmul.mubr.bf16.gmra.mrb[0].mxu0 %v1801
  %v3361 = vpop.f32.mrb[0].mxu0
  %v3362 = vadd.f32 %v3265, %v3361
  %v3363 = vpop.f32.mrb[0].mxu0
  %v3364 = vpop.f32.mrb[0].mxu0
  %v3365 = vadd.f32 %v3268, %v3364
  %v3366 = vpop.f32.mrb[0].mxu0
  %3367 = vmatprep.mubr.bf16.mxu0 %v1850
  %3368 = vmatmul.mubr.bf16.gmra.mrb[0].mxu0 %v1802
  %v3369 = vpop.f32.mrb[0].mxu0
  %v3370 = vadd.f32 %v3273, %v3369
  %v3371 = vpop.f32.mrb[0].mxu0
  %v3372 = vpop.f32.mrb[0].mxu0
  %v3373 = vadd.f32 %v3276, %v3372
  %v3374 = vpop.f32.mrb[0].mxu0
  %3375 = vmatprep.mubr.bf16.mxu0 %v1851
  %3376 = vmatmul.mubr.bf16.gmra.mrb[0].mxu0 %v1803
  %v3377 = vpop.f32.mrb[0].mxu0
  %v3378 = vadd.f32 %v3281, %v3377
  %v3379 = vpop.f32.mrb[0].mxu0
  %v3380 = vpop.f32.mrb[0].mxu0
  %v3381 = vadd.f32 %v3284, %v3380
  %v3382 = vpop.f32.mrb[0].mxu0
  %3383 = vmatprep.mubr.bf16.mxu0 %v1852
  %3384 = vmatmul.mubr.bf16.gmra.mrb[0].mxu0 %v1804
  %v3385 = vpop.f32.mrb[0].mxu0
  %v3386 = vadd.f32 %v3289, %v3385
  %v3387 = vpop.f32.mrb[0].mxu0
  %v3388 = vpop.f32.mrb[0].mxu0
  %v3389 = vadd.f32 %v3292, %v3388
  %v3390 = vpop.f32.mrb[0].mxu0
  %3391 = vdwg.mxu0
  %3392 = vmatprep.subr.bf16.mxu0 0
  %3393 = vmatpush1.bf16.msra.mxu0 %v2893
  %3394 = vmatprep.subr.bf16.mxu0 0
  %3395 = vmatpush1.bf16.msra.mxu0 %v2894
  %3396 = vmatprep.subr.bf16.mxu0 0
  %3397 = vmatpush1.bf16.msra.mxu0 %v2895
  %3398 = vmatprep.subr.bf16.mxu0 0
  %3399 = vmatpush1.bf16.msra.mxu0 %v2896
  %3400 = vmatprep.subr.bf16.mxu0 0
  %3401 = vmatpush1.bf16.msra.mxu0 %v2897
  %3402 = vmatprep.subr.bf16.mxu0 0
  %3403 = vmatpush1.bf16.msra.mxu0 %v2898
  %3404 = vmatprep.subr.bf16.mxu0 0
  %3405 = vmatpush1.bf16.msra.mxu0 %v2899
  %3406 = vmatprep.subr.bf16.mxu0 0
  %3407 = vmatpush1.bf16.msra.mxu0 %v2900
  %3408 = vmatprep.subr.bf16.mxu0 0
  %3409 = vmatpush1.bf16.msra.mxu0 %v2901
  %3410 = vmatprep.subr.bf16.mxu0 0
  %3411 = vmatpush1.bf16.msra.mxu0 %v2902
  %3412 = vmatprep.subr.bf16.mxu0 0
  %3413 = vmatpush1.bf16.msra.mxu0 %v2903
  %3414 = vmatprep.subr.bf16.mxu0 0
  %3415 = vmatpush1.bf16.msra.mxu0 %v2904
  %3416 = vmatprep.subr.bf16.mxu0 0
  %3417 = vmatpush1.bf16.msra.mxu0 %v2905
  %3418 = vmatprep.subr.bf16.mxu0 0
  %3419 = vmatpush1.bf16.msra.mxu0 %v2906
  %3420 = vmatprep.subr.bf16.mxu0 0
  %3421 = vmatpush1.bf16.msra.mxu0 %v2907
  %3422 = vmatprep.subr.bf16.mxu0 0
  %3423 = vmatpush1.bf16.msra.mxu0 %v2908
  %3424 = vmatprep.mubr.bf16.mxu0 %v1909
  %3425 = vmatmul.mubr.bf16.gmra.mrb[0].mxu0 %v1877
  %v3426 = vpop.f32.mrb[0].mxu0
  %v3427 = vadd.f32 %v3330, %v3426
  %v3428 = vpop.f32.mrb[0].mxu0
  %v3429 = vpop.f32.mrb[0].mxu0
  %v3430 = vadd.f32 %v3333, %v3429
  %v3431 = vpop.f32.mrb[0].mxu0
  %3432 = vmatprep.mubr.bf16.mxu0 %v1910
  %3433 = vmatmul.mubr.bf16.gmra.mrb[0].mxu0 %v1878
  %v3434 = vpop.f32.mrb[0].mxu0
  %v3435 = vadd.f32 %v3338, %v3434
  %v3436 = vpop.f32.mrb[0].mxu0
  %v3437 = vpop.f32.mrb[0].mxu0
  %v3438 = vadd.f32 %v3341, %v3437
  %v3439 = vpop.f32.mrb[0].mxu0
  %3440 = vmatprep.mubr.bf16.mxu0 %v1911
  %3441 = vmatmul.mubr.bf16.gmra.mrb[0].mxu0 %v1879
  %v3442 = vpop.f32.mrb[0].mxu0
  %v3443 = vadd.f32 %v3346, %v3442
  %v3444 = vpop.f32.mrb[0].mxu0
  %v3445 = vpop.f32.mrb[0].mxu0
  %v3446 = vadd.f32 %v3349, %v3445
  %v3447 = vpop.f32.mrb[0].mxu0
  %3448 = vmatprep.mubr.bf16.mxu0 %v1912
  %3449 = vmatmul.mubr.bf16.gmra.mrb[0].mxu0 %v1880
  %v3450 = vpop.f32.mrb[0].mxu0
  %v3451 = vadd.f32 %v3354, %v3450
  %v3452 = vpop.f32.mrb[0].mxu0
  %v3453 = vpop.f32.mrb[0].mxu0
  %v3454 = vadd.f32 %v3357, %v3453
  %v3455 = vpop.f32.mrb[0].mxu0
  %3456 = vmatprep.mubr.bf16.mxu0 %v1913
  %3457 = vmatmul.mubr.bf16.gmra.mrb[0].mxu0 %v1881
  %v3458 = vpop.f32.mrb[0].mxu0
  %v3459 = vadd.f32 %v3362, %v3458
  %v3460 = vpop.f32.mrb[0].mxu0
  %v3461 = vpop.f32.mrb[0].mxu0
  %v3462 = vadd.f32 %v3365, %v3461
  %v3463 = vpop.f32.mrb[0].mxu0
  %3464 = vmatprep.mubr.bf16.mxu0 %v1914
  %3465 = vmatmul.mubr.bf16.gmra.mrb[0].mxu0 %v1882
  %v3466 = vpop.f32.mrb[0].mxu0
  %v3467 = vadd.f32 %v3370, %v3466
  %v3468 = vpop.f32.mrb[0].mxu0
  %v3469 = vpop.f32.mrb[0].mxu0
  %v3470 = vadd.f32 %v3373, %v3469
  %v3471 = vpop.f32.mrb[0].mxu0
  %3472 = vmatprep.mubr.bf16.mxu0 %v1915
  %3473 = vmatmul.mubr.bf16.gmra.mrb[0].mxu0 %v1883
  %v3474 = vpop.f32.mrb[0].mxu0
  %v3475 = vadd.f32 %v3378, %v3474
  %v3476 = vpop.f32.mrb[0].mxu0
  %v3477 = vpop.f32.mrb[0].mxu0
  %v3478 = vadd.f32 %v3381, %v3477
  %v3479 = vpop.f32.mrb[0].mxu0
  %3480 = vmatprep.mubr.bf16.mxu0 %v1916
  %3481 = vmatmul.mubr.bf16.gmra.mrb[0].mxu0 %v1884
  %v3482 = vpop.f32.mrb[0].mxu0
  %v3483 = vadd.f32 %v3386, %v3482
  %v3484 = vpop.f32.mrb[0].mxu0
  %v3485 = vpop.f32.mrb[0].mxu0
  %v3486 = vadd.f32 %v3389, %v3485
  %v3487 = vpop.f32.mrb[0].mxu0
  %3488 = vdwg.mxu0
  %3489 = vmatprep.subr.bf16.mxu0 0
  %3490 = vmatpush1.bf16.msra.mxu0 %v2909
  %3491 = vmatprep.subr.bf16.mxu0 0
  %3492 = vmatpush1.bf16.msra.mxu0 %v2910
  %3493 = vmatprep.subr.bf16.mxu0 0
  %3494 = vmatpush1.bf16.msra.mxu0 %v2911
  %3495 = vmatprep.subr.bf16.mxu0 0
  %3496 = vmatpush1.bf16.msra.mxu0 %v2912
  %3497 = vmatprep.subr.bf16.mxu0 0
  %3498 = vmatpush1.bf16.msra.mxu0 %v2913
  %3499 = vmatprep.subr.bf16.mxu0 0
  %3500 = vmatpush1.bf16.msra.mxu0 %v2914
  %3501 = vmatprep.subr.bf16.mxu0 0
  %3502 = vmatpush1.bf16.msra.mxu0 %v2915
  %3503 = vmatprep.subr.bf16.mxu0 0
  %3504 = vmatpush1.bf16.msra.mxu0 %v2916
  %3505 = vmatprep.subr.bf16.mxu0 0
  %3506 = vmatpush1.bf16.msra.mxu0 %v2917
  %3507 = vmatprep.subr.bf16.mxu0 0
  %3508 = vmatpush1.bf16.msra.mxu0 %v2918
  %3509 = vmatprep.subr.bf16.mxu0 0
  %3510 = vmatpush1.bf16.msra.mxu0 %v2919
  %3511 = vmatprep.subr.bf16.mxu0 0
  %3512 = vmatpush1.bf16.msra.mxu0 %v2920
  %3513 = vmatprep.subr.bf16.mxu0 0
  %3514 = vmatpush1.bf16.msra.mxu0 %v2921
  %3515 = vmatprep.subr.bf16.mxu0 0
  %3516 = vmatpush1.bf16.msra.mxu0 %v2922
  %3517 = vmatprep.subr.bf16.mxu0 0
  %3518 = vmatpush1.bf16.msra.mxu0 %v2923
  %3519 = vmatprep.subr.bf16.mxu0 0
  %3520 = vmatpush1.bf16.msra.mxu0 %v2924
  %3521 = vmatprep.mubr.bf16.mxu0 %v1949
  %3522 = vmatmul.mubr.bf16.gmra.mrb[0].mxu0 %v1929
  %v3523 = vpop.f32.mrb[0].mxu0
  %v3524 = vadd.f32 %v3427, %v3523
  %v3525 = vpop.f32.mrb[0].mxu0
  %v3526 = vpop.f32.mrb[0].mxu0
  %v3527 = vadd.f32 %v3430, %v3526
  %v3528 = vpop.f32.mrb[0].mxu0
  %3529 = vmatprep.mubr.bf16.mxu0 %v1950
  %3530 = vmatmul.mubr.bf16.gmra.mrb[0].mxu0 %v1930
  %v3531 = vpop.f32.mrb[0].mxu0
  %v3532 = vadd.f32 %v3435, %v3531
  %v3533 = vpop.f32.mrb[0].mxu0
  %v3534 = vpop.f32.mrb[0].mxu0
  %v3535 = vadd.f32 %v3438, %v3534
  %v3536 = vpop.f32.mrb[0].mxu0
  %3537 = vmatprep.mubr.bf16.mxu0 %v1951
  %3538 = vmatmul.mubr.bf16.gmra.mrb[0].mxu0 %v1931
  %v3539 = vpop.f32.mrb[0].mxu0
  %v3540 = vadd.f32 %v3443, %v3539
  %v3541 = vpop.f32.mrb[0].mxu0
  %v3542 = vpop.f32.mrb[0].mxu0
  %v3543 = vadd.f32 %v3446, %v3542
  %v3544 = vpop.f32.mrb[0].mxu0
  %3545 = vmatprep.mubr.bf16.mxu0 %v1952
  %3546 = vmatmul.mubr.bf16.gmra.mrb[0].mxu0 %v1932
  %v3547 = vpop.f32.mrb[0].mxu0
  %v3548 = vadd.f32 %v3451, %v3547
  %v3549 = vpop.f32.mrb[0].mxu0
  %v3550 = vpop.f32.mrb[0].mxu0
  %v3551 = vadd.f32 %v3454, %v3550
  %v3552 = vpop.f32.mrb[0].mxu0
  %3553 = vmatprep.mubr.bf16.mxu0 %v1953
  %3554 = vmatmul.mubr.bf16.gmra.mrb[0].mxu0 %v1933
  %v3555 = vpop.f32.mrb[0].mxu0
  %v3556 = vadd.f32 %v3459, %v3555
  %v3557 = vpop.f32.mrb[0].mxu0
  %v3558 = vpop.f32.mrb[0].mxu0
  %v3559 = vadd.f32 %v3462, %v3558
  %v3560 = vpop.f32.mrb[0].mxu0
  %3561 = vmatprep.mubr.bf16.mxu0 %v1954
  %3562 = vmatmul.mubr.bf16.gmra.mrb[0].mxu0 %v1934
  %v3563 = vpop.f32.mrb[0].mxu0
  %v3564 = vadd.f32 %v3467, %v3563
  %v3565 = vpop.f32.mrb[0].mxu0
  %v3566 = vpop.f32.mrb[0].mxu0
  %v3567 = vadd.f32 %v3470, %v3566
  %v3568 = vpop.f32.mrb[0].mxu0
  %3569 = vmatprep.mubr.bf16.mxu0 %v1955
  %3570 = vmatmul.mubr.bf16.gmra.mrb[0].mxu0 %v1935
  %v3571 = vpop.f32.mrb[0].mxu0
  %v3572 = vadd.f32 %v3475, %v3571
  %v3573 = vpop.f32.mrb[0].mxu0
  %v3574 = vpop.f32.mrb[0].mxu0
  %v3575 = vadd.f32 %v3478, %v3574
  %v3576 = vpop.f32.mrb[0].mxu0
  %3577 = vmatprep.mubr.bf16.mxu0 %v1956
  %3578 = vmatmul.mubr.bf16.gmra.mrb[0].mxu0 %v1936
  %v3579 = vpop.f32.mrb[0].mxu0
  %v3580 = vadd.f32 %v3483, %v3579
  %v3581 = vpop.f32.mrb[0].mxu0
  %v3582 = vpop.f32.mrb[0].mxu0
  %v3583 = vadd.f32 %v3486, %v3582
  %v3584 = vpop.f32.mrb[0].mxu0
  %3585 = vdwg.mxu0
  %3586 = vmatprep.subr.bf16.mxu0 0
  %3587 = vmatpush1.bf16.msra.mxu0 %v2925
  %3588 = vmatprep.subr.bf16.mxu0 0
  %3589 = vmatpush1.bf16.msra.mxu0 %v2926
  %3590 = vmatprep.subr.bf16.mxu0 0
  %3591 = vmatpush1.bf16.msra.mxu0 %v2927
  %3592 = vmatprep.subr.bf16.mxu0 0
  %3593 = vmatpush1.bf16.msra.mxu0 %v2928
  %3594 = vmatprep.subr.bf16.mxu0 0
  %3595 = vmatpush1.bf16.msra.mxu0 %v2929
  %3596 = vmatprep.subr.bf16.mxu0 0
  %3597 = vmatpush1.bf16.msra.mxu0 %v2930
  %3598 = vmatprep.subr.bf16.mxu0 0
  %3599 = vmatpush1.bf16.msra.mxu0 %v2931
  %3600 = vmatprep.subr.bf16.mxu0 0
  %3601 = vmatpush1.bf16.msra.mxu0 %v2932
  %3602 = vmatprep.subr.bf16.mxu0 0
  %3603 = vmatpush1.bf16.msra.mxu0 %v2933
  %3604 = vmatprep.subr.bf16.mxu0 0
  %3605 = vmatpush1.bf16.msra.mxu0 %v2934
  %3606 = vmatprep.subr.bf16.mxu0 0
  %3607 = vmatpush1.bf16.msra.mxu0 %v2935
  %3608 = vmatprep.subr.bf16.mxu0 0
  %3609 = vmatpush1.bf16.msra.mxu0 %v2936
  %3610 = vmatprep.subr.bf16.mxu0 0
  %3611 = vmatpush1.bf16.msra.mxu0 %v2937
  %3612 = vmatprep.subr.bf16.mxu0 0
  %3613 = vmatpush1.bf16.msra.mxu0 %v2938
  %3614 = vmatprep.subr.bf16.mxu0 0
  %3615 = vmatpush1.bf16.msra.mxu0 %v2939
  %3616 = vmatprep.subr.bf16.mxu0 0
  %3617 = vmatpush1.bf16.msra.mxu0 %v2940
  %3618 = vmatprep.mubr.bf16.mxu0 %v1985
  %3619 = vmatmul.mubr.bf16.gmra.mrb[0].mxu0 %v1967
  %v3620 = vpop.f32.mrb[0].mxu0
  %v3621 = vadd.f32 %v3524, %v3620
  %v3622 = vpop.f32.mrb[0].mxu0
  %v3623 = vpop.f32.mrb[0].mxu0
  %v3624 = vadd.f32 %v3527, %v3623
  %v3625 = vpop.f32.mrb[0].mxu0
  %3626 = vmatprep.mubr.bf16.mxu0 %v1986
  %3627 = vmatmul.mubr.bf16.gmra.mrb[0].mxu0 %v1968
  %v3628 = vpop.f32.mrb[0].mxu0
  %v3629 = vadd.f32 %v3532, %v3628
  %v3630 = vpop.f32.mrb[0].mxu0
  %v3631 = vpop.f32.mrb[0].mxu0
  %v3632 = vadd.f32 %v3535, %v3631
  %v3633 = vpop.f32.mrb[0].mxu0
  %3634 = vmatprep.mubr.bf16.mxu0 %v1987
  %3635 = vmatmul.mubr.bf16.gmra.mrb[0].mxu0 %v1969
  %v3636 = vpop.f32.mrb[0].mxu0
  %v3637 = vadd.f32 %v3540, %v3636
  %v3638 = vpop.f32.mrb[0].mxu0
  %v3639 = vpop.f32.mrb[0].mxu0
  %v3640 = vadd.f32 %v3543, %v3639
  %v3641 = vpop.f32.mrb[0].mxu0
  %3642 = vmatprep.mubr.bf16.mxu0 %v1988
  %3643 = vmatmul.mubr.bf16.gmra.mrb[0].mxu0 %v1970
  %v3644 = vpop.f32.mrb[0].mxu0
  %v3645 = vadd.f32 %v3548, %v3644
  %v3646 = vpop.f32.mrb[0].mxu0
  %v3647 = vpop.f32.mrb[0].mxu0
  %v3648 = vadd.f32 %v3551, %v3647
  %v3649 = vpop.f32.mrb[0].mxu0
  %3650 = vmatprep.mubr.bf16.mxu0 %v1989
  %3651 = vmatmul.mubr.bf16.gmra.mrb[0].mxu0 %v1971
  %v3652 = vpop.f32.mrb[0].mxu0
  %v3653 = vadd.f32 %v3556, %v3652
  %v3654 = vpop.f32.mrb[0].mxu0
  %v3655 = vpop.f32.mrb[0].mxu0
  %v3656 = vadd.f32 %v3559, %v3655
  %v3657 = vpop.f32.mrb[0].mxu0
  %3658 = vmatprep.mubr.bf16.mxu0 %v1990
  %3659 = vmatmul.mubr.bf16.gmra.mrb[0].mxu0 %v1972
  %v3660 = vpop.f32.mrb[0].mxu0
  %v3661 = vadd.f32 %v3564, %v3660
  %v3662 = vpop.f32.mrb[0].mxu0
  %v3663 = vpop.f32.mrb[0].mxu0
  %v3664 = vadd.f32 %v3567, %v3663
  %v3665 = vpop.f32.mrb[0].mxu0
  %3666 = vmatprep.mubr.bf16.mxu0 %v1991
  %3667 = vmatmul.mubr.bf16.gmra.mrb[0].mxu0 %v1973
  %v3668 = vpop.f32.mrb[0].mxu0
  %v3669 = vadd.f32 %v3572, %v3668
  %v3670 = vpop.f32.mrb[0].mxu0
  %v3671 = vpop.f32.mrb[0].mxu0
  %v3672 = vadd.f32 %v3575, %v3671
  %v3673 = vpop.f32.mrb[0].mxu0
  %3674 = vmatprep.mubr.bf16.mxu0 %v1992
  %3675 = vmatmul.mubr.bf16.gmra.mrb[0].mxu0 %v1974
  %v3676 = vpop.f32.mrb[0].mxu0
  %v3677 = vadd.f32 %v3580, %v3676
  %v3678 = vpop.f32.mrb[0].mxu0
  %v3679 = vpop.f32.mrb[0].mxu0
  %v3680 = vadd.f32 %v3583, %v3679
  %v3681 = vpop.f32.mrb[0].mxu0
  %3682 = vdwg.mxu0
  %3683 = vmatprep.subr.bf16.mxu0 0
  %3684 = vmatpush1.bf16.msra.mxu0 %v2941
  %3685 = vmatprep.subr.bf16.mxu0 0
  %3686 = vmatpush1.bf16.msra.mxu0 %v2942
  %3687 = vmatprep.subr.bf16.mxu0 0
  %3688 = vmatpush1.bf16.msra.mxu0 %v2943
  %3689 = vmatprep.subr.bf16.mxu0 0
  %3690 = vmatpush1.bf16.msra.mxu0 %v2944
  %3691 = vmatprep.subr.bf16.mxu0 0
  %3692 = vmatpush1.bf16.msra.mxu0 %v2945
  %3693 = vmatprep.subr.bf16.mxu0 0
  %3694 = vmatpush1.bf16.msra.mxu0 %v2946
  %3695 = vmatprep.subr.bf16.mxu0 0
  %3696 = vmatpush1.bf16.msra.mxu0 %v2947
  %3697 = vmatprep.subr.bf16.mxu0 0
  %3698 = vmatpush1.bf16.msra.mxu0 %v2948
  %3699 = vmatprep.subr.bf16.mxu0 0
  %3700 = vmatpush1.bf16.msra.mxu0 %v2949
  %3701 = vmatprep.subr.bf16.mxu0 0
  %3702 = vmatpush1.bf16.msra.mxu0 %v2950
  %3703 = vmatprep.subr.bf16.mxu0 0
  %3704 = vmatpush1.bf16.msra.mxu0 %v2951
  %3705 = vmatprep.subr.bf16.mxu0 0
  %3706 = vmatpush1.bf16.msra.mxu0 %v2952
  %3707 = vmatprep.subr.bf16.mxu0 0
  %3708 = vmatpush1.bf16.msra.mxu0 %v2953
  %3709 = vmatprep.subr.bf16.mxu0 0
  %3710 = vmatpush1.bf16.msra.mxu0 %v2954
  %3711 = vmatprep.subr.bf16.mxu0 0
  %3712 = vmatpush1.bf16.msra.mxu0 %v2955
  %3713 = vmatprep.subr.bf16.mxu0 0
  %3714 = vmatpush1.bf16.msra.mxu0 %v2956
  %3715 = vmatprep.mubr.bf16.mxu0 %v2025
  %3716 = vmatmul.mubr.bf16.gmra.mrb[0].mxu0 %v2005
  %v3717 = vpop.f32.mrb[0].mxu0
  %v3718 = vadd.f32 %v3621, %v3717
  %v3719 = vpop.f32.mrb[0].mxu0
  %v3720 = vpop.f32.mrb[0].mxu0
  %v3721 = vadd.f32 %v3624, %v3720
  %v3722 = vpop.f32.mrb[0].mxu0
  %3723 = vmatprep.mubr.bf16.mxu0 %v2026
  %3724 = vmatmul.mubr.bf16.gmra.mrb[0].mxu0 %v2006
  %v3725 = vpop.f32.mrb[0].mxu0
  %v3726 = vadd.f32 %v3629, %v3725
  %v3727 = vpop.f32.mrb[0].mxu0
  %v3728 = vpop.f32.mrb[0].mxu0
  %v3729 = vadd.f32 %v3632, %v3728
  %v3730 = vpop.f32.mrb[0].mxu0
  %3731 = vmatprep.mubr.bf16.mxu0 %v2027
  %3732 = vmatmul.mubr.bf16.gmra.mrb[0].mxu0 %v2007
  %v3733 = vpop.f32.mrb[0].mxu0
  %v3734 = vadd.f32 %v3637, %v3733
  %v3735 = vpop.f32.mrb[0].mxu0
  %v3736 = vpop.f32.mrb[0].mxu0
  %v3737 = vadd.f32 %v3640, %v3736
  %v3738 = vpop.f32.mrb[0].mxu0
  %3739 = vmatprep.mubr.bf16.mxu0 %v2028
  %3740 = vmatmul.mubr.bf16.gmra.mrb[0].mxu0 %v2008
  %v3741 = vpop.f32.mrb[0].mxu0
  %v3742 = vadd.f32 %v3645, %v3741
  %v3743 = vpop.f32.mrb[0].mxu0
  %v3744 = vpop.f32.mrb[0].mxu0
  %v3745 = vadd.f32 %v3648, %v3744
  %v3746 = vpop.f32.mrb[0].mxu0
  %3747 = vmatprep.mubr.bf16.mxu0 %v2029
  %3748 = vmatmul.mubr.bf16.gmra.mrb[0].mxu0 %v2009
  %v3749 = vpop.f32.mrb[0].mxu0
  %v3750 = vadd.f32 %v3653, %v3749
  %v3751 = vpop.f32.mrb[0].mxu0
  %v3752 = vpop.f32.mrb[0].mxu0
  %v3753 = vadd.f32 %v3656, %v3752
  %v3754 = vpop.f32.mrb[0].mxu0
  %3755 = vmatprep.mubr.bf16.mxu0 %v2030
  %3756 = vmatmul.mubr.bf16.gmra.mrb[0].mxu0 %v2010
  %v3757 = vpop.f32.mrb[0].mxu0
  %v3758 = vadd.f32 %v3661, %v3757
  %v3759 = vpop.f32.mrb[0].mxu0
  %v3760 = vpop.f32.mrb[0].mxu0
  %v3761 = vadd.f32 %v3664, %v3760
  %v3762 = vpop.f32.mrb[0].mxu0
  %3763 = vmatprep.mubr.bf16.mxu0 %v2031
  %3764 = vmatmul.mubr.bf16.gmra.mrb[0].mxu0 %v2011
  %v3765 = vpop.f32.mrb[0].mxu0
  %v3766 = vadd.f32 %v3669, %v3765
  %v3767 = vpop.f32.mrb[0].mxu0
  %v3768 = vpop.f32.mrb[0].mxu0
  %v3769 = vadd.f32 %v3672, %v3768
  %v3770 = vpop.f32.mrb[0].mxu0
  %3771 = vmatprep.mubr.bf16.mxu0 %v2032
  %3772 = vmatmul.mubr.bf16.gmra.mrb[0].mxu0 %v2012
  %v3773 = vpop.f32.mrb[0].mxu0
  %v3774 = vadd.f32 %v3677, %v3773
  %v3775 = vpop.f32.mrb[0].mxu0
  %v3776 = vpop.f32.mrb[0].mxu0
  %v3777 = vadd.f32 %v3680, %v3776
  %v3778 = vpop.f32.mrb[0].mxu0
  %3779 = vdwg.mxu0
  %3780 = vmatprep.subr.bf16.mxu0 0
  %3781 = vmatpush1.bf16.msra.mxu0 %v2957
  %3782 = vmatprep.subr.bf16.mxu0 0
  %3783 = vmatpush1.bf16.msra.mxu0 %v2958
  %3784 = vmatprep.subr.bf16.mxu0 0
  %3785 = vmatpush1.bf16.msra.mxu0 %v2959
  %3786 = vmatprep.subr.bf16.mxu0 0
  %3787 = vmatpush1.bf16.msra.mxu0 %v2960
  %3788 = vmatprep.subr.bf16.mxu0 0
  %3789 = vmatpush1.bf16.msra.mxu0 %v2961
  %3790 = vmatprep.subr.bf16.mxu0 0
  %3791 = vmatpush1.bf16.msra.mxu0 %v2962
  %3792 = vmatprep.subr.bf16.mxu0 0
  %3793 = vmatpush1.bf16.msra.mxu0 %v2963
  %3794 = vmatprep.subr.bf16.mxu0 0
  %3795 = vmatpush1.bf16.msra.mxu0 %v2964
  %3796 = vmatprep.subr.bf16.mxu0 0
  %3797 = vmatpush1.bf16.msra.mxu0 %v2965
  %3798 = vmatprep.subr.bf16.mxu0 0
  %3799 = vmatpush1.bf16.msra.mxu0 %v2966
  %3800 = vmatprep.subr.bf16.mxu0 0
  %3801 = vmatpush1.bf16.msra.mxu0 %v2967
  %3802 = vmatprep.subr.bf16.mxu0 0
  %3803 = vmatpush1.bf16.msra.mxu0 %v2968
  %3804 = vmatprep.subr.bf16.mxu0 0
  %3805 = vmatpush1.bf16.msra.mxu0 %v2969
  %3806 = vmatprep.subr.bf16.mxu0 0
  %3807 = vmatpush1.bf16.msra.mxu0 %v2970
  %3808 = vmatprep.subr.bf16.mxu0 0
  %3809 = vmatpush1.bf16.msra.mxu0 %v2971
  %3810 = vmatprep.subr.bf16.mxu0 0
  %3811 = vmatpush1.bf16.msra.mxu0 %v2972
  %3812 = vmatprep.mubr.bf16.mxu0 %v2061
  %3813 = vmatmul.mubr.bf16.gmra.mrb[0].mxu0 %v2043
  %v3814 = vpop.f32.mrb[0].mxu0
  %v3815 = vadd.f32 %v3718, %v3814
  %v3816 = vpop.f32.mrb[0].mxu0
  %v3817 = vpop.f32.mrb[0].mxu0
  %v3818 = vadd.f32 %v3721, %v3817
  %v3819 = vpop.f32.mrb[0].mxu0
  %3820 = vmatprep.mubr.bf16.mxu0 %v2062
  %3821 = vmatmul.mubr.bf16.gmra.mrb[0].mxu0 %v2044
  %v3822 = vpop.f32.mrb[0].mxu0
  %v3823 = vadd.f32 %v3726, %v3822
  %v3824 = vpop.f32.mrb[0].mxu0
  %v3825 = vpop.f32.mrb[0].mxu0
  %v3826 = vadd.f32 %v3729, %v3825
  %v3827 = vpop.f32.mrb[0].mxu0
  %3828 = vmatprep.mubr.bf16.mxu0 %v2063
  %3829 = vmatmul.mubr.bf16.gmra.mrb[0].mxu0 %v2045
  %v3830 = vpop.f32.mrb[0].mxu0
  %v3831 = vadd.f32 %v3734, %v3830
  %v3832 = vpop.f32.mrb[0].mxu0
  %v3833 = vpop.f32.mrb[0].mxu0
  %v3834 = vadd.f32 %v3737, %v3833
  %v3835 = vpop.f32.mrb[0].mxu0
  %3836 = vmatprep.mubr.bf16.mxu0 %v2064
  %3837 = vmatmul.mubr.bf16.gmra.mrb[0].mxu0 %v2046
  %v3838 = vpop.f32.mrb[0].mxu0
  %v3839 = vadd.f32 %v3742, %v3838
  %v3840 = vpop.f32.mrb[0].mxu0
  %v3841 = vpop.f32.mrb[0].mxu0
  %v3842 = vadd.f32 %v3745, %v3841
  %v3843 = vpop.f32.mrb[0].mxu0
  %3844 = vmatprep.mubr.bf16.mxu0 %v2065
  %3845 = vmatmul.mubr.bf16.gmra.mrb[0].mxu0 %v2047
  %v3846 = vpop.f32.mrb[0].mxu0
  %v3847 = vadd.f32 %v3750, %v3846
  %v3848 = vpop.f32.mrb[0].mxu0
  %v3849 = vpop.f32.mrb[0].mxu0
  %v3850 = vadd.f32 %v3753, %v3849
  %v3851 = vpop.f32.mrb[0].mxu0
  %3852 = vmatprep.mubr.bf16.mxu0 %v2066
  %3853 = vmatmul.mubr.bf16.gmra.mrb[0].mxu0 %v2048
  %v3854 = vpop.f32.mrb[0].mxu0
  %v3855 = vadd.f32 %v3758, %v3854
  %v3856 = vpop.f32.mrb[0].mxu0
  %v3857 = vpop.f32.mrb[0].mxu0
  %v3858 = vadd.f32 %v3761, %v3857
  %v3859 = vpop.f32.mrb[0].mxu0
  %3860 = vmatprep.mubr.bf16.mxu0 %v2067
  %3861 = vmatmul.mubr.bf16.gmra.mrb[0].mxu0 %v2049
  %v3862 = vpop.f32.mrb[0].mxu0
  %v3863 = vadd.f32 %v3766, %v3862
  %v3864 = vpop.f32.mrb[0].mxu0
  %v3865 = vpop.f32.mrb[0].mxu0
  %v3866 = vadd.f32 %v3769, %v3865
  %v3867 = vpop.f32.mrb[0].mxu0
  %3868 = vmatprep.mubr.bf16.mxu0 %v2068
  %3869 = vmatmul.mubr.bf16.gmra.mrb[0].mxu0 %v2050
  %v3870 = vpop.f32.mrb[0].mxu0
  %v3871 = vadd.f32 %v3774, %v3870
  %v3872 = vpop.f32.mrb[0].mxu0
  %v3873 = vpop.f32.mrb[0].mxu0
  %v3874 = vadd.f32 %v3777, %v3873
  %v3875 = vpop.f32.mrb[0].mxu0
  %3876 = vdwg.mxu0
  %v3877 = vmax.f32 %v3815, 0.0
  %v3878 = vmax.f32 %v3818, 0.0
  %v3879 = vmax.f32 %v3823, 0.0
  %v3880 = vmax.f32 %v3826, 0.0
  %v3881 = vmax.f32 %v3831, 0.0
  %v3882 = vmax.f32 %v3834, 0.0
  %v3883 = vmax.f32 %v3839, 0.0
  %v3884 = vmax.f32 %v3842, 0.0
  %v3885 = vmax.f32 %v3847, 0.0
  %v3886 = vmax.f32 %v3850, 0.0
  %v3887 = vmax.f32 %v3855, 0.0
  %v3888 = vmax.f32 %v3858, 0.0
  %v3889 = vmax.f32 %v3863, 0.0
  %v3890 = vmax.f32 %v3866, 0.0
  %v3891 = vmax.f32 %v3871, 0.0
  %v3892 = vmax.f32 %v3874, 0.0
  %3893 = vst [vmem:[#allocation2] sm:$0xf] 0
  %3894 = vst [vmem:[#allocation2 + $0x4] sm:$0x1] 0
  %3895 = vst [vmem:[#allocation2 + $0x50] sm:$0xf] 0
  %3896 = vst [vmem:[#allocation2 + $0x54] sm:$0x1] 0
  %s3897 = scalar_lea.vmem [#allocation2], 72
  %3898 = vst [vmem:[%s3897] sm:$0xf] 0
  %3899 = vst [vmem:[%s3897 + $0x4] sm:$0x1] 0
  %3900 = vst [vmem:[%s3897 + $0x50] sm:$0xf] 0
  %3901 = vst [vmem:[%s3897 + $0x54] sm:$0x1] 0
  %vm3902 = vcmask 1040384
  %vm3903 = vsmask.f32 256
  %vm3904 = vmand %vm3902, %vm3903
  %v3905 = vld [vmem:[#allocation2] sm:$0x1]
  %v3906 = vsel %vm3904, 0, %v3905
  %3907 = vst [vmem:[#allocation2] sm:$0x1] %v3906
  %v3908 = vld [vmem:[#allocation2 + $0x8] sm:$0x1]
  %v3909 = vsel %vm3904, 0, %v3908
  %3910 = vst [vmem:[#allocation2 + $0x8] sm:$0x1] %v3909
  %v3911 = vld [vmem:[#allocation2 + $0x10] sm:$0x1]
  %v3912 = vsel %vm3904, 0, %v3911
  %3913 = vst [vmem:[#allocation2 + $0x10] sm:$0x1] %v3912
  %v3914 = vld [vmem:[#allocation2 + $0x18] sm:$0x1]
  %v3915 = vsel %vm3904, 0, %v3914
  %3916 = vst [vmem:[#allocation2 + $0x18] sm:$0x1] %v3915
  %v3917 = vld [vmem:[#allocation2 + $0x20] sm:$0x1]
  %v3918 = vsel %vm3904, 0, %v3917
  %3919 = vst [vmem:[#allocation2 + $0x20] sm:$0x1] %v3918
  %v3920 = vld [vmem:[#allocation2 + $0x28] sm:$0x1]
  %v3921 = vsel %vm3904, 0, %v3920
  %3922 = vst [vmem:[#allocation2 + $0x28] sm:$0x1] %v3921
  %v3923 = vld [vmem:[#allocation2 + $0x30] sm:$0x1]
  %v3924 = vsel %vm3904, 0, %v3923
  %3925 = vst [vmem:[#allocation2 + $0x30] sm:$0x1] %v3924
  %v3926 = vld [vmem:[#allocation2 + $0x38] sm:$0x1]
  %v3927 = vsel %vm3904, 0, %v3926
  %3928 = vst [vmem:[#allocation2 + $0x38] sm:$0x1] %v3927
  %v3929 = vld [vmem:[#allocation2 + $0x40] sm:$0x1]
  %v3930 = vsel %vm3904, 0, %v3929
  %3931 = vst [vmem:[#allocation2 + $0x40] sm:$0x1] %v3930
  %v3932 = vld [vmem:[#allocation2 + $0x48] sm:$0x1]
  %v3933 = vsel %vm3904, 0, %v3932
  %3934 = vst [vmem:[#allocation2 + $0x48] sm:$0x1] %v3933
  %v3935 = vld [vmem:[#allocation2 + $0x50] sm:$0x1]
  %v3936 = vsel %vm3904, 0, %v3935
  %3937 = vst [vmem:[#allocation2 + $0x50] sm:$0x1] %v3936
  %v3938 = vld [vmem:[#allocation2 + $0x58] sm:$0x1]
  %v3939 = vsel %vm3904, 0, %v3938
  %3940 = vst [vmem:[#allocation2 + $0x58] sm:$0x1] %v3939
  %v3941 = vld [vmem:[#allocation2 + $0x60] sm:$0x1]
  %v3942 = vsel %vm3904, 0, %v3941
  %3943 = vst [vmem:[#allocation2 + $0x60] sm:$0x1] %v3942
  %v3944 = vld [vmem:[#allocation2 + $0x68] sm:$0x1]
  %v3945 = vsel %vm3904, 0, %v3944
  %3946 = vst [vmem:[#allocation2 + $0x68] sm:$0x1] %v3945
  %v3947 = vld [vmem:[#allocation2 + $0x70] sm:$0x1]
  %v3948 = vsel %vm3904, 0, %v3947
  %3949 = vst [vmem:[#allocation2 + $0x70] sm:$0x1] %v3948
  %v3950 = vld [vmem:[#allocation2 + $0x78] sm:$0x1]
  %v3951 = vsel %vm3904, 0, %v3950
  %3952 = vst [vmem:[#allocation2 + $0x78] sm:$0x1] %v3951
  %v3953 = vld [vmem:[#allocation2 + $0x80] sm:$0x1]
  %v3954 = vsel %vm3904, 0, %v3953
  %3955 = vst [vmem:[#allocation2 + $0x80] sm:$0x1] %v3954
  %v3956 = vld [vmem:[#allocation2 + $0x88] sm:$0x1]
  %v3957 = vsel %vm3904, 0, %v3956
  %3958 = vst [vmem:[#allocation2 + $0x88] sm:$0x1] %v3957
  %v3959 = vld [vmem:[#allocation2 + $0x90] sm:$0x1]
  %v3960 = vsel %vm3904, 0, %v3959
  %3961 = vst [vmem:[#allocation2 + $0x90] sm:$0x1] %v3960
  %v3962 = vld [vmem:[#allocation2 + $0x98] sm:$0x1]
  %v3963 = vsel %vm3904, 0, %v3962
  %3964 = vst [vmem:[#allocation2 + $0x98] sm:$0x1] %v3963
  %vm3965 = vsmask.f32 7938
  %vm3966 = vmand %vm3902, %vm3965
  %v3967 = vld [vmem:[#allocation2 + $0x4] sm:$0x1]
  %v3968 = vsel %vm3966, 0, %v3967
  %3969 = vst [vmem:[#allocation2 + $0x4] sm:$0x1] %v3968
  %v3970 = vld [vmem:[#allocation2 + $0xc] sm:$0x1]
  %v3971 = vsel %vm3966, 0, %v3970
  %3972 = vst [vmem:[#allocation2 + $0xc] sm:$0x1] %v3971
  %v3973 = vld [vmem:[#allocation2 + $0x14] sm:$0x1]
  %v3974 = vsel %vm3966, 0, %v3973
  %3975 = vst [vmem:[#allocation2 + $0x14] sm:$0x1] %v3974
  %v3976 = vld [vmem:[#allocation2 + $0x1c] sm:$0x1]
  %v3977 = vsel %vm3966, 0, %v3976
  %3978 = vst [vmem:[#allocation2 + $0x1c] sm:$0x1] %v3977
  %v3979 = vld [vmem:[#allocation2 + $0x24] sm:$0x1]
  %v3980 = vsel %vm3966, 0, %v3979
  %3981 = vst [vmem:[#allocation2 + $0x24] sm:$0x1] %v3980
  %v3982 = vld [vmem:[#allocation2 + $0x2c] sm:$0x1]
  %v3983 = vsel %vm3966, 0, %v3982
  %3984 = vst [vmem:[#allocation2 + $0x2c] sm:$0x1] %v3983
  %v3985 = vld [vmem:[#allocation2 + $0x34] sm:$0x1]
  %v3986 = vsel %vm3966, 0, %v3985
  %3987 = vst [vmem:[#allocation2 + $0x34] sm:$0x1] %v3986
  %v3988 = vld [vmem:[#allocation2 + $0x3c] sm:$0x1]
  %v3989 = vsel %vm3966, 0, %v3988
  %3990 = vst [vmem:[#allocation2 + $0x3c] sm:$0x1] %v3989
  %v3991 = vld [vmem:[#allocation2 + $0x44] sm:$0x1]
  %v3992 = vsel %vm3966, 0, %v3991
  %3993 = vst [vmem:[#allocation2 + $0x44] sm:$0x1] %v3992
  %v3994 = vld [vmem:[#allocation2 + $0x4c] sm:$0x1]
  %v3995 = vsel %vm3966, 0, %v3994
  %3996 = vst [vmem:[#allocation2 + $0x4c] sm:$0x1] %v3995
  %v3997 = vld [vmem:[#allocation2 + $0x54] sm:$0x1]
  %v3998 = vsel %vm3966, 0, %v3997
  %3999 = vst [vmem:[#allocation2 + $0x54] sm:$0x1] %v3998
  %v4000 = vld [vmem:[#allocation2 + $0x5c] sm:$0x1]
  %v4001 = vsel %vm3966, 0, %v4000
  %4002 = vst [vmem:[#allocation2 + $0x5c] sm:$0x1] %v4001
  %v4003 = vld [vmem:[#allocation2 + $0x64] sm:$0x1]
  %v4004 = vsel %vm3966, 0, %v4003
  %4005 = vst [vmem:[#allocation2 + $0x64] sm:$0x1] %v4004
  %v4006 = vld [vmem:[#allocation2 + $0x6c] sm:$0x1]
  %v4007 = vsel %vm3966, 0, %v4006
  %4008 = vst [vmem:[#allocation2 + $0x6c] sm:$0x1] %v4007
  %v4009 = vld [vmem:[#allocation2 + $0x74] sm:$0x1]
  %v4010 = vsel %vm3966, 0, %v4009
  %4011 = vst [vmem:[#allocation2 + $0x74] sm:$0x1] %v4010
  %v4012 = vld [vmem:[#allocation2 + $0x7c] sm:$0x1]
  %v4013 = vsel %vm3966, 0, %v4012
  %4014 = vst [vmem:[#allocation2 + $0x7c] sm:$0x1] %v4013
  %v4015 = vld [vmem:[#allocation2 + $0x84] sm:$0x1]
  %v4016 = vsel %vm3966, 0, %v4015
  %4017 = vst [vmem:[#allocation2 + $0x84] sm:$0x1] %v4016
  %v4018 = vld [vmem:[#allocation2 + $0x8c] sm:$0x1]
  %v4019 = vsel %vm3966, 0, %v4018
  %4020 = vst [vmem:[#allocation2 + $0x8c] sm:$0x1] %v4019
  %v4021 = vld [vmem:[#allocation2 + $0x94] sm:$0x1]
  %v4022 = vsel %vm3966, 0, %v4021
  %4023 = vst [vmem:[#allocation2 + $0x94] sm:$0x1] %v4022
  %v4024 = vld [vmem:[#allocation2 + $0x9c] sm:$0x1]
  %v4025 = vsel %vm3966, 0, %v4024
  %4026 = vst [vmem:[#allocation2 + $0x9c] sm:$0x1] %v4025
  %v4027 = vpack.c.bf16 %v3878, %v3877
  %v4028 = vpack.c.bf16 %v3880, %v3879
  %v4029 = vpack.c.bf16 %v3882, %v3881
  %v4030 = vpack.c.bf16 %v3884, %v3883
  %v4031 = vpack.c.bf16 %v3886, %v3885
  %v4032 = vpack.c.bf16 %v3888, %v3887
  %v4033 = vpack.c.bf16 %v3890, %v3889
  %v4034 = vpack.c.bf16 %v3892, %v3891
  %v4043 = vunpack.c.l.b16 %v4027
  %v4044 = vunpack.c.h.b16 %v4027
  %v4045 = vunpack.c.l.b16 %v4028
  %v4046 = vunpack.c.h.b16 %v4028
  %v4047 = vunpack.c.l.b16 %v4029
  %v4048 = vunpack.c.h.b16 %v4029
  %v4049 = vunpack.c.l.b16 %v4030
  %v4050 = vunpack.c.h.b16 %v4030
  %v4051 = vunpack.c.l.b16 %v4031
  %v4052 = vunpack.c.h.b16 %v4031
  %v4053 = vunpack.c.l.b16 %v4032
  %v4054 = vunpack.c.h.b16 %v4032
  %v4055 = vunpack.c.l.b16 %v4033
  %v4056 = vunpack.c.h.b16 %v4033
  %v4057 = vunpack.c.l.b16 %v4034
  %v4058 = vunpack.c.h.b16 %v4034
  %v4059 = vpack.c.b16 %v4043, %v4043
  %v4060 = vpack.c.b16 %v4044, %v4044
  %v4061 = vpack.c.b16 %v4045, %v4045
  %v4062 = vpack.c.b16 %v4046, %v4046
  %v4063 = vpack.c.b16 %v4047, %v4047
  %v4064 = vpack.c.b16 %v4048, %v4048
  %v4065 = vpack.c.b16 %v4049, %v4049
  %v4066 = vpack.c.b16 %v4050, %v4050
  %v4067 = vpack.c.b16 %v4051, %v4051
  %v4068 = vpack.c.b16 %v4052, %v4052
  %v4069 = vpack.c.b16 %v4053, %v4053
  %v4070 = vpack.c.b16 %v4054, %v4054
  %v4071 = vpack.c.b16 %v4055, %v4055
  %v4072 = vpack.c.b16 %v4056, %v4056
  %v4073 = vpack.c.b16 %v4057, %v4057
  %v4074 = vpack.c.b16 %v4058, %v4058
  %v4076 = vshrl.u32 %v4059, 16
  %v4078 = vrot.slane %v4076, 7
  %v4079 = vshll.u32 %v4059, 16
  %v4081 = vor.u32 %v4078, %v4079
  %v4082 = vrot.slane %v4078, 4
  %v4084 = vshrl.u32 %v4060, 16
  %v4086 = vrot.slane %v4084, 7
  %v4087 = vshll.u32 %v4060, 16
  %v4089 = vor.u32 %v4086, %v4087
  %v4090 = vrot.slane %v4086, 4
  %v4092 = vshrl.u32 %v4061, 16
  %v4094 = vrot.slane %v4092, 7
  %v4095 = vshll.u32 %v4061, 16
  %v4097 = vor.u32 %v4094, %v4095
  %v4098 = vrot.slane %v4094, 4
  %v4100 = vshrl.u32 %v4062, 16
  %v4102 = vrot.slane %v4100, 7
  %v4103 = vshll.u32 %v4062, 16
  %v4105 = vor.u32 %v4102, %v4103
  %v4106 = vrot.slane %v4102, 4
  %v4108 = vshrl.u32 %v4063, 16
  %v4110 = vrot.slane %v4108, 7
  %v4111 = vshll.u32 %v4063, 16
  %v4113 = vor.u32 %v4110, %v4111
  %v4114 = vrot.slane %v4110, 4
  %v4116 = vshrl.u32 %v4064, 16
  %v4118 = vrot.slane %v4116, 7
  %v4119 = vshll.u32 %v4064, 16
  %v4121 = vor.u32 %v4118, %v4119
  %v4122 = vrot.slane %v4118, 4
  %v4124 = vshrl.u32 %v4065, 16
  %v4126 = vrot.slane %v4124, 7
  %v4127 = vshll.u32 %v4065, 16
  %v4129 = vor.u32 %v4126, %v4127
  %v4130 = vrot.slane %v4126, 4
  %v4132 = vshrl.u32 %v4066, 16
  %v4134 = vrot.slane %v4132, 7
  %v4135 = vshll.u32 %v4066, 16
  %v4137 = vor.u32 %v4134, %v4135
  %v4138 = vrot.slane %v4134, 4
  %v4140 = vshrl.u32 %v4067, 16
  %v4142 = vrot.slane %v4140, 7
  %v4143 = vshll.u32 %v4067, 16
  %v4145 = vor.u32 %v4142, %v4143
  %v4146 = vrot.slane %v4142, 4
  %v4148 = vshrl.u32 %v4068, 16
  %v4150 = vrot.slane %v4148, 7
  %v4151 = vshll.u32 %v4068, 16
  %v4153 = vor.u32 %v4150, %v4151
  %v4154 = vrot.slane %v4150, 4
  %v4156 = vshrl.u32 %v4069, 16
  %v4158 = vrot.slane %v4156, 7
  %v4159 = vshll.u32 %v4069, 16
  %v4161 = vor.u32 %v4158, %v4159
  %v4162 = vrot.slane %v4158, 4
  %v4164 = vshrl.u32 %v4070, 16
  %v4166 = vrot.slane %v4164, 7
  %v4167 = vshll.u32 %v4070, 16
  %v4169 = vor.u32 %v4166, %v4167
  %v4170 = vrot.slane %v4166, 4
  %v4172 = vshrl.u32 %v4071, 16
  %v4174 = vrot.slane %v4172, 7
  %v4175 = vshll.u32 %v4071, 16
  %v4177 = vor.u32 %v4174, %v4175
  %v4178 = vrot.slane %v4174, 4
  %v4180 = vshrl.u32 %v4072, 16
  %v4182 = vrot.slane %v4180, 7
  %v4183 = vshll.u32 %v4072, 16
  %v4185 = vor.u32 %v4182, %v4183
  %v4186 = vrot.slane %v4182, 4
  %v4188 = vshrl.u32 %v4073, 16
  %v4190 = vrot.slane %v4188, 7
  %v4191 = vshll.u32 %v4073, 16
  %v4193 = vor.u32 %v4190, %v4191
  %v4194 = vrot.slane %v4190, 4
  %v4196 = vshrl.u32 %v4074, 16
  %v4198 = vrot.slane %v4196, 7
  %v4199 = vshll.u32 %v4074, 16
  %v4201 = vor.u32 %v4198, %v4199
  %v4202 = vrot.slane %v4198, 4
  %s4235 = scalar_lea.vmem [#allocation2], 8
  %vm4236 = vcmask 1043456
  %vm4237 = vmand %vm4236, %vm3965
  %v4238 = vld [vmem:[%s4235] sm:$0xf]
  %v4239 = vsel %vm4237, %v4081, %v4238
  %4240 = vst [vmem:[%s4235] sm:$0xf] %v4239
  %v4241 = vld [vmem:[%s4235 + $0x4] sm:$0x1]
  %v4242 = vsel %vm3904, %v4082, %v4241
  %4243 = vst [vmem:[%s4235 + $0x4] sm:$0x1] %v4242
  %v4244 = vld [vmem:[%s4235 + $0x8] sm:$0xf]
  %v4245 = vsel %vm4237, %v4089, %v4244
  %4246 = vst [vmem:[%s4235 + $0x8] sm:$0xf] %v4245
  %v4247 = vld [vmem:[%s4235 + $0xc] sm:$0x1]
  %v4248 = vsel %vm3904, %v4090, %v4247
  %4249 = vst [vmem:[%s4235 + $0xc] sm:$0x1] %v4248
  %v4250 = vld [vmem:[%s4235 + $0x10] sm:$0xf]
  %v4251 = vsel %vm4237, %v4097, %v4250
  %4252 = vst [vmem:[%s4235 + $0x10] sm:$0xf] %v4251
  %v4253 = vld [vmem:[%s4235 + $0x14] sm:$0x1]
  %v4254 = vsel %vm3904, %v4098, %v4253
  %4255 = vst [vmem:[%s4235 + $0x14] sm:$0x1] %v4254
  %v4256 = vld [vmem:[%s4235 + $0x18] sm:$0xf]
  %v4257 = vsel %vm4237, %v4105, %v4256
  %4258 = vst [vmem:[%s4235 + $0x18] sm:$0xf] %v4257
  %v4259 = vld [vmem:[%s4235 + $0x1c] sm:$0x1]
  %v4260 = vsel %vm3904, %v4106, %v4259
  %4261 = vst [vmem:[%s4235 + $0x1c] sm:$0x1] %v4260
  %v4262 = vld [vmem:[%s4235 + $0x20] sm:$0xf]
  %v4263 = vsel %vm4237, %v4113, %v4262
  %4264 = vst [vmem:[%s4235 + $0x20] sm:$0xf] %v4263
  %v4265 = vld [vmem:[%s4235 + $0x24] sm:$0x1]
  %v4266 = vsel %vm3904, %v4114, %v4265
  %4267 = vst [vmem:[%s4235 + $0x24] sm:$0x1] %v4266
  %v4268 = vld [vmem:[%s4235 + $0x28] sm:$0xf]
  %v4269 = vsel %vm4237, %v4121, %v4268
  %4270 = vst [vmem:[%s4235 + $0x28] sm:$0xf] %v4269
  %v4271 = vld [vmem:[%s4235 + $0x2c] sm:$0x1]
  %v4272 = vsel %vm3904, %v4122, %v4271
  %4273 = vst [vmem:[%s4235 + $0x2c] sm:$0x1] %v4272
  %v4274 = vld [vmem:[%s4235 + $0x30] sm:$0xf]
  %v4275 = vsel %vm4237, %v4129, %v4274
  %4276 = vst [vmem:[%s4235 + $0x30] sm:$0xf] %v4275
  %v4277 = vld [vmem:[%s4235 + $0x34] sm:$0x1]
  %v4278 = vsel %vm3904, %v4130, %v4277
  %4279 = vst [vmem:[%s4235 + $0x34] sm:$0x1] %v4278
  %v4280 = vld [vmem:[%s4235 + $0x38] sm:$0xf]
  %v4281 = vsel %vm4237, %v4137, %v4280
  %4282 = vst [vmem:[%s4235 + $0x38] sm:$0xf] %v4281
  %v4283 = vld [vmem:[%s4235 + $0x3c] sm:$0x1]
  %v4284 = vsel %vm3904, %v4138, %v4283
  %4285 = vst [vmem:[%s4235 + $0x3c] sm:$0x1] %v4284
  %v4286 = vld [vmem:[%s4235 + $0x50] sm:$0xf]
  %v4287 = vsel %vm4237, %v4145, %v4286
  %4288 = vst [vmem:[%s4235 + $0x50] sm:$0xf] %v4287
  %v4289 = vld [vmem:[%s4235 + $0x54] sm:$0x1]
  %v4290 = vsel %vm3904, %v4146, %v4289
  %4291 = vst [vmem:[%s4235 + $0x54] sm:$0x1] %v4290
  %v4292 = vld [vmem:[%s4235 + $0x58] sm:$0xf]
  %v4293 = vsel %vm4237, %v4153, %v4292
  %4294 = vst [vmem:[%s4235 + $0x58] sm:$0xf] %v4293
  %v4295 = vld [vmem:[%s4235 + $0x5c] sm:$0x1]
  %v4296 = vsel %vm3904, %v4154, %v4295
  %4297 = vst [vmem:[%s4235 + $0x5c] sm:$0x1] %v4296
  %v4298 = vld [vmem:[%s4235 + $0x60] sm:$0xf]
  %v4299 = vsel %vm4237, %v4161, %v4298
  %4300 = vst [vmem:[%s4235 + $0x60] sm:$0xf] %v4299
  %v4301 = vld [vmem:[%s4235 + $0x64] sm:$0x1]
  %v4302 = vsel %vm3904, %v4162, %v4301
  %4303 = vst [vmem:[%s4235 + $0x64] sm:$0x1] %v4302
  %v4304 = vld [vmem:[%s4235 + $0x68] sm:$0xf]
  %v4305 = vsel %vm4237, %v4169, %v4304
  %4306 = vst [vmem:[%s4235 + $0x68] sm:$0xf] %v4305
  %v4307 = vld [vmem:[%s4235 + $0x6c] sm:$0x1]
  %v4308 = vsel %vm3904, %v4170, %v4307
  %4309 = vst [vmem:[%s4235 + $0x6c] sm:$0x1] %v4308
  %v4310 = vld [vmem:[%s4235 + $0x70] sm:$0xf]
  %v4311 = vsel %vm4237, %v4177, %v4310
  %4312 = vst [vmem:[%s4235 + $0x70] sm:$0xf] %v4311
  %v4313 = vld [vmem:[%s4235 + $0x74] sm:$0x1]
  %v4314 = vsel %vm3904, %v4178, %v4313
  %4315 = vst [vmem:[%s4235 + $0x74] sm:$0x1] %v4314
  %v4316 = vld [vmem:[%s4235 + $0x78] sm:$0xf]
  %v4317 = vsel %vm4237, %v4185, %v4316
  %4318 = vst [vmem:[%s4235 + $0x78] sm:$0xf] %v4317
  %v4319 = vld [vmem:[%s4235 + $0x7c] sm:$0x1]
  %v4320 = vsel %vm3904, %v4186, %v4319
  %4321 = vst [vmem:[%s4235 + $0x7c] sm:$0x1] %v4320
  %v4322 = vld [vmem:[%s4235 + $0x80] sm:$0xf]
  %v4323 = vsel %vm4237, %v4193, %v4322
  %4324 = vst [vmem:[%s4235 + $0x80] sm:$0xf] %v4323
  %v4325 = vld [vmem:[%s4235 + $0x84] sm:$0x1]
  %v4326 = vsel %vm3904, %v4194, %v4325
  %4327 = vst [vmem:[%s4235 + $0x84] sm:$0x1] %v4326
  %v4328 = vld [vmem:[%s4235 + $0x88] sm:$0xf]
  %v4329 = vsel %vm4237, %v4201, %v4328
  %4330 = vst [vmem:[%s4235 + $0x88] sm:$0xf] %v4329
  %v4331 = vld [vmem:[%s4235 + $0x8c] sm:$0x1]
  %v4332 = vsel %vm3904, %v4202, %v4331
  %4333 = vst [vmem:[%s4235 + $0x8c] sm:$0x1] %v4332
  %v4334 = vld [vmem:[%s4235] sm:$0xf]
  %v4335 = vld [vmem:[%s4235 + $0x4] sm:$0x1]
  %v4336 = vld [vmem:[%s4235 + $0x8] sm:$0xf]
  %v4337 = vld [vmem:[%s4235 + $0xc] sm:$0x1]
  %v4338 = vld [vmem:[%s4235 + $0x10] sm:$0xf]
  %v4339 = vld [vmem:[%s4235 + $0x14] sm:$0x1]
  %v4340 = vld [vmem:[%s4235 + $0x18] sm:$0xf]
  %v4341 = vld [vmem:[%s4235 + $0x1c] sm:$0x1]
  %v4342 = vld [vmem:[%s4235 + $0x20] sm:$0xf]
  %v4343 = vld [vmem:[%s4235 + $0x24] sm:$0x1]
  %v4344 = vld [vmem:[%s4235 + $0x28] sm:$0xf]
  %v4345 = vld [vmem:[%s4235 + $0x2c] sm:$0x1]
  %v4346 = vld [vmem:[%s4235 + $0x30] sm:$0xf]
  %v4347 = vld [vmem:[%s4235 + $0x34] sm:$0x1]
  %v4348 = vld [vmem:[%s4235 + $0x38] sm:$0xf]
  %v4349 = vld [vmem:[%s4235 + $0x3c] sm:$0x1]
  %v4350 = vld [vmem:[%s4235 + $0x50] sm:$0xf]
  %v4351 = vld [vmem:[%s4235 + $0x54] sm:$0x1]
  %v4352 = vld [vmem:[%s4235 + $0x58] sm:$0xf]
  %v4353 = vld [vmem:[%s4235 + $0x5c] sm:$0x1]
  %v4354 = vld [vmem:[%s4235 + $0x60] sm:$0xf]
  %v4355 = vld [vmem:[%s4235 + $0x64] sm:$0x1]
  %v4356 = vld [vmem:[%s4235 + $0x68] sm:$0xf]
  %v4357 = vld [vmem:[%s4235 + $0x6c] sm:$0x1]
  %v4358 = vld [vmem:[%s4235 + $0x70] sm:$0xf]
  %v4359 = vld [vmem:[%s4235 + $0x74] sm:$0x1]
  %v4360 = vld [vmem:[%s4235 + $0x78] sm:$0xf]
  %v4361 = vld [vmem:[%s4235 + $0x7c] sm:$0x1]
  %v4362 = vld [vmem:[%s4235 + $0x80] sm:$0xf]
  %v4363 = vld [vmem:[%s4235 + $0x84] sm:$0x1]
  %v4364 = vld [vmem:[%s4235 + $0x88] sm:$0xf]
  %v4365 = vld [vmem:[%s4235 + $0x8c] sm:$0x1]
  %v4367 = vshrl.u32 %v4334, 16
  %v4369 = vrot.slane %v4367, 4
  %v4370 = vshll.u32 %v4334, 16
  %v4372 = vrot.slane %v4370, 5
  %v4373 = vor.u32 %v4369, %v4372
  %v4374 = vrot.slane %v4373, 4
  %v4376 = vshll.u32 %v4335, 16
  %v4378 = vrot.slane %v4376, 5
  %v4379 = vsel %vm596, %v4374, %v4378
  %v4381 = vshrl.u32 %v4336, 16
  %v4383 = vrot.slane %v4381, 4
  %v4384 = vshll.u32 %v4336, 16
  %v4386 = vrot.slane %v4384, 5
  %v4387 = vor.u32 %v4383, %v4386
  %v4388 = vrot.slane %v4387, 4
  %v4390 = vshll.u32 %v4337, 16
  %v4392 = vrot.slane %v4390, 5
  %v4393 = vsel %vm596, %v4388, %v4392
  %v4395 = vshrl.u32 %v4338, 16
  %v4397 = vrot.slane %v4395, 4
  %v4398 = vshll.u32 %v4338, 16
  %v4400 = vrot.slane %v4398, 5
  %v4401 = vor.u32 %v4397, %v4400
  %v4402 = vrot.slane %v4401, 4
  %v4404 = vshll.u32 %v4339, 16
  %v4406 = vrot.slane %v4404, 5
  %v4407 = vsel %vm596, %v4402, %v4406
  %v4409 = vshrl.u32 %v4340, 16
  %v4411 = vrot.slane %v4409, 4
  %v4412 = vshll.u32 %v4340, 16
  %v4414 = vrot.slane %v4412, 5
  %v4415 = vor.u32 %v4411, %v4414
  %v4416 = vrot.slane %v4415, 4
  %v4418 = vshll.u32 %v4341, 16
  %v4420 = vrot.slane %v4418, 5
  %v4421 = vsel %vm596, %v4416, %v4420
  %v4423 = vshrl.u32 %v4342, 16
  %v4425 = vrot.slane %v4423, 4
  %v4426 = vshll.u32 %v4342, 16
  %v4428 = vrot.slane %v4426, 5
  %v4429 = vor.u32 %v4425, %v4428
  %v4430 = vrot.slane %v4429, 4
  %v4432 = vshll.u32 %v4343, 16
  %v4434 = vrot.slane %v4432, 5
  %v4435 = vsel %vm596, %v4430, %v4434
  %v4437 = vshrl.u32 %v4344, 16
  %v4439 = vrot.slane %v4437, 4
  %v4440 = vshll.u32 %v4344, 16
  %v4442 = vrot.slane %v4440, 5
  %v4443 = vor.u32 %v4439, %v4442
  %v4444 = vrot.slane %v4443, 4
  %v4446 = vshll.u32 %v4345, 16
  %v4448 = vrot.slane %v4446, 5
  %v4449 = vsel %vm596, %v4444, %v4448
  %v4451 = vshrl.u32 %v4346, 16
  %v4453 = vrot.slane %v4451, 4
  %v4454 = vshll.u32 %v4346, 16
  %v4456 = vrot.slane %v4454, 5
  %v4457 = vor.u32 %v4453, %v4456
  %v4458 = vrot.slane %v4457, 4
  %v4460 = vshll.u32 %v4347, 16
  %v4462 = vrot.slane %v4460, 5
  %v4463 = vsel %vm596, %v4458, %v4462
  %v4465 = vshrl.u32 %v4348, 16
  %v4467 = vrot.slane %v4465, 4
  %v4468 = vshll.u32 %v4348, 16
  %v4470 = vrot.slane %v4468, 5
  %v4471 = vor.u32 %v4467, %v4470
  %v4472 = vrot.slane %v4471, 4
  %v4474 = vshll.u32 %v4349, 16
  %v4476 = vrot.slane %v4474, 5
  %v4477 = vsel %vm596, %v4472, %v4476
  %v4479 = vshrl.u32 %v4350, 16
  %v4481 = vrot.slane %v4479, 4
  %v4482 = vshll.u32 %v4350, 16
  %v4484 = vrot.slane %v4482, 5
  %v4485 = vor.u32 %v4481, %v4484
  %v4486 = vrot.slane %v4485, 4
  %v4488 = vshll.u32 %v4351, 16
  %v4490 = vrot.slane %v4488, 5
  %v4491 = vsel %vm596, %v4486, %v4490
  %v4493 = vshrl.u32 %v4352, 16
  %v4495 = vrot.slane %v4493, 4
  %v4496 = vshll.u32 %v4352, 16
  %v4498 = vrot.slane %v4496, 5
  %v4499 = vor.u32 %v4495, %v4498
  %v4500 = vrot.slane %v4499, 4
  %v4502 = vshll.u32 %v4353, 16
  %v4504 = vrot.slane %v4502, 5
  %v4505 = vsel %vm596, %v4500, %v4504
  %v4507 = vshrl.u32 %v4354, 16
  %v4509 = vrot.slane %v4507, 4
  %v4510 = vshll.u32 %v4354, 16
  %v4512 = vrot.slane %v4510, 5
  %v4513 = vor.u32 %v4509, %v4512
  %v4514 = vrot.slane %v4513, 4
  %v4516 = vshll.u32 %v4355, 16
  %v4518 = vrot.slane %v4516, 5
  %v4519 = vsel %vm596, %v4514, %v4518
  %v4521 = vshrl.u32 %v4356, 16
  %v4523 = vrot.slane %v4521, 4
  %v4524 = vshll.u32 %v4356, 16
  %v4526 = vrot.slane %v4524, 5
  %v4527 = vor.u32 %v4523, %v4526
  %v4528 = vrot.slane %v4527, 4
  %v4530 = vshll.u32 %v4357, 16
  %v4532 = vrot.slane %v4530, 5
  %v4533 = vsel %vm596, %v4528, %v4532
  %v4535 = vshrl.u32 %v4358, 16
  %v4537 = vrot.slane %v4535, 4
  %v4538 = vshll.u32 %v4358, 16
  %v4540 = vrot.slane %v4538, 5
  %v4541 = vor.u32 %v4537, %v4540
  %v4542 = vrot.slane %v4541, 4
  %v4544 = vshll.u32 %v4359, 16
  %v4546 = vrot.slane %v4544, 5
  %v4547 = vsel %vm596, %v4542, %v4546
  %v4549 = vshrl.u32 %v4360, 16
  %v4551 = vrot.slane %v4549, 4
  %v4552 = vshll.u32 %v4360, 16
  %v4554 = vrot.slane %v4552, 5
  %v4555 = vor.u32 %v4551, %v4554
  %v4556 = vrot.slane %v4555, 4
  %v4558 = vshll.u32 %v4361, 16
  %v4560 = vrot.slane %v4558, 5
  %v4561 = vsel %vm596, %v4556, %v4560
  %v4563 = vshrl.u32 %v4362, 16
  %v4565 = vrot.slane %v4563, 4
  %v4566 = vshll.u32 %v4362, 16
  %v4568 = vrot.slane %v4566, 5
  %v4569 = vor.u32 %v4565, %v4568
  %v4570 = vrot.slane %v4569, 4
  %v4572 = vshll.u32 %v4363, 16
  %v4574 = vrot.slane %v4572, 5
  %v4575 = vsel %vm596, %v4570, %v4574
  %v4577 = vshrl.u32 %v4364, 16
  %v4579 = vrot.slane %v4577, 4
  %v4580 = vshll.u32 %v4364, 16
  %v4582 = vrot.slane %v4580, 5
  %v4583 = vor.u32 %v4579, %v4582
  %v4584 = vrot.slane %v4583, 4
  %v4586 = vshll.u32 %v4365, 16
  %v4588 = vrot.slane %v4586, 5
  %v4589 = vsel %vm596, %v4584, %v4588
  %v4590 = vld [vmem:[#allocation2] sm:$0xf]
  %v4591 = vld [vmem:[#allocation2 + $0x4] sm:$0x1]
  %v4592 = vld [vmem:[#allocation2 + $0x8] sm:$0xf]
  %v4593 = vld [vmem:[#allocation2 + $0xc] sm:$0x1]
  %v4594 = vld [vmem:[#allocation2 + $0x10] sm:$0xf]
  %v4595 = vld [vmem:[#allocation2 + $0x14] sm:$0x1]
  %v4596 = vld [vmem:[#allocation2 + $0x18] sm:$0xf]
  %v4597 = vld [vmem:[#allocation2 + $0x1c] sm:$0x1]
  %v4598 = vld [vmem:[#allocation2 + $0x20] sm:$0xf]
  %v4599 = vld [vmem:[#allocation2 + $0x24] sm:$0x1]
  %v4600 = vld [vmem:[#allocation2 + $0x28] sm:$0xf]
  %v4601 = vld [vmem:[#allocation2 + $0x2c] sm:$0x1]
  %v4602 = vld [vmem:[#allocation2 + $0x30] sm:$0xf]
  %v4603 = vld [vmem:[#allocation2 + $0x34] sm:$0x1]
  %v4604 = vld [vmem:[#allocation2 + $0x38] sm:$0xf]
  %v4605 = vld [vmem:[#allocation2 + $0x3c] sm:$0x1]
  %v4606 = vld [vmem:[#allocation2 + $0x50] sm:$0xf]
  %v4607 = vld [vmem:[#allocation2 + $0x54] sm:$0x1]
  %v4608 = vld [vmem:[#allocation2 + $0x58] sm:$0xf]
  %v4609 = vld [vmem:[#allocation2 + $0x5c] sm:$0x1]
  %v4610 = vld [vmem:[#allocation2 + $0x60] sm:$0xf]
  %v4611 = vld [vmem:[#allocation2 + $0x64] sm:$0x1]
  %v4612 = vld [vmem:[#allocation2 + $0x68] sm:$0xf]
  %v4613 = vld [vmem:[#allocation2 + $0x6c] sm:$0x1]
  %v4614 = vld [vmem:[#allocation2 + $0x70] sm:$0xf]
  %v4615 = vld [vmem:[#allocation2 + $0x74] sm:$0x1]
  %v4616 = vld [vmem:[#allocation2 + $0x78] sm:$0xf]
  %v4617 = vld [vmem:[#allocation2 + $0x7c] sm:$0x1]
  %v4618 = vld [vmem:[#allocation2 + $0x80] sm:$0xf]
  %v4619 = vld [vmem:[#allocation2 + $0x84] sm:$0x1]
  %v4620 = vld [vmem:[#allocation2 + $0x88] sm:$0xf]
  %v4621 = vld [vmem:[#allocation2 + $0x8c] sm:$0x1]
  %v4623 = vshrl.u32 %v4590, 16
  %v4625 = vrot.slane %v4623, 4
  %v4626 = vshll.u32 %v4590, 16
  %v4628 = vrot.slane %v4626, 5
  %v4629 = vor.u32 %v4625, %v4628
  %v4630 = vrot.slane %v4629, 4
  %v4632 = vshll.u32 %v4591, 16
  %v4634 = vrot.slane %v4632, 5
  %v4635 = vsel %vm596, %v4630, %v4634
  %v4637 = vshrl.u32 %v4592, 16
  %v4639 = vrot.slane %v4637, 4
  %v4640 = vshll.u32 %v4592, 16
  %v4642 = vrot.slane %v4640, 5
  %v4643 = vor.u32 %v4639, %v4642
  %v4644 = vrot.slane %v4643, 4
  %v4646 = vshll.u32 %v4593, 16
  %v4648 = vrot.slane %v4646, 5
  %v4649 = vsel %vm596, %v4644, %v4648
  %v4651 = vshrl.u32 %v4594, 16
  %v4653 = vrot.slane %v4651, 4
  %v4654 = vshll.u32 %v4594, 16
  %v4656 = vrot.slane %v4654, 5
  %v4657 = vor.u32 %v4653, %v4656
  %v4658 = vrot.slane %v4657, 4
  %v4660 = vshll.u32 %v4595, 16
  %v4662 = vrot.slane %v4660, 5
  %v4663 = vsel %vm596, %v4658, %v4662
  %v4665 = vshrl.u32 %v4596, 16
  %v4667 = vrot.slane %v4665, 4
  %v4668 = vshll.u32 %v4596, 16
  %v4670 = vrot.slane %v4668, 5
  %v4671 = vor.u32 %v4667, %v4670
  %v4672 = vrot.slane %v4671, 4
  %v4674 = vshll.u32 %v4597, 16
  %v4676 = vrot.slane %v4674, 5
  %v4677 = vsel %vm596, %v4672, %v4676
  %v4679 = vshrl.u32 %v4598, 16
  %v4681 = vrot.slane %v4679, 4
  %v4682 = vshll.u32 %v4598, 16
  %v4684 = vrot.slane %v4682, 5
  %v4685 = vor.u32 %v4681, %v4684
  %v4686 = vrot.slane %v4685, 4
  %v4688 = vshll.u32 %v4599, 16
  %v4690 = vrot.slane %v4688, 5
  %v4691 = vsel %vm596, %v4686, %v4690
  %v4693 = vshrl.u32 %v4600, 16
  %v4695 = vrot.slane %v4693, 4
  %v4696 = vshll.u32 %v4600, 16
  %v4698 = vrot.slane %v4696, 5
  %v4699 = vor.u32 %v4695, %v4698
  %v4700 = vrot.slane %v4699, 4
  %v4702 = vshll.u32 %v4601, 16
  %v4704 = vrot.slane %v4702, 5
  %v4705 = vsel %vm596, %v4700, %v4704
  %v4707 = vshrl.u32 %v4602, 16
  %v4709 = vrot.slane %v4707, 4
  %v4710 = vshll.u32 %v4602, 16
  %v4712 = vrot.slane %v4710, 5
  %v4713 = vor.u32 %v4709, %v4712
  %v4714 = vrot.slane %v4713, 4
  %v4716 = vshll.u32 %v4603, 16
  %v4718 = vrot.slane %v4716, 5
  %v4719 = vsel %vm596, %v4714, %v4718
  %v4721 = vshrl.u32 %v4604, 16
  %v4723 = vrot.slane %v4721, 4
  %v4724 = vshll.u32 %v4604, 16
  %v4726 = vrot.slane %v4724, 5
  %v4727 = vor.u32 %v4723, %v4726
  %v4728 = vrot.slane %v4727, 4
  %v4730 = vshll.u32 %v4605, 16
  %v4732 = vrot.slane %v4730, 5
  %v4733 = vsel %vm596, %v4728, %v4732
  %v4735 = vshrl.u32 %v4606, 16
  %v4737 = vrot.slane %v4735, 4
  %v4738 = vshll.u32 %v4606, 16
  %v4740 = vrot.slane %v4738, 5
  %v4741 = vor.u32 %v4737, %v4740
  %v4742 = vrot.slane %v4741, 4
  %v4744 = vshll.u32 %v4607, 16
  %v4746 = vrot.slane %v4744, 5
  %v4747 = vsel %vm596, %v4742, %v4746
  %v4749 = vshrl.u32 %v4608, 16
  %v4751 = vrot.slane %v4749, 4
  %v4752 = vshll.u32 %v4608, 16
  %v4754 = vrot.slane %v4752, 5
  %v4755 = vor.u32 %v4751, %v4754
  %v4756 = vrot.slane %v4755, 4
  %v4758 = vshll.u32 %v4609, 16
  %v4760 = vrot.slane %v4758, 5
  %v4761 = vsel %vm596, %v4756, %v4760
  %v4763 = vshrl.u32 %v4610, 16
  %v4765 = vrot.slane %v4763, 4
  %v4766 = vshll.u32 %v4610, 16
  %v4768 = vrot.slane %v4766, 5
  %v4769 = vor.u32 %v4765, %v4768
  %v4770 = vrot.slane %v4769, 4
  %v4772 = vshll.u32 %v4611, 16
  %v4774 = vrot.slane %v4772, 5
  %v4775 = vsel %vm596, %v4770, %v4774
  %v4777 = vshrl.u32 %v4612, 16
  %v4779 = vrot.slane %v4777, 4
  %v4780 = vshll.u32 %v4612, 16
  %v4782 = vrot.slane %v4780, 5
  %v4783 = vor.u32 %v4779, %v4782
  %v4784 = vrot.slane %v4783, 4
  %v4786 = vshll.u32 %v4613, 16
  %v4788 = vrot.slane %v4786, 5
  %v4789 = vsel %vm596, %v4784, %v4788
  %v4791 = vshrl.u32 %v4614, 16
  %v4793 = vrot.slane %v4791, 4
  %v4794 = vshll.u32 %v4614, 16
  %v4796 = vrot.slane %v4794, 5
  %v4797 = vor.u32 %v4793, %v4796
  %v4798 = vrot.slane %v4797, 4
  %v4800 = vshll.u32 %v4615, 16
  %v4802 = vrot.slane %v4800, 5
  %v4803 = vsel %vm596, %v4798, %v4802
  %v4805 = vshrl.u32 %v4616, 16
  %v4807 = vrot.slane %v4805, 4
  %v4808 = vshll.u32 %v4616, 16
  %v4810 = vrot.slane %v4808, 5
  %v4811 = vor.u32 %v4807, %v4810
  %v4812 = vrot.slane %v4811, 4
  %v4814 = vshll.u32 %v4617, 16
  %v4816 = vrot.slane %v4814, 5
  %v4817 = vsel %vm596, %v4812, %v4816
  %v4819 = vshrl.u32 %v4618, 16
  %v4821 = vrot.slane %v4819, 4
  %v4822 = vshll.u32 %v4618, 16
  %v4824 = vrot.slane %v4822, 5
  %v4825 = vor.u32 %v4821, %v4824
  %v4826 = vrot.slane %v4825, 4
  %v4828 = vshll.u32 %v4619, 16
  %v4830 = vrot.slane %v4828, 5
  %v4831 = vsel %vm596, %v4826, %v4830
  %v4833 = vshrl.u32 %v4620, 16
  %v4835 = vrot.slane %v4833, 4
  %v4836 = vshll.u32 %v4620, 16
  %v4838 = vrot.slane %v4836, 5
  %v4839 = vor.u32 %v4835, %v4838
  %v4840 = vrot.slane %v4839, 4
  %v4842 = vshll.u32 %v4621, 16
  %v4844 = vrot.slane %v4842, 5
  %v4845 = vsel %vm596, %v4840, %v4844
  %v4846 = vunpack.c.l.b16 %v4379
  %v4847 = vunpack.c.l.b16 %v4393
  %v4848 = vunpack.c.l.b16 %v4407
  %v4849 = vunpack.c.l.b16 %v4421
  %v4850 = vunpack.c.l.b16 %v4435
  %v4851 = vunpack.c.l.b16 %v4449
  %v4852 = vunpack.c.l.b16 %v4463
  %v4853 = vunpack.c.l.b16 %v4477
  %v4854 = vunpack.c.l.b16 %v4491
  %v4855 = vunpack.c.l.b16 %v4505
  %v4856 = vunpack.c.l.b16 %v4519
  %v4857 = vunpack.c.l.b16 %v4533
  %v4858 = vunpack.c.l.b16 %v4547
  %v4859 = vunpack.c.l.b16 %v4561
  %v4860 = vunpack.c.l.b16 %v4575
  %v4861 = vunpack.c.l.b16 %v4589
  %v4862 = vpack.c.b16 %v4847, %v4846
  %v4863 = vpack.c.b16 %v4849, %v4848
  %v4864 = vpack.c.b16 %v4851, %v4850
  %v4865 = vpack.c.b16 %v4853, %v4852
  %v4866 = vpack.c.b16 %v4855, %v4854
  %v4867 = vpack.c.b16 %v4857, %v4856
  %v4868 = vpack.c.b16 %v4859, %v4858
  %v4869 = vpack.c.b16 %v4861, %v4860
  %v4894 = vunpack.c.l.b16 %v4334
  %v4895 = vunpack.c.l.b16 %v4336
  %v4896 = vunpack.c.l.b16 %v4338
  %v4897 = vunpack.c.l.b16 %v4340
  %v4898 = vunpack.c.l.b16 %v4342
  %v4899 = vunpack.c.l.b16 %v4344
  %v4900 = vunpack.c.l.b16 %v4346
  %v4901 = vunpack.c.l.b16 %v4348
  %v4902 = vunpack.c.l.b16 %v4350
  %v4903 = vunpack.c.l.b16 %v4352
  %v4904 = vunpack.c.l.b16 %v4354
  %v4905 = vunpack.c.l.b16 %v4356
  %v4906 = vunpack.c.l.b16 %v4358
  %v4907 = vunpack.c.l.b16 %v4360
  %v4908 = vunpack.c.l.b16 %v4362
  %v4909 = vunpack.c.l.b16 %v4364
  %v4910 = vpack.c.b16 %v4895, %v4894
  %v4911 = vpack.c.b16 %v4897, %v4896
  %v4912 = vpack.c.b16 %v4899, %v4898
  %v4913 = vpack.c.b16 %v4901, %v4900
  %v4914 = vpack.c.b16 %v4903, %v4902
  %v4915 = vpack.c.b16 %v4905, %v4904
  %v4916 = vpack.c.b16 %v4907, %v4906
  %v4917 = vpack.c.b16 %v4909, %v4908
  %v4926 = vunpack.c.l.b16 %v4635
  %v4927 = vunpack.c.l.b16 %v4649
  %v4928 = vunpack.c.l.b16 %v4663
  %v4929 = vunpack.c.l.b16 %v4677
  %v4930 = vunpack.c.l.b16 %v4691
  %v4931 = vunpack.c.l.b16 %v4705
  %v4932 = vunpack.c.l.b16 %v4719
  %v4933 = vunpack.c.l.b16 %v4733
  %v4934 = vunpack.c.l.b16 %v4747
  %v4935 = vunpack.c.l.b16 %v4761
  %v4936 = vunpack.c.l.b16 %v4775
  %v4937 = vunpack.c.l.b16 %v4789
  %v4938 = vunpack.c.l.b16 %v4803
  %v4939 = vunpack.c.l.b16 %v4817
  %v4940 = vunpack.c.l.b16 %v4831
  %v4941 = vunpack.c.l.b16 %v4845
  %v4942 = vpack.c.b16 %v4927, %v4926
  %v4943 = vpack.c.b16 %v4929, %v4928
  %v4944 = vpack.c.b16 %v4931, %v4930
  %v4945 = vpack.c.b16 %v4933, %v4932
  %v4946 = vpack.c.b16 %v4935, %v4934
  %v4947 = vpack.c.b16 %v4937, %v4936
  %v4948 = vpack.c.b16 %v4939, %v4938
  %v4949 = vpack.c.b16 %v4941, %v4940
  %v4974 = vunpack.c.l.b16 %v4590
  %v4975 = vunpack.c.l.b16 %v4592
  %v4976 = vunpack.c.l.b16 %v4594
  %v4977 = vunpack.c.l.b16 %v4596
  %v4978 = vunpack.c.l.b16 %v4598
  %v4979 = vunpack.c.l.b16 %v4600
  %v4980 = vunpack.c.l.b16 %v4602
  %v4981 = vunpack.c.l.b16 %v4604
  %v4982 = vunpack.c.l.b16 %v4606
  %v4983 = vunpack.c.l.b16 %v4608
  %v4984 = vunpack.c.l.b16 %v4610
  %v4985 = vunpack.c.l.b16 %v4612
  %v4986 = vunpack.c.l.b16 %v4614
  %v4987 = vunpack.c.l.b16 %v4616
  %v4988 = vunpack.c.l.b16 %v4618
  %v4989 = vunpack.c.l.b16 %v4620
  %v4990 = vpack.c.b16 %v4975, %v4974
  %v4991 = vpack.c.b16 %v4977, %v4976
  %v4992 = vpack.c.b16 %v4979, %v4978
  %v4993 = vpack.c.b16 %v4981, %v4980
  %v4994 = vpack.c.b16 %v4983, %v4982
  %v4995 = vpack.c.b16 %v4985, %v4984
  %v4996 = vpack.c.b16 %v4987, %v4986
  %v4997 = vpack.c.b16 %v4989, %v4988
  %v5006 = vld [vmem:[%s2] sm:$0xf]
  %v5007 = vld [vmem:[%s2 + $0x4] sm:$0xf]
  %v5008 = vld [vmem:[%s2 + $0x8] sm:$0xf]
  %v5009 = vld [vmem:[%s2 + $0xc] sm:$0xf]
  %v5010 = vld [vmem:[%s2 + $0x10] sm:$0xf]
  %v5011 = vld [vmem:[%s2 + $0x14] sm:$0xf]
  %v5012 = vld [vmem:[%s2 + $0x18] sm:$0xf]
  %v5013 = vld [vmem:[%s2 + $0x1c] sm:$0xf]
  %v5014 = vld [vmem:[%s2 + $0x20] sm:$0xf]
  %v5015 = vld [vmem:[%s2 + $0x24] sm:$0xf]
  %v5016 = vld [vmem:[%s2 + $0x28] sm:$0xf]
  %v5017 = vld [vmem:[%s2 + $0x2c] sm:$0xf]
  %v5018 = vld [vmem:[%s2 + $0x30] sm:$0xf]
  %v5019 = vld [vmem:[%s2 + $0x34] sm:$0xf]
  %v5020 = vld [vmem:[%s2 + $0x38] sm:$0xf]
  %v5021 = vld [vmem:[%s2 + $0x3c] sm:$0xf]
  %v5022 = vld [vmem:[%s2 + $0x40] sm:$0xf]
  %v5023 = vld [vmem:[%s2 + $0x44] sm:$0xf]
  %v5024 = vld [vmem:[%s2 + $0x48] sm:$0xf]
  %v5025 = vld [vmem:[%s2 + $0x4c] sm:$0xf]
  %v5026 = vld [vmem:[%s2 + $0x50] sm:$0xf]
  %v5027 = vld [vmem:[%s2 + $0x54] sm:$0xf]
  %v5028 = vld [vmem:[%s2 + $0x58] sm:$0xf]
  %v5029 = vld [vmem:[%s2 + $0x5c] sm:$0xf]
  %v5030 = vld [vmem:[%s2 + $0x60] sm:$0xf]
  %v5031 = vld [vmem:[%s2 + $0x64] sm:$0xf]
  %v5032 = vld [vmem:[%s2 + $0x68] sm:$0xf]
  %v5033 = vld [vmem:[%s2 + $0x6c] sm:$0xf]
  %v5034 = vld [vmem:[%s2 + $0x70] sm:$0xf]
  %v5035 = vld [vmem:[%s2 + $0x74] sm:$0xf]
  %v5036 = vld [vmem:[%s2 + $0x78] sm:$0xf]
  %v5037 = vld [vmem:[%s2 + $0x7c] sm:$0xf]
  %v5038 = vld [vmem:[%s2 + $0x80] sm:$0xf]
  %v5039 = vld [vmem:[%s2 + $0x84] sm:$0xf]
  %v5040 = vld [vmem:[%s2 + $0x88] sm:$0xf]
  %v5041 = vld [vmem:[%s2 + $0x8c] sm:$0xf]
  %v5042 = vld [vmem:[%s2 + $0x90] sm:$0xf]
  %v5043 = vld [vmem:[%s2 + $0x94] sm:$0xf]
  %v5044 = vld [vmem:[%s2 + $0x98] sm:$0xf]
  %v5045 = vld [vmem:[%s2 + $0x9c] sm:$0xf]
  %v5046 = vld [vmem:[%s2 + $0xa0] sm:$0xf]
  %v5047 = vld [vmem:[%s2 + $0xa4] sm:$0xf]
  %v5048 = vld [vmem:[%s2 + $0xa8] sm:$0xf]
  %v5049 = vld [vmem:[%s2 + $0xac] sm:$0xf]
  %v5050 = vld [vmem:[%s2 + $0xb0] sm:$0xf]
  %v5051 = vld [vmem:[%s2 + $0xb4] sm:$0xf]
  %v5052 = vld [vmem:[%s2 + $0xb8] sm:$0xf]
  %v5053 = vld [vmem:[%s2 + $0xbc] sm:$0xf]
  %v5054 = vld [vmem:[%s2 + $0xc0] sm:$0xf]
  %v5055 = vld [vmem:[%s2 + $0xc4] sm:$0xf]
  %v5056 = vld [vmem:[%s2 + $0xc8] sm:$0xf]
  %v5057 = vld [vmem:[%s2 + $0xcc] sm:$0xf]
  %v5058 = vld [vmem:[%s2 + $0xd0] sm:$0xf]
  %v5059 = vld [vmem:[%s2 + $0xd4] sm:$0xf]
  %v5060 = vld [vmem:[%s2 + $0xd8] sm:$0xf]
  %v5061 = vld [vmem:[%s2 + $0xdc] sm:$0xf]
  %v5062 = vld [vmem:[%s2 + $0xe0] sm:$0xf]
  %v5063 = vld [vmem:[%s2 + $0xe4] sm:$0xf]
  %v5064 = vld [vmem:[%s2 + $0xe8] sm:$0xf]
  %v5065 = vld [vmem:[%s2 + $0xec] sm:$0xf]
  %v5066 = vld [vmem:[%s2 + $0xf0] sm:$0xf]
  %v5067 = vld [vmem:[%s2 + $0xf4] sm:$0xf]
  %v5068 = vld [vmem:[%s2 + $0xf8] sm:$0xf]
  %v5069 = vld [vmem:[%s2 + $0xfc] sm:$0xf]
  %v5134 = vunpack.c.l.b16 %v5006
  %v5135 = vunpack.c.l.b16 %v5007
  %v5136 = vunpack.c.l.b16 %v5008
  %v5137 = vunpack.c.l.b16 %v5009
  %v5138 = vunpack.c.l.b16 %v5010
  %v5139 = vunpack.c.l.b16 %v5011
  %v5140 = vunpack.c.l.b16 %v5012
  %v5141 = vunpack.c.l.b16 %v5013
  %v5142 = vunpack.c.l.b16 %v5014
  %v5143 = vunpack.c.l.b16 %v5015
  %v5144 = vunpack.c.l.b16 %v5016
  %v5145 = vunpack.c.l.b16 %v5017
  %v5146 = vunpack.c.l.b16 %v5018
  %v5147 = vunpack.c.l.b16 %v5019
  %v5148 = vunpack.c.l.b16 %v5020
  %v5149 = vunpack.c.l.b16 %v5021
  %v5150 = vunpack.c.l.b16 %v5022
  %v5151 = vunpack.c.l.b16 %v5023
  %v5152 = vunpack.c.l.b16 %v5024
  %v5153 = vunpack.c.l.b16 %v5025
  %v5154 = vunpack.c.l.b16 %v5026
  %v5155 = vunpack.c.l.b16 %v5027
  %v5156 = vunpack.c.l.b16 %v5028
  %v5157 = vunpack.c.l.b16 %v5029
  %v5158 = vunpack.c.l.b16 %v5030
  %v5159 = vunpack.c.l.b16 %v5031
  %v5160 = vunpack.c.l.b16 %v5032
  %v5161 = vunpack.c.l.b16 %v5033
  %v5162 = vunpack.c.l.b16 %v5034
  %v5163 = vunpack.c.l.b16 %v5035
  %v5164 = vunpack.c.l.b16 %v5036
  %v5165 = vunpack.c.l.b16 %v5037
  %v5166 = vunpack.c.l.b16 %v5038
  %v5167 = vunpack.c.l.b16 %v5039
  %v5168 = vunpack.c.l.b16 %v5040
  %v5169 = vunpack.c.l.b16 %v5041
  %v5170 = vunpack.c.l.b16 %v5042
  %v5171 = vunpack.c.l.b16 %v5043
  %v5172 = vunpack.c.l.b16 %v5044
  %v5173 = vunpack.c.l.b16 %v5045
  %v5174 = vunpack.c.l.b16 %v5046
  %v5175 = vunpack.c.l.b16 %v5047
  %v5176 = vunpack.c.l.b16 %v5048
  %v5177 = vunpack.c.l.b16 %v5049
  %v5178 = vunpack.c.l.b16 %v5050
  %v5179 = vunpack.c.l.b16 %v5051
  %v5180 = vunpack.c.l.b16 %v5052
  %v5181 = vunpack.c.l.b16 %v5053
  %v5182 = vunpack.c.l.b16 %v5054
  %v5183 = vunpack.c.l.b16 %v5055
  %v5184 = vunpack.c.l.b16 %v5056
  %v5185 = vunpack.c.l.b16 %v5057
  %v5186 = vunpack.c.l.b16 %v5058
  %v5187 = vunpack.c.l.b16 %v5059
  %v5188 = vunpack.c.l.b16 %v5060
  %v5189 = vunpack.c.l.b16 %v5061
  %v5190 = vunpack.c.l.b16 %v5062
  %v5191 = vunpack.c.l.b16 %v5063
  %v5192 = vunpack.c.l.b16 %v5064
  %v5193 = vunpack.c.l.b16 %v5065
  %v5194 = vunpack.c.l.b16 %v5066
  %v5195 = vunpack.c.l.b16 %v5067
  %v5196 = vunpack.c.l.b16 %v5068
  %v5197 = vunpack.c.l.b16 %v5069
  %v5198 = vpack.c.b16 %v5135, %v5134
  %v5199 = vpack.c.b16 %v5137, %v5136
  %v5200 = vpack.c.b16 %v5139, %v5138
  %v5201 = vpack.c.b16 %v5141, %v5140
  %v5202 = vpack.c.b16 %v5143, %v5142
  %v5203 = vpack.c.b16 %v5145, %v5144
  %v5204 = vpack.c.b16 %v5147, %v5146
  %v5205 = vpack.c.b16 %v5149, %v5148
  %v5206 = vpack.c.b16 %v5151, %v5150
  %v5207 = vpack.c.b16 %v5153, %v5152
  %v5208 = vpack.c.b16 %v5155, %v5154
  %v5209 = vpack.c.b16 %v5157, %v5156
  %v5210 = vpack.c.b16 %v5159, %v5158
  %v5211 = vpack.c.b16 %v5161, %v5160
  %v5212 = vpack.c.b16 %v5163, %v5162
  %v5213 = vpack.c.b16 %v5165, %v5164
  %v5214 = vpack.c.b16 %v5167, %v5166
  %v5215 = vpack.c.b16 %v5169, %v5168
  %v5216 = vpack.c.b16 %v5171, %v5170
  %v5217 = vpack.c.b16 %v5173, %v5172
  %v5218 = vpack.c.b16 %v5175, %v5174
  %v5219 = vpack.c.b16 %v5177, %v5176
  %v5220 = vpack.c.b16 %v5179, %v5178
  %v5221 = vpack.c.b16 %v5181, %v5180
  %v5222 = vpack.c.b16 %v5183, %v5182
  %v5223 = vpack.c.b16 %v5185, %v5184
  %v5224 = vpack.c.b16 %v5187, %v5186
  %v5225 = vpack.c.b16 %v5189, %v5188
  %v5226 = vpack.c.b16 %v5191, %v5190
  %v5227 = vpack.c.b16 %v5193, %v5192
  %v5228 = vpack.c.b16 %v5195, %v5194
  %v5229 = vpack.c.b16 %v5197, %v5196
  %5262 = vmatprep.subr.bf16.mxu0 0
  %5263 = vmatpush1.bf16.msra.mxu0 %v5198
  %5264 = vmatprep.subr.bf16.mxu0 0
  %5265 = vmatpush1.bf16.msra.mxu0 %v5199
  %5266 = vmatprep.subr.bf16.mxu0 0
  %5267 = vmatpush1.bf16.msra.mxu0 %v5200
  %5268 = vmatprep.subr.bf16.mxu0 0
  %5269 = vmatpush1.bf16.msra.mxu0 %v5201
  %5270 = vmatprep.subr.bf16.mxu0 0
  %5271 = vmatpush1.bf16.msra.mxu0 %v5202
  %5272 = vmatprep.subr.bf16.mxu0 0
  %5273 = vmatpush1.bf16.msra.mxu0 %v5203
  %5274 = vmatprep.subr.bf16.mxu0 0
  %5275 = vmatpush1.bf16.msra.mxu0 %v5204
  %5276 = vmatprep.subr.bf16.mxu0 0
  %5277 = vmatpush1.bf16.msra.mxu0 %v5205
  %5278 = vmatprep.subr.bf16.mxu0 0
  %5279 = vmatpush1.bf16.msra.mxu0 %v5206
  %5280 = vmatprep.subr.bf16.mxu0 0
  %5281 = vmatpush1.bf16.msra.mxu0 %v5207
  %5282 = vmatprep.subr.bf16.mxu0 0
  %5283 = vmatpush1.bf16.msra.mxu0 %v5208
  %5284 = vmatprep.subr.bf16.mxu0 0
  %5285 = vmatpush1.bf16.msra.mxu0 %v5209
  %5286 = vmatprep.subr.bf16.mxu0 0
  %5287 = vmatpush1.bf16.msra.mxu0 %v5210
  %5288 = vmatprep.subr.bf16.mxu0 0
  %5289 = vmatpush1.bf16.msra.mxu0 %v5211
  %5290 = vmatprep.subr.bf16.mxu0 0
  %5291 = vmatpush1.bf16.msra.mxu0 %v5212
  %5292 = vmatprep.subr.bf16.mxu0 0
  %5293 = vmatpush1.bf16.msra.mxu0 %v5213
  %5294 = vmatprep.mubr.bf16.mxu0 %v4910
  %5295 = vmatmul.mubr.bf16.gmra.mrb[0].mxu0 %v4862
  %v5296 = vpop.f32.mrb[0].mxu0
  %v5297 = vadd.f32 0.0, %v5296
  %v5298 = vpop.f32.mrb[0].mxu0
  %v5299 = vpop.f32.mrb[0].mxu0
  %v5300 = vadd.f32 0.0, %v5299
  %v5301 = vpop.f32.mrb[0].mxu0
  %5302 = vmatprep.mubr.bf16.mxu0 %v4911
  %5303 = vmatmul.mubr.bf16.gmra.mrb[0].mxu0 %v4863
  %v5304 = vpop.f32.mrb[0].mxu0
  %v5305 = vadd.f32 0.0, %v5304
  %v5306 = vpop.f32.mrb[0].mxu0
  %v5307 = vpop.f32.mrb[0].mxu0
  %v5308 = vadd.f32 0.0, %v5307
  %v5309 = vpop.f32.mrb[0].mxu0
  %5310 = vmatprep.mubr.bf16.mxu0 %v4912
  %5311 = vmatmul.mubr.bf16.gmra.mrb[0].mxu0 %v4864
  %v5312 = vpop.f32.mrb[0].mxu0
  %v5313 = vadd.f32 0.0, %v5312
  %v5314 = vpop.f32.mrb[0].mxu0
  %v5315 = vpop.f32.mrb[0].mxu0
  %v5316 = vadd.f32 0.0, %v5315
  %v5317 = vpop.f32.mrb[0].mxu0
  %5318 = vmatprep.mubr.bf16.mxu0 %v4913
  %5319 = vmatmul.mubr.bf16.gmra.mrb[0].mxu0 %v4865
  %v5320 = vpop.f32.mrb[0].mxu0
  %v5321 = vadd.f32 0.0, %v5320
  %v5322 = vpop.f32.mrb[0].mxu0
  %v5323 = vpop.f32.mrb[0].mxu0
  %v5324 = vadd.f32 0.0, %v5323
  %v5325 = vpop.f32.mrb[0].mxu0
  %5326 = vmatprep.mubr.bf16.mxu0 %v4914
  %5327 = vmatmul.mubr.bf16.gmra.mrb[0].mxu0 %v4866
  %v5328 = vpop.f32.mrb[0].mxu0
  %v5329 = vadd.f32 0.0, %v5328
  %v5330 = vpop.f32.mrb[0].mxu0
  %v5331 = vpop.f32.mrb[0].mxu0
  %v5332 = vadd.f32 0.0, %v5331
  %v5333 = vpop.f32.mrb[0].mxu0
  %5334 = vmatprep.mubr.bf16.mxu0 %v4915
  %5335 = vmatmul.mubr.bf16.gmra.mrb[0].mxu0 %v4867
  %v5336 = vpop.f32.mrb[0].mxu0
  %v5337 = vadd.f32 0.0, %v5336
  %v5338 = vpop.f32.mrb[0].mxu0
  %v5339 = vpop.f32.mrb[0].mxu0
  %v5340 = vadd.f32 0.0, %v5339
  %v5341 = vpop.f32.mrb[0].mxu0
  %5342 = vmatprep.mubr.bf16.mxu0 %v4916
  %5343 = vmatmul.mubr.bf16.gmra.mrb[0].mxu0 %v4868
  %v5344 = vpop.f32.mrb[0].mxu0
  %v5345 = vadd.f32 0.0, %v5344
  %v5346 = vpop.f32.mrb[0].mxu0
  %v5347 = vpop.f32.mrb[0].mxu0
  %v5348 = vadd.f32 0.0, %v5347
  %v5349 = vpop.f32.mrb[0].mxu0
  %5350 = vmatprep.mubr.bf16.mxu0 %v4917
  %5351 = vmatmul.mubr.bf16.gmra.mrb[0].mxu0 %v4869
  %v5352 = vpop.f32.mrb[0].mxu0
  %v5353 = vadd.f32 0.0, %v5352
  %v5354 = vpop.f32.mrb[0].mxu0
  %v5355 = vpop.f32.mrb[0].mxu0
  %v5356 = vadd.f32 0.0, %v5355
  %v5357 = vpop.f32.mrb[0].mxu0
  %5358 = vdwg.mxu0
  %5359 = vmatprep.subr.bf16.mxu0 0
  %5360 = vmatpush1.bf16.msra.mxu0 %v5214
  %5361 = vmatprep.subr.bf16.mxu0 0
  %5362 = vmatpush1.bf16.msra.mxu0 %v5215
  %5363 = vmatprep.subr.bf16.mxu0 0
  %5364 = vmatpush1.bf16.msra.mxu0 %v5216
  %5365 = vmatprep.subr.bf16.mxu0 0
  %5366 = vmatpush1.bf16.msra.mxu0 %v5217
  %5367 = vmatprep.subr.bf16.mxu0 0
  %5368 = vmatpush1.bf16.msra.mxu0 %v5218
  %5369 = vmatprep.subr.bf16.mxu0 0
  %5370 = vmatpush1.bf16.msra.mxu0 %v5219
  %5371 = vmatprep.subr.bf16.mxu0 0
  %5372 = vmatpush1.bf16.msra.mxu0 %v5220
  %5373 = vmatprep.subr.bf16.mxu0 0
  %5374 = vmatpush1.bf16.msra.mxu0 %v5221
  %5375 = vmatprep.subr.bf16.mxu0 0
  %5376 = vmatpush1.bf16.msra.mxu0 %v5222
  %5377 = vmatprep.subr.bf16.mxu0 0
  %5378 = vmatpush1.bf16.msra.mxu0 %v5223
  %5379 = vmatprep.subr.bf16.mxu0 0
  %5380 = vmatpush1.bf16.msra.mxu0 %v5224
  %5381 = vmatprep.subr.bf16.mxu0 0
  %5382 = vmatpush1.bf16.msra.mxu0 %v5225
  %5383 = vmatprep.subr.bf16.mxu0 0
  %5384 = vmatpush1.bf16.msra.mxu0 %v5226
  %5385 = vmatprep.subr.bf16.mxu0 0
  %5386 = vmatpush1.bf16.msra.mxu0 %v5227
  %5387 = vmatprep.subr.bf16.mxu0 0
  %5388 = vmatpush1.bf16.msra.mxu0 %v5228
  %5389 = vmatprep.subr.bf16.mxu0 0
  %5390 = vmatpush1.bf16.msra.mxu0 %v5229
  %5391 = vmatprep.mubr.bf16.mxu0 %v4990
  %5392 = vmatmul.mubr.bf16.gmra.mrb[0].mxu0 %v4942
  %v5393 = vpop.f32.mrb[0].mxu0
  %v5394 = vadd.f32 %v5297, %v5393
  %v5395 = vpop.f32.mrb[0].mxu0
  %v5396 = vpop.f32.mrb[0].mxu0
  %v5397 = vadd.f32 %v5300, %v5396
  %v5398 = vpop.f32.mrb[0].mxu0
  %5399 = vmatprep.mubr.bf16.mxu0 %v4991
  %5400 = vmatmul.mubr.bf16.gmra.mrb[0].mxu0 %v4943
  %v5401 = vpop.f32.mrb[0].mxu0
  %v5402 = vadd.f32 %v5305, %v5401
  %v5403 = vpop.f32.mrb[0].mxu0
  %v5404 = vpop.f32.mrb[0].mxu0
  %v5405 = vadd.f32 %v5308, %v5404
  %v5406 = vpop.f32.mrb[0].mxu0
  %5407 = vmatprep.mubr.bf16.mxu0 %v4992
  %5408 = vmatmul.mubr.bf16.gmra.mrb[0].mxu0 %v4944
  %v5409 = vpop.f32.mrb[0].mxu0
  %v5410 = vadd.f32 %v5313, %v5409
  %v5411 = vpop.f32.mrb[0].mxu0
  %v5412 = vpop.f32.mrb[0].mxu0
  %v5413 = vadd.f32 %v5316, %v5412
  %v5414 = vpop.f32.mrb[0].mxu0
  %5415 = vmatprep.mubr.bf16.mxu0 %v4993
  %5416 = vmatmul.mubr.bf16.gmra.mrb[0].mxu0 %v4945
  %v5417 = vpop.f32.mrb[0].mxu0
  %v5418 = vadd.f32 %v5321, %v5417
  %v5419 = vpop.f32.mrb[0].mxu0
  %v5420 = vpop.f32.mrb[0].mxu0
  %v5421 = vadd.f32 %v5324, %v5420
  %v5422 = vpop.f32.mrb[0].mxu0
  %5423 = vmatprep.mubr.bf16.mxu0 %v4994
  %5424 = vmatmul.mubr.bf16.gmra.mrb[0].mxu0 %v4946
  %v5425 = vpop.f32.mrb[0].mxu0
  %v5426 = vadd.f32 %v5329, %v5425
  %v5427 = vpop.f32.mrb[0].mxu0
  %v5428 = vpop.f32.mrb[0].mxu0
  %v5429 = vadd.f32 %v5332, %v5428
  %v5430 = vpop.f32.mrb[0].mxu0
  %5431 = vmatprep.mubr.bf16.mxu0 %v4995
  %5432 = vmatmul.mubr.bf16.gmra.mrb[0].mxu0 %v4947
  %v5433 = vpop.f32.mrb[0].mxu0
  %v5434 = vadd.f32 %v5337, %v5433
  %v5435 = vpop.f32.mrb[0].mxu0
  %v5436 = vpop.f32.mrb[0].mxu0
  %v5437 = vadd.f32 %v5340, %v5436
  %v5438 = vpop.f32.mrb[0].mxu0
  %5439 = vmatprep.mubr.bf16.mxu0 %v4996
  %5440 = vmatmul.mubr.bf16.gmra.mrb[0].mxu0 %v4948
  %v5441 = vpop.f32.mrb[0].mxu0
  %v5442 = vadd.f32 %v5345, %v5441
  %v5443 = vpop.f32.mrb[0].mxu0
  %v5444 = vpop.f32.mrb[0].mxu0
  %v5445 = vadd.f32 %v5348, %v5444
  %v5446 = vpop.f32.mrb[0].mxu0
  %5447 = vmatprep.mubr.bf16.mxu0 %v4997
  %5448 = vmatmul.mubr.bf16.gmra.mrb[0].mxu0 %v4949
  %v5449 = vpop.f32.mrb[0].mxu0
  %v5450 = vadd.f32 %v5353, %v5449
  %v5451 = vpop.f32.mrb[0].mxu0
  %v5452 = vpop.f32.mrb[0].mxu0
  %v5453 = vadd.f32 %v5356, %v5452
  %v5454 = vpop.f32.mrb[0].mxu0
  %5455 = vdwg.mxu0
  %v5456 = vpack.c.bf16 %v5397, %v5394
  %v5457 = vpack.c.bf16 %v5405, %v5402
  %v5458 = vpack.c.bf16 %v5413, %v5410
  %v5459 = vpack.c.bf16 %v5421, %v5418
  %v5460 = vpack.c.bf16 %v5429, %v5426
  %v5461 = vpack.c.bf16 %v5437, %v5434
  %v5462 = vpack.c.bf16 %v5445, %v5442
  %v5463 = vpack.c.bf16 %v5453, %v5450
  %v5472 = vunpack.c.l.b16 %v5456
  %v5473 = vunpack.c.h.b16 %v5456
  %v5474 = vunpack.c.l.b16 %v5457
  %v5475 = vunpack.c.h.b16 %v5457
  %v5476 = vunpack.c.l.b16 %v5458
  %v5477 = vunpack.c.h.b16 %v5458
  %v5478 = vunpack.c.l.b16 %v5459
  %v5479 = vunpack.c.h.b16 %v5459
  %v5480 = vunpack.c.l.b16 %v5460
  %v5481 = vunpack.c.h.b16 %v5460
  %v5482 = vunpack.c.l.b16 %v5461
  %v5483 = vunpack.c.h.b16 %v5461
  %v5484 = vunpack.c.l.b16 %v5462
  %v5485 = vunpack.c.h.b16 %v5462
  %v5486 = vunpack.c.l.b16 %v5463
  %v5487 = vunpack.c.h.b16 %v5463
  %v5488 = vpack.c.b16 %v5472, %v5472
  %v5489 = vpack.c.b16 %v5473, %v5473
  %v5490 = vpack.c.b16 %v5474, %v5474
  %v5491 = vpack.c.b16 %v5475, %v5475
  %v5492 = vpack.c.b16 %v5476, %v5476
  %v5493 = vpack.c.b16 %v5477, %v5477
  %v5494 = vpack.c.b16 %v5478, %v5478
  %v5495 = vpack.c.b16 %v5479, %v5479
  %v5496 = vpack.c.b16 %v5480, %v5480
  %v5497 = vpack.c.b16 %v5481, %v5481
  %v5498 = vpack.c.b16 %v5482, %v5482
  %v5499 = vpack.c.b16 %v5483, %v5483
  %v5500 = vpack.c.b16 %v5484, %v5484
  %v5501 = vpack.c.b16 %v5485, %v5485
  %v5502 = vpack.c.b16 %v5486, %v5486
  %v5503 = vpack.c.b16 %v5487, %v5487
  %5520 = vst [vmem:[%s3] sm:$0xf] %v5488
  %5521 = vst [vmem:[%s3 + $0x4] sm:$0xf] %v5489
  %5522 = vst [vmem:[%s3 + $0x8] sm:$0xf] %v5490
  %5523 = vst [vmem:[%s3 + $0xc] sm:$0xf] %v5491
  %5524 = vst [vmem:[%s3 + $0x10] sm:$0xf] %v5492
  %5525 = vst [vmem:[%s3 + $0x14] sm:$0xf] %v5493
  %5526 = vst [vmem:[%s3 + $0x18] sm:$0xf] %v5494
  %5527 = vst [vmem:[%s3 + $0x1c] sm:$0xf] %v5495
  %5528 = vst [vmem:[%s3 + $0x20] sm:$0xf] %v5496
  %5529 = vst [vmem:[%s3 + $0x24] sm:$0xf] %v5497
  %5530 = vst [vmem:[%s3 + $0x28] sm:$0xf] %v5498
  %5531 = vst [vmem:[%s3 + $0x2c] sm:$0xf] %v5499
  %5532 = vst [vmem:[%s3 + $0x30] sm:$0xf] %v5500
  %5533 = vst [vmem:[%s3 + $0x34] sm:$0xf] %v5501
  %5534 = vst [vmem:[%s3 + $0x38] sm:$0xf] %v5502
  %5535 = vst [vmem:[%s3 + $0x3c] sm:$0xf] %v5503
  %v5536 = vadd.f32 %v5394, %v5397
  %v5537 = vadd.f32 %v5536, %v5402
  %v5538 = vadd.f32 %v5537, %v5405
  %v5539 = vadd.f32 %v5538, %v5410
  %v5540 = vadd.f32 %v5539, %v5413
  %v5541 = vadd.f32 %v5540, %v5418
  %v5542 = vadd.f32 %v5541, %v5421
  %v5543 = vadd.f32 %v5542, %v5426
  %v5544 = vadd.f32 %v5543, %v5429
  %v5545 = vadd.f32 %v5544, %v5434
  %v5546 = vadd.f32 %v5545, %v5437
  %v5547 = vadd.f32 %v5546, %v5442
  %v5548 = vadd.f32 %v5547, %v5445
  %v5549 = vadd.f32 %v5548, %v5450
  %v5550 = vadd.f32 %v5549, %v5453
  %v5551 = vrot.slane %v5550, 4
  %v5552 = vadd.f32 %v5550, %v5551
  %v5553 = vrot.slane %v5552, 2
  %v5554 = vadd.f32 %v5552, %v5553
  %v5555 = vrot.slane %v5554, 1
  %v5556 = vadd.f32 %v5554, %v5555
  %v5557 = vadd.f32 %v5556, 0.0
  %v5558 = vmul.f32 %v5394, %v5394
  %v5559 = vmul.f32 %v5397, %v5397
  %v5560 = vmul.f32 %v5402, %v5402
  %v5561 = vmul.f32 %v5405, %v5405
  %v5562 = vmul.f32 %v5410, %v5410
  %v5563 = vmul.f32 %v5413, %v5413
  %v5564 = vmul.f32 %v5418, %v5418
  %v5565 = vmul.f32 %v5421, %v5421
  %v5566 = vmul.f32 %v5426, %v5426
  %v5567 = vmul.f32 %v5429, %v5429
  %v5568 = vmul.f32 %v5434, %v5434
  %v5569 = vmul.f32 %v5437, %v5437
  %v5570 = vmul.f32 %v5442, %v5442
  %v5571 = vmul.f32 %v5445, %v5445
  %v5572 = vmul.f32 %v5450, %v5450
  %v5573 = vmul.f32 %v5453, %v5453
  %v5574 = vadd.f32 %v5558, %v5559
  %v5575 = vadd.f32 %v5574, %v5560
  %v5576 = vadd.f32 %v5575, %v5561
  %v5577 = vadd.f32 %v5576, %v5562
  %v5578 = vadd.f32 %v5577, %v5563
  %v5579 = vadd.f32 %v5578, %v5564
  %v5580 = vadd.f32 %v5579, %v5565
  %v5581 = vadd.f32 %v5580, %v5566
  %v5582 = vadd.f32 %v5581, %v5567
  %v5583 = vadd.f32 %v5582, %v5568
  %v5584 = vadd.f32 %v5583, %v5569
  %v5585 = vadd.f32 %v5584, %v5570
  %v5586 = vadd.f32 %v5585, %v5571
  %v5587 = vadd.f32 %v5586, %v5572
  %v5588 = vadd.f32 %v5587, %v5573
  %v5589 = vrot.slane %v5588, 4
  %v5590 = vadd.f32 %v5588, %v5589
  %v5591 = vrot.slane %v5590, 2
  %v5592 = vadd.f32 %v5590, %v5591
  %v5593 = vrot.slane %v5592, 1
  %v5594 = vadd.f32 %v5592, %v5593
  %v5595 = vadd.f32 %v5594, 0.0
  %v5596 = vld [vmem:[%s4235] sm:$0xf]
  %v5597 = vld [vmem:[%s4235 + $0x4] sm:$0x1]
  %v5598 = vld [vmem:[%s4235 + $0x8] sm:$0xf]
  %v5599 = vld [vmem:[%s4235 + $0xc] sm:$0x1]
  %v5600 = vld [vmem:[%s4235 + $0x10] sm:$0xf]
  %v5601 = vld [vmem:[%s4235 + $0x14] sm:$0x1]
  %v5602 = vld [vmem:[%s4235 + $0x18] sm:$0xf]
  %v5603 = vld [vmem:[%s4235 + $0x1c] sm:$0x1]
  %v5604 = vld [vmem:[%s4235 + $0x20] sm:$0xf]
  %v5605 = vld [vmem:[%s4235 + $0x24] sm:$0x1]
  %v5606 = vld [vmem:[%s4235 + $0x28] sm:$0xf]
  %v5607 = vld [vmem:[%s4235 + $0x2c] sm:$0x1]
  %v5608 = vld [vmem:[%s4235 + $0x30] sm:$0xf]
  %v5609 = vld [vmem:[%s4235 + $0x34] sm:$0x1]
  %v5610 = vld [vmem:[%s4235 + $0x38] sm:$0xf]
  %v5611 = vld [vmem:[%s4235 + $0x3c] sm:$0x1]
  %v5612 = vld [vmem:[%s4235 + $0x50] sm:$0xf]
  %v5613 = vld [vmem:[%s4235 + $0x54] sm:$0x1]
  %v5614 = vld [vmem:[%s4235 + $0x58] sm:$0xf]
  %v5615 = vld [vmem:[%s4235 + $0x5c] sm:$0x1]
  %v5616 = vld [vmem:[%s4235 + $0x60] sm:$0xf]
  %v5617 = vld [vmem:[%s4235 + $0x64] sm:$0x1]
  %v5618 = vld [vmem:[%s4235 + $0x68] sm:$0xf]
  %v5619 = vld [vmem:[%s4235 + $0x6c] sm:$0x1]
  %v5620 = vld [vmem:[%s4235 + $0x70] sm:$0xf]
  %v5621 = vld [vmem:[%s4235 + $0x74] sm:$0x1]
  %v5622 = vld [vmem:[%s4235 + $0x78] sm:$0xf]
  %v5623 = vld [vmem:[%s4235 + $0x7c] sm:$0x1]
  %v5624 = vld [vmem:[%s4235 + $0x80] sm:$0xf]
  %v5625 = vld [vmem:[%s4235 + $0x84] sm:$0x1]
  %v5626 = vld [vmem:[%s4235 + $0x88] sm:$0xf]
  %v5627 = vld [vmem:[%s4235 + $0x8c] sm:$0x1]
  %v5629 = vshrl.u32 %v5596, 16
  %v5631 = vrot.slane %v5629, 4
  %v5632 = vshll.u32 %v5596, 16
  %v5634 = vrot.slane %v5632, 5
  %v5635 = vor.u32 %v5631, %v5634
  %v5636 = vrot.slane %v5635, 4
  %v5638 = vshll.u32 %v5597, 16
  %v5640 = vrot.slane %v5638, 5
  %v5641 = vsel %vm596, %v5636, %v5640
  %v5643 = vshrl.u32 %v5598, 16
  %v5645 = vrot.slane %v5643, 4
  %v5646 = vshll.u32 %v5598, 16
  %v5648 = vrot.slane %v5646, 5
  %v5649 = vor.u32 %v5645, %v5648
  %v5650 = vrot.slane %v5649, 4
  %v5652 = vshll.u32 %v5599, 16
  %v5654 = vrot.slane %v5652, 5
  %v5655 = vsel %vm596, %v5650, %v5654
  %v5657 = vshrl.u32 %v5600, 16
  %v5659 = vrot.slane %v5657, 4
  %v5660 = vshll.u32 %v5600, 16
  %v5662 = vrot.slane %v5660, 5
  %v5663 = vor.u32 %v5659, %v5662
  %v5664 = vrot.slane %v5663, 4
  %v5666 = vshll.u32 %v5601, 16
  %v5668 = vrot.slane %v5666, 5
  %v5669 = vsel %vm596, %v5664, %v5668
  %v5671 = vshrl.u32 %v5602, 16
  %v5673 = vrot.slane %v5671, 4
  %v5674 = vshll.u32 %v5602, 16
  %v5676 = vrot.slane %v5674, 5
  %v5677 = vor.u32 %v5673, %v5676
  %v5678 = vrot.slane %v5677, 4
  %v5680 = vshll.u32 %v5603, 16
  %v5682 = vrot.slane %v5680, 5
  %v5683 = vsel %vm596, %v5678, %v5682
  %v5685 = vshrl.u32 %v5604, 16
  %v5687 = vrot.slane %v5685, 4
  %v5688 = vshll.u32 %v5604, 16
  %v5690 = vrot.slane %v5688, 5
  %v5691 = vor.u32 %v5687, %v5690
  %v5692 = vrot.slane %v5691, 4
  %v5694 = vshll.u32 %v5605, 16
  %v5696 = vrot.slane %v5694, 5
  %v5697 = vsel %vm596, %v5692, %v5696
  %v5699 = vshrl.u32 %v5606, 16
  %v5701 = vrot.slane %v5699, 4
  %v5702 = vshll.u32 %v5606, 16
  %v5704 = vrot.slane %v5702, 5
  %v5705 = vor.u32 %v5701, %v5704
  %v5706 = vrot.slane %v5705, 4
  %v5708 = vshll.u32 %v5607, 16
  %v5710 = vrot.slane %v5708, 5
  %v5711 = vsel %vm596, %v5706, %v5710
  %v5713 = vshrl.u32 %v5608, 16
  %v5715 = vrot.slane %v5713, 4
  %v5716 = vshll.u32 %v5608, 16
  %v5718 = vrot.slane %v5716, 5
  %v5719 = vor.u32 %v5715, %v5718
  %v5720 = vrot.slane %v5719, 4
  %v5722 = vshll.u32 %v5609, 16
  %v5724 = vrot.slane %v5722, 5
  %v5725 = vsel %vm596, %v5720, %v5724
  %v5727 = vshrl.u32 %v5610, 16
  %v5729 = vrot.slane %v5727, 4
  %v5730 = vshll.u32 %v5610, 16
  %v5732 = vrot.slane %v5730, 5
  %v5733 = vor.u32 %v5729, %v5732
  %v5734 = vrot.slane %v5733, 4
  %v5736 = vshll.u32 %v5611, 16
  %v5738 = vrot.slane %v5736, 5
  %v5739 = vsel %vm596, %v5734, %v5738
  %v5741 = vshrl.u32 %v5612, 16
  %v5743 = vrot.slane %v5741, 4
  %v5744 = vshll.u32 %v5612, 16
  %v5746 = vrot.slane %v5744, 5
  %v5747 = vor.u32 %v5743, %v5746
  %v5748 = vrot.slane %v5747, 4
  %v5750 = vshll.u32 %v5613, 16
  %v5752 = vrot.slane %v5750, 5
  %v5753 = vsel %vm596, %v5748, %v5752
  %v5755 = vshrl.u32 %v5614, 16
  %v5757 = vrot.slane %v5755, 4
  %v5758 = vshll.u32 %v5614, 16
  %v5760 = vrot.slane %v5758, 5
  %v5761 = vor.u32 %v5757, %v5760
  %v5762 = vrot.slane %v5761, 4
  %v5764 = vshll.u32 %v5615, 16
  %v5766 = vrot.slane %v5764, 5
  %v5767 = vsel %vm596, %v5762, %v5766
  %v5769 = vshrl.u32 %v5616, 16
  %v5771 = vrot.slane %v5769, 4
  %v5772 = vshll.u32 %v5616, 16
  %v5774 = vrot.slane %v5772, 5
  %v5775 = vor.u32 %v5771, %v5774
  %v5776 = vrot.slane %v5775, 4
  %v5778 = vshll.u32 %v5617, 16
  %v5780 = vrot.slane %v5778, 5
  %v5781 = vsel %vm596, %v5776, %v5780
  %v5783 = vshrl.u32 %v5618, 16
  %v5785 = vrot.slane %v5783, 4
  %v5786 = vshll.u32 %v5618, 16
  %v5788 = vrot.slane %v5786, 5
  %v5789 = vor.u32 %v5785, %v5788
  %v5790 = vrot.slane %v5789, 4
  %v5792 = vshll.u32 %v5619, 16
  %v5794 = vrot.slane %v5792, 5
  %v5795 = vsel %vm596, %v5790, %v5794
  %v5797 = vshrl.u32 %v5620, 16
  %v5799 = vrot.slane %v5797, 4
  %v5800 = vshll.u32 %v5620, 16
  %v5802 = vrot.slane %v5800, 5
  %v5803 = vor.u32 %v5799, %v5802
  %v5804 = vrot.slane %v5803, 4
  %v5806 = vshll.u32 %v5621, 16
  %v5808 = vrot.slane %v5806, 5
  %v5809 = vsel %vm596, %v5804, %v5808
  %v5811 = vshrl.u32 %v5622, 16
  %v5813 = vrot.slane %v5811, 4
  %v5814 = vshll.u32 %v5622, 16
  %v5816 = vrot.slane %v5814, 5
  %v5817 = vor.u32 %v5813, %v5816
  %v5818 = vrot.slane %v5817, 4
  %v5820 = vshll.u32 %v5623, 16
  %v5822 = vrot.slane %v5820, 5
  %v5823 = vsel %vm596, %v5818, %v5822
  %v5825 = vshrl.u32 %v5624, 16
  %v5827 = vrot.slane %v5825, 4
  %v5828 = vshll.u32 %v5624, 16
  %v5830 = vrot.slane %v5828, 5
  %v5831 = vor.u32 %v5827, %v5830
  %v5832 = vrot.slane %v5831, 4
  %v5834 = vshll.u32 %v5625, 16
  %v5836 = vrot.slane %v5834, 5
  %v5837 = vsel %vm596, %v5832, %v5836
  %v5839 = vshrl.u32 %v5626, 16
  %v5841 = vrot.slane %v5839, 4
  %v5842 = vshll.u32 %v5626, 16
  %v5844 = vrot.slane %v5842, 5
  %v5845 = vor.u32 %v5841, %v5844
  %v5846 = vrot.slane %v5845, 4
  %v5848 = vshll.u32 %v5627, 16
  %v5850 = vrot.slane %v5848, 5
  %v5851 = vsel %vm596, %v5846, %v5850
  %v5852 = vld [vmem:[%s4235] sm:$0xe]
  %v5853 = vld [vmem:[%s4235 + $0x8] sm:$0xe]
  %v5854 = vld [vmem:[%s4235 + $0x10] sm:$0xe]
  %v5855 = vld [vmem:[%s4235 + $0x18] sm:$0xe]
  %v5856 = vld [vmem:[%s4235 + $0x20] sm:$0xe]
  %v5857 = vld [vmem:[%s4235 + $0x28] sm:$0xe]
  %v5858 = vld [vmem:[%s4235 + $0x30] sm:$0xe]
  %v5859 = vld [vmem:[%s4235 + $0x38] sm:$0xe]
  %v5860 = vld [vmem:[%s4235 + $0x50] sm:$0xe]
  %v5861 = vld [vmem:[%s4235 + $0x58] sm:$0xe]
  %v5862 = vld [vmem:[%s4235 + $0x60] sm:$0xe]
  %v5863 = vld [vmem:[%s4235 + $0x68] sm:$0xe]
  %v5864 = vld [vmem:[%s4235 + $0x70] sm:$0xe]
  %v5865 = vld [vmem:[%s4235 + $0x78] sm:$0xe]
  %v5866 = vld [vmem:[%s4235 + $0x80] sm:$0xe]
  %v5867 = vld [vmem:[%s4235 + $0x88] sm:$0xe]
  %vm5900 = vcmask 1042432
  %vm5901 = vcmask 1046532
  %vm5902 = vmor %vm5900, %vm5901
  %v5903 = vrot.slane %v5852, 5
  %v5904 = vrot.slane %v5903, 4
  %v5905 = vrot.slane %v5597, 5
  %v5906 = vsel %vm5902, %v5904, %v5905
  %v5907 = vrot.slane %v5853, 5
  %v5908 = vrot.slane %v5907, 4
  %v5909 = vrot.slane %v5599, 5
  %v5910 = vsel %vm5902, %v5908, %v5909
  %v5911 = vrot.slane %v5854, 5
  %v5912 = vrot.slane %v5911, 4
  %v5913 = vrot.slane %v5601, 5
  %v5914 = vsel %vm5902, %v5912, %v5913
  %v5915 = vrot.slane %v5855, 5
  %v5916 = vrot.slane %v5915, 4
  %v5917 = vrot.slane %v5603, 5
  %v5918 = vsel %vm5902, %v5916, %v5917
  %v5919 = vrot.slane %v5856, 5
  %v5920 = vrot.slane %v5919, 4
  %v5921 = vrot.slane %v5605, 5
  %v5922 = vsel %vm5902, %v5920, %v5921
  %v5923 = vrot.slane %v5857, 5
  %v5924 = vrot.slane %v5923, 4
  %v5925 = vrot.slane %v5607, 5
  %v5926 = vsel %vm5902, %v5924, %v5925
  %v5927 = vrot.slane %v5858, 5
  %v5928 = vrot.slane %v5927, 4
  %v5929 = vrot.slane %v5609, 5
  %v5930 = vsel %vm5902, %v5928, %v5929
  %v5931 = vrot.slane %v5859, 5
  %v5932 = vrot.slane %v5931, 4
  %v5933 = vrot.slane %v5611, 5
  %v5934 = vsel %vm5902, %v5932, %v5933
  %v5935 = vrot.slane %v5860, 5
  %v5936 = vrot.slane %v5935, 4
  %v5937 = vrot.slane %v5613, 5
  %v5938 = vsel %vm5902, %v5936, %v5937
  %v5939 = vrot.slane %v5861, 5
  %v5940 = vrot.slane %v5939, 4
  %v5941 = vrot.slane %v5615, 5
  %v5942 = vsel %vm5902, %v5940, %v5941
  %v5943 = vrot.slane %v5862, 5
  %v5944 = vrot.slane %v5943, 4
  %v5945 = vrot.slane %v5617, 5
  %v5946 = vsel %vm5902, %v5944, %v5945
  %v5947 = vrot.slane %v5863, 5
  %v5948 = vrot.slane %v5947, 4
  %v5949 = vrot.slane %v5619, 5
  %v5950 = vsel %vm5902, %v5948, %v5949
  %v5951 = vrot.slane %v5864, 5
  %v5952 = vrot.slane %v5951, 4
  %v5953 = vrot.slane %v5621, 5
  %v5954 = vsel %vm5902, %v5952, %v5953
  %v5955 = vrot.slane %v5865, 5
  %v5956 = vrot.slane %v5955, 4
  %v5957 = vrot.slane %v5623, 5
  %v5958 = vsel %vm5902, %v5956, %v5957
  %v5959 = vrot.slane %v5866, 5
  %v5960 = vrot.slane %v5959, 4
  %v5961 = vrot.slane %v5625, 5
  %v5962 = vsel %vm5902, %v5960, %v5961
  %v5963 = vrot.slane %v5867, 5
  %v5964 = vrot.slane %v5963, 4
  %v5965 = vrot.slane %v5627, 5
  %v5966 = vsel %vm5902, %v5964, %v5965
  %v5967 = vld [vmem:[#allocation2] sm:$0xf]
  %v5968 = vld [vmem:[#allocation2 + $0x4] sm:$0x1]
  %v5969 = vld [vmem:[#allocation2 + $0x8] sm:$0xf]
  %v5970 = vld [vmem:[#allocation2 + $0xc] sm:$0x1]
  %v5971 = vld [vmem:[#allocation2 + $0x10] sm:$0xf]
  %v5972 = vld [vmem:[#allocation2 + $0x14] sm:$0x1]
  %v5973 = vld [vmem:[#allocation2 + $0x18] sm:$0xf]
  %v5974 = vld [vmem:[#allocation2 + $0x1c] sm:$0x1]
  %v5975 = vld [vmem:[#allocation2 + $0x20] sm:$0xf]
  %v5976 = vld [vmem:[#allocation2 + $0x24] sm:$0x1]
  %v5977 = vld [vmem:[#allocation2 + $0x28] sm:$0xf]
  %v5978 = vld [vmem:[#allocation2 + $0x2c] sm:$0x1]
  %v5979 = vld [vmem:[#allocation2 + $0x30] sm:$0xf]
  %v5980 = vld [vmem:[#allocation2 + $0x34] sm:$0x1]
  %v5981 = vld [vmem:[#allocation2 + $0x38] sm:$0xf]
  %v5982 = vld [vmem:[#allocation2 + $0x3c] sm:$0x1]
  %v5983 = vld [vmem:[#allocation2 + $0x50] sm:$0xf]
  %v5984 = vld [vmem:[#allocation2 + $0x54] sm:$0x1]
  %v5985 = vld [vmem:[#allocation2 + $0x58] sm:$0xf]
  %v5986 = vld [vmem:[#allocation2 + $0x5c] sm:$0x1]
  %v5987 = vld [vmem:[#allocation2 + $0x60] sm:$0xf]
  %v5988 = vld [vmem:[#allocation2 + $0x64] sm:$0x1]
  %v5989 = vld [vmem:[#allocation2 + $0x68] sm:$0xf]
  %v5990 = vld [vmem:[#allocation2 + $0x6c] sm:$0x1]
  %v5991 = vld [vmem:[#allocation2 + $0x70] sm:$0xf]
  %v5992 = vld [vmem:[#allocation2 + $0x74] sm:$0x1]
  %v5993 = vld [vmem:[#allocation2 + $0x78] sm:$0xf]
  %v5994 = vld [vmem:[#allocation2 + $0x7c] sm:$0x1]
  %v5995 = vld [vmem:[#allocation2 + $0x80] sm:$0xf]
  %v5996 = vld [vmem:[#allocation2 + $0x84] sm:$0x1]
  %v5997 = vld [vmem:[#allocation2 + $0x88] sm:$0xf]
  %v5998 = vld [vmem:[#allocation2 + $0x8c] sm:$0x1]
  %v6000 = vshrl.u32 %v5967, 16
  %v6002 = vrot.slane %v6000, 4
  %v6003 = vshll.u32 %v5967, 16
  %v6005 = vrot.slane %v6003, 5
  %v6006 = vor.u32 %v6002, %v6005
  %v6007 = vrot.slane %v6006, 4
  %v6009 = vshll.u32 %v5968, 16
  %v6011 = vrot.slane %v6009, 5
  %v6012 = vsel %vm596, %v6007, %v6011
  %v6014 = vshrl.u32 %v5969, 16
  %v6016 = vrot.slane %v6014, 4
  %v6017 = vshll.u32 %v5969, 16
  %v6019 = vrot.slane %v6017, 5
  %v6020 = vor.u32 %v6016, %v6019
  %v6021 = vrot.slane %v6020, 4
  %v6023 = vshll.u32 %v5970, 16
  %v6025 = vrot.slane %v6023, 5
  %v6026 = vsel %vm596, %v6021, %v6025
  %v6028 = vshrl.u32 %v5971, 16
  %v6030 = vrot.slane %v6028, 4
  %v6031 = vshll.u32 %v5971, 16
  %v6033 = vrot.slane %v6031, 5
  %v6034 = vor.u32 %v6030, %v6033
  %v6035 = vrot.slane %v6034, 4
  %v6037 = vshll.u32 %v5972, 16
  %v6039 = vrot.slane %v6037, 5
  %v6040 = vsel %vm596, %v6035, %v6039
  %v6042 = vshrl.u32 %v5973, 16
  %v6044 = vrot.slane %v6042, 4
  %v6045 = vshll.u32 %v5973, 16
  %v6047 = vrot.slane %v6045, 5
  %v6048 = vor.u32 %v6044, %v6047
  %v6049 = vrot.slane %v6048, 4
  %v6051 = vshll.u32 %v5974, 16
  %v6053 = vrot.slane %v6051, 5
  %v6054 = vsel %vm596, %v6049, %v6053
  %v6056 = vshrl.u32 %v5975, 16
  %v6058 = vrot.slane %v6056, 4
  %v6059 = vshll.u32 %v5975, 16
  %v6061 = vrot.slane %v6059, 5
  %v6062 = vor.u32 %v6058, %v6061
  %v6063 = vrot.slane %v6062, 4
  %v6065 = vshll.u32 %v5976, 16
  %v6067 = vrot.slane %v6065, 5
  %v6068 = vsel %vm596, %v6063, %v6067
  %v6070 = vshrl.u32 %v5977, 16
  %v6072 = vrot.slane %v6070, 4
  %v6073 = vshll.u32 %v5977, 16
  %v6075 = vrot.slane %v6073, 5
  %v6076 = vor.u32 %v6072, %v6075
  %v6077 = vrot.slane %v6076, 4
  %v6079 = vshll.u32 %v5978, 16
  %v6081 = vrot.slane %v6079, 5
  %v6082 = vsel %vm596, %v6077, %v6081
  %v6084 = vshrl.u32 %v5979, 16
  %v6086 = vrot.slane %v6084, 4
  %v6087 = vshll.u32 %v5979, 16
  %v6089 = vrot.slane %v6087, 5
  %v6090 = vor.u32 %v6086, %v6089
  %v6091 = vrot.slane %v6090, 4
  %v6093 = vshll.u32 %v5980, 16
  %v6095 = vrot.slane %v6093, 5
  %v6096 = vsel %vm596, %v6091, %v6095
  %v6098 = vshrl.u32 %v5981, 16
  %v6100 = vrot.slane %v6098, 4
  %v6101 = vshll.u32 %v5981, 16
  %v6103 = vrot.slane %v6101, 5
  %v6104 = vor.u32 %v6100, %v6103
  %v6105 = vrot.slane %v6104, 4
  %v6107 = vshll.u32 %v5982, 16
  %v6109 = vrot.slane %v6107, 5
  %v6110 = vsel %vm596, %v6105, %v6109
  %v6112 = vshrl.u32 %v5983, 16
  %v6114 = vrot.slane %v6112, 4
  %v6115 = vshll.u32 %v5983, 16
  %v6117 = vrot.slane %v6115, 5
  %v6118 = vor.u32 %v6114, %v6117
  %v6119 = vrot.slane %v6118, 4
  %v6121 = vshll.u32 %v5984, 16
  %v6123 = vrot.slane %v6121, 5
  %v6124 = vsel %vm596, %v6119, %v6123
  %v6126 = vshrl.u32 %v5985, 16
  %v6128 = vrot.slane %v6126, 4
  %v6129 = vshll.u32 %v5985, 16
  %v6131 = vrot.slane %v6129, 5
  %v6132 = vor.u32 %v6128, %v6131
  %v6133 = vrot.slane %v6132, 4
  %v6135 = vshll.u32 %v5986, 16
  %v6137 = vrot.slane %v6135, 5
  %v6138 = vsel %vm596, %v6133, %v6137
  %v6140 = vshrl.u32 %v5987, 16
  %v6142 = vrot.slane %v6140, 4
  %v6143 = vshll.u32 %v5987, 16
  %v6145 = vrot.slane %v6143, 5
  %v6146 = vor.u32 %v6142, %v6145
  %v6147 = vrot.slane %v6146, 4
  %v6149 = vshll.u32 %v5988, 16
  %v6151 = vrot.slane %v6149, 5
  %v6152 = vsel %vm596, %v6147, %v6151
  %v6154 = vshrl.u32 %v5989, 16
  %v6156 = vrot.slane %v6154, 4
  %v6157 = vshll.u32 %v5989, 16
  %v6159 = vrot.slane %v6157, 5
  %v6160 = vor.u32 %v6156, %v6159
  %v6161 = vrot.slane %v6160, 4
  %v6163 = vshll.u32 %v5990, 16
  %v6165 = vrot.slane %v6163, 5
  %v6166 = vsel %vm596, %v6161, %v6165
  %v6168 = vshrl.u32 %v5991, 16
  %v6170 = vrot.slane %v6168, 4
  %v6171 = vshll.u32 %v5991, 16
  %v6173 = vrot.slane %v6171, 5
  %v6174 = vor.u32 %v6170, %v6173
  %v6175 = vrot.slane %v6174, 4
  %v6177 = vshll.u32 %v5992, 16
  %v6179 = vrot.slane %v6177, 5
  %v6180 = vsel %vm596, %v6175, %v6179
  %v6182 = vshrl.u32 %v5993, 16
  %v6184 = vrot.slane %v6182, 4
  %v6185 = vshll.u32 %v5993, 16
  %v6187 = vrot.slane %v6185, 5
  %v6188 = vor.u32 %v6184, %v6187
  %v6189 = vrot.slane %v6188, 4
  %v6191 = vshll.u32 %v5994, 16
  %v6193 = vrot.slane %v6191, 5
  %v6194 = vsel %vm596, %v6189, %v6193
  %v6196 = vshrl.u32 %v5995, 16
  %v6198 = vrot.slane %v6196, 4
  %v6199 = vshll.u32 %v5995, 16
  %v6201 = vrot.slane %v6199, 5
  %v6202 = vor.u32 %v6198, %v6201
  %v6203 = vrot.slane %v6202, 4
  %v6205 = vshll.u32 %v5996, 16
  %v6207 = vrot.slane %v6205, 5
  %v6208 = vsel %vm596, %v6203, %v6207
  %v6210 = vshrl.u32 %v5997, 16
  %v6212 = vrot.slane %v6210, 4
  %v6213 = vshll.u32 %v5997, 16
  %v6215 = vrot.slane %v6213, 5
  %v6216 = vor.u32 %v6212, %v6215
  %v6217 = vrot.slane %v6216, 4
  %v6219 = vshll.u32 %v5998, 16
  %v6221 = vrot.slane %v6219, 5
  %v6222 = vsel %vm596, %v6217, %v6221
  %v6223 = vld [vmem:[#allocation2] sm:$0xe]
  %v6224 = vld [vmem:[#allocation2 + $0x8] sm:$0xe]
  %v6225 = vld [vmem:[#allocation2 + $0x10] sm:$0xe]
  %v6226 = vld [vmem:[#allocation2 + $0x18] sm:$0xe]
  %v6227 = vld [vmem:[#allocation2 + $0x20] sm:$0xe]
  %v6228 = vld [vmem:[#allocation2 + $0x28] sm:$0xe]
  %v6229 = vld [vmem:[#allocation2 + $0x30] sm:$0xe]
  %v6230 = vld [vmem:[#allocation2 + $0x38] sm:$0xe]
  %v6231 = vld [vmem:[#allocation2 + $0x50] sm:$0xe]
  %v6232 = vld [vmem:[#allocation2 + $0x58] sm:$0xe]
  %v6233 = vld [vmem:[#allocation2 + $0x60] sm:$0xe]
  %v6234 = vld [vmem:[#allocation2 + $0x68] sm:$0xe]
  %v6235 = vld [vmem:[#allocation2 + $0x70] sm:$0xe]
  %v6236 = vld [vmem:[#allocation2 + $0x78] sm:$0xe]
  %v6237 = vld [vmem:[#allocation2 + $0x80] sm:$0xe]
  %v6238 = vld [vmem:[#allocation2 + $0x88] sm:$0xe]
  %v6271 = vrot.slane %v6223, 5
  %v6272 = vrot.slane %v6271, 4
  %v6273 = vrot.slane %v5968, 5
  %v6274 = vsel %vm5902, %v6272, %v6273
  %v6275 = vrot.slane %v6224, 5
  %v6276 = vrot.slane %v6275, 4
  %v6277 = vrot.slane %v5970, 5
  %v6278 = vsel %vm5902, %v6276, %v6277
  %v6279 = vrot.slane %v6225, 5
  %v6280 = vrot.slane %v6279, 4
  %v6281 = vrot.slane %v5972, 5
  %v6282 = vsel %vm5902, %v6280, %v6281
  %v6283 = vrot.slane %v6226, 5
  %v6284 = vrot.slane %v6283, 4
  %v6285 = vrot.slane %v5974, 5
  %v6286 = vsel %vm5902, %v6284, %v6285
  %v6287 = vrot.slane %v6227, 5
  %v6288 = vrot.slane %v6287, 4
  %v6289 = vrot.slane %v5976, 5
  %v6290 = vsel %vm5902, %v6288, %v6289
  %v6291 = vrot.slane %v6228, 5
  %v6292 = vrot.slane %v6291, 4
  %v6293 = vrot.slane %v5978, 5
  %v6294 = vsel %vm5902, %v6292, %v6293
  %v6295 = vrot.slane %v6229, 5
  %v6296 = vrot.slane %v6295, 4
  %v6297 = vrot.slane %v5980, 5
  %v6298 = vsel %vm5902, %v6296, %v6297
  %v6299 = vrot.slane %v6230, 5
  %v6300 = vrot.slane %v6299, 4
  %v6301 = vrot.slane %v5982, 5
  %v6302 = vsel %vm5902, %v6300, %v6301
  %v6303 = vrot.slane %v6231, 5
  %v6304 = vrot.slane %v6303, 4
  %v6305 = vrot.slane %v5984, 5
  %v6306 = vsel %vm5902, %v6304, %v6305
  %v6307 = vrot.slane %v6232, 5
  %v6308 = vrot.slane %v6307, 4
  %v6309 = vrot.slane %v5986, 5
  %v6310 = vsel %vm5902, %v6308, %v6309
  %v6311 = vrot.slane %v6233, 5
  %v6312 = vrot.slane %v6311, 4
  %v6313 = vrot.slane %v5988, 5
  %v6314 = vsel %vm5902, %v6312, %v6313
  %v6315 = vrot.slane %v6234, 5
  %v6316 = vrot.slane %v6315, 4
  %v6317 = vrot.slane %v5990, 5
  %v6318 = vsel %vm5902, %v6316, %v6317
  %v6319 = vrot.slane %v6235, 5
  %v6320 = vrot.slane %v6319, 4
  %v6321 = vrot.slane %v5992, 5
  %v6322 = vsel %vm5902, %v6320, %v6321
  %v6323 = vrot.slane %v6236, 5
  %v6324 = vrot.slane %v6323, 4
  %v6325 = vrot.slane %v5994, 5
  %v6326 = vsel %vm5902, %v6324, %v6325
  %v6327 = vrot.slane %v6237, 5
  %v6328 = vrot.slane %v6327, 4
  %v6329 = vrot.slane %v5996, 5
  %v6330 = vsel %vm5902, %v6328, %v6329
  %v6331 = vrot.slane %v6238, 5
  %v6332 = vrot.slane %v6331, 4
  %v6333 = vrot.slane %v5998, 5
  %v6334 = vsel %vm5902, %v6332, %v6333
  %v6335 = vunpack.c.l.b16 %v5641
  %v6336 = vunpack.c.l.b16 %v5655
  %v6337 = vunpack.c.l.b16 %v5669
  %v6338 = vunpack.c.l.b16 %v5683
  %v6339 = vunpack.c.l.b16 %v5697
  %v6340 = vunpack.c.l.b16 %v5711
  %v6341 = vunpack.c.l.b16 %v5725
  %v6342 = vunpack.c.l.b16 %v5739
  %v6343 = vunpack.c.l.b16 %v5753
  %v6344 = vunpack.c.l.b16 %v5767
  %v6345 = vunpack.c.l.b16 %v5781
  %v6346 = vunpack.c.l.b16 %v5795
  %v6347 = vunpack.c.l.b16 %v5809
  %v6348 = vunpack.c.l.b16 %v5823
  %v6349 = vunpack.c.l.b16 %v5837
  %v6350 = vunpack.c.l.b16 %v5851
  %v6351 = vpack.c.b16 %v6336, %v6335
  %v6352 = vpack.c.b16 %v6338, %v6337
  %v6353 = vpack.c.b16 %v6340, %v6339
  %v6354 = vpack.c.b16 %v6342, %v6341
  %v6355 = vpack.c.b16 %v6344, %v6343
  %v6356 = vpack.c.b16 %v6346, %v6345
  %v6357 = vpack.c.b16 %v6348, %v6347
  %v6358 = vpack.c.b16 %v6350, %v6349
  %v6367 = vunpack.c.l.b16 %v5906
  %v6368 = vunpack.c.l.b16 %v5910
  %v6369 = vunpack.c.l.b16 %v5914
  %v6370 = vunpack.c.l.b16 %v5918
  %v6371 = vunpack.c.l.b16 %v5922
  %v6372 = vunpack.c.l.b16 %v5926
  %v6373 = vunpack.c.l.b16 %v5930
  %v6374 = vunpack.c.l.b16 %v5934
  %v6375 = vunpack.c.l.b16 %v5938
  %v6376 = vunpack.c.l.b16 %v5942
  %v6377 = vunpack.c.l.b16 %v5946
  %v6378 = vunpack.c.l.b16 %v5950
  %v6379 = vunpack.c.l.b16 %v5954
  %v6380 = vunpack.c.l.b16 %v5958
  %v6381 = vunpack.c.l.b16 %v5962
  %v6382 = vunpack.c.l.b16 %v5966
  %v6383 = vpack.c.b16 %v6368, %v6367
  %v6384 = vpack.c.b16 %v6370, %v6369
  %v6385 = vpack.c.b16 %v6372, %v6371
  %v6386 = vpack.c.b16 %v6374, %v6373
  %v6387 = vpack.c.b16 %v6376, %v6375
  %v6388 = vpack.c.b16 %v6378, %v6377
  %v6389 = vpack.c.b16 %v6380, %v6379
  %v6390 = vpack.c.b16 %v6382, %v6381
  %v6399 = vunpack.c.l.b16 %v6012
  %v6400 = vunpack.c.l.b16 %v6026
  %v6401 = vunpack.c.l.b16 %v6040
  %v6402 = vunpack.c.l.b16 %v6054
  %v6403 = vunpack.c.l.b16 %v6068
  %v6404 = vunpack.c.l.b16 %v6082
  %v6405 = vunpack.c.l.b16 %v6096
  %v6406 = vunpack.c.l.b16 %v6110
  %v6407 = vunpack.c.l.b16 %v6124
  %v6408 = vunpack.c.l.b16 %v6138
  %v6409 = vunpack.c.l.b16 %v6152
  %v6410 = vunpack.c.l.b16 %v6166
  %v6411 = vunpack.c.l.b16 %v6180
  %v6412 = vunpack.c.l.b16 %v6194
  %v6413 = vunpack.c.l.b16 %v6208
  %v6414 = vunpack.c.l.b16 %v6222
  %v6415 = vpack.c.b16 %v6400, %v6399
  %v6416 = vpack.c.b16 %v6402, %v6401
  %v6417 = vpack.c.b16 %v6404, %v6403
  %v6418 = vpack.c.b16 %v6406, %v6405
  %v6419 = vpack.c.b16 %v6408, %v6407
  %v6420 = vpack.c.b16 %v6410, %v6409
  %v6421 = vpack.c.b16 %v6412, %v6411
  %v6422 = vpack.c.b16 %v6414, %v6413
  %v6431 = vunpack.c.l.b16 %v6274
  %v6432 = vunpack.c.l.b16 %v6278
  %v6433 = vunpack.c.l.b16 %v6282
  %v6434 = vunpack.c.l.b16 %v6286
  %v6435 = vunpack.c.l.b16 %v6290
  %v6436 = vunpack.c.l.b16 %v6294
  %v6437 = vunpack.c.l.b16 %v6298
  %v6438 = vunpack.c.l.b16 %v6302
  %v6439 = vunpack.c.l.b16 %v6306
  %v6440 = vunpack.c.l.b16 %v6310
  %v6441 = vunpack.c.l.b16 %v6314
  %v6442 = vunpack.c.l.b16 %v6318
  %v6443 = vunpack.c.l.b16 %v6322
  %v6444 = vunpack.c.l.b16 %v6326
  %v6445 = vunpack.c.l.b16 %v6330
  %v6446 = vunpack.c.l.b16 %v6334
  %v6447 = vpack.c.b16 %v6432, %v6431
  %v6448 = vpack.c.b16 %v6434, %v6433
  %v6449 = vpack.c.b16 %v6436, %v6435
  %v6450 = vpack.c.b16 %v6438, %v6437
  %v6451 = vpack.c.b16 %v6440, %v6439
  %v6452 = vpack.c.b16 %v6442, %v6441
  %v6453 = vpack.c.b16 %v6444, %v6443
  %v6454 = vpack.c.b16 %v6446, %v6445
  %s6463 = scalar_lea.vmem %s2, 256
  %v6464 = vld [vmem:[%s6463] sm:$0xf]
  %v6465 = vld [vmem:[%s6463 + $0x4] sm:$0xf]
  %v6466 = vld [vmem:[%s6463 + $0x8] sm:$0xf]
  %v6467 = vld [vmem:[%s6463 + $0xc] sm:$0xf]
  %v6468 = vld [vmem:[%s6463 + $0x10] sm:$0xf]
  %v6469 = vld [vmem:[%s6463 + $0x14] sm:$0xf]
  %v6470 = vld [vmem:[%s6463 + $0x18] sm:$0xf]
  %v6471 = vld [vmem:[%s6463 + $0x1c] sm:$0xf]
  %v6472 = vld [vmem:[%s6463 + $0x20] sm:$0xf]
  %v6473 = vld [vmem:[%s6463 + $0x24] sm:$0xf]
  %v6474 = vld [vmem:[%s6463 + $0x28] sm:$0xf]
  %v6475 = vld [vmem:[%s6463 + $0x2c] sm:$0xf]
  %v6476 = vld [vmem:[%s6463 + $0x30] sm:$0xf]
  %v6477 = vld [vmem:[%s6463 + $0x34] sm:$0xf]
  %v6478 = vld [vmem:[%s6463 + $0x38] sm:$0xf]
  %v6479 = vld [vmem:[%s6463 + $0x3c] sm:$0xf]
  %v6480 = vld [vmem:[%s6463 + $0x40] sm:$0xf]
  %v6481 = vld [vmem:[%s6463 + $0x44] sm:$0xf]
  %v6482 = vld [vmem:[%s6463 + $0x48] sm:$0xf]
  %v6483 = vld [vmem:[%s6463 + $0x4c] sm:$0xf]
  %v6484 = vld [vmem:[%s6463 + $0x50] sm:$0xf]
  %v6485 = vld [vmem:[%s6463 + $0x54] sm:$0xf]
  %v6486 = vld [vmem:[%s6463 + $0x58] sm:$0xf]
  %v6487 = vld [vmem:[%s6463 + $0x5c] sm:$0xf]
  %v6488 = vld [vmem:[%s6463 + $0x60] sm:$0xf]
  %v6489 = vld [vmem:[%s6463 + $0x64] sm:$0xf]
  %v6490 = vld [vmem:[%s6463 + $0x68] sm:$0xf]
  %v6491 = vld [vmem:[%s6463 + $0x6c] sm:$0xf]
  %v6492 = vld [vmem:[%s6463 + $0x70] sm:$0xf]
  %v6493 = vld [vmem:[%s6463 + $0x74] sm:$0xf]
  %v6494 = vld [vmem:[%s6463 + $0x78] sm:$0xf]
  %v6495 = vld [vmem:[%s6463 + $0x7c] sm:$0xf]
  %v6496 = vld [vmem:[%s6463 + $0x80] sm:$0xf]
  %v6497 = vld [vmem:[%s6463 + $0x84] sm:$0xf]
  %v6498 = vld [vmem:[%s6463 + $0x88] sm:$0xf]
  %v6499 = vld [vmem:[%s6463 + $0x8c] sm:$0xf]
  %v6500 = vld [vmem:[%s6463 + $0x90] sm:$0xf]
  %v6501 = vld [vmem:[%s6463 + $0x94] sm:$0xf]
  %v6502 = vld [vmem:[%s6463 + $0x98] sm:$0xf]
  %v6503 = vld [vmem:[%s6463 + $0x9c] sm:$0xf]
  %v6504 = vld [vmem:[%s6463 + $0xa0] sm:$0xf]
  %v6505 = vld [vmem:[%s6463 + $0xa4] sm:$0xf]
  %v6506 = vld [vmem:[%s6463 + $0xa8] sm:$0xf]
  %v6507 = vld [vmem:[%s6463 + $0xac] sm:$0xf]
  %v6508 = vld [vmem:[%s6463 + $0xb0] sm:$0xf]
  %v6509 = vld [vmem:[%s6463 + $0xb4] sm:$0xf]
  %v6510 = vld [vmem:[%s6463 + $0xb8] sm:$0xf]
  %v6511 = vld [vmem:[%s6463 + $0xbc] sm:$0xf]
  %v6512 = vld [vmem:[%s6463 + $0xc0] sm:$0xf]
  %v6513 = vld [vmem:[%s6463 + $0xc4] sm:$0xf]
  %v6514 = vld [vmem:[%s6463 + $0xc8] sm:$0xf]
  %v6515 = vld [vmem:[%s6463 + $0xcc] sm:$0xf]
  %v6516 = vld [vmem:[%s6463 + $0xd0] sm:$0xf]
  %v6517 = vld [vmem:[%s6463 + $0xd4] sm:$0xf]
  %v6518 = vld [vmem:[%s6463 + $0xd8] sm:$0xf]
  %v6519 = vld [vmem:[%s6463 + $0xdc] sm:$0xf]
  %v6520 = vld [vmem:[%s6463 + $0xe0] sm:$0xf]
  %v6521 = vld [vmem:[%s6463 + $0xe4] sm:$0xf]
  %v6522 = vld [vmem:[%s6463 + $0xe8] sm:$0xf]
  %v6523 = vld [vmem:[%s6463 + $0xec] sm:$0xf]
  %v6524 = vld [vmem:[%s6463 + $0xf0] sm:$0xf]
  %v6525 = vld [vmem:[%s6463 + $0xf4] sm:$0xf]
  %v6526 = vld [vmem:[%s6463 + $0xf8] sm:$0xf]
  %v6527 = vld [vmem:[%s6463 + $0xfc] sm:$0xf]
  %v6592 = vunpack.c.l.b16 %v6464
  %v6593 = vunpack.c.l.b16 %v6465
  %v6594 = vunpack.c.l.b16 %v6466
  %v6595 = vunpack.c.l.b16 %v6467
  %v6596 = vunpack.c.l.b16 %v6468
  %v6597 = vunpack.c.l.b16 %v6469
  %v6598 = vunpack.c.l.b16 %v6470
  %v6599 = vunpack.c.l.b16 %v6471
  %v6600 = vunpack.c.l.b16 %v6472
  %v6601 = vunpack.c.l.b16 %v6473
  %v6602 = vunpack.c.l.b16 %v6474
  %v6603 = vunpack.c.l.b16 %v6475
  %v6604 = vunpack.c.l.b16 %v6476
  %v6605 = vunpack.c.l.b16 %v6477
  %v6606 = vunpack.c.l.b16 %v6478
  %v6607 = vunpack.c.l.b16 %v6479
  %v6608 = vunpack.c.l.b16 %v6480
  %v6609 = vunpack.c.l.b16 %v6481
  %v6610 = vunpack.c.l.b16 %v6482
  %v6611 = vunpack.c.l.b16 %v6483
  %v6612 = vunpack.c.l.b16 %v6484
  %v6613 = vunpack.c.l.b16 %v6485
  %v6614 = vunpack.c.l.b16 %v6486
  %v6615 = vunpack.c.l.b16 %v6487
  %v6616 = vunpack.c.l.b16 %v6488
  %v6617 = vunpack.c.l.b16 %v6489
  %v6618 = vunpack.c.l.b16 %v6490
  %v6619 = vunpack.c.l.b16 %v6491
  %v6620 = vunpack.c.l.b16 %v6492
  %v6621 = vunpack.c.l.b16 %v6493
  %v6622 = vunpack.c.l.b16 %v6494
  %v6623 = vunpack.c.l.b16 %v6495
  %v6624 = vunpack.c.l.b16 %v6496
  %v6625 = vunpack.c.l.b16 %v6497
  %v6626 = vunpack.c.l.b16 %v6498
  %v6627 = vunpack.c.l.b16 %v6499
  %v6628 = vunpack.c.l.b16 %v6500
  %v6629 = vunpack.c.l.b16 %v6501
  %v6630 = vunpack.c.l.b16 %v6502
  %v6631 = vunpack.c.l.b16 %v6503
  %v6632 = vunpack.c.l.b16 %v6504
  %v6633 = vunpack.c.l.b16 %v6505
  %v6634 = vunpack.c.l.b16 %v6506
  %v6635 = vunpack.c.l.b16 %v6507
  %v6636 = vunpack.c.l.b16 %v6508
  %v6637 = vunpack.c.l.b16 %v6509
  %v6638 = vunpack.c.l.b16 %v6510
  %v6639 = vunpack.c.l.b16 %v6511
  %v6640 = vunpack.c.l.b16 %v6512
  %v6641 = vunpack.c.l.b16 %v6513
  %v6642 = vunpack.c.l.b16 %v6514
  %v6643 = vunpack.c.l.b16 %v6515
  %v6644 = vunpack.c.l.b16 %v6516
  %v6645 = vunpack.c.l.b16 %v6517
  %v6646 = vunpack.c.l.b16 %v6518
  %v6647 = vunpack.c.l.b16 %v6519
  %v6648 = vunpack.c.l.b16 %v6520
  %v6649 = vunpack.c.l.b16 %v6521
  %v6650 = vunpack.c.l.b16 %v6522
  %v6651 = vunpack.c.l.b16 %v6523
  %v6652 = vunpack.c.l.b16 %v6524
  %v6653 = vunpack.c.l.b16 %v6525
  %v6654 = vunpack.c.l.b16 %v6526
  %v6655 = vunpack.c.l.b16 %v6527
  %v6656 = vpack.c.b16 %v6593, %v6592
  %v6657 = vpack.c.b16 %v6595, %v6594
  %v6658 = vpack.c.b16 %v6597, %v6596
  %v6659 = vpack.c.b16 %v6599, %v6598
  %v6660 = vpack.c.b16 %v6601, %v6600
  %v6661 = vpack.c.b16 %v6603, %v6602
  %v6662 = vpack.c.b16 %v6605, %v6604
  %v6663 = vpack.c.b16 %v6607, %v6606
  %v6664 = vpack.c.b16 %v6609, %v6608
  %v6665 = vpack.c.b16 %v6611, %v6610
  %v6666 = vpack.c.b16 %v6613, %v6612
  %v6667 = vpack.c.b16 %v6615, %v6614
  %v6668 = vpack.c.b16 %v6617, %v6616
  %v6669 = vpack.c.b16 %v6619, %v6618
  %v6670 = vpack.c.b16 %v6621, %v6620
  %v6671 = vpack.c.b16 %v6623, %v6622
  %v6672 = vpack.c.b16 %v6625, %v6624
  %v6673 = vpack.c.b16 %v6627, %v6626
  %v6674 = vpack.c.b16 %v6629, %v6628
  %v6675 = vpack.c.b16 %v6631, %v6630
  %v6676 = vpack.c.b16 %v6633, %v6632
  %v6677 = vpack.c.b16 %v6635, %v6634
  %v6678 = vpack.c.b16 %v6637, %v6636
  %v6679 = vpack.c.b16 %v6639, %v6638
  %v6680 = vpack.c.b16 %v6641, %v6640
  %v6681 = vpack.c.b16 %v6643, %v6642
  %v6682 = vpack.c.b16 %v6645, %v6644
  %v6683 = vpack.c.b16 %v6647, %v6646
  %v6684 = vpack.c.b16 %v6649, %v6648
  %v6685 = vpack.c.b16 %v6651, %v6650
  %v6686 = vpack.c.b16 %v6653, %v6652
  %v6687 = vpack.c.b16 %v6655, %v6654
  %6720 = vmatprep.subr.bf16.mxu0 0
  %6721 = vmatpush1.bf16.msra.mxu0 %v6656
  %6722 = vmatprep.subr.bf16.mxu0 0
  %6723 = vmatpush1.bf16.msra.mxu0 %v6657
  %6724 = vmatprep.subr.bf16.mxu0 0
  %6725 = vmatpush1.bf16.msra.mxu0 %v6658
  %6726 = vmatprep.subr.bf16.mxu0 0
  %6727 = vmatpush1.bf16.msra.mxu0 %v6659
  %6728 = vmatprep.subr.bf16.mxu0 0
  %6729 = vmatpush1.bf16.msra.mxu0 %v6660
  %6730 = vmatprep.subr.bf16.mxu0 0
  %6731 = vmatpush1.bf16.msra.mxu0 %v6661
  %6732 = vmatprep.subr.bf16.mxu0 0
  %6733 = vmatpush1.bf16.msra.mxu0 %v6662
  %6734 = vmatprep.subr.bf16.mxu0 0
  %6735 = vmatpush1.bf16.msra.mxu0 %v6663
  %6736 = vmatprep.subr.bf16.mxu0 0
  %6737 = vmatpush1.bf16.msra.mxu0 %v6664
  %6738 = vmatprep.subr.bf16.mxu0 0
  %6739 = vmatpush1.bf16.msra.mxu0 %v6665
  %6740 = vmatprep.subr.bf16.mxu0 0
  %6741 = vmatpush1.bf16.msra.mxu0 %v6666
  %6742 = vmatprep.subr.bf16.mxu0 0
  %6743 = vmatpush1.bf16.msra.mxu0 %v6667
  %6744 = vmatprep.subr.bf16.mxu0 0
  %6745 = vmatpush1.bf16.msra.mxu0 %v6668
  %6746 = vmatprep.subr.bf16.mxu0 0
  %6747 = vmatpush1.bf16.msra.mxu0 %v6669
  %6748 = vmatprep.subr.bf16.mxu0 0
  %6749 = vmatpush1.bf16.msra.mxu0 %v6670
  %6750 = vmatprep.subr.bf16.mxu0 0
  %6751 = vmatpush1.bf16.msra.mxu0 %v6671
  %6752 = vmatprep.mubr.bf16.mxu0 %v6383
  %6753 = vmatmul.mubr.bf16.gmra.mrb[0].mxu0 %v6351
  %v6754 = vpop.f32.mrb[0].mxu0
  %v6755 = vadd.f32 0.0, %v6754
  %v6756 = vpop.f32.mrb[0].mxu0
  %v6757 = vpop.f32.mrb[0].mxu0
  %v6758 = vadd.f32 0.0, %v6757
  %v6759 = vpop.f32.mrb[0].mxu0
  %6760 = vmatprep.mubr.bf16.mxu0 %v6384
  %6761 = vmatmul.mubr.bf16.gmra.mrb[0].mxu0 %v6352
  %v6762 = vpop.f32.mrb[0].mxu0
  %v6763 = vadd.f32 0.0, %v6762
  %v6764 = vpop.f32.mrb[0].mxu0
  %v6765 = vpop.f32.mrb[0].mxu0
  %v6766 = vadd.f32 0.0, %v6765
  %v6767 = vpop.f32.mrb[0].mxu0
  %6768 = vmatprep.mubr.bf16.mxu0 %v6385
  %6769 = vmatmul.mubr.bf16.gmra.mrb[0].mxu0 %v6353
  %v6770 = vpop.f32.mrb[0].mxu0
  %v6771 = vadd.f32 0.0, %v6770
  %v6772 = vpop.f32.mrb[0].mxu0
  %v6773 = vpop.f32.mrb[0].mxu0
  %v6774 = vadd.f32 0.0, %v6773
  %v6775 = vpop.f32.mrb[0].mxu0
  %6776 = vmatprep.mubr.bf16.mxu0 %v6386
  %6777 = vmatmul.mubr.bf16.gmra.mrb[0].mxu0 %v6354
  %v6778 = vpop.f32.mrb[0].mxu0
  %v6779 = vadd.f32 0.0, %v6778
  %v6780 = vpop.f32.mrb[0].mxu0
  %v6781 = vpop.f32.mrb[0].mxu0
  %v6782 = vadd.f32 0.0, %v6781
  %v6783 = vpop.f32.mrb[0].mxu0
  %6784 = vmatprep.mubr.bf16.mxu0 %v6387
  %6785 = vmatmul.mubr.bf16.gmra.mrb[0].mxu0 %v6355
  %v6786 = vpop.f32.mrb[0].mxu0
  %v6787 = vadd.f32 0.0, %v6786
  %v6788 = vpop.f32.mrb[0].mxu0
  %v6789 = vpop.f32.mrb[0].mxu0
  %v6790 = vadd.f32 0.0, %v6789
  %v6791 = vpop.f32.mrb[0].mxu0
  %6792 = vmatprep.mubr.bf16.mxu0 %v6388
  %6793 = vmatmul.mubr.bf16.gmra.mrb[0].mxu0 %v6356
  %v6794 = vpop.f32.mrb[0].mxu0
  %v6795 = vadd.f32 0.0, %v6794
  %v6796 = vpop.f32.mrb[0].mxu0
  %v6797 = vpop.f32.mrb[0].mxu0
  %v6798 = vadd.f32 0.0, %v6797
  %v6799 = vpop.f32.mrb[0].mxu0
  %6800 = vmatprep.mubr.bf16.mxu0 %v6389
  %6801 = vmatmul.mubr.bf16.gmra.mrb[0].mxu0 %v6357
  %v6802 = vpop.f32.mrb[0].mxu0
  %v6803 = vadd.f32 0.0, %v6802
  %v6804 = vpop.f32.mrb[0].mxu0
  %v6805 = vpop.f32.mrb[0].mxu0
  %v6806 = vadd.f32 0.0, %v6805
  %v6807 = vpop.f32.mrb[0].mxu0
  %6808 = vmatprep.mubr.bf16.mxu0 %v6390
  %6809 = vmatmul.mubr.bf16.gmra.mrb[0].mxu0 %v6358
  %v6810 = vpop.f32.mrb[0].mxu0
  %v6811 = vadd.f32 0.0, %v6810
  %v6812 = vpop.f32.mrb[0].mxu0
  %v6813 = vpop.f32.mrb[0].mxu0
  %v6814 = vadd.f32 0.0, %v6813
  %v6815 = vpop.f32.mrb[0].mxu0
  %6816 = vdwg.mxu0
  %6817 = vmatprep.subr.bf16.mxu0 0
  %6818 = vmatpush1.bf16.msra.mxu0 %v6672
  %6819 = vmatprep.subr.bf16.mxu0 0
  %6820 = vmatpush1.bf16.msra.mxu0 %v6673
  %6821 = vmatprep.subr.bf16.mxu0 0
  %6822 = vmatpush1.bf16.msra.mxu0 %v6674
  %6823 = vmatprep.subr.bf16.mxu0 0
  %6824 = vmatpush1.bf16.msra.mxu0 %v6675
  %6825 = vmatprep.subr.bf16.mxu0 0
  %6826 = vmatpush1.bf16.msra.mxu0 %v6676
  %6827 = vmatprep.subr.bf16.mxu0 0
  %6828 = vmatpush1.bf16.msra.mxu0 %v6677
  %6829 = vmatprep.subr.bf16.mxu0 0
  %6830 = vmatpush1.bf16.msra.mxu0 %v6678
  %6831 = vmatprep.subr.bf16.mxu0 0
  %6832 = vmatpush1.bf16.msra.mxu0 %v6679
  %6833 = vmatprep.subr.bf16.mxu0 0
  %6834 = vmatpush1.bf16.msra.mxu0 %v6680
  %6835 = vmatprep.subr.bf16.mxu0 0
  %6836 = vmatpush1.bf16.msra.mxu0 %v6681
  %6837 = vmatprep.subr.bf16.mxu0 0
  %6838 = vmatpush1.bf16.msra.mxu0 %v6682
  %6839 = vmatprep.subr.bf16.mxu0 0
  %6840 = vmatpush1.bf16.msra.mxu0 %v6683
  %6841 = vmatprep.subr.bf16.mxu0 0
  %6842 = vmatpush1.bf16.msra.mxu0 %v6684
  %6843 = vmatprep.subr.bf16.mxu0 0
  %6844 = vmatpush1.bf16.msra.mxu0 %v6685
  %6845 = vmatprep.subr.bf16.mxu0 0
  %6846 = vmatpush1.bf16.msra.mxu0 %v6686
  %6847 = vmatprep.subr.bf16.mxu0 0
  %6848 = vmatpush1.bf16.msra.mxu0 %v6687
  %6849 = vmatprep.mubr.bf16.mxu0 %v6447
  %6850 = vmatmul.mubr.bf16.gmra.mrb[0].mxu0 %v6415
  %v6851 = vpop.f32.mrb[0].mxu0
  %v6852 = vadd.f32 %v6755, %v6851
  %v6853 = vpop.f32.mrb[0].mxu0
  %v6854 = vpop.f32.mrb[0].mxu0
  %v6855 = vadd.f32 %v6758, %v6854
  %v6856 = vpop.f32.mrb[0].mxu0
  %6857 = vmatprep.mubr.bf16.mxu0 %v6448
  %6858 = vmatmul.mubr.bf16.gmra.mrb[0].mxu0 %v6416
  %v6859 = vpop.f32.mrb[0].mxu0
  %v6860 = vadd.f32 %v6763, %v6859
  %v6861 = vpop.f32.mrb[0].mxu0
  %v6862 = vpop.f32.mrb[0].mxu0
  %v6863 = vadd.f32 %v6766, %v6862
  %v6864 = vpop.f32.mrb[0].mxu0
  %6865 = vmatprep.mubr.bf16.mxu0 %v6449
  %6866 = vmatmul.mubr.bf16.gmra.mrb[0].mxu0 %v6417
  %v6867 = vpop.f32.mrb[0].mxu0
  %v6868 = vadd.f32 %v6771, %v6867
  %v6869 = vpop.f32.mrb[0].mxu0
  %v6870 = vpop.f32.mrb[0].mxu0
  %v6871 = vadd.f32 %v6774, %v6870
  %v6872 = vpop.f32.mrb[0].mxu0
  %6873 = vmatprep.mubr.bf16.mxu0 %v6450
  %6874 = vmatmul.mubr.bf16.gmra.mrb[0].mxu0 %v6418
  %v6875 = vpop.f32.mrb[0].mxu0
  %v6876 = vadd.f32 %v6779, %v6875
  %v6877 = vpop.f32.mrb[0].mxu0
  %v6878 = vpop.f32.mrb[0].mxu0
  %v6879 = vadd.f32 %v6782, %v6878
  %v6880 = vpop.f32.mrb[0].mxu0
  %6881 = vmatprep.mubr.bf16.mxu0 %v6451
  %6882 = vmatmul.mubr.bf16.gmra.mrb[0].mxu0 %v6419
  %v6883 = vpop.f32.mrb[0].mxu0
  %v6884 = vadd.f32 %v6787, %v6883
  %v6885 = vpop.f32.mrb[0].mxu0
  %v6886 = vpop.f32.mrb[0].mxu0
  %v6887 = vadd.f32 %v6790, %v6886
  %v6888 = vpop.f32.mrb[0].mxu0
  %6889 = vmatprep.mubr.bf16.mxu0 %v6452
  %6890 = vmatmul.mubr.bf16.gmra.mrb[0].mxu0 %v6420
  %v6891 = vpop.f32.mrb[0].mxu0
  %v6892 = vadd.f32 %v6795, %v6891
  %v6893 = vpop.f32.mrb[0].mxu0
  %v6894 = vpop.f32.mrb[0].mxu0
  %v6895 = vadd.f32 %v6798, %v6894
  %v6896 = vpop.f32.mrb[0].mxu0
  %6897 = vmatprep.mubr.bf16.mxu0 %v6453
  %6898 = vmatmul.mubr.bf16.gmra.mrb[0].mxu0 %v6421
  %v6899 = vpop.f32.mrb[0].mxu0
  %v6900 = vadd.f32 %v6803, %v6899
  %v6901 = vpop.f32.mrb[0].mxu0
  %v6902 = vpop.f32.mrb[0].mxu0
  %v6903 = vadd.f32 %v6806, %v6902
  %v6904 = vpop.f32.mrb[0].mxu0
  %6905 = vmatprep.mubr.bf16.mxu0 %v6454
  %6906 = vmatmul.mubr.bf16.gmra.mrb[0].mxu0 %v6422
  %v6907 = vpop.f32.mrb[0].mxu0
  %v6908 = vadd.f32 %v6811, %v6907
  %v6909 = vpop.f32.mrb[0].mxu0
  %v6910 = vpop.f32.mrb[0].mxu0
  %v6911 = vadd.f32 %v6814, %v6910
  %v6912 = vpop.f32.mrb[0].mxu0
  %6913 = vdwg.mxu0
  %v6914 = vpack.c.bf16 %v6855, %v6852
  %v6915 = vpack.c.bf16 %v6863, %v6860
  %v6916 = vpack.c.bf16 %v6871, %v6868
  %v6917 = vpack.c.bf16 %v6879, %v6876
  %v6918 = vpack.c.bf16 %v6887, %v6884
  %v6919 = vpack.c.bf16 %v6895, %v6892
  %v6920 = vpack.c.bf16 %v6903, %v6900
  %v6921 = vpack.c.bf16 %v6911, %v6908
  %v6930 = vunpack.c.l.b16 %v6914
  %v6931 = vunpack.c.h.b16 %v6914
  %v6932 = vunpack.c.l.b16 %v6915
  %v6933 = vunpack.c.h.b16 %v6915
  %v6934 = vunpack.c.l.b16 %v6916
  %v6935 = vunpack.c.h.b16 %v6916
  %v6936 = vunpack.c.l.b16 %v6917
  %v6937 = vunpack.c.h.b16 %v6917
  %v6938 = vunpack.c.l.b16 %v6918
  %v6939 = vunpack.c.h.b16 %v6918
  %v6940 = vunpack.c.l.b16 %v6919
  %v6941 = vunpack.c.h.b16 %v6919
  %v6942 = vunpack.c.l.b16 %v6920
  %v6943 = vunpack.c.h.b16 %v6920
  %v6944 = vunpack.c.l.b16 %v6921
  %v6945 = vunpack.c.h.b16 %v6921
  %v6946 = vpack.c.b16 %v6930, %v6930
  %v6947 = vpack.c.b16 %v6931, %v6931
  %v6948 = vpack.c.b16 %v6932, %v6932
  %v6949 = vpack.c.b16 %v6933, %v6933
  %v6950 = vpack.c.b16 %v6934, %v6934
  %v6951 = vpack.c.b16 %v6935, %v6935
  %v6952 = vpack.c.b16 %v6936, %v6936
  %v6953 = vpack.c.b16 %v6937, %v6937
  %v6954 = vpack.c.b16 %v6938, %v6938
  %v6955 = vpack.c.b16 %v6939, %v6939
  %v6956 = vpack.c.b16 %v6940, %v6940
  %v6957 = vpack.c.b16 %v6941, %v6941
  %v6958 = vpack.c.b16 %v6942, %v6942
  %v6959 = vpack.c.b16 %v6943, %v6943
  %v6960 = vpack.c.b16 %v6944, %v6944
  %v6961 = vpack.c.b16 %v6945, %v6945
  %s6978 = scalar_lea.vmem %s3, 64
  %6979 = vst [vmem:[%s6978] sm:$0xf] %v6946
  %6980 = vst [vmem:[%s6978 + $0x4] sm:$0xf] %v6947
  %6981 = vst [vmem:[%s6978 + $0x8] sm:$0xf] %v6948
  %6982 = vst [vmem:[%s6978 + $0xc] sm:$0xf] %v6949
  %6983 = vst [vmem:[%s6978 + $0x10] sm:$0xf] %v6950
  %6984 = vst [vmem:[%s6978 + $0x14] sm:$0xf] %v6951
  %6985 = vst [vmem:[%s6978 + $0x18] sm:$0xf] %v6952
  %6986 = vst [vmem:[%s6978 + $0x1c] sm:$0xf] %v6953
  %6987 = vst [vmem:[%s6978 + $0x20] sm:$0xf] %v6954
  %6988 = vst [vmem:[%s6978 + $0x24] sm:$0xf] %v6955
  %6989 = vst [vmem:[%s6978 + $0x28] sm:$0xf] %v6956
  %6990 = vst [vmem:[%s6978 + $0x2c] sm:$0xf] %v6957
  %6991 = vst [vmem:[%s6978 + $0x30] sm:$0xf] %v6958
  %6992 = vst [vmem:[%s6978 + $0x34] sm:$0xf] %v6959
  %6993 = vst [vmem:[%s6978 + $0x38] sm:$0xf] %v6960
  %6994 = vst [vmem:[%s6978 + $0x3c] sm:$0xf] %v6961
  %v6995 = vadd.f32 %v6852, %v6855
  %v6996 = vadd.f32 %v6995, %v6860
  %v6997 = vadd.f32 %v6996, %v6863
  %v6998 = vadd.f32 %v6997, %v6868
  %v6999 = vadd.f32 %v6998, %v6871
  %v7000 = vadd.f32 %v6999, %v6876
  %v7001 = vadd.f32 %v7000, %v6879
  %v7002 = vadd.f32 %v7001, %v6884
  %v7003 = vadd.f32 %v7002, %v6887
  %v7004 = vadd.f32 %v7003, %v6892
  %v7005 = vadd.f32 %v7004, %v6895
  %v7006 = vadd.f32 %v7005, %v6900
  %v7007 = vadd.f32 %v7006, %v6903
  %v7008 = vadd.f32 %v7007, %v6908
  %v7009 = vadd.f32 %v7008, %v6911
  %v7010 = vrot.slane %v7009, 4
  %v7011 = vadd.f32 %v7009, %v7010
  %v7012 = vrot.slane %v7011, 2
  %v7013 = vadd.f32 %v7011, %v7012
  %v7014 = vrot.slane %v7013, 1
  %v7015 = vadd.f32 %v7013, %v7014
  %v7016 = vadd.f32 %v5557, %v7015
  %v7017 = vmul.f32 %v6852, %v6852
  %v7018 = vmul.f32 %v6855, %v6855
  %v7019 = vmul.f32 %v6860, %v6860
  %v7020 = vmul.f32 %v6863, %v6863
  %v7021 = vmul.f32 %v6868, %v6868
  %v7022 = vmul.f32 %v6871, %v6871
  %v7023 = vmul.f32 %v6876, %v6876
  %v7024 = vmul.f32 %v6879, %v6879
  %v7025 = vmul.f32 %v6884, %v6884
  %v7026 = vmul.f32 %v6887, %v6887
  %v7027 = vmul.f32 %v6892, %v6892
  %v7028 = vmul.f32 %v6895, %v6895
  %v7029 = vmul.f32 %v6900, %v6900
  %v7030 = vmul.f32 %v6903, %v6903
  %v7031 = vmul.f32 %v6908, %v6908
  %v7032 = vmul.f32 %v6911, %v6911
  %v7033 = vadd.f32 %v7017, %v7018
  %v7034 = vadd.f32 %v7033, %v7019
  %v7035 = vadd.f32 %v7034, %v7020
  %v7036 = vadd.f32 %v7035, %v7021
  %v7037 = vadd.f32 %v7036, %v7022
  %v7038 = vadd.f32 %v7037, %v7023
  %v7039 = vadd.f32 %v7038, %v7024
  %v7040 = vadd.f32 %v7039, %v7025
  %v7041 = vadd.f32 %v7040, %v7026
  %v7042 = vadd.f32 %v7041, %v7027
  %v7043 = vadd.f32 %v7042, %v7028
  %v7044 = vadd.f32 %v7043, %v7029
  %v7045 = vadd.f32 %v7044, %v7030
  %v7046 = vadd.f32 %v7045, %v7031
  %v7047 = vadd.f32 %v7046, %v7032
  %v7048 = vrot.slane %v7047, 4
  %v7049 = vadd.f32 %v7047, %v7048
  %v7050 = vrot.slane %v7049, 2
  %v7051 = vadd.f32 %v7049, %v7050
  %v7052 = vrot.slane %v7051, 1
  %v7053 = vadd.f32 %v7051, %v7052
  %v7054 = vadd.f32 %v5595, %v7053
  %v7055 = vld [vmem:[%s4235] sm:$0xf]
  %v7056 = vld [vmem:[%s4235 + $0x4] sm:$0x1]
  %v7057 = vld [vmem:[%s4235 + $0x8] sm:$0xf]
  %v7058 = vld [vmem:[%s4235 + $0xc] sm:$0x1]
  %v7059 = vld [vmem:[%s4235 + $0x10] sm:$0xf]
  %v7060 = vld [vmem:[%s4235 + $0x14] sm:$0x1]
  %v7061 = vld [vmem:[%s4235 + $0x18] sm:$0xf]
  %v7062 = vld [vmem:[%s4235 + $0x1c] sm:$0x1]
  %v7063 = vld [vmem:[%s4235 + $0x20] sm:$0xf]
  %v7064 = vld [vmem:[%s4235 + $0x24] sm:$0x1]
  %v7065 = vld [vmem:[%s4235 + $0x28] sm:$0xf]
  %v7066 = vld [vmem:[%s4235 + $0x2c] sm:$0x1]
  %v7067 = vld [vmem:[%s4235 + $0x30] sm:$0xf]
  %v7068 = vld [vmem:[%s4235 + $0x34] sm:$0x1]
  %v7069 = vld [vmem:[%s4235 + $0x38] sm:$0xf]
  %v7070 = vld [vmem:[%s4235 + $0x3c] sm:$0x1]
  %v7071 = vld [vmem:[%s4235 + $0x50] sm:$0xf]
  %v7072 = vld [vmem:[%s4235 + $0x54] sm:$0x1]
  %v7073 = vld [vmem:[%s4235 + $0x58] sm:$0xf]
  %v7074 = vld [vmem:[%s4235 + $0x5c] sm:$0x1]
  %v7075 = vld [vmem:[%s4235 + $0x60] sm:$0xf]
  %v7076 = vld [vmem:[%s4235 + $0x64] sm:$0x1]
  %v7077 = vld [vmem:[%s4235 + $0x68] sm:$0xf]
  %v7078 = vld [vmem:[%s4235 + $0x6c] sm:$0x1]
  %v7079 = vld [vmem:[%s4235 + $0x70] sm:$0xf]
  %v7080 = vld [vmem:[%s4235 + $0x74] sm:$0x1]
  %v7081 = vld [vmem:[%s4235 + $0x78] sm:$0xf]
  %v7082 = vld [vmem:[%s4235 + $0x7c] sm:$0x1]
  %v7083 = vld [vmem:[%s4235 + $0x80] sm:$0xf]
  %v7084 = vld [vmem:[%s4235 + $0x84] sm:$0x1]
  %v7085 = vld [vmem:[%s4235 + $0x88] sm:$0xf]
  %v7086 = vld [vmem:[%s4235 + $0x8c] sm:$0x1]
  %v7088 = vshrl.u32 %v7055, 16
  %v7090 = vrot.slane %v7088, 4
  %v7091 = vshll.u32 %v7055, 16
  %v7093 = vrot.slane %v7091, 5
  %v7094 = vor.u32 %v7090, %v7093
  %v7095 = vrot.slane %v7094, 4
  %v7097 = vshll.u32 %v7056, 16
  %v7099 = vrot.slane %v7097, 5
  %v7100 = vsel %vm596, %v7095, %v7099
  %v7102 = vshrl.u32 %v7057, 16
  %v7104 = vrot.slane %v7102, 4
  %v7105 = vshll.u32 %v7057, 16
  %v7107 = vrot.slane %v7105, 5
  %v7108 = vor.u32 %v7104, %v7107
  %v7109 = vrot.slane %v7108, 4
  %v7111 = vshll.u32 %v7058, 16
  %v7113 = vrot.slane %v7111, 5
  %v7114 = vsel %vm596, %v7109, %v7113
  %v7116 = vshrl.u32 %v7059, 16
  %v7118 = vrot.slane %v7116, 4
  %v7119 = vshll.u32 %v7059, 16
  %v7121 = vrot.slane %v7119, 5
  %v7122 = vor.u32 %v7118, %v7121
  %v7123 = vrot.slane %v7122, 4
  %v7125 = vshll.u32 %v7060, 16
  %v7127 = vrot.slane %v7125, 5
  %v7128 = vsel %vm596, %v7123, %v7127
  %v7130 = vshrl.u32 %v7061, 16
  %v7132 = vrot.slane %v7130, 4
  %v7133 = vshll.u32 %v7061, 16
  %v7135 = vrot.slane %v7133, 5
  %v7136 = vor.u32 %v7132, %v7135
  %v7137 = vrot.slane %v7136, 4
  %v7139 = vshll.u32 %v7062, 16
  %v7141 = vrot.slane %v7139, 5
  %v7142 = vsel %vm596, %v7137, %v7141
  %v7144 = vshrl.u32 %v7063, 16
  %v7146 = vrot.slane %v7144, 4
  %v7147 = vshll.u32 %v7063, 16
  %v7149 = vrot.slane %v7147, 5
  %v7150 = vor.u32 %v7146, %v7149
  %v7151 = vrot.slane %v7150, 4
  %v7153 = vshll.u32 %v7064, 16
  %v7155 = vrot.slane %v7153, 5
  %v7156 = vsel %vm596, %v7151, %v7155
  %v7158 = vshrl.u32 %v7065, 16
  %v7160 = vrot.slane %v7158, 4
  %v7161 = vshll.u32 %v7065, 16
  %v7163 = vrot.slane %v7161, 5
  %v7164 = vor.u32 %v7160, %v7163
  %v7165 = vrot.slane %v7164, 4
  %v7167 = vshll.u32 %v7066, 16
  %v7169 = vrot.slane %v7167, 5
  %v7170 = vsel %vm596, %v7165, %v7169
  %v7172 = vshrl.u32 %v7067, 16
  %v7174 = vrot.slane %v7172, 4
  %v7175 = vshll.u32 %v7067, 16
  %v7177 = vrot.slane %v7175, 5
  %v7178 = vor.u32 %v7174, %v7177
  %v7179 = vrot.slane %v7178, 4
  %v7181 = vshll.u32 %v7068, 16
  %v7183 = vrot.slane %v7181, 5
  %v7184 = vsel %vm596, %v7179, %v7183
  %v7186 = vshrl.u32 %v7069, 16
  %v7188 = vrot.slane %v7186, 4
  %v7189 = vshll.u32 %v7069, 16
  %v7191 = vrot.slane %v7189, 5
  %v7192 = vor.u32 %v7188, %v7191
  %v7193 = vrot.slane %v7192, 4
  %v7195 = vshll.u32 %v7070, 16
  %v7197 = vrot.slane %v7195, 5
  %v7198 = vsel %vm596, %v7193, %v7197
  %v7200 = vshrl.u32 %v7071, 16
  %v7202 = vrot.slane %v7200, 4
  %v7203 = vshll.u32 %v7071, 16
  %v7205 = vrot.slane %v7203, 5
  %v7206 = vor.u32 %v7202, %v7205
  %v7207 = vrot.slane %v7206, 4
  %v7209 = vshll.u32 %v7072, 16
  %v7211 = vrot.slane %v7209, 5
  %v7212 = vsel %vm596, %v7207, %v7211
  %v7214 = vshrl.u32 %v7073, 16
  %v7216 = vrot.slane %v7214, 4
  %v7217 = vshll.u32 %v7073, 16
  %v7219 = vrot.slane %v7217, 5
  %v7220 = vor.u32 %v7216, %v7219
  %v7221 = vrot.slane %v7220, 4
  %v7223 = vshll.u32 %v7074, 16
  %v7225 = vrot.slane %v7223, 5
  %v7226 = vsel %vm596, %v7221, %v7225
  %v7228 = vshrl.u32 %v7075, 16
  %v7230 = vrot.slane %v7228, 4
  %v7231 = vshll.u32 %v7075, 16
  %v7233 = vrot.slane %v7231, 5
  %v7234 = vor.u32 %v7230, %v7233
  %v7235 = vrot.slane %v7234, 4
  %v7237 = vshll.u32 %v7076, 16
  %v7239 = vrot.slane %v7237, 5
  %v7240 = vsel %vm596, %v7235, %v7239
  %v7242 = vshrl.u32 %v7077, 16
  %v7244 = vrot.slane %v7242, 4
  %v7245 = vshll.u32 %v7077, 16
  %v7247 = vrot.slane %v7245, 5
  %v7248 = vor.u32 %v7244, %v7247
  %v7249 = vrot.slane %v7248, 4
  %v7251 = vshll.u32 %v7078, 16
  %v7253 = vrot.slane %v7251, 5
  %v7254 = vsel %vm596, %v7249, %v7253
  %v7256 = vshrl.u32 %v7079, 16
  %v7258 = vrot.slane %v7256, 4
  %v7259 = vshll.u32 %v7079, 16
  %v7261 = vrot.slane %v7259, 5
  %v7262 = vor.u32 %v7258, %v7261
  %v7263 = vrot.slane %v7262, 4
  %v7265 = vshll.u32 %v7080, 16
  %v7267 = vrot.slane %v7265, 5
  %v7268 = vsel %vm596, %v7263, %v7267
  %v7270 = vshrl.u32 %v7081, 16
  %v7272 = vrot.slane %v7270, 4
  %v7273 = vshll.u32 %v7081, 16
  %v7275 = vrot.slane %v7273, 5
  %v7276 = vor.u32 %v7272, %v7275
  %v7277 = vrot.slane %v7276, 4
  %v7279 = vshll.u32 %v7082, 16
  %v7281 = vrot.slane %v7279, 5
  %v7282 = vsel %vm596, %v7277, %v7281
  %v7284 = vshrl.u32 %v7083, 16
  %v7286 = vrot.slane %v7284, 4
  %v7287 = vshll.u32 %v7083, 16
  %v7289 = vrot.slane %v7287, 5
  %v7290 = vor.u32 %v7286, %v7289
  %v7291 = vrot.slane %v7290, 4
  %v7293 = vshll.u32 %v7084, 16
  %v7295 = vrot.slane %v7293, 5
  %v7296 = vsel %vm596, %v7291, %v7295
  %v7298 = vshrl.u32 %v7085, 16
  %v7300 = vrot.slane %v7298, 4
  %v7301 = vshll.u32 %v7085, 16
  %v7303 = vrot.slane %v7301, 5
  %v7304 = vor.u32 %v7300, %v7303
  %v7305 = vrot.slane %v7304, 4
  %v7307 = vshll.u32 %v7086, 16
  %v7309 = vrot.slane %v7307, 5
  %v7310 = vsel %vm596, %v7305, %v7309
  %s7311 = scalar_lea.vmem [#allocation2], 16
  %v7312 = vld [vmem:[%s7311] sm:$0xf]
  %v7313 = vld [vmem:[%s7311 + $0x4] sm:$0x1]
  %v7314 = vld [vmem:[%s7311 + $0x8] sm:$0xf]
  %v7315 = vld [vmem:[%s7311 + $0xc] sm:$0x1]
  %v7316 = vld [vmem:[%s7311 + $0x10] sm:$0xf]
  %v7317 = vld [vmem:[%s7311 + $0x14] sm:$0x1]
  %v7318 = vld [vmem:[%s7311 + $0x18] sm:$0xf]
  %v7319 = vld [vmem:[%s7311 + $0x1c] sm:$0x1]
  %v7320 = vld [vmem:[%s7311 + $0x20] sm:$0xf]
  %v7321 = vld [vmem:[%s7311 + $0x24] sm:$0x1]
  %v7322 = vld [vmem:[%s7311 + $0x28] sm:$0xf]
  %v7323 = vld [vmem:[%s7311 + $0x2c] sm:$0x1]
  %v7324 = vld [vmem:[%s7311 + $0x30] sm:$0xf]
  %v7325 = vld [vmem:[%s7311 + $0x34] sm:$0x1]
  %v7326 = vld [vmem:[%s7311 + $0x38] sm:$0xf]
  %v7327 = vld [vmem:[%s7311 + $0x3c] sm:$0x1]
  %v7328 = vld [vmem:[%s7311 + $0x50] sm:$0xf]
  %v7329 = vld [vmem:[%s7311 + $0x54] sm:$0x1]
  %v7330 = vld [vmem:[%s7311 + $0x58] sm:$0xf]
  %v7331 = vld [vmem:[%s7311 + $0x5c] sm:$0x1]
  %v7332 = vld [vmem:[%s7311 + $0x60] sm:$0xf]
  %v7333 = vld [vmem:[%s7311 + $0x64] sm:$0x1]
  %v7334 = vld [vmem:[%s7311 + $0x68] sm:$0xf]
  %v7335 = vld [vmem:[%s7311 + $0x6c] sm:$0x1]
  %v7336 = vld [vmem:[%s7311 + $0x70] sm:$0xf]
  %v7337 = vld [vmem:[%s7311 + $0x74] sm:$0x1]
  %v7338 = vld [vmem:[%s7311 + $0x78] sm:$0xf]
  %v7339 = vld [vmem:[%s7311 + $0x7c] sm:$0x1]
  %v7340 = vld [vmem:[%s7311 + $0x80] sm:$0xf]
  %v7341 = vld [vmem:[%s7311 + $0x84] sm:$0x1]
  %v7342 = vld [vmem:[%s7311 + $0x88] sm:$0xf]
  %v7343 = vld [vmem:[%s7311 + $0x8c] sm:$0x1]
  %v7345 = vshrl.u32 %v7312, 16
  %v7347 = vrot.slane %v7345, 4
  %v7348 = vshll.u32 %v7312, 16
  %v7350 = vrot.slane %v7348, 5
  %v7351 = vor.u32 %v7347, %v7350
  %v7352 = vrot.slane %v7351, 4
  %v7354 = vshll.u32 %v7313, 16
  %v7356 = vrot.slane %v7354, 5
  %v7357 = vsel %vm596, %v7352, %v7356
  %v7359 = vshrl.u32 %v7314, 16
  %v7361 = vrot.slane %v7359, 4
  %v7362 = vshll.u32 %v7314, 16
  %v7364 = vrot.slane %v7362, 5
  %v7365 = vor.u32 %v7361, %v7364
  %v7366 = vrot.slane %v7365, 4
  %v7368 = vshll.u32 %v7315, 16
  %v7370 = vrot.slane %v7368, 5
  %v7371 = vsel %vm596, %v7366, %v7370
  %v7373 = vshrl.u32 %v7316, 16
  %v7375 = vrot.slane %v7373, 4
  %v7376 = vshll.u32 %v7316, 16
  %v7378 = vrot.slane %v7376, 5
  %v7379 = vor.u32 %v7375, %v7378
  %v7380 = vrot.slane %v7379, 4
  %v7382 = vshll.u32 %v7317, 16
  %v7384 = vrot.slane %v7382, 5
  %v7385 = vsel %vm596, %v7380, %v7384
  %v7387 = vshrl.u32 %v7318, 16
  %v7389 = vrot.slane %v7387, 4
  %v7390 = vshll.u32 %v7318, 16
  %v7392 = vrot.slane %v7390, 5
  %v7393 = vor.u32 %v7389, %v7392
  %v7394 = vrot.slane %v7393, 4
  %v7396 = vshll.u32 %v7319, 16
  %v7398 = vrot.slane %v7396, 5
  %v7399 = vsel %vm596, %v7394, %v7398
  %v7401 = vshrl.u32 %v7320, 16
  %v7403 = vrot.slane %v7401, 4
  %v7404 = vshll.u32 %v7320, 16
  %v7406 = vrot.slane %v7404, 5
  %v7407 = vor.u32 %v7403, %v7406
  %v7408 = vrot.slane %v7407, 4
  %v7410 = vshll.u32 %v7321, 16
  %v7412 = vrot.slane %v7410, 5
  %v7413 = vsel %vm596, %v7408, %v7412
  %v7415 = vshrl.u32 %v7322, 16
  %v7417 = vrot.slane %v7415, 4
  %v7418 = vshll.u32 %v7322, 16
  %v7420 = vrot.slane %v7418, 5
  %v7421 = vor.u32 %v7417, %v7420
  %v7422 = vrot.slane %v7421, 4
  %v7424 = vshll.u32 %v7323, 16
  %v7426 = vrot.slane %v7424, 5
  %v7427 = vsel %vm596, %v7422, %v7426
  %v7429 = vshrl.u32 %v7324, 16
  %v7431 = vrot.slane %v7429, 4
  %v7432 = vshll.u32 %v7324, 16
  %v7434 = vrot.slane %v7432, 5
  %v7435 = vor.u32 %v7431, %v7434
  %v7436 = vrot.slane %v7435, 4
  %v7438 = vshll.u32 %v7325, 16
  %v7440 = vrot.slane %v7438, 5
  %v7441 = vsel %vm596, %v7436, %v7440
  %v7443 = vshrl.u32 %v7326, 16
  %v7445 = vrot.slane %v7443, 4
  %v7446 = vshll.u32 %v7326, 16
  %v7448 = vrot.slane %v7446, 5
  %v7449 = vor.u32 %v7445, %v7448
  %v7450 = vrot.slane %v7449, 4
  %v7452 = vshll.u32 %v7327, 16
  %v7454 = vrot.slane %v7452, 5
  %v7455 = vsel %vm596, %v7450, %v7454
  %v7457 = vshrl.u32 %v7328, 16
  %v7459 = vrot.slane %v7457, 4
  %v7460 = vshll.u32 %v7328, 16
  %v7462 = vrot.slane %v7460, 5
  %v7463 = vor.u32 %v7459, %v7462
  %v7464 = vrot.slane %v7463, 4
  %v7466 = vshll.u32 %v7329, 16
  %v7468 = vrot.slane %v7466, 5
  %v7469 = vsel %vm596, %v7464, %v7468
  %v7471 = vshrl.u32 %v7330, 16
  %v7473 = vrot.slane %v7471, 4
  %v7474 = vshll.u32 %v7330, 16
  %v7476 = vrot.slane %v7474, 5
  %v7477 = vor.u32 %v7473, %v7476
  %v7478 = vrot.slane %v7477, 4
  %v7480 = vshll.u32 %v7331, 16
  %v7482 = vrot.slane %v7480, 5
  %v7483 = vsel %vm596, %v7478, %v7482
  %v7485 = vshrl.u32 %v7332, 16
  %v7487 = vrot.slane %v7485, 4
  %v7488 = vshll.u32 %v7332, 16
  %v7490 = vrot.slane %v7488, 5
  %v7491 = vor.u32 %v7487, %v7490
  %v7492 = vrot.slane %v7491, 4
  %v7494 = vshll.u32 %v7333, 16
  %v7496 = vrot.slane %v7494, 5
  %v7497 = vsel %vm596, %v7492, %v7496
  %v7499 = vshrl.u32 %v7334, 16
  %v7501 = vrot.slane %v7499, 4
  %v7502 = vshll.u32 %v7334, 16
  %v7504 = vrot.slane %v7502, 5
  %v7505 = vor.u32 %v7501, %v7504
  %v7506 = vrot.slane %v7505, 4
  %v7508 = vshll.u32 %v7335, 16
  %v7510 = vrot.slane %v7508, 5
  %v7511 = vsel %vm596, %v7506, %v7510
  %v7513 = vshrl.u32 %v7336, 16
  %v7515 = vrot.slane %v7513, 4
  %v7516 = vshll.u32 %v7336, 16
  %v7518 = vrot.slane %v7516, 5
  %v7519 = vor.u32 %v7515, %v7518
  %v7520 = vrot.slane %v7519, 4
  %v7522 = vshll.u32 %v7337, 16
  %v7524 = vrot.slane %v7522, 5
  %v7525 = vsel %vm596, %v7520, %v7524
  %v7527 = vshrl.u32 %v7338, 16
  %v7529 = vrot.slane %v7527, 4
  %v7530 = vshll.u32 %v7338, 16
  %v7532 = vrot.slane %v7530, 5
  %v7533 = vor.u32 %v7529, %v7532
  %v7534 = vrot.slane %v7533, 4
  %v7536 = vshll.u32 %v7339, 16
  %v7538 = vrot.slane %v7536, 5
  %v7539 = vsel %vm596, %v7534, %v7538
  %v7541 = vshrl.u32 %v7340, 16
  %v7543 = vrot.slane %v7541, 4
  %v7544 = vshll.u32 %v7340, 16
  %v7546 = vrot.slane %v7544, 5
  %v7547 = vor.u32 %v7543, %v7546
  %v7548 = vrot.slane %v7547, 4
  %v7550 = vshll.u32 %v7341, 16
  %v7552 = vrot.slane %v7550, 5
  %v7553 = vsel %vm596, %v7548, %v7552
  %v7555 = vshrl.u32 %v7342, 16
  %v7557 = vrot.slane %v7555, 4
  %v7558 = vshll.u32 %v7342, 16
  %v7560 = vrot.slane %v7558, 5
  %v7561 = vor.u32 %v7557, %v7560
  %v7562 = vrot.slane %v7561, 4
  %v7564 = vshll.u32 %v7343, 16
  %v7566 = vrot.slane %v7564, 5
  %v7567 = vsel %vm596, %v7562, %v7566
  %v7568 = vunpack.c.l.b16 %v7100
  %v7569 = vunpack.c.l.b16 %v7114
  %v7570 = vunpack.c.l.b16 %v7128
  %v7571 = vunpack.c.l.b16 %v7142
  %v7572 = vunpack.c.l.b16 %v7156
  %v7573 = vunpack.c.l.b16 %v7170
  %v7574 = vunpack.c.l.b16 %v7184
  %v7575 = vunpack.c.l.b16 %v7198
  %v7576 = vunpack.c.l.b16 %v7212
  %v7577 = vunpack.c.l.b16 %v7226
  %v7578 = vunpack.c.l.b16 %v7240
  %v7579 = vunpack.c.l.b16 %v7254
  %v7580 = vunpack.c.l.b16 %v7268
  %v7581 = vunpack.c.l.b16 %v7282
  %v7582 = vunpack.c.l.b16 %v7296
  %v7583 = vunpack.c.l.b16 %v7310
  %v7584 = vpack.c.b16 %v7569, %v7568
  %v7585 = vpack.c.b16 %v7571, %v7570
  %v7586 = vpack.c.b16 %v7573, %v7572
  %v7587 = vpack.c.b16 %v7575, %v7574
  %v7588 = vpack.c.b16 %v7577, %v7576
  %v7589 = vpack.c.b16 %v7579, %v7578
  %v7590 = vpack.c.b16 %v7581, %v7580
  %v7591 = vpack.c.b16 %v7583, %v7582
  %v7616 = vunpack.c.l.b16 %v7055
  %v7617 = vunpack.c.l.b16 %v7057
  %v7618 = vunpack.c.l.b16 %v7059
  %v7619 = vunpack.c.l.b16 %v7061
  %v7620 = vunpack.c.l.b16 %v7063
  %v7621 = vunpack.c.l.b16 %v7065
  %v7622 = vunpack.c.l.b16 %v7067
  %v7623 = vunpack.c.l.b16 %v7069
  %v7624 = vunpack.c.l.b16 %v7071
  %v7625 = vunpack.c.l.b16 %v7073
  %v7626 = vunpack.c.l.b16 %v7075
  %v7627 = vunpack.c.l.b16 %v7077
  %v7628 = vunpack.c.l.b16 %v7079
  %v7629 = vunpack.c.l.b16 %v7081
  %v7630 = vunpack.c.l.b16 %v7083
  %v7631 = vunpack.c.l.b16 %v7085
  %v7632 = vpack.c.b16 %v7617, %v7616
  %v7633 = vpack.c.b16 %v7619, %v7618
  %v7634 = vpack.c.b16 %v7621, %v7620
  %v7635 = vpack.c.b16 %v7623, %v7622
  %v7636 = vpack.c.b16 %v7625, %v7624
  %v7637 = vpack.c.b16 %v7627, %v7626
  %v7638 = vpack.c.b16 %v7629, %v7628
  %v7639 = vpack.c.b16 %v7631, %v7630
  %v7648 = vunpack.c.l.b16 %v7357
  %v7649 = vunpack.c.l.b16 %v7371
  %v7650 = vunpack.c.l.b16 %v7385
  %v7651 = vunpack.c.l.b16 %v7399
  %v7652 = vunpack.c.l.b16 %v7413
  %v7653 = vunpack.c.l.b16 %v7427
  %v7654 = vunpack.c.l.b16 %v7441
  %v7655 = vunpack.c.l.b16 %v7455
  %v7656 = vunpack.c.l.b16 %v7469
  %v7657 = vunpack.c.l.b16 %v7483
  %v7658 = vunpack.c.l.b16 %v7497
  %v7659 = vunpack.c.l.b16 %v7511
  %v7660 = vunpack.c.l.b16 %v7525
  %v7661 = vunpack.c.l.b16 %v7539
  %v7662 = vunpack.c.l.b16 %v7553
  %v7663 = vunpack.c.l.b16 %v7567
  %v7664 = vpack.c.b16 %v7649, %v7648
  %v7665 = vpack.c.b16 %v7651, %v7650
  %v7666 = vpack.c.b16 %v7653, %v7652
  %v7667 = vpack.c.b16 %v7655, %v7654
  %v7668 = vpack.c.b16 %v7657, %v7656
  %v7669 = vpack.c.b16 %v7659, %v7658
  %v7670 = vpack.c.b16 %v7661, %v7660
  %v7671 = vpack.c.b16 %v7663, %v7662
  %v7696 = vunpack.c.l.b16 %v7312
  %v7697 = vunpack.c.l.b16 %v7314
  %v7698 = vunpack.c.l.b16 %v7316
  %v7699 = vunpack.c.l.b16 %v7318
  %v7700 = vunpack.c.l.b16 %v7320
  %v7701 = vunpack.c.l.b16 %v7322
  %v7702 = vunpack.c.l.b16 %v7324
  %v7703 = vunpack.c.l.b16 %v7326
  %v7704 = vunpack.c.l.b16 %v7328
  %v7705 = vunpack.c.l.b16 %v7330
  %v7706 = vunpack.c.l.b16 %v7332
  %v7707 = vunpack.c.l.b16 %v7334
  %v7708 = vunpack.c.l.b16 %v7336
  %v7709 = vunpack.c.l.b16 %v7338
  %v7710 = vunpack.c.l.b16 %v7340
  %v7711 = vunpack.c.l.b16 %v7342
  %v7712 = vpack.c.b16 %v7697, %v7696
  %v7713 = vpack.c.b16 %v7699, %v7698
  %v7714 = vpack.c.b16 %v7701, %v7700
  %v7715 = vpack.c.b16 %v7703, %v7702
  %v7716 = vpack.c.b16 %v7705, %v7704
  %v7717 = vpack.c.b16 %v7707, %v7706
  %v7718 = vpack.c.b16 %v7709, %v7708
  %v7719 = vpack.c.b16 %v7711, %v7710
  %s7728 = scalar_lea.vmem %s2, 512
  %v7729 = vld [vmem:[%s7728] sm:$0xf]
  %v7730 = vld [vmem:[%s7728 + $0x4] sm:$0xf]
  %v7731 = vld [vmem:[%s7728 + $0x8] sm:$0xf]
  %v7732 = vld [vmem:[%s7728 + $0xc] sm:$0xf]
  %v7733 = vld [vmem:[%s7728 + $0x10] sm:$0xf]
  %v7734 = vld [vmem:[%s7728 + $0x14] sm:$0xf]
  %v7735 = vld [vmem:[%s7728 + $0x18] sm:$0xf]
  %v7736 = vld [vmem:[%s7728 + $0x1c] sm:$0xf]
  %v7737 = vld [vmem:[%s7728 + $0x20] sm:$0xf]
  %v7738 = vld [vmem:[%s7728 + $0x24] sm:$0xf]
  %v7739 = vld [vmem:[%s7728 + $0x28] sm:$0xf]
  %v7740 = vld [vmem:[%s7728 + $0x2c] sm:$0xf]
  %v7741 = vld [vmem:[%s7728 + $0x30] sm:$0xf]
  %v7742 = vld [vmem:[%s7728 + $0x34] sm:$0xf]
  %v7743 = vld [vmem:[%s7728 + $0x38] sm:$0xf]
  %v7744 = vld [vmem:[%s7728 + $0x3c] sm:$0xf]
  %v7745 = vld [vmem:[%s7728 + $0x40] sm:$0xf]
  %v7746 = vld [vmem:[%s7728 + $0x44] sm:$0xf]
  %v7747 = vld [vmem:[%s7728 + $0x48] sm:$0xf]
  %v7748 = vld [vmem:[%s7728 + $0x4c] sm:$0xf]
  %v7749 = vld [vmem:[%s7728 + $0x50] sm:$0xf]
  %v7750 = vld [vmem:[%s7728 + $0x54] sm:$0xf]
  %v7751 = vld [vmem:[%s7728 + $0x58] sm:$0xf]
  %v7752 = vld [vmem:[%s7728 + $0x5c] sm:$0xf]
  %v7753 = vld [vmem:[%s7728 + $0x60] sm:$0xf]
  %v7754 = vld [vmem:[%s7728 + $0x64] sm:$0xf]
  %v7755 = vld [vmem:[%s7728 + $0x68] sm:$0xf]
  %v7756 = vld [vmem:[%s7728 + $0x6c] sm:$0xf]
  %v7757 = vld [vmem:[%s7728 + $0x70] sm:$0xf]
  %v7758 = vld [vmem:[%s7728 + $0x74] sm:$0xf]
  %v7759 = vld [vmem:[%s7728 + $0x78] sm:$0xf]
  %v7760 = vld [vmem:[%s7728 + $0x7c] sm:$0xf]
  %v7761 = vld [vmem:[%s7728 + $0x80] sm:$0xf]
  %v7762 = vld [vmem:[%s7728 + $0x84] sm:$0xf]
  %v7763 = vld [vmem:[%s7728 + $0x88] sm:$0xf]
  %v7764 = vld [vmem:[%s7728 + $0x8c] sm:$0xf]
  %v7765 = vld [vmem:[%s7728 + $0x90] sm:$0xf]
  %v7766 = vld [vmem:[%s7728 + $0x94] sm:$0xf]
  %v7767 = vld [vmem:[%s7728 + $0x98] sm:$0xf]
  %v7768 = vld [vmem:[%s7728 + $0x9c] sm:$0xf]
  %v7769 = vld [vmem:[%s7728 + $0xa0] sm:$0xf]
  %v7770 = vld [vmem:[%s7728 + $0xa4] sm:$0xf]
  %v7771 = vld [vmem:[%s7728 + $0xa8] sm:$0xf]
  %v7772 = vld [vmem:[%s7728 + $0xac] sm:$0xf]
  %v7773 = vld [vmem:[%s7728 + $0xb0] sm:$0xf]
  %v7774 = vld [vmem:[%s7728 + $0xb4] sm:$0xf]
  %v7775 = vld [vmem:[%s7728 + $0xb8] sm:$0xf]
  %v7776 = vld [vmem:[%s7728 + $0xbc] sm:$0xf]
  %v7777 = vld [vmem:[%s7728 + $0xc0] sm:$0xf]
  %v7778 = vld [vmem:[%s7728 + $0xc4] sm:$0xf]
  %v7779 = vld [vmem:[%s7728 + $0xc8] sm:$0xf]
  %v7780 = vld [vmem:[%s7728 + $0xcc] sm:$0xf]
  %v7781 = vld [vmem:[%s7728 + $0xd0] sm:$0xf]
  %v7782 = vld [vmem:[%s7728 + $0xd4] sm:$0xf]
  %v7783 = vld [vmem:[%s7728 + $0xd8] sm:$0xf]
  %v7784 = vld [vmem:[%s7728 + $0xdc] sm:$0xf]
  %v7785 = vld [vmem:[%s7728 + $0xe0] sm:$0xf]
  %v7786 = vld [vmem:[%s7728 + $0xe4] sm:$0xf]
  %v7787 = vld [vmem:[%s7728 + $0xe8] sm:$0xf]
  %v7788 = vld [vmem:[%s7728 + $0xec] sm:$0xf]
  %v7789 = vld [vmem:[%s7728 + $0xf0] sm:$0xf]
  %v7790 = vld [vmem:[%s7728 + $0xf4] sm:$0xf]
  %v7791 = vld [vmem:[%s7728 + $0xf8] sm:$0xf]
  %v7792 = vld [vmem:[%s7728 + $0xfc] sm:$0xf]
  %v7857 = vunpack.c.l.b16 %v7729
  %v7858 = vunpack.c.l.b16 %v7730
  %v7859 = vunpack.c.l.b16 %v7731
  %v7860 = vunpack.c.l.b16 %v7732
  %v7861 = vunpack.c.l.b16 %v7733
  %v7862 = vunpack.c.l.b16 %v7734
  %v7863 = vunpack.c.l.b16 %v7735
  %v7864 = vunpack.c.l.b16 %v7736
  %v7865 = vunpack.c.l.b16 %v7737
  %v7866 = vunpack.c.l.b16 %v7738
  %v7867 = vunpack.c.l.b16 %v7739
  %v7868 = vunpack.c.l.b16 %v7740
  %v7869 = vunpack.c.l.b16 %v7741
  %v7870 = vunpack.c.l.b16 %v7742
  %v7871 = vunpack.c.l.b16 %v7743
  %v7872 = vunpack.c.l.b16 %v7744
  %v7873 = vunpack.c.l.b16 %v7745
  %v7874 = vunpack.c.l.b16 %v7746
  %v7875 = vunpack.c.l.b16 %v7747
  %v7876 = vunpack.c.l.b16 %v7748
  %v7877 = vunpack.c.l.b16 %v7749
  %v7878 = vunpack.c.l.b16 %v7750
  %v7879 = vunpack.c.l.b16 %v7751
  %v7880 = vunpack.c.l.b16 %v7752
  %v7881 = vunpack.c.l.b16 %v7753
  %v7882 = vunpack.c.l.b16 %v7754
  %v7883 = vunpack.c.l.b16 %v7755
  %v7884 = vunpack.c.l.b16 %v7756
  %v7885 = vunpack.c.l.b16 %v7757
  %v7886 = vunpack.c.l.b16 %v7758
  %v7887 = vunpack.c.l.b16 %v7759
  %v7888 = vunpack.c.l.b16 %v7760
  %v7889 = vunpack.c.l.b16 %v7761
  %v7890 = vunpack.c.l.b16 %v7762
  %v7891 = vunpack.c.l.b16 %v7763
  %v7892 = vunpack.c.l.b16 %v7764
  %v7893 = vunpack.c.l.b16 %v7765
  %v7894 = vunpack.c.l.b16 %v7766
  %v7895 = vunpack.c.l.b16 %v7767
  %v7896 = vunpack.c.l.b16 %v7768
  %v7897 = vunpack.c.l.b16 %v7769
  %v7898 = vunpack.c.l.b16 %v7770
  %v7899 = vunpack.c.l.b16 %v7771
  %v7900 = vunpack.c.l.b16 %v7772
  %v7901 = vunpack.c.l.b16 %v7773
  %v7902 = vunpack.c.l.b16 %v7774
  %v7903 = vunpack.c.l.b16 %v7775
  %v7904 = vunpack.c.l.b16 %v7776
  %v7905 = vunpack.c.l.b16 %v7777
  %v7906 = vunpack.c.l.b16 %v7778
  %v7907 = vunpack.c.l.b16 %v7779
  %v7908 = vunpack.c.l.b16 %v7780
  %v7909 = vunpack.c.l.b16 %v7781
  %v7910 = vunpack.c.l.b16 %v7782
  %v7911 = vunpack.c.l.b16 %v7783
  %v7912 = vunpack.c.l.b16 %v7784
  %v7913 = vunpack.c.l.b16 %v7785
  %v7914 = vunpack.c.l.b16 %v7786
  %v7915 = vunpack.c.l.b16 %v7787
  %v7916 = vunpack.c.l.b16 %v7788
  %v7917 = vunpack.c.l.b16 %v7789
  %v7918 = vunpack.c.l.b16 %v7790
  %v7919 = vunpack.c.l.b16 %v7791
  %v7920 = vunpack.c.l.b16 %v7792
  %v7921 = vpack.c.b16 %v7858, %v7857
  %v7922 = vpack.c.b16 %v7860, %v7859
  %v7923 = vpack.c.b16 %v7862, %v7861
  %v7924 = vpack.c.b16 %v7864, %v7863
  %v7925 = vpack.c.b16 %v7866, %v7865
  %v7926 = vpack.c.b16 %v7868, %v7867
  %v7927 = vpack.c.b16 %v7870, %v7869
  %v7928 = vpack.c.b16 %v7872, %v7871
  %v7929 = vpack.c.b16 %v7874, %v7873
  %v7930 = vpack.c.b16 %v7876, %v7875
  %v7931 = vpack.c.b16 %v7878, %v7877
  %v7932 = vpack.c.b16 %v7880, %v7879
  %v7933 = vpack.c.b16 %v7882, %v7881
  %v7934 = vpack.c.b16 %v7884, %v7883
  %v7935 = vpack.c.b16 %v7886, %v7885
  %v7936 = vpack.c.b16 %v7888, %v7887
  %v7937 = vpack.c.b16 %v7890, %v7889
  %v7938 = vpack.c.b16 %v7892, %v7891
  %v7939 = vpack.c.b16 %v7894, %v7893
  %v7940 = vpack.c.b16 %v7896, %v7895
  %v7941 = vpack.c.b16 %v7898, %v7897
  %v7942 = vpack.c.b16 %v7900, %v7899
  %v7943 = vpack.c.b16 %v7902, %v7901
  %v7944 = vpack.c.b16 %v7904, %v7903
  %v7945 = vpack.c.b16 %v7906, %v7905
  %v7946 = vpack.c.b16 %v7908, %v7907
  %v7947 = vpack.c.b16 %v7910, %v7909
  %v7948 = vpack.c.b16 %v7912, %v7911
  %v7949 = vpack.c.b16 %v7914, %v7913
  %v7950 = vpack.c.b16 %v7916, %v7915
  %v7951 = vpack.c.b16 %v7918, %v7917
  %v7952 = vpack.c.b16 %v7920, %v7919
  %7985 = vmatprep.subr.bf16.mxu0 0
  %7986 = vmatpush1.bf16.msra.mxu0 %v7921
  %7987 = vmatprep.subr.bf16.mxu0 0
  %7988 = vmatpush1.bf16.msra.mxu0 %v7922
  %7989 = vmatprep.subr.bf16.mxu0 0
  %7990 = vmatpush1.bf16.msra.mxu0 %v7923
  %7991 = vmatprep.subr.bf16.mxu0 0
  %7992 = vmatpush1.bf16.msra.mxu0 %v7924
  %7993 = vmatprep.subr.bf16.mxu0 0
  %7994 = vmatpush1.bf16.msra.mxu0 %v7925
  %7995 = vmatprep.subr.bf16.mxu0 0
  %7996 = vmatpush1.bf16.msra.mxu0 %v7926
  %7997 = vmatprep.subr.bf16.mxu0 0
  %7998 = vmatpush1.bf16.msra.mxu0 %v7927
  %7999 = vmatprep.subr.bf16.mxu0 0
  %8000 = vmatpush1.bf16.msra.mxu0 %v7928
  %8001 = vmatprep.subr.bf16.mxu0 0
  %8002 = vmatpush1.bf16.msra.mxu0 %v7929
  %8003 = vmatprep.subr.bf16.mxu0 0
  %8004 = vmatpush1.bf16.msra.mxu0 %v7930
  %8005 = vmatprep.subr.bf16.mxu0 0
  %8006 = vmatpush1.bf16.msra.mxu0 %v7931
  %8007 = vmatprep.subr.bf16.mxu0 0
  %8008 = vmatpush1.bf16.msra.mxu0 %v7932
  %8009 = vmatprep.subr.bf16.mxu0 0
  %8010 = vmatpush1.bf16.msra.mxu0 %v7933
  %8011 = vmatprep.subr.bf16.mxu0 0
  %8012 = vmatpush1.bf16.msra.mxu0 %v7934
  %8013 = vmatprep.subr.bf16.mxu0 0
  %8014 = vmatpush1.bf16.msra.mxu0 %v7935
  %8015 = vmatprep.subr.bf16.mxu0 0
  %8016 = vmatpush1.bf16.msra.mxu0 %v7936
  %8017 = vmatprep.mubr.bf16.mxu0 %v7632
  %8018 = vmatmul.mubr.bf16.gmra.mrb[0].mxu0 %v7584
  %v8019 = vpop.f32.mrb[0].mxu0
  %v8020 = vadd.f32 0.0, %v8019
  %v8021 = vpop.f32.mrb[0].mxu0
  %v8022 = vpop.f32.mrb[0].mxu0
  %v8023 = vadd.f32 0.0, %v8022
  %v8024 = vpop.f32.mrb[0].mxu0
  %8025 = vmatprep.mubr.bf16.mxu0 %v7633
  %8026 = vmatmul.mubr.bf16.gmra.mrb[0].mxu0 %v7585
  %v8027 = vpop.f32.mrb[0].mxu0
  %v8028 = vadd.f32 0.0, %v8027
  %v8029 = vpop.f32.mrb[0].mxu0
  %v8030 = vpop.f32.mrb[0].mxu0
  %v8031 = vadd.f32 0.0, %v8030
  %v8032 = vpop.f32.mrb[0].mxu0
  %8033 = vmatprep.mubr.bf16.mxu0 %v7634
  %8034 = vmatmul.mubr.bf16.gmra.mrb[0].mxu0 %v7586
  %v8035 = vpop.f32.mrb[0].mxu0
  %v8036 = vadd.f32 0.0, %v8035
  %v8037 = vpop.f32.mrb[0].mxu0
  %v8038 = vpop.f32.mrb[0].mxu0
  %v8039 = vadd.f32 0.0, %v8038
  %v8040 = vpop.f32.mrb[0].mxu0
  %8041 = vmatprep.mubr.bf16.mxu0 %v7635
  %8042 = vmatmul.mubr.bf16.gmra.mrb[0].mxu0 %v7587
  %v8043 = vpop.f32.mrb[0].mxu0
  %v8044 = vadd.f32 0.0, %v8043
  %v8045 = vpop.f32.mrb[0].mxu0
  %v8046 = vpop.f32.mrb[0].mxu0
  %v8047 = vadd.f32 0.0, %v8046
  %v8048 = vpop.f32.mrb[0].mxu0
  %8049 = vmatprep.mubr.bf16.mxu0 %v7636
  %8050 = vmatmul.mubr.bf16.gmra.mrb[0].mxu0 %v7588
  %v8051 = vpop.f32.mrb[0].mxu0
  %v8052 = vadd.f32 0.0, %v8051
  %v8053 = vpop.f32.mrb[0].mxu0
  %v8054 = vpop.f32.mrb[0].mxu0
  %v8055 = vadd.f32 0.0, %v8054
  %v8056 = vpop.f32.mrb[0].mxu0
  %8057 = vmatprep.mubr.bf16.mxu0 %v7637
  %8058 = vmatmul.mubr.bf16.gmra.mrb[0].mxu0 %v7589
  %v8059 = vpop.f32.mrb[0].mxu0
  %v8060 = vadd.f32 0.0, %v8059
  %v8061 = vpop.f32.mrb[0].mxu0
  %v8062 = vpop.f32.mrb[0].mxu0
  %v8063 = vadd.f32 0.0, %v8062
  %v8064 = vpop.f32.mrb[0].mxu0
  %8065 = vmatprep.mubr.bf16.mxu0 %v7638
  %8066 = vmatmul.mubr.bf16.gmra.mrb[0].mxu0 %v7590
  %v8067 = vpop.f32.mrb[0].mxu0
  %v8068 = vadd.f32 0.0, %v8067
  %v8069 = vpop.f32.mrb[0].mxu0
  %v8070 = vpop.f32.mrb[0].mxu0
  %v8071 = vadd.f32 0.0, %v8070
  %v8072 = vpop.f32.mrb[0].mxu0
  %8073 = vmatprep.mubr.bf16.mxu0 %v7639
  %8074 = vmatmul.mubr.bf16.gmra.mrb[0].mxu0 %v7591
  %v8075 = vpop.f32.mrb[0].mxu0
  %v8076 = vadd.f32 0.0, %v8075
  %v8077 = vpop.f32.mrb[0].mxu0
  %v8078 = vpop.f32.mrb[0].mxu0
  %v8079 = vadd.f32 0.0, %v8078
  %v8080 = vpop.f32.mrb[0].mxu0
  %8081 = vdwg.mxu0
  %8082 = vmatprep.subr.bf16.mxu0 0
  %8083 = vmatpush1.bf16.msra.mxu0 %v7937
  %8084 = vmatprep.subr.bf16.mxu0 0
  %8085 = vmatpush1.bf16.msra.mxu0 %v7938
  %8086 = vmatprep.subr.bf16.mxu0 0
  %8087 = vmatpush1.bf16.msra.mxu0 %v7939
  %8088 = vmatprep.subr.bf16.mxu0 0
  %8089 = vmatpush1.bf16.msra.mxu0 %v7940
  %8090 = vmatprep.subr.bf16.mxu0 0
  %8091 = vmatpush1.bf16.msra.mxu0 %v7941
  %8092 = vmatprep.subr.bf16.mxu0 0
  %8093 = vmatpush1.bf16.msra.mxu0 %v7942
  %8094 = vmatprep.subr.bf16.mxu0 0
  %8095 = vmatpush1.bf16.msra.mxu0 %v7943
  %8096 = vmatprep.subr.bf16.mxu0 0
  %8097 = vmatpush1.bf16.msra.mxu0 %v7944
  %8098 = vmatprep.subr.bf16.mxu0 0
  %8099 = vmatpush1.bf16.msra.mxu0 %v7945
  %8100 = vmatprep.subr.bf16.mxu0 0
  %8101 = vmatpush1.bf16.msra.mxu0 %v7946
  %8102 = vmatprep.subr.bf16.mxu0 0
  %8103 = vmatpush1.bf16.msra.mxu0 %v7947
  %8104 = vmatprep.subr.bf16.mxu0 0
  %8105 = vmatpush1.bf16.msra.mxu0 %v7948
  %8106 = vmatprep.subr.bf16.mxu0 0
  %8107 = vmatpush1.bf16.msra.mxu0 %v7949
  %8108 = vmatprep.subr.bf16.mxu0 0
  %8109 = vmatpush1.bf16.msra.mxu0 %v7950
  %8110 = vmatprep.subr.bf16.mxu0 0
  %8111 = vmatpush1.bf16.msra.mxu0 %v7951
  %8112 = vmatprep.subr.bf16.mxu0 0
  %8113 = vmatpush1.bf16.msra.mxu0 %v7952
  %8114 = vmatprep.mubr.bf16.mxu0 %v7712
  %8115 = vmatmul.mubr.bf16.gmra.mrb[0].mxu0 %v7664
  %v8116 = vpop.f32.mrb[0].mxu0
  %v8117 = vadd.f32 %v8020, %v8116
  %v8118 = vpop.f32.mrb[0].mxu0
  %v8119 = vpop.f32.mrb[0].mxu0
  %v8120 = vadd.f32 %v8023, %v8119
  %v8121 = vpop.f32.mrb[0].mxu0
  %8122 = vmatprep.mubr.bf16.mxu0 %v7713
  %8123 = vmatmul.mubr.bf16.gmra.mrb[0].mxu0 %v7665
  %v8124 = vpop.f32.mrb[0].mxu0
  %v8125 = vadd.f32 %v8028, %v8124
  %v8126 = vpop.f32.mrb[0].mxu0
  %v8127 = vpop.f32.mrb[0].mxu0
  %v8128 = vadd.f32 %v8031, %v8127
  %v8129 = vpop.f32.mrb[0].mxu0
  %8130 = vmatprep.mubr.bf16.mxu0 %v7714
  %8131 = vmatmul.mubr.bf16.gmra.mrb[0].mxu0 %v7666
  %v8132 = vpop.f32.mrb[0].mxu0
  %v8133 = vadd.f32 %v8036, %v8132
  %v8134 = vpop.f32.mrb[0].mxu0
  %v8135 = vpop.f32.mrb[0].mxu0
  %v8136 = vadd.f32 %v8039, %v8135
  %v8137 = vpop.f32.mrb[0].mxu0
  %8138 = vmatprep.mubr.bf16.mxu0 %v7715
  %8139 = vmatmul.mubr.bf16.gmra.mrb[0].mxu0 %v7667
  %v8140 = vpop.f32.mrb[0].mxu0
  %v8141 = vadd.f32 %v8044, %v8140
  %v8142 = vpop.f32.mrb[0].mxu0
  %v8143 = vpop.f32.mrb[0].mxu0
  %v8144 = vadd.f32 %v8047, %v8143
  %v8145 = vpop.f32.mrb[0].mxu0
  %8146 = vmatprep.mubr.bf16.mxu0 %v7716
  %8147 = vmatmul.mubr.bf16.gmra.mrb[0].mxu0 %v7668
  %v8148 = vpop.f32.mrb[0].mxu0
  %v8149 = vadd.f32 %v8052, %v8148
  %v8150 = vpop.f32.mrb[0].mxu0
  %v8151 = vpop.f32.mrb[0].mxu0
  %v8152 = vadd.f32 %v8055, %v8151
  %v8153 = vpop.f32.mrb[0].mxu0
  %8154 = vmatprep.mubr.bf16.mxu0 %v7717
  %8155 = vmatmul.mubr.bf16.gmra.mrb[0].mxu0 %v7669
  %v8156 = vpop.f32.mrb[0].mxu0
  %v8157 = vadd.f32 %v8060, %v8156
  %v8158 = vpop.f32.mrb[0].mxu0
  %v8159 = vpop.f32.mrb[0].mxu0
  %v8160 = vadd.f32 %v8063, %v8159
  %v8161 = vpop.f32.mrb[0].mxu0
  %8162 = vmatprep.mubr.bf16.mxu0 %v7718
  %8163 = vmatmul.mubr.bf16.gmra.mrb[0].mxu0 %v7670
  %v8164 = vpop.f32.mrb[0].mxu0
  %v8165 = vadd.f32 %v8068, %v8164
  %v8166 = vpop.f32.mrb[0].mxu0
  %v8167 = vpop.f32.mrb[0].mxu0
  %v8168 = vadd.f32 %v8071, %v8167
  %v8169 = vpop.f32.mrb[0].mxu0
  %8170 = vmatprep.mubr.bf16.mxu0 %v7719
  %8171 = vmatmul.mubr.bf16.gmra.mrb[0].mxu0 %v7671
  %v8172 = vpop.f32.mrb[0].mxu0
  %v8173 = vadd.f32 %v8076, %v8172
  %v8174 = vpop.f32.mrb[0].mxu0
  %v8175 = vpop.f32.mrb[0].mxu0
  %v8176 = vadd.f32 %v8079, %v8175
  %v8177 = vpop.f32.mrb[0].mxu0
  %8178 = vdwg.mxu0
  %v8179 = vpack.c.bf16 %v8120, %v8117
  %v8180 = vpack.c.bf16 %v8128, %v8125
  %v8181 = vpack.c.bf16 %v8136, %v8133
  %v8182 = vpack.c.bf16 %v8144, %v8141
  %v8183 = vpack.c.bf16 %v8152, %v8149
  %v8184 = vpack.c.bf16 %v8160, %v8157
  %v8185 = vpack.c.bf16 %v8168, %v8165
  %v8186 = vpack.c.bf16 %v8176, %v8173
  %v8195 = vunpack.c.l.b16 %v8179
  %v8196 = vunpack.c.h.b16 %v8179
  %v8197 = vunpack.c.l.b16 %v8180
  %v8198 = vunpack.c.h.b16 %v8180
  %v8199 = vunpack.c.l.b16 %v8181
  %v8200 = vunpack.c.h.b16 %v8181
  %v8201 = vunpack.c.l.b16 %v8182
  %v8202 = vunpack.c.h.b16 %v8182
  %v8203 = vunpack.c.l.b16 %v8183
  %v8204 = vunpack.c.h.b16 %v8183
  %v8205 = vunpack.c.l.b16 %v8184
  %v8206 = vunpack.c.h.b16 %v8184
  %v8207 = vunpack.c.l.b16 %v8185
  %v8208 = vunpack.c.h.b16 %v8185
  %v8209 = vunpack.c.l.b16 %v8186
  %v8210 = vunpack.c.h.b16 %v8186
  %v8211 = vpack.c.b16 %v8195, %v8195
  %v8212 = vpack.c.b16 %v8196, %v8196
  %v8213 = vpack.c.b16 %v8197, %v8197
  %v8214 = vpack.c.b16 %v8198, %v8198
  %v8215 = vpack.c.b16 %v8199, %v8199
  %v8216 = vpack.c.b16 %v8200, %v8200
  %v8217 = vpack.c.b16 %v8201, %v8201
  %v8218 = vpack.c.b16 %v8202, %v8202
  %v8219 = vpack.c.b16 %v8203, %v8203
  %v8220 = vpack.c.b16 %v8204, %v8204
  %v8221 = vpack.c.b16 %v8205, %v8205
  %v8222 = vpack.c.b16 %v8206, %v8206
  %v8223 = vpack.c.b16 %v8207, %v8207
  %v8224 = vpack.c.b16 %v8208, %v8208
  %v8225 = vpack.c.b16 %v8209, %v8209
  %v8226 = vpack.c.b16 %v8210, %v8210
  %s8243 = scalar_lea.vmem %s3, 128
  %8244 = vst [vmem:[%s8243] sm:$0xf] %v8211
  %8245 = vst [vmem:[%s8243 + $0x4] sm:$0xf] %v8212
  %8246 = vst [vmem:[%s8243 + $0x8] sm:$0xf] %v8213
  %8247 = vst [vmem:[%s8243 + $0xc] sm:$0xf] %v8214
  %8248 = vst [vmem:[%s8243 + $0x10] sm:$0xf] %v8215
  %8249 = vst [vmem:[%s8243 + $0x14] sm:$0xf] %v8216
  %8250 = vst [vmem:[%s8243 + $0x18] sm:$0xf] %v8217
  %8251 = vst [vmem:[%s8243 + $0x1c] sm:$0xf] %v8218
  %8252 = vst [vmem:[%s8243 + $0x20] sm:$0xf] %v8219
  %8253 = vst [vmem:[%s8243 + $0x24] sm:$0xf] %v8220
  %8254 = vst [vmem:[%s8243 + $0x28] sm:$0xf] %v8221
  %8255 = vst [vmem:[%s8243 + $0x2c] sm:$0xf] %v8222
  %8256 = vst [vmem:[%s8243 + $0x30] sm:$0xf] %v8223
  %8257 = vst [vmem:[%s8243 + $0x34] sm:$0xf] %v8224
  %8258 = vst [vmem:[%s8243 + $0x38] sm:$0xf] %v8225
  %8259 = vst [vmem:[%s8243 + $0x3c] sm:$0xf] %v8226
  %v8260 = vadd.f32 %v8117, %v8120
  %v8261 = vadd.f32 %v8260, %v8125
  %v8262 = vadd.f32 %v8261, %v8128
  %v8263 = vadd.f32 %v8262, %v8133
  %v8264 = vadd.f32 %v8263, %v8136
  %v8265 = vadd.f32 %v8264, %v8141
  %v8266 = vadd.f32 %v8265, %v8144
  %v8267 = vadd.f32 %v8266, %v8149
  %v8268 = vadd.f32 %v8267, %v8152
  %v8269 = vadd.f32 %v8268, %v8157
  %v8270 = vadd.f32 %v8269, %v8160
  %v8271 = vadd.f32 %v8270, %v8165
  %v8272 = vadd.f32 %v8271, %v8168
  %v8273 = vadd.f32 %v8272, %v8173
  %v8274 = vadd.f32 %v8273, %v8176
  %v8275 = vrot.slane %v8274, 4
  %v8276 = vadd.f32 %v8274, %v8275
  %v8277 = vrot.slane %v8276, 2
  %v8278 = vadd.f32 %v8276, %v8277
  %v8279 = vrot.slane %v8278, 1
  %v8280 = vadd.f32 %v8278, %v8279
  %v8281 = vadd.f32 %v7016, %v8280
  %v8282 = vmul.f32 %v8117, %v8117
  %v8283 = vmul.f32 %v8120, %v8120
  %v8284 = vmul.f32 %v8125, %v8125
  %v8285 = vmul.f32 %v8128, %v8128
  %v8286 = vmul.f32 %v8133, %v8133
  %v8287 = vmul.f32 %v8136, %v8136
  %v8288 = vmul.f32 %v8141, %v8141
  %v8289 = vmul.f32 %v8144, %v8144
  %v8290 = vmul.f32 %v8149, %v8149
  %v8291 = vmul.f32 %v8152, %v8152
  %v8292 = vmul.f32 %v8157, %v8157
  %v8293 = vmul.f32 %v8160, %v8160
  %v8294 = vmul.f32 %v8165, %v8165
  %v8295 = vmul.f32 %v8168, %v8168
  %v8296 = vmul.f32 %v8173, %v8173
  %v8297 = vmul.f32 %v8176, %v8176
  %v8298 = vadd.f32 %v8282, %v8283
  %v8299 = vadd.f32 %v8298, %v8284
  %v8300 = vadd.f32 %v8299, %v8285
  %v8301 = vadd.f32 %v8300, %v8286
  %v8302 = vadd.f32 %v8301, %v8287
  %v8303 = vadd.f32 %v8302, %v8288
  %v8304 = vadd.f32 %v8303, %v8289
  %v8305 = vadd.f32 %v8304, %v8290
  %v8306 = vadd.f32 %v8305, %v8291
  %v8307 = vadd.f32 %v8306, %v8292
  %v8308 = vadd.f32 %v8307, %v8293
  %v8309 = vadd.f32 %v8308, %v8294
  %v8310 = vadd.f32 %v8309, %v8295
  %v8311 = vadd.f32 %v8310, %v8296
  %v8312 = vadd.f32 %v8311, %v8297
  %v8313 = vrot.slane %v8312, 4
  %v8314 = vadd.f32 %v8312, %v8313
  %v8315 = vrot.slane %v8314, 2
  %v8316 = vadd.f32 %v8314, %v8315
  %v8317 = vrot.slane %v8316, 1
  %v8318 = vadd.f32 %v8316, %v8317
  %v8319 = vadd.f32 %v7054, %v8318
  %v8320 = vld [vmem:[%s4235] sm:$0xf]
  %v8321 = vld [vmem:[%s4235 + $0x4] sm:$0x1]
  %v8322 = vld [vmem:[%s4235 + $0x8] sm:$0xf]
  %v8323 = vld [vmem:[%s4235 + $0xc] sm:$0x1]
  %v8324 = vld [vmem:[%s4235 + $0x10] sm:$0xf]
  %v8325 = vld [vmem:[%s4235 + $0x14] sm:$0x1]
  %v8326 = vld [vmem:[%s4235 + $0x18] sm:$0xf]
  %v8327 = vld [vmem:[%s4235 + $0x1c] sm:$0x1]
  %v8328 = vld [vmem:[%s4235 + $0x20] sm:$0xf]
  %v8329 = vld [vmem:[%s4235 + $0x24] sm:$0x1]
  %v8330 = vld [vmem:[%s4235 + $0x28] sm:$0xf]
  %v8331 = vld [vmem:[%s4235 + $0x2c] sm:$0x1]
  %v8332 = vld [vmem:[%s4235 + $0x30] sm:$0xf]
  %v8333 = vld [vmem:[%s4235 + $0x34] sm:$0x1]
  %v8334 = vld [vmem:[%s4235 + $0x38] sm:$0xf]
  %v8335 = vld [vmem:[%s4235 + $0x3c] sm:$0x1]
  %v8336 = vld [vmem:[%s4235 + $0x50] sm:$0xf]
  %v8337 = vld [vmem:[%s4235 + $0x54] sm:$0x1]
  %v8338 = vld [vmem:[%s4235 + $0x58] sm:$0xf]
  %v8339 = vld [vmem:[%s4235 + $0x5c] sm:$0x1]
  %v8340 = vld [vmem:[%s4235 + $0x60] sm:$0xf]
  %v8341 = vld [vmem:[%s4235 + $0x64] sm:$0x1]
  %v8342 = vld [vmem:[%s4235 + $0x68] sm:$0xf]
  %v8343 = vld [vmem:[%s4235 + $0x6c] sm:$0x1]
  %v8344 = vld [vmem:[%s4235 + $0x70] sm:$0xf]
  %v8345 = vld [vmem:[%s4235 + $0x74] sm:$0x1]
  %v8346 = vld [vmem:[%s4235 + $0x78] sm:$0xf]
  %v8347 = vld [vmem:[%s4235 + $0x7c] sm:$0x1]
  %v8348 = vld [vmem:[%s4235 + $0x80] sm:$0xf]
  %v8349 = vld [vmem:[%s4235 + $0x84] sm:$0x1]
  %v8350 = vld [vmem:[%s4235 + $0x88] sm:$0xf]
  %v8351 = vld [vmem:[%s4235 + $0x8c] sm:$0x1]
  %v8353 = vshrl.u32 %v8320, 16
  %v8355 = vrot.slane %v8353, 4
  %v8356 = vshll.u32 %v8320, 16
  %v8358 = vrot.slane %v8356, 5
  %v8359 = vor.u32 %v8355, %v8358
  %v8360 = vrot.slane %v8359, 4
  %v8362 = vshll.u32 %v8321, 16
  %v8364 = vrot.slane %v8362, 5
  %v8365 = vsel %vm596, %v8360, %v8364
  %v8367 = vshrl.u32 %v8322, 16
  %v8369 = vrot.slane %v8367, 4
  %v8370 = vshll.u32 %v8322, 16
  %v8372 = vrot.slane %v8370, 5
  %v8373 = vor.u32 %v8369, %v8372
  %v8374 = vrot.slane %v8373, 4
  %v8376 = vshll.u32 %v8323, 16
  %v8378 = vrot.slane %v8376, 5
  %v8379 = vsel %vm596, %v8374, %v8378
  %v8381 = vshrl.u32 %v8324, 16
  %v8383 = vrot.slane %v8381, 4
  %v8384 = vshll.u32 %v8324, 16
  %v8386 = vrot.slane %v8384, 5
  %v8387 = vor.u32 %v8383, %v8386
  %v8388 = vrot.slane %v8387, 4
  %v8390 = vshll.u32 %v8325, 16
  %v8392 = vrot.slane %v8390, 5
  %v8393 = vsel %vm596, %v8388, %v8392
  %v8395 = vshrl.u32 %v8326, 16
  %v8397 = vrot.slane %v8395, 4
  %v8398 = vshll.u32 %v8326, 16
  %v8400 = vrot.slane %v8398, 5
  %v8401 = vor.u32 %v8397, %v8400
  %v8402 = vrot.slane %v8401, 4
  %v8404 = vshll.u32 %v8327, 16
  %v8406 = vrot.slane %v8404, 5
  %v8407 = vsel %vm596, %v8402, %v8406
  %v8409 = vshrl.u32 %v8328, 16
  %v8411 = vrot.slane %v8409, 4
  %v8412 = vshll.u32 %v8328, 16
  %v8414 = vrot.slane %v8412, 5
  %v8415 = vor.u32 %v8411, %v8414
  %v8416 = vrot.slane %v8415, 4
  %v8418 = vshll.u32 %v8329, 16
  %v8420 = vrot.slane %v8418, 5
  %v8421 = vsel %vm596, %v8416, %v8420
  %v8423 = vshrl.u32 %v8330, 16
  %v8425 = vrot.slane %v8423, 4
  %v8426 = vshll.u32 %v8330, 16
  %v8428 = vrot.slane %v8426, 5
  %v8429 = vor.u32 %v8425, %v8428
  %v8430 = vrot.slane %v8429, 4
  %v8432 = vshll.u32 %v8331, 16
  %v8434 = vrot.slane %v8432, 5
  %v8435 = vsel %vm596, %v8430, %v8434
  %v8437 = vshrl.u32 %v8332, 16
  %v8439 = vrot.slane %v8437, 4
  %v8440 = vshll.u32 %v8332, 16
  %v8442 = vrot.slane %v8440, 5
  %v8443 = vor.u32 %v8439, %v8442
  %v8444 = vrot.slane %v8443, 4
  %v8446 = vshll.u32 %v8333, 16
  %v8448 = vrot.slane %v8446, 5
  %v8449 = vsel %vm596, %v8444, %v8448
  %v8451 = vshrl.u32 %v8334, 16
  %v8453 = vrot.slane %v8451, 4
  %v8454 = vshll.u32 %v8334, 16
  %v8456 = vrot.slane %v8454, 5
  %v8457 = vor.u32 %v8453, %v8456
  %v8458 = vrot.slane %v8457, 4
  %v8460 = vshll.u32 %v8335, 16
  %v8462 = vrot.slane %v8460, 5
  %v8463 = vsel %vm596, %v8458, %v8462
  %v8465 = vshrl.u32 %v8336, 16
  %v8467 = vrot.slane %v8465, 4
  %v8468 = vshll.u32 %v8336, 16
  %v8470 = vrot.slane %v8468, 5
  %v8471 = vor.u32 %v8467, %v8470
  %v8472 = vrot.slane %v8471, 4
  %v8474 = vshll.u32 %v8337, 16
  %v8476 = vrot.slane %v8474, 5
  %v8477 = vsel %vm596, %v8472, %v8476
  %v8479 = vshrl.u32 %v8338, 16
  %v8481 = vrot.slane %v8479, 4
  %v8482 = vshll.u32 %v8338, 16
  %v8484 = vrot.slane %v8482, 5
  %v8485 = vor.u32 %v8481, %v8484
  %v8486 = vrot.slane %v8485, 4
  %v8488 = vshll.u32 %v8339, 16
  %v8490 = vrot.slane %v8488, 5
  %v8491 = vsel %vm596, %v8486, %v8490
  %v8493 = vshrl.u32 %v8340, 16
  %v8495 = vrot.slane %v8493, 4
  %v8496 = vshll.u32 %v8340, 16
  %v8498 = vrot.slane %v8496, 5
  %v8499 = vor.u32 %v8495, %v8498
  %v8500 = vrot.slane %v8499, 4
  %v8502 = vshll.u32 %v8341, 16
  %v8504 = vrot.slane %v8502, 5
  %v8505 = vsel %vm596, %v8500, %v8504
  %v8507 = vshrl.u32 %v8342, 16
  %v8509 = vrot.slane %v8507, 4
  %v8510 = vshll.u32 %v8342, 16
  %v8512 = vrot.slane %v8510, 5
  %v8513 = vor.u32 %v8509, %v8512
  %v8514 = vrot.slane %v8513, 4
  %v8516 = vshll.u32 %v8343, 16
  %v8518 = vrot.slane %v8516, 5
  %v8519 = vsel %vm596, %v8514, %v8518
  %v8521 = vshrl.u32 %v8344, 16
  %v8523 = vrot.slane %v8521, 4
  %v8524 = vshll.u32 %v8344, 16
  %v8526 = vrot.slane %v8524, 5
  %v8527 = vor.u32 %v8523, %v8526
  %v8528 = vrot.slane %v8527, 4
  %v8530 = vshll.u32 %v8345, 16
  %v8532 = vrot.slane %v8530, 5
  %v8533 = vsel %vm596, %v8528, %v8532
  %v8535 = vshrl.u32 %v8346, 16
  %v8537 = vrot.slane %v8535, 4
  %v8538 = vshll.u32 %v8346, 16
  %v8540 = vrot.slane %v8538, 5
  %v8541 = vor.u32 %v8537, %v8540
  %v8542 = vrot.slane %v8541, 4
  %v8544 = vshll.u32 %v8347, 16
  %v8546 = vrot.slane %v8544, 5
  %v8547 = vsel %vm596, %v8542, %v8546
  %v8549 = vshrl.u32 %v8348, 16
  %v8551 = vrot.slane %v8549, 4
  %v8552 = vshll.u32 %v8348, 16
  %v8554 = vrot.slane %v8552, 5
  %v8555 = vor.u32 %v8551, %v8554
  %v8556 = vrot.slane %v8555, 4
  %v8558 = vshll.u32 %v8349, 16
  %v8560 = vrot.slane %v8558, 5
  %v8561 = vsel %vm596, %v8556, %v8560
  %v8563 = vshrl.u32 %v8350, 16
  %v8565 = vrot.slane %v8563, 4
  %v8566 = vshll.u32 %v8350, 16
  %v8568 = vrot.slane %v8566, 5
  %v8569 = vor.u32 %v8565, %v8568
  %v8570 = vrot.slane %v8569, 4
  %v8572 = vshll.u32 %v8351, 16
  %v8574 = vrot.slane %v8572, 5
  %v8575 = vsel %vm596, %v8570, %v8574
  %v8576 = vld [vmem:[%s4235] sm:$0xe]
  %v8577 = vld [vmem:[%s4235 + $0x8] sm:$0xe]
  %v8578 = vld [vmem:[%s4235 + $0x10] sm:$0xe]
  %v8579 = vld [vmem:[%s4235 + $0x18] sm:$0xe]
  %v8580 = vld [vmem:[%s4235 + $0x20] sm:$0xe]
  %v8581 = vld [vmem:[%s4235 + $0x28] sm:$0xe]
  %v8582 = vld [vmem:[%s4235 + $0x30] sm:$0xe]
  %v8583 = vld [vmem:[%s4235 + $0x38] sm:$0xe]
  %v8584 = vld [vmem:[%s4235 + $0x50] sm:$0xe]
  %v8585 = vld [vmem:[%s4235 + $0x58] sm:$0xe]
  %v8586 = vld [vmem:[%s4235 + $0x60] sm:$0xe]
  %v8587 = vld [vmem:[%s4235 + $0x68] sm:$0xe]
  %v8588 = vld [vmem:[%s4235 + $0x70] sm:$0xe]
  %v8589 = vld [vmem:[%s4235 + $0x78] sm:$0xe]
  %v8590 = vld [vmem:[%s4235 + $0x80] sm:$0xe]
  %v8591 = vld [vmem:[%s4235 + $0x88] sm:$0xe]
  %v8624 = vrot.slane %v8576, 5
  %v8625 = vrot.slane %v8624, 4
  %v8626 = vrot.slane %v8321, 5
  %v8627 = vsel %vm5902, %v8625, %v8626
  %v8628 = vrot.slane %v8577, 5
  %v8629 = vrot.slane %v8628, 4
  %v8630 = vrot.slane %v8323, 5
  %v8631 = vsel %vm5902, %v8629, %v8630
  %v8632 = vrot.slane %v8578, 5
  %v8633 = vrot.slane %v8632, 4
  %v8634 = vrot.slane %v8325, 5
  %v8635 = vsel %vm5902, %v8633, %v8634
  %v8636 = vrot.slane %v8579, 5
  %v8637 = vrot.slane %v8636, 4
  %v8638 = vrot.slane %v8327, 5
  %v8639 = vsel %vm5902, %v8637, %v8638
  %v8640 = vrot.slane %v8580, 5
  %v8641 = vrot.slane %v8640, 4
  %v8642 = vrot.slane %v8329, 5
  %v8643 = vsel %vm5902, %v8641, %v8642
  %v8644 = vrot.slane %v8581, 5
  %v8645 = vrot.slane %v8644, 4
  %v8646 = vrot.slane %v8331, 5
  %v8647 = vsel %vm5902, %v8645, %v8646
  %v8648 = vrot.slane %v8582, 5
  %v8649 = vrot.slane %v8648, 4
  %v8650 = vrot.slane %v8333, 5
  %v8651 = vsel %vm5902, %v8649, %v8650
  %v8652 = vrot.slane %v8583, 5
  %v8653 = vrot.slane %v8652, 4
  %v8654 = vrot.slane %v8335, 5
  %v8655 = vsel %vm5902, %v8653, %v8654
  %v8656 = vrot.slane %v8584, 5
  %v8657 = vrot.slane %v8656, 4
  %v8658 = vrot.slane %v8337, 5
  %v8659 = vsel %vm5902, %v8657, %v8658
  %v8660 = vrot.slane %v8585, 5
  %v8661 = vrot.slane %v8660, 4
  %v8662 = vrot.slane %v8339, 5
  %v8663 = vsel %vm5902, %v8661, %v8662
  %v8664 = vrot.slane %v8586, 5
  %v8665 = vrot.slane %v8664, 4
  %v8666 = vrot.slane %v8341, 5
  %v8667 = vsel %vm5902, %v8665, %v8666
  %v8668 = vrot.slane %v8587, 5
  %v8669 = vrot.slane %v8668, 4
  %v8670 = vrot.slane %v8343, 5
  %v8671 = vsel %vm5902, %v8669, %v8670
  %v8672 = vrot.slane %v8588, 5
  %v8673 = vrot.slane %v8672, 4
  %v8674 = vrot.slane %v8345, 5
  %v8675 = vsel %vm5902, %v8673, %v8674
  %v8676 = vrot.slane %v8589, 5
  %v8677 = vrot.slane %v8676, 4
  %v8678 = vrot.slane %v8347, 5
  %v8679 = vsel %vm5902, %v8677, %v8678
  %v8680 = vrot.slane %v8590, 5
  %v8681 = vrot.slane %v8680, 4
  %v8682 = vrot.slane %v8349, 5
  %v8683 = vsel %vm5902, %v8681, %v8682
  %v8684 = vrot.slane %v8591, 5
  %v8685 = vrot.slane %v8684, 4
  %v8686 = vrot.slane %v8351, 5
  %v8687 = vsel %vm5902, %v8685, %v8686
  %v8688 = vld [vmem:[%s7311] sm:$0xf]
  %v8689 = vld [vmem:[%s7311 + $0x4] sm:$0x1]
  %v8690 = vld [vmem:[%s7311 + $0x8] sm:$0xf]
  %v8691 = vld [vmem:[%s7311 + $0xc] sm:$0x1]
  %v8692 = vld [vmem:[%s7311 + $0x10] sm:$0xf]
  %v8693 = vld [vmem:[%s7311 + $0x14] sm:$0x1]
  %v8694 = vld [vmem:[%s7311 + $0x18] sm:$0xf]
  %v8695 = vld [vmem:[%s7311 + $0x1c] sm:$0x1]
  %v8696 = vld [vmem:[%s7311 + $0x20] sm:$0xf]
  %v8697 = vld [vmem:[%s7311 + $0x24] sm:$0x1]
  %v8698 = vld [vmem:[%s7311 + $0x28] sm:$0xf]
  %v8699 = vld [vmem:[%s7311 + $0x2c] sm:$0x1]
  %v8700 = vld [vmem:[%s7311 + $0x30] sm:$0xf]
  %v8701 = vld [vmem:[%s7311 + $0x34] sm:$0x1]
  %v8702 = vld [vmem:[%s7311 + $0x38] sm:$0xf]
  %v8703 = vld [vmem:[%s7311 + $0x3c] sm:$0x1]
  %v8704 = vld [vmem:[%s7311 + $0x50] sm:$0xf]
  %v8705 = vld [vmem:[%s7311 + $0x54] sm:$0x1]
  %v8706 = vld [vmem:[%s7311 + $0x58] sm:$0xf]
  %v8707 = vld [vmem:[%s7311 + $0x5c] sm:$0x1]
  %v8708 = vld [vmem:[%s7311 + $0x60] sm:$0xf]
  %v8709 = vld [vmem:[%s7311 + $0x64] sm:$0x1]
  %v8710 = vld [vmem:[%s7311 + $0x68] sm:$0xf]
  %v8711 = vld [vmem:[%s7311 + $0x6c] sm:$0x1]
  %v8712 = vld [vmem:[%s7311 + $0x70] sm:$0xf]
  %v8713 = vld [vmem:[%s7311 + $0x74] sm:$0x1]
  %v8714 = vld [vmem:[%s7311 + $0x78] sm:$0xf]
  %v8715 = vld [vmem:[%s7311 + $0x7c] sm:$0x1]
  %v8716 = vld [vmem:[%s7311 + $0x80] sm:$0xf]
  %v8717 = vld [vmem:[%s7311 + $0x84] sm:$0x1]
  %v8718 = vld [vmem:[%s7311 + $0x88] sm:$0xf]
  %v8719 = vld [vmem:[%s7311 + $0x8c] sm:$0x1]
  %v8721 = vshrl.u32 %v8688, 16
  %v8723 = vrot.slane %v8721, 4
  %v8724 = vshll.u32 %v8688, 16
  %v8726 = vrot.slane %v8724, 5
  %v8727 = vor.u32 %v8723, %v8726
  %v8728 = vrot.slane %v8727, 4
  %v8730 = vshll.u32 %v8689, 16
  %v8732 = vrot.slane %v8730, 5
  %v8733 = vsel %vm596, %v8728, %v8732
  %v8735 = vshrl.u32 %v8690, 16
  %v8737 = vrot.slane %v8735, 4
  %v8738 = vshll.u32 %v8690, 16
  %v8740 = vrot.slane %v8738, 5
  %v8741 = vor.u32 %v8737, %v8740
  %v8742 = vrot.slane %v8741, 4
  %v8744 = vshll.u32 %v8691, 16
  %v8746 = vrot.slane %v8744, 5
  %v8747 = vsel %vm596, %v8742, %v8746
  %v8749 = vshrl.u32 %v8692, 16
  %v8751 = vrot.slane %v8749, 4
  %v8752 = vshll.u32 %v8692, 16
  %v8754 = vrot.slane %v8752, 5
  %v8755 = vor.u32 %v8751, %v8754
  %v8756 = vrot.slane %v8755, 4
  %v8758 = vshll.u32 %v8693, 16
  %v8760 = vrot.slane %v8758, 5
  %v8761 = vsel %vm596, %v8756, %v8760
  %v8763 = vshrl.u32 %v8694, 16
  %v8765 = vrot.slane %v8763, 4
  %v8766 = vshll.u32 %v8694, 16
  %v8768 = vrot.slane %v8766, 5
  %v8769 = vor.u32 %v8765, %v8768
  %v8770 = vrot.slane %v8769, 4
  %v8772 = vshll.u32 %v8695, 16
  %v8774 = vrot.slane %v8772, 5
  %v8775 = vsel %vm596, %v8770, %v8774
  %v8777 = vshrl.u32 %v8696, 16
  %v8779 = vrot.slane %v8777, 4
  %v8780 = vshll.u32 %v8696, 16
  %v8782 = vrot.slane %v8780, 5
  %v8783 = vor.u32 %v8779, %v8782
  %v8784 = vrot.slane %v8783, 4
  %v8786 = vshll.u32 %v8697, 16
  %v8788 = vrot.slane %v8786, 5
  %v8789 = vsel %vm596, %v8784, %v8788
  %v8791 = vshrl.u32 %v8698, 16
  %v8793 = vrot.slane %v8791, 4
  %v8794 = vshll.u32 %v8698, 16
  %v8796 = vrot.slane %v8794, 5
  %v8797 = vor.u32 %v8793, %v8796
  %v8798 = vrot.slane %v8797, 4
  %v8800 = vshll.u32 %v8699, 16
  %v8802 = vrot.slane %v8800, 5
  %v8803 = vsel %vm596, %v8798, %v8802
  %v8805 = vshrl.u32 %v8700, 16
  %v8807 = vrot.slane %v8805, 4
  %v8808 = vshll.u32 %v8700, 16
  %v8810 = vrot.slane %v8808, 5
  %v8811 = vor.u32 %v8807, %v8810
  %v8812 = vrot.slane %v8811, 4
  %v8814 = vshll.u32 %v8701, 16
  %v8816 = vrot.slane %v8814, 5
  %v8817 = vsel %vm596, %v8812, %v8816
  %v8819 = vshrl.u32 %v8702, 16
  %v8821 = vrot.slane %v8819, 4
  %v8822 = vshll.u32 %v8702, 16
  %v8824 = vrot.slane %v8822, 5
  %v8825 = vor.u32 %v8821, %v8824
  %v8826 = vrot.slane %v8825, 4
  %v8828 = vshll.u32 %v8703, 16
  %v8830 = vrot.slane %v8828, 5
  %v8831 = vsel %vm596, %v8826, %v8830
  %v8833 = vshrl.u32 %v8704, 16
  %v8835 = vrot.slane %v8833, 4
  %v8836 = vshll.u32 %v8704, 16
  %v8838 = vrot.slane %v8836, 5
  %v8839 = vor.u32 %v8835, %v8838
  %v8840 = vrot.slane %v8839, 4
  %v8842 = vshll.u32 %v8705, 16
  %v8844 = vrot.slane %v8842, 5
  %v8845 = vsel %vm596, %v8840, %v8844
  %v8847 = vshrl.u32 %v8706, 16
  %v8849 = vrot.slane %v8847, 4
  %v8850 = vshll.u32 %v8706, 16
  %v8852 = vrot.slane %v8850, 5
  %v8853 = vor.u32 %v8849, %v8852
  %v8854 = vrot.slane %v8853, 4
  %v8856 = vshll.u32 %v8707, 16
  %v8858 = vrot.slane %v8856, 5
  %v8859 = vsel %vm596, %v8854, %v8858
  %v8861 = vshrl.u32 %v8708, 16
  %v8863 = vrot.slane %v8861, 4
  %v8864 = vshll.u32 %v8708, 16
  %v8866 = vrot.slane %v8864, 5
  %v8867 = vor.u32 %v8863, %v8866
  %v8868 = vrot.slane %v8867, 4
  %v8870 = vshll.u32 %v8709, 16
  %v8872 = vrot.slane %v8870, 5
  %v8873 = vsel %vm596, %v8868, %v8872
  %v8875 = vshrl.u32 %v8710, 16
  %v8877 = vrot.slane %v8875, 4
  %v8878 = vshll.u32 %v8710, 16
  %v8880 = vrot.slane %v8878, 5
  %v8881 = vor.u32 %v8877, %v8880
  %v8882 = vrot.slane %v8881, 4
  %v8884 = vshll.u32 %v8711, 16
  %v8886 = vrot.slane %v8884, 5
  %v8887 = vsel %vm596, %v8882, %v8886
  %v8889 = vshrl.u32 %v8712, 16
  %v8891 = vrot.slane %v8889, 4
  %v8892 = vshll.u32 %v8712, 16
  %v8894 = vrot.slane %v8892, 5
  %v8895 = vor.u32 %v8891, %v8894
  %v8896 = vrot.slane %v8895, 4
  %v8898 = vshll.u32 %v8713, 16
  %v8900 = vrot.slane %v8898, 5
  %v8901 = vsel %vm596, %v8896, %v8900
  %v8903 = vshrl.u32 %v8714, 16
  %v8905 = vrot.slane %v8903, 4
  %v8906 = vshll.u32 %v8714, 16
  %v8908 = vrot.slane %v8906, 5
  %v8909 = vor.u32 %v8905, %v8908
  %v8910 = vrot.slane %v8909, 4
  %v8912 = vshll.u32 %v8715, 16
  %v8914 = vrot.slane %v8912, 5
  %v8915 = vsel %vm596, %v8910, %v8914
  %v8917 = vshrl.u32 %v8716, 16
  %v8919 = vrot.slane %v8917, 4
  %v8920 = vshll.u32 %v8716, 16
  %v8922 = vrot.slane %v8920, 5
  %v8923 = vor.u32 %v8919, %v8922
  %v8924 = vrot.slane %v8923, 4
  %v8926 = vshll.u32 %v8717, 16
  %v8928 = vrot.slane %v8926, 5
  %v8929 = vsel %vm596, %v8924, %v8928
  %v8931 = vshrl.u32 %v8718, 16
  %v8933 = vrot.slane %v8931, 4
  %v8934 = vshll.u32 %v8718, 16
  %v8936 = vrot.slane %v8934, 5
  %v8937 = vor.u32 %v8933, %v8936
  %v8938 = vrot.slane %v8937, 4
  %v8940 = vshll.u32 %v8719, 16
  %v8942 = vrot.slane %v8940, 5
  %v8943 = vsel %vm596, %v8938, %v8942
  %v8944 = vld [vmem:[%s7311] sm:$0xe]
  %v8945 = vld [vmem:[%s7311 + $0x8] sm:$0xe]
  %v8946 = vld [vmem:[%s7311 + $0x10] sm:$0xe]
  %v8947 = vld [vmem:[%s7311 + $0x18] sm:$0xe]
  %v8948 = vld [vmem:[%s7311 + $0x20] sm:$0xe]
  %v8949 = vld [vmem:[%s7311 + $0x28] sm:$0xe]
  %v8950 = vld [vmem:[%s7311 + $0x30] sm:$0xe]
  %v8951 = vld [vmem:[%s7311 + $0x38] sm:$0xe]
  %v8952 = vld [vmem:[%s7311 + $0x50] sm:$0xe]
  %v8953 = vld [vmem:[%s7311 + $0x58] sm:$0xe]
  %v8954 = vld [vmem:[%s7311 + $0x60] sm:$0xe]
  %v8955 = vld [vmem:[%s7311 + $0x68] sm:$0xe]
  %v8956 = vld [vmem:[%s7311 + $0x70] sm:$0xe]
  %v8957 = vld [vmem:[%s7311 + $0x78] sm:$0xe]
  %v8958 = vld [vmem:[%s7311 + $0x80] sm:$0xe]
  %v8959 = vld [vmem:[%s7311 + $0x88] sm:$0xe]
  %v8992 = vrot.slane %v8944, 5
  %v8993 = vrot.slane %v8992, 4
  %v8994 = vrot.slane %v8689, 5
  %v8995 = vsel %vm5902, %v8993, %v8994
  %v8996 = vrot.slane %v8945, 5
  %v8997 = vrot.slane %v8996, 4
  %v8998 = vrot.slane %v8691, 5
  %v8999 = vsel %vm5902, %v8997, %v8998
  %v9000 = vrot.slane %v8946, 5
  %v9001 = vrot.slane %v9000, 4
  %v9002 = vrot.slane %v8693, 5
  %v9003 = vsel %vm5902, %v9001, %v9002
  %v9004 = vrot.slane %v8947, 5
  %v9005 = vrot.slane %v9004, 4
  %v9006 = vrot.slane %v8695, 5
  %v9007 = vsel %vm5902, %v9005, %v9006
  %v9008 = vrot.slane %v8948, 5
  %v9009 = vrot.slane %v9008, 4
  %v9010 = vrot.slane %v8697, 5
  %v9011 = vsel %vm5902, %v9009, %v9010
  %v9012 = vrot.slane %v8949, 5
  %v9013 = vrot.slane %v9012, 4
  %v9014 = vrot.slane %v8699, 5
  %v9015 = vsel %vm5902, %v9013, %v9014
  %v9016 = vrot.slane %v8950, 5
  %v9017 = vrot.slane %v9016, 4
  %v9018 = vrot.slane %v8701, 5
  %v9019 = vsel %vm5902, %v9017, %v9018
  %v9020 = vrot.slane %v8951, 5
  %v9021 = vrot.slane %v9020, 4
  %v9022 = vrot.slane %v8703, 5
  %v9023 = vsel %vm5902, %v9021, %v9022
  %v9024 = vrot.slane %v8952, 5
  %v9025 = vrot.slane %v9024, 4
  %v9026 = vrot.slane %v8705, 5
  %v9027 = vsel %vm5902, %v9025, %v9026
  %v9028 = vrot.slane %v8953, 5
  %v9029 = vrot.slane %v9028, 4
  %v9030 = vrot.slane %v8707, 5
  %v9031 = vsel %vm5902, %v9029, %v9030
  %v9032 = vrot.slane %v8954, 5
  %v9033 = vrot.slane %v9032, 4
  %v9034 = vrot.slane %v8709, 5
  %v9035 = vsel %vm5902, %v9033, %v9034
  %v9036 = vrot.slane %v8955, 5
  %v9037 = vrot.slane %v9036, 4
  %v9038 = vrot.slane %v8711, 5
  %v9039 = vsel %vm5902, %v9037, %v9038
  %v9040 = vrot.slane %v8956, 5
  %v9041 = vrot.slane %v9040, 4
  %v9042 = vrot.slane %v8713, 5
  %v9043 = vsel %vm5902, %v9041, %v9042
  %v9044 = vrot.slane %v8957, 5
  %v9045 = vrot.slane %v9044, 4
  %v9046 = vrot.slane %v8715, 5
  %v9047 = vsel %vm5902, %v9045, %v9046
  %v9048 = vrot.slane %v8958, 5
  %v9049 = vrot.slane %v9048, 4
  %v9050 = vrot.slane %v8717, 5
  %v9051 = vsel %vm5902, %v9049, %v9050
  %v9052 = vrot.slane %v8959, 5
  %v9053 = vrot.slane %v9052, 4
  %v9054 = vrot.slane %v8719, 5
  %v9055 = vsel %vm5902, %v9053, %v9054
  %v9056 = vunpack.c.l.b16 %v8365
  %v9057 = vunpack.c.l.b16 %v8379
  %v9058 = vunpack.c.l.b16 %v8393
  %v9059 = vunpack.c.l.b16 %v8407
  %v9060 = vunpack.c.l.b16 %v8421
  %v9061 = vunpack.c.l.b16 %v8435
  %v9062 = vunpack.c.l.b16 %v8449
  %v9063 = vunpack.c.l.b16 %v8463
  %v9064 = vunpack.c.l.b16 %v8477
  %v9065 = vunpack.c.l.b16 %v8491
  %v9066 = vunpack.c.l.b16 %v8505
  %v9067 = vunpack.c.l.b16 %v8519
  %v9068 = vunpack.c.l.b16 %v8533
  %v9069 = vunpack.c.l.b16 %v8547
  %v9070 = vunpack.c.l.b16 %v8561
  %v9071 = vunpack.c.l.b16 %v8575
  %v9072 = vpack.c.b16 %v9057, %v9056
  %v9073 = vpack.c.b16 %v9059, %v9058
  %v9074 = vpack.c.b16 %v9061, %v9060
  %v9075 = vpack.c.b16 %v9063, %v9062
  %v9076 = vpack.c.b16 %v9065, %v9064
  %v9077 = vpack.c.b16 %v9067, %v9066
  %v9078 = vpack.c.b16 %v9069, %v9068
  %v9079 = vpack.c.b16 %v9071, %v9070
  %v9088 = vunpack.c.l.b16 %v8627
  %v9089 = vunpack.c.l.b16 %v8631
  %v9090 = vunpack.c.l.b16 %v8635
  %v9091 = vunpack.c.l.b16 %v8639
  %v9092 = vunpack.c.l.b16 %v8643
  %v9093 = vunpack.c.l.b16 %v8647
  %v9094 = vunpack.c.l.b16 %v8651
  %v9095 = vunpack.c.l.b16 %v8655
  %v9096 = vunpack.c.l.b16 %v8659
  %v9097 = vunpack.c.l.b16 %v8663
  %v9098 = vunpack.c.l.b16 %v8667
  %v9099 = vunpack.c.l.b16 %v8671
  %v9100 = vunpack.c.l.b16 %v8675
  %v9101 = vunpack.c.l.b16 %v8679
  %v9102 = vunpack.c.l.b16 %v8683
  %v9103 = vunpack.c.l.b16 %v8687
  %v9104 = vpack.c.b16 %v9089, %v9088
  %v9105 = vpack.c.b16 %v9091, %v9090
  %v9106 = vpack.c.b16 %v9093, %v9092
  %v9107 = vpack.c.b16 %v9095, %v9094
  %v9108 = vpack.c.b16 %v9097, %v9096
  %v9109 = vpack.c.b16 %v9099, %v9098
  %v9110 = vpack.c.b16 %v9101, %v9100
  %v9111 = vpack.c.b16 %v9103, %v9102
  %v9120 = vunpack.c.l.b16 %v8733
  %v9121 = vunpack.c.l.b16 %v8747
  %v9122 = vunpack.c.l.b16 %v8761
  %v9123 = vunpack.c.l.b16 %v8775
  %v9124 = vunpack.c.l.b16 %v8789
  %v9125 = vunpack.c.l.b16 %v8803
  %v9126 = vunpack.c.l.b16 %v8817
  %v9127 = vunpack.c.l.b16 %v8831
  %v9128 = vunpack.c.l.b16 %v8845
  %v9129 = vunpack.c.l.b16 %v8859
  %v9130 = vunpack.c.l.b16 %v8873
  %v9131 = vunpack.c.l.b16 %v8887
  %v9132 = vunpack.c.l.b16 %v8901
  %v9133 = vunpack.c.l.b16 %v8915
  %v9134 = vunpack.c.l.b16 %v8929
  %v9135 = vunpack.c.l.b16 %v8943
  %v9136 = vpack.c.b16 %v9121, %v9120
  %v9137 = vpack.c.b16 %v9123, %v9122
  %v9138 = vpack.c.b16 %v9125, %v9124
  %v9139 = vpack.c.b16 %v9127, %v9126
  %v9140 = vpack.c.b16 %v9129, %v9128
  %v9141 = vpack.c.b16 %v9131, %v9130
  %v9142 = vpack.c.b16 %v9133, %v9132
  %v9143 = vpack.c.b16 %v9135, %v9134
  %v9152 = vunpack.c.l.b16 %v8995
  %v9153 = vunpack.c.l.b16 %v8999
  %v9154 = vunpack.c.l.b16 %v9003
  %v9155 = vunpack.c.l.b16 %v9007
  %v9156 = vunpack.c.l.b16 %v9011
  %v9157 = vunpack.c.l.b16 %v9015
  %v9158 = vunpack.c.l.b16 %v9019
  %v9159 = vunpack.c.l.b16 %v9023
  %v9160 = vunpack.c.l.b16 %v9027
  %v9161 = vunpack.c.l.b16 %v9031
  %v9162 = vunpack.c.l.b16 %v9035
  %v9163 = vunpack.c.l.b16 %v9039
  %v9164 = vunpack.c.l.b16 %v9043
  %v9165 = vunpack.c.l.b16 %v9047
  %v9166 = vunpack.c.l.b16 %v9051
  %v9167 = vunpack.c.l.b16 %v9055
  %v9168 = vpack.c.b16 %v9153, %v9152
  %v9169 = vpack.c.b16 %v9155, %v9154
  %v9170 = vpack.c.b16 %v9157, %v9156
  %v9171 = vpack.c.b16 %v9159, %v9158
  %v9172 = vpack.c.b16 %v9161, %v9160
  %v9173 = vpack.c.b16 %v9163, %v9162
  %v9174 = vpack.c.b16 %v9165, %v9164
  %v9175 = vpack.c.b16 %v9167, %v9166
  %s9184 = scalar_lea.vmem %s2, 768
  %v9185 = vld [vmem:[%s9184] sm:$0xf]
  %v9186 = vld [vmem:[%s9184 + $0x4] sm:$0xf]
  %v9187 = vld [vmem:[%s9184 + $0x8] sm:$0xf]
  %v9188 = vld [vmem:[%s9184 + $0xc] sm:$0xf]
  %v9189 = vld [vmem:[%s9184 + $0x10] sm:$0xf]
  %v9190 = vld [vmem:[%s9184 + $0x14] sm:$0xf]
  %v9191 = vld [vmem:[%s9184 + $0x18] sm:$0xf]
  %v9192 = vld [vmem:[%s9184 + $0x1c] sm:$0xf]
  %v9193 = vld [vmem:[%s9184 + $0x20] sm:$0xf]
  %v9194 = vld [vmem:[%s9184 + $0x24] sm:$0xf]
  %v9195 = vld [vmem:[%s9184 + $0x28] sm:$0xf]
  %v9196 = vld [vmem:[%s9184 + $0x2c] sm:$0xf]
  %v9197 = vld [vmem:[%s9184 + $0x30] sm:$0xf]
  %v9198 = vld [vmem:[%s9184 + $0x34] sm:$0xf]
  %v9199 = vld [vmem:[%s9184 + $0x38] sm:$0xf]
  %v9200 = vld [vmem:[%s9184 + $0x3c] sm:$0xf]
  %v9201 = vld [vmem:[%s9184 + $0x40] sm:$0xf]
  %v9202 = vld [vmem:[%s9184 + $0x44] sm:$0xf]
  %v9203 = vld [vmem:[%s9184 + $0x48] sm:$0xf]
  %v9204 = vld [vmem:[%s9184 + $0x4c] sm:$0xf]
  %v9205 = vld [vmem:[%s9184 + $0x50] sm:$0xf]
  %v9206 = vld [vmem:[%s9184 + $0x54] sm:$0xf]
  %v9207 = vld [vmem:[%s9184 + $0x58] sm:$0xf]
  %v9208 = vld [vmem:[%s9184 + $0x5c] sm:$0xf]
  %v9209 = vld [vmem:[%s9184 + $0x60] sm:$0xf]
  %v9210 = vld [vmem:[%s9184 + $0x64] sm:$0xf]
  %v9211 = vld [vmem:[%s9184 + $0x68] sm:$0xf]
  %v9212 = vld [vmem:[%s9184 + $0x6c] sm:$0xf]
  %v9213 = vld [vmem:[%s9184 + $0x70] sm:$0xf]
  %v9214 = vld [vmem:[%s9184 + $0x74] sm:$0xf]
  %v9215 = vld [vmem:[%s9184 + $0x78] sm:$0xf]
  %v9216 = vld [vmem:[%s9184 + $0x7c] sm:$0xf]
  %v9217 = vld [vmem:[%s9184 + $0x80] sm:$0xf]
  %v9218 = vld [vmem:[%s9184 + $0x84] sm:$0xf]
  %v9219 = vld [vmem:[%s9184 + $0x88] sm:$0xf]
  %v9220 = vld [vmem:[%s9184 + $0x8c] sm:$0xf]
  %v9221 = vld [vmem:[%s9184 + $0x90] sm:$0xf]
  %v9222 = vld [vmem:[%s9184 + $0x94] sm:$0xf]
  %v9223 = vld [vmem:[%s9184 + $0x98] sm:$0xf]
  %v9224 = vld [vmem:[%s9184 + $0x9c] sm:$0xf]
  %v9225 = vld [vmem:[%s9184 + $0xa0] sm:$0xf]
  %v9226 = vld [vmem:[%s9184 + $0xa4] sm:$0xf]
  %v9227 = vld [vmem:[%s9184 + $0xa8] sm:$0xf]
  %v9228 = vld [vmem:[%s9184 + $0xac] sm:$0xf]
  %v9229 = vld [vmem:[%s9184 + $0xb0] sm:$0xf]
  %v9230 = vld [vmem:[%s9184 + $0xb4] sm:$0xf]
  %v9231 = vld [vmem:[%s9184 + $0xb8] sm:$0xf]
  %v9232 = vld [vmem:[%s9184 + $0xbc] sm:$0xf]
  %v9233 = vld [vmem:[%s9184 + $0xc0] sm:$0xf]
  %v9234 = vld [vmem:[%s9184 + $0xc4] sm:$0xf]
  %v9235 = vld [vmem:[%s9184 + $0xc8] sm:$0xf]
  %v9236 = vld [vmem:[%s9184 + $0xcc] sm:$0xf]
  %v9237 = vld [vmem:[%s9184 + $0xd0] sm:$0xf]
  %v9238 = vld [vmem:[%s9184 + $0xd4] sm:$0xf]
  %v9239 = vld [vmem:[%s9184 + $0xd8] sm:$0xf]
  %v9240 = vld [vmem:[%s9184 + $0xdc] sm:$0xf]
  %v9241 = vld [vmem:[%s9184 + $0xe0] sm:$0xf]
  %v9242 = vld [vmem:[%s9184 + $0xe4] sm:$0xf]
  %v9243 = vld [vmem:[%s9184 + $0xe8] sm:$0xf]
  %v9244 = vld [vmem:[%s9184 + $0xec] sm:$0xf]
  %v9245 = vld [vmem:[%s9184 + $0xf0] sm:$0xf]
  %v9246 = vld [vmem:[%s9184 + $0xf4] sm:$0xf]
  %v9247 = vld [vmem:[%s9184 + $0xf8] sm:$0xf]
  %v9248 = vld [vmem:[%s9184 + $0xfc] sm:$0xf]
  %v9313 = vunpack.c.l.b16 %v9185
  %v9314 = vunpack.c.l.b16 %v9186
  %v9315 = vunpack.c.l.b16 %v9187
  %v9316 = vunpack.c.l.b16 %v9188
  %v9317 = vunpack.c.l.b16 %v9189
  %v9318 = vunpack.c.l.b16 %v9190
  %v9319 = vunpack.c.l.b16 %v9191
  %v9320 = vunpack.c.l.b16 %v9192
  %v9321 = vunpack.c.l.b16 %v9193
  %v9322 = vunpack.c.l.b16 %v9194
  %v9323 = vunpack.c.l.b16 %v9195
  %v9324 = vunpack.c.l.b16 %v9196
  %v9325 = vunpack.c.l.b16 %v9197
  %v9326 = vunpack.c.l.b16 %v9198
  %v9327 = vunpack.c.l.b16 %v9199
  %v9328 = vunpack.c.l.b16 %v9200
  %v9329 = vunpack.c.l.b16 %v9201
  %v9330 = vunpack.c.l.b16 %v9202
  %v9331 = vunpack.c.l.b16 %v9203
  %v9332 = vunpack.c.l.b16 %v9204
  %v9333 = vunpack.c.l.b16 %v9205
  %v9334 = vunpack.c.l.b16 %v9206
  %v9335 = vunpack.c.l.b16 %v9207
  %v9336 = vunpack.c.l.b16 %v9208
  %v9337 = vunpack.c.l.b16 %v9209
  %v9338 = vunpack.c.l.b16 %v9210
  %v9339 = vunpack.c.l.b16 %v9211
  %v9340 = vunpack.c.l.b16 %v9212
  %v9341 = vunpack.c.l.b16 %v9213
  %v9342 = vunpack.c.l.b16 %v9214
  %v9343 = vunpack.c.l.b16 %v9215
  %v9344 = vunpack.c.l.b16 %v9216
  %v9345 = vunpack.c.l.b16 %v9217
  %v9346 = vunpack.c.l.b16 %v9218
  %v9347 = vunpack.c.l.b16 %v9219
  %v9348 = vunpack.c.l.b16 %v9220
  %v9349 = vunpack.c.l.b16 %v9221
  %v9350 = vunpack.c.l.b16 %v9222
  %v9351 = vunpack.c.l.b16 %v9223
  %v9352 = vunpack.c.l.b16 %v9224
  %v9353 = vunpack.c.l.b16 %v9225
  %v9354 = vunpack.c.l.b16 %v9226
  %v9355 = vunpack.c.l.b16 %v9227
  %v9356 = vunpack.c.l.b16 %v9228
  %v9357 = vunpack.c.l.b16 %v9229
  %v9358 = vunpack.c.l.b16 %v9230
  %v9359 = vunpack.c.l.b16 %v9231
  %v9360 = vunpack.c.l.b16 %v9232
  %v9361 = vunpack.c.l.b16 %v9233
  %v9362 = vunpack.c.l.b16 %v9234
  %v9363 = vunpack.c.l.b16 %v9235
  %v9364 = vunpack.c.l.b16 %v9236
  %v9365 = vunpack.c.l.b16 %v9237
  %v9366 = vunpack.c.l.b16 %v9238
  %v9367 = vunpack.c.l.b16 %v9239
  %v9368 = vunpack.c.l.b16 %v9240
  %v9369 = vunpack.c.l.b16 %v9241
  %v9370 = vunpack.c.l.b16 %v9242
  %v9371 = vunpack.c.l.b16 %v9243
  %v9372 = vunpack.c.l.b16 %v9244
  %v9373 = vunpack.c.l.b16 %v9245
  %v9374 = vunpack.c.l.b16 %v9246
  %v9375 = vunpack.c.l.b16 %v9247
  %v9376 = vunpack.c.l.b16 %v9248
  %v9377 = vpack.c.b16 %v9314, %v9313
  %v9378 = vpack.c.b16 %v9316, %v9315
  %v9379 = vpack.c.b16 %v9318, %v9317
  %v9380 = vpack.c.b16 %v9320, %v9319
  %v9381 = vpack.c.b16 %v9322, %v9321
  %v9382 = vpack.c.b16 %v9324, %v9323
  %v9383 = vpack.c.b16 %v9326, %v9325
  %v9384 = vpack.c.b16 %v9328, %v9327
  %v9385 = vpack.c.b16 %v9330, %v9329
  %v9386 = vpack.c.b16 %v9332, %v9331
  %v9387 = vpack.c.b16 %v9334, %v9333
  %v9388 = vpack.c.b16 %v9336, %v9335
  %v9389 = vpack.c.b16 %v9338, %v9337
  %v9390 = vpack.c.b16 %v9340, %v9339
  %v9391 = vpack.c.b16 %v9342, %v9341
  %v9392 = vpack.c.b16 %v9344, %v9343
  %v9393 = vpack.c.b16 %v9346, %v9345
  %v9394 = vpack.c.b16 %v9348, %v9347
  %v9395 = vpack.c.b16 %v9350, %v9349
  %v9396 = vpack.c.b16 %v9352, %v9351
  %v9397 = vpack.c.b16 %v9354, %v9353
  %v9398 = vpack.c.b16 %v9356, %v9355
  %v9399 = vpack.c.b16 %v9358, %v9357
  %v9400 = vpack.c.b16 %v9360, %v9359
  %v9401 = vpack.c.b16 %v9362, %v9361
  %v9402 = vpack.c.b16 %v9364, %v9363
  %v9403 = vpack.c.b16 %v9366, %v9365
  %v9404 = vpack.c.b16 %v9368, %v9367
  %v9405 = vpack.c.b16 %v9370, %v9369
  %v9406 = vpack.c.b16 %v9372, %v9371
  %v9407 = vpack.c.b16 %v9374, %v9373
  %v9408 = vpack.c.b16 %v9376, %v9375
  %9441 = vmatprep.subr.bf16.mxu0 0
  %9442 = vmatpush1.bf16.msra.mxu0 %v9377
  %9443 = vmatprep.subr.bf16.mxu0 0
  %9444 = vmatpush1.bf16.msra.mxu0 %v9378
  %9445 = vmatprep.subr.bf16.mxu0 0
  %9446 = vmatpush1.bf16.msra.mxu0 %v9379
  %9447 = vmatprep.subr.bf16.mxu0 0
  %9448 = vmatpush1.bf16.msra.mxu0 %v9380
  %9449 = vmatprep.subr.bf16.mxu0 0
  %9450 = vmatpush1.bf16.msra.mxu0 %v9381
  %9451 = vmatprep.subr.bf16.mxu0 0
  %9452 = vmatpush1.bf16.msra.mxu0 %v9382
  %9453 = vmatprep.subr.bf16.mxu0 0
  %9454 = vmatpush1.bf16.msra.mxu0 %v9383
  %9455 = vmatprep.subr.bf16.mxu0 0
  %9456 = vmatpush1.bf16.msra.mxu0 %v9384
  %9457 = vmatprep.subr.bf16.mxu0 0
  %9458 = vmatpush1.bf16.msra.mxu0 %v9385
  %9459 = vmatprep.subr.bf16.mxu0 0
  %9460 = vmatpush1.bf16.msra.mxu0 %v9386
  %9461 = vmatprep.subr.bf16.mxu0 0
  %9462 = vmatpush1.bf16.msra.mxu0 %v9387
  %9463 = vmatprep.subr.bf16.mxu0 0
  %9464 = vmatpush1.bf16.msra.mxu0 %v9388
  %9465 = vmatprep.subr.bf16.mxu0 0
  %9466 = vmatpush1.bf16.msra.mxu0 %v9389
  %9467 = vmatprep.subr.bf16.mxu0 0
  %9468 = vmatpush1.bf16.msra.mxu0 %v9390
  %9469 = vmatprep.subr.bf16.mxu0 0
  %9470 = vmatpush1.bf16.msra.mxu0 %v9391
  %9471 = vmatprep.subr.bf16.mxu0 0
  %9472 = vmatpush1.bf16.msra.mxu0 %v9392
  %9473 = vmatprep.mubr.bf16.mxu0 %v9104
  %9474 = vmatmul.mubr.bf16.gmra.mrb[0].mxu0 %v9072
  %v9475 = vpop.f32.mrb[0].mxu0
  %v9476 = vadd.f32 0.0, %v9475
  %v9477 = vpop.f32.mrb[0].mxu0
  %v9478 = vpop.f32.mrb[0].mxu0
  %v9479 = vadd.f32 0.0, %v9478
  %v9480 = vpop.f32.mrb[0].mxu0
  %9481 = vmatprep.mubr.bf16.mxu0 %v9105
  %9482 = vmatmul.mubr.bf16.gmra.mrb[0].mxu0 %v9073
  %v9483 = vpop.f32.mrb[0].mxu0
  %v9484 = vadd.f32 0.0, %v9483
  %v9485 = vpop.f32.mrb[0].mxu0
  %v9486 = vpop.f32.mrb[0].mxu0
  %v9487 = vadd.f32 0.0, %v9486
  %v9488 = vpop.f32.mrb[0].mxu0
  %9489 = vmatprep.mubr.bf16.mxu0 %v9106
  %9490 = vmatmul.mubr.bf16.gmra.mrb[0].mxu0 %v9074
  %v9491 = vpop.f32.mrb[0].mxu0
  %v9492 = vadd.f32 0.0, %v9491
  %v9493 = vpop.f32.mrb[0].mxu0
  %v9494 = vpop.f32.mrb[0].mxu0
  %v9495 = vadd.f32 0.0, %v9494
  %v9496 = vpop.f32.mrb[0].mxu0
  %9497 = vmatprep.mubr.bf16.mxu0 %v9107
  %9498 = vmatmul.mubr.bf16.gmra.mrb[0].mxu0 %v9075
  %v9499 = vpop.f32.mrb[0].mxu0
  %v9500 = vadd.f32 0.0, %v9499
  %v9501 = vpop.f32.mrb[0].mxu0
  %v9502 = vpop.f32.mrb[0].mxu0
  %v9503 = vadd.f32 0.0, %v9502
  %v9504 = vpop.f32.mrb[0].mxu0
  %9505 = vmatprep.mubr.bf16.mxu0 %v9108
  %9506 = vmatmul.mubr.bf16.gmra.mrb[0].mxu0 %v9076
  %v9507 = vpop.f32.mrb[0].mxu0
  %v9508 = vadd.f32 0.0, %v9507
  %v9509 = vpop.f32.mrb[0].mxu0
  %v9510 = vpop.f32.mrb[0].mxu0
  %v9511 = vadd.f32 0.0, %v9510
  %v9512 = vpop.f32.mrb[0].mxu0
  %9513 = vmatprep.mubr.bf16.mxu0 %v9109
  %9514 = vmatmul.mubr.bf16.gmra.mrb[0].mxu0 %v9077
  %v9515 = vpop.f32.mrb[0].mxu0
  %v9516 = vadd.f32 0.0, %v9515
  %v9517 = vpop.f32.mrb[0].mxu0
  %v9518 = vpop.f32.mrb[0].mxu0
  %v9519 = vadd.f32 0.0, %v9518
  %v9520 = vpop.f32.mrb[0].mxu0
  %9521 = vmatprep.mubr.bf16.mxu0 %v9110
  %9522 = vmatmul.mubr.bf16.gmra.mrb[0].mxu0 %v9078
  %v9523 = vpop.f32.mrb[0].mxu0
  %v9524 = vadd.f32 0.0, %v9523
  %v9525 = vpop.f32.mrb[0].mxu0
  %v9526 = vpop.f32.mrb[0].mxu0
  %v9527 = vadd.f32 0.0, %v9526
  %v9528 = vpop.f32.mrb[0].mxu0
  %9529 = vmatprep.mubr.bf16.mxu0 %v9111
  %9530 = vmatmul.mubr.bf16.gmra.mrb[0].mxu0 %v9079
  %v9531 = vpop.f32.mrb[0].mxu0
  %v9532 = vadd.f32 0.0, %v9531
  %v9533 = vpop.f32.mrb[0].mxu0
  %v9534 = vpop.f32.mrb[0].mxu0
  %v9535 = vadd.f32 0.0, %v9534
  %v9536 = vpop.f32.mrb[0].mxu0
  %9537 = vdwg.mxu0
  %9538 = vmatprep.subr.bf16.mxu0 0
  %9539 = vmatpush1.bf16.msra.mxu0 %v9393
  %9540 = vmatprep.subr.bf16.mxu0 0
  %9541 = vmatpush1.bf16.msra.mxu0 %v9394
  %9542 = vmatprep.subr.bf16.mxu0 0
  %9543 = vmatpush1.bf16.msra.mxu0 %v9395
  %9544 = vmatprep.subr.bf16.mxu0 0
  %9545 = vmatpush1.bf16.msra.mxu0 %v9396
  %9546 = vmatprep.subr.bf16.mxu0 0
  %9547 = vmatpush1.bf16.msra.mxu0 %v9397
  %9548 = vmatprep.subr.bf16.mxu0 0
  %9549 = vmatpush1.bf16.msra.mxu0 %v9398
  %9550 = vmatprep.subr.bf16.mxu0 0
  %9551 = vmatpush1.bf16.msra.mxu0 %v9399
  %9552 = vmatprep.subr.bf16.mxu0 0
  %9553 = vmatpush1.bf16.msra.mxu0 %v9400
  %9554 = vmatprep.subr.bf16.mxu0 0
  %9555 = vmatpush1.bf16.msra.mxu0 %v9401
  %9556 = vmatprep.subr.bf16.mxu0 0
  %9557 = vmatpush1.bf16.msra.mxu0 %v9402
  %9558 = vmatprep.subr.bf16.mxu0 0
  %9559 = vmatpush1.bf16.msra.mxu0 %v9403
  %9560 = vmatprep.subr.bf16.mxu0 0
  %9561 = vmatpush1.bf16.msra.mxu0 %v9404
  %9562 = vmatprep.subr.bf16.mxu0 0
  %9563 = vmatpush1.bf16.msra.mxu0 %v9405
  %9564 = vmatprep.subr.bf16.mxu0 0
  %9565 = vmatpush1.bf16.msra.mxu0 %v9406
  %9566 = vmatprep.subr.bf16.mxu0 0
  %9567 = vmatpush1.bf16.msra.mxu0 %v9407
  %9568 = vmatprep.subr.bf16.mxu0 0
  %9569 = vmatpush1.bf16.msra.mxu0 %v9408
  %9570 = vmatprep.mubr.bf16.mxu0 %v9168
  %9571 = vmatmul.mubr.bf16.gmra.mrb[0].mxu0 %v9136
  %v9572 = vpop.f32.mrb[0].mxu0
  %v9573 = vadd.f32 %v9476, %v9572
  %v9574 = vpop.f32.mrb[0].mxu0
  %v9575 = vpop.f32.mrb[0].mxu0
  %v9576 = vadd.f32 %v9479, %v9575
  %v9577 = vpop.f32.mrb[0].mxu0
  %9578 = vmatprep.mubr.bf16.mxu0 %v9169
  %9579 = vmatmul.mubr.bf16.gmra.mrb[0].mxu0 %v9137
  %v9580 = vpop.f32.mrb[0].mxu0
  %v9581 = vadd.f32 %v9484, %v9580
  %v9582 = vpop.f32.mrb[0].mxu0
  %v9583 = vpop.f32.mrb[0].mxu0
  %v9584 = vadd.f32 %v9487, %v9583
  %v9585 = vpop.f32.mrb[0].mxu0
  %9586 = vmatprep.mubr.bf16.mxu0 %v9170
  %9587 = vmatmul.mubr.bf16.gmra.mrb[0].mxu0 %v9138
  %v9588 = vpop.f32.mrb[0].mxu0
  %v9589 = vadd.f32 %v9492, %v9588
  %v9590 = vpop.f32.mrb[0].mxu0
  %v9591 = vpop.f32.mrb[0].mxu0
  %v9592 = vadd.f32 %v9495, %v9591
  %v9593 = vpop.f32.mrb[0].mxu0
  %9594 = vmatprep.mubr.bf16.mxu0 %v9171
  %9595 = vmatmul.mubr.bf16.gmra.mrb[0].mxu0 %v9139
  %v9596 = vpop.f32.mrb[0].mxu0
  %v9597 = vadd.f32 %v9500, %v9596
  %v9598 = vpop.f32.mrb[0].mxu0
  %v9599 = vpop.f32.mrb[0].mxu0
  %v9600 = vadd.f32 %v9503, %v9599
  %v9601 = vpop.f32.mrb[0].mxu0
  %9602 = vmatprep.mubr.bf16.mxu0 %v9172
  %9603 = vmatmul.mubr.bf16.gmra.mrb[0].mxu0 %v9140
  %v9604 = vpop.f32.mrb[0].mxu0
  %v9605 = vadd.f32 %v9508, %v9604
  %v9606 = vpop.f32.mrb[0].mxu0
  %v9607 = vpop.f32.mrb[0].mxu0
  %v9608 = vadd.f32 %v9511, %v9607
  %v9609 = vpop.f32.mrb[0].mxu0
  %9610 = vmatprep.mubr.bf16.mxu0 %v9173
  %9611 = vmatmul.mubr.bf16.gmra.mrb[0].mxu0 %v9141
  %v9612 = vpop.f32.mrb[0].mxu0
  %v9613 = vadd.f32 %v9516, %v9612
  %v9614 = vpop.f32.mrb[0].mxu0
  %v9615 = vpop.f32.mrb[0].mxu0
  %v9616 = vadd.f32 %v9519, %v9615
  %v9617 = vpop.f32.mrb[0].mxu0
  %9618 = vmatprep.mubr.bf16.mxu0 %v9174
  %9619 = vmatmul.mubr.bf16.gmra.mrb[0].mxu0 %v9142
  %v9620 = vpop.f32.mrb[0].mxu0
  %v9621 = vadd.f32 %v9524, %v9620
  %v9622 = vpop.f32.mrb[0].mxu0
  %v9623 = vpop.f32.mrb[0].mxu0
  %v9624 = vadd.f32 %v9527, %v9623
  %v9625 = vpop.f32.mrb[0].mxu0
  %9626 = vmatprep.mubr.bf16.mxu0 %v9175
  %9627 = vmatmul.mubr.bf16.gmra.mrb[0].mxu0 %v9143
  %v9628 = vpop.f32.mrb[0].mxu0
  %v9629 = vadd.f32 %v9532, %v9628
  %v9630 = vpop.f32.mrb[0].mxu0
  %v9631 = vpop.f32.mrb[0].mxu0
  %v9632 = vadd.f32 %v9535, %v9631
  %v9633 = vpop.f32.mrb[0].mxu0
  %9634 = vdwg.mxu0
  %v9635 = vpack.c.bf16 %v9576, %v9573
  %v9636 = vpack.c.bf16 %v9584, %v9581
  %v9637 = vpack.c.bf16 %v9592, %v9589
  %v9638 = vpack.c.bf16 %v9600, %v9597
  %v9639 = vpack.c.bf16 %v9608, %v9605
  %v9640 = vpack.c.bf16 %v9616, %v9613
  %v9641 = vpack.c.bf16 %v9624, %v9621
  %v9642 = vpack.c.bf16 %v9632, %v9629
  %v9651 = vunpack.c.l.b16 %v9635
  %v9652 = vunpack.c.h.b16 %v9635
  %v9653 = vunpack.c.l.b16 %v9636
  %v9654 = vunpack.c.h.b16 %v9636
  %v9655 = vunpack.c.l.b16 %v9637
  %v9656 = vunpack.c.h.b16 %v9637
  %v9657 = vunpack.c.l.b16 %v9638
  %v9658 = vunpack.c.h.b16 %v9638
  %v9659 = vunpack.c.l.b16 %v9639
  %v9660 = vunpack.c.h.b16 %v9639
  %v9661 = vunpack.c.l.b16 %v9640
  %v9662 = vunpack.c.h.b16 %v9640
  %v9663 = vunpack.c.l.b16 %v9641
  %v9664 = vunpack.c.h.b16 %v9641
  %v9665 = vunpack.c.l.b16 %v9642
  %v9666 = vunpack.c.h.b16 %v9642
  %v9667 = vpack.c.b16 %v9651, %v9651
  %v9668 = vpack.c.b16 %v9652, %v9652
  %v9669 = vpack.c.b16 %v9653, %v9653
  %v9670 = vpack.c.b16 %v9654, %v9654
  %v9671 = vpack.c.b16 %v9655, %v9655
  %v9672 = vpack.c.b16 %v9656, %v9656
  %v9673 = vpack.c.b16 %v9657, %v9657
  %v9674 = vpack.c.b16 %v9658, %v9658
  %v9675 = vpack.c.b16 %v9659, %v9659
  %v9676 = vpack.c.b16 %v9660, %v9660
  %v9677 = vpack.c.b16 %v9661, %v9661
  %v9678 = vpack.c.b16 %v9662, %v9662
  %v9679 = vpack.c.b16 %v9663, %v9663
  %v9680 = vpack.c.b16 %v9664, %v9664
  %v9681 = vpack.c.b16 %v9665, %v9665
  %v9682 = vpack.c.b16 %v9666, %v9666
  %s9699 = scalar_lea.vmem %s3, 192
  %9700 = vst [vmem:[%s9699] sm:$0xf] %v9667
  %9701 = vst [vmem:[%s9699 + $0x4] sm:$0xf] %v9668
  %9702 = vst [vmem:[%s9699 + $0x8] sm:$0xf] %v9669
  %9703 = vst [vmem:[%s9699 + $0xc] sm:$0xf] %v9670
  %9704 = vst [vmem:[%s9699 + $0x10] sm:$0xf] %v9671
  %9705 = vst [vmem:[%s9699 + $0x14] sm:$0xf] %v9672
  %9706 = vst [vmem:[%s9699 + $0x18] sm:$0xf] %v9673
  %9707 = vst [vmem:[%s9699 + $0x1c] sm:$0xf] %v9674
  %9708 = vst [vmem:[%s9699 + $0x20] sm:$0xf] %v9675
  %9709 = vst [vmem:[%s9699 + $0x24] sm:$0xf] %v9676
  %9710 = vst [vmem:[%s9699 + $0x28] sm:$0xf] %v9677
  %9711 = vst [vmem:[%s9699 + $0x2c] sm:$0xf] %v9678
  %9712 = vst [vmem:[%s9699 + $0x30] sm:$0xf] %v9679
  %9713 = vst [vmem:[%s9699 + $0x34] sm:$0xf] %v9680
  %9714 = vst [vmem:[%s9699 + $0x38] sm:$0xf] %v9681
  %9715 = vst [vmem:[%s9699 + $0x3c] sm:$0xf] %v9682
  %v9716 = vadd.f32 %v9573, %v9576
  %v9717 = vadd.f32 %v9716, %v9581
  %v9718 = vadd.f32 %v9717, %v9584
  %v9719 = vadd.f32 %v9718, %v9589
  %v9720 = vadd.f32 %v9719, %v9592
  %v9721 = vadd.f32 %v9720, %v9597
  %v9722 = vadd.f32 %v9721, %v9600
  %v9723 = vadd.f32 %v9722, %v9605
  %v9724 = vadd.f32 %v9723, %v9608
  %v9725 = vadd.f32 %v9724, %v9613
  %v9726 = vadd.f32 %v9725, %v9616
  %v9727 = vadd.f32 %v9726, %v9621
  %v9728 = vadd.f32 %v9727, %v9624
  %v9729 = vadd.f32 %v9728, %v9629
  %v9730 = vadd.f32 %v9729, %v9632
  %v9731 = vrot.slane %v9730, 4
  %v9732 = vadd.f32 %v9730, %v9731
  %v9733 = vrot.slane %v9732, 2
  %v9734 = vadd.f32 %v9732, %v9733
  %v9735 = vrot.slane %v9734, 1
  %v9736 = vadd.f32 %v9734, %v9735
  %v9737 = vadd.f32 %v8281, %v9736
  %v9738 = vmul.f32 %v9573, %v9573
  %v9739 = vmul.f32 %v9576, %v9576
  %v9740 = vmul.f32 %v9581, %v9581
  %v9741 = vmul.f32 %v9584, %v9584
  %v9742 = vmul.f32 %v9589, %v9589
  %v9743 = vmul.f32 %v9592, %v9592
  %v9744 = vmul.f32 %v9597, %v9597
  %v9745 = vmul.f32 %v9600, %v9600
  %v9746 = vmul.f32 %v9605, %v9605
  %v9747 = vmul.f32 %v9608, %v9608
  %v9748 = vmul.f32 %v9613, %v9613
  %v9749 = vmul.f32 %v9616, %v9616
  %v9750 = vmul.f32 %v9621, %v9621
  %v9751 = vmul.f32 %v9624, %v9624
  %v9752 = vmul.f32 %v9629, %v9629
  %v9753 = vmul.f32 %v9632, %v9632
  %v9754 = vadd.f32 %v9738, %v9739
  %v9755 = vadd.f32 %v9754, %v9740
  %v9756 = vadd.f32 %v9755, %v9741
  %v9757 = vadd.f32 %v9756, %v9742
  %v9758 = vadd.f32 %v9757, %v9743
  %v9759 = vadd.f32 %v9758, %v9744
  %v9760 = vadd.f32 %v9759, %v9745
  %v9761 = vadd.f32 %v9760, %v9746
  %v9762 = vadd.f32 %v9761, %v9747
  %v9763 = vadd.f32 %v9762, %v9748
  %v9764 = vadd.f32 %v9763, %v9749
  %v9765 = vadd.f32 %v9764, %v9750
  %v9766 = vadd.f32 %v9765, %v9751
  %v9767 = vadd.f32 %v9766, %v9752
  %v9768 = vadd.f32 %v9767, %v9753
  %v9769 = vrot.slane %v9768, 4
  %v9770 = vadd.f32 %v9768, %v9769
  %v9771 = vrot.slane %v9770, 2
  %v9772 = vadd.f32 %v9770, %v9771
  %v9773 = vrot.slane %v9772, 1
  %v9774 = vadd.f32 %v9772, %v9773
  %v9775 = vadd.f32 %v8319, %v9774
  %9776 = vst [vmem:[%s4] sm:$0x1] %v9737
  %9777 = vst [vmem:[%s4 + $0x1] sm:$0x1] %v9775
  // Predicated region
  $region14: #{unet_innermost_block.2} parent=0 // pred_check
    _
  $region15: #{unet_innermost_block.2} parent=0 // pred_check_branch
    %9779 = sbr.rel (0) target = $region17
  $region16: #{unet_innermost_block.2} parent=0 // pred_region
    _
  $region17: #{unet_innermost_block.2} parent=0 // pred_fallthru
    _
  // Predicated region
  $region18: #{unet_innermost_block.2} parent=0 // pred_check
    _
  $region19: #{unet_innermost_block.2} parent=0 // pred_check_branch
    %9781 = sbr.rel (0) target = $region21
  $region20: #{unet_innermost_block.2} parent=0 // pred_region
    _
  $region21: #{unet_innermost_block.2} parent=0 // pred_fallthru
    _
  // Predicated region
  $region22: #{unet_innermost_block.2} parent=0 // pred_check
    _
  $region23: #{unet_innermost_block.2} parent=0 // pred_check_branch
    %9783 = sbr.rel (0) target = $region25
  $region24: #{unet_innermost_block.2} parent=0 // pred_region
    _
  $region25: #{unet_innermost_block.2} parent=0 // pred_fallthru
    _
  // Predicated region
  $region26: #{unet_innermost_block.2} parent=0 // pred_check
    _
  $region27: #{unet_innermost_block.2} parent=0 // pred_check_branch
    %9785 = sbr.rel (0) target = $region29
  $region28: #{unet_innermost_block.2} parent=0 // pred_region
    _
  $region29: #{unet_innermost_block.2} parent=0 // pred_fallthru
    _

</llo_original>
